<compile_context>
chip_gen: v6e
topology: v6e:2x2x1
jax: 0.10.0
libtpu: 0.0.40
codegen_flags: <defaults>
</compile_context>

<pallas_src>
import functools

import jax
import jax.numpy as jnp
from jax.experimental import pallas as pl
from jax.experimental.pallas import tpu as pltpu

LANES = 128       # lane width of a vreg
SUBLANES = 8      # sublane depth of a f32 vreg


# ----------------------------------------------------------------------------
# Basis functions + first derivatives (NURBS Book A2.3, nth_derivative = 1)
# with clamped-uniform knot values computed on the fly:
#   knot[idx] = clip((idx - degree) / (num_unique - 1), 0, 1)
#   span      = floor(u * (num_unique - 1)) + degree,  base = span - degree
# Works on arrays of any shape (used both in-kernel and in the pure-JAX ref).
# ----------------------------------------------------------------------------
def _basis_and_first_derivative(u, base, degree, inv_interval):
    zero = jnp.zeros_like(u)
    one = jnp.ones_like(u)

    def knot(delta):
        # knot_vector[span + delta]  ==  clip((base + delta) * inv, 0, 1)
        return jnp.clip((base + float(delta)) * inv_interval, 0.0, 1.0)

    left = [zero for _ in range(degree + 1)]
    right = [zero for _ in range(degree + 1)]
    ndu = [[zero for _ in range(degree + 1)] for _ in range(degree + 1)]
    ndu[0][0] = one
    for j in range(1, degree + 1):
        left[j] = u - knot(1 - j)          # u - knot_vector[span + 1 - j]
        right[j] = knot(j) - u             # knot_vector[span + j] - u
        saved = zero
        for r in range(j):
            ndu[j][r] = right[r + 1] + left[j - r]
            tmp = ndu[r][j - 1] / ndu[j][r]
            ndu[r][j] = saved + right[r + 1] * tmp
            saved = left[j - r] * tmp
        ndu[j][j] = saved

    nth = 1  # forward pass only needs first derivatives
    ders = [[zero for _ in range(degree + 1)] for _ in range(nth + 1)]
    for j in range(degree + 1):
        ders[0][j] = ndu[j][degree]

    a = [[zero for _ in range(degree + 1)] for _ in range(2)]
    for r in range(degree + 1):
        s1, s2 = 0, 1
        a[0][0] = one
        for k in range(1, nth + 1):
            d = zero
            rk = r - k
            pk = degree - k
            if r >= k:
                a[s2][0] = a[s1][0] / ndu[pk + 1][rk]
                d = a[s2][0] * ndu[rk][pk]
            j1 = 1 if rk >= -1 else -rk
            j2 = k - 1 if r - 1 <= pk else degree - r
            for j in range(j1, j2 + 1):
                a[s2][j] = (a[s1][j] - a[s1][j - 1]) / ndu[pk + 1][rk + j]
                d = d + a[s2][j] * ndu[rk + j][pk]
            if r <= pk:
                a[s2][k] = -a[s1][k - 1] / ndu[pk + 1][r]
                d = d + a[s2][k] * ndu[r][pk]
            ders[k][r] = d
            s1, s2 = s2, s1

    rmul = degree
    for k in range(1, nth + 1):
        for j in range(degree + 1):
            ders[k][j] = ders[k][j] * float(rmul)
        rmul *= degree - k
    return ders


# ----------------------------------------------------------------------------
# One (8, LANES) sub-tile of evaluation points.
# ----------------------------------------------------------------------------
def _eval_subtile(deg_e, deg_n, nc_e, nc_n, cp_ref, ue, un, out_ref, r0):
    nspan_e = nc_e - deg_e           # number of knot intervals (east)
    nspan_n = nc_n - deg_n           # number of knot intervals (north)

    # Uniform-knot fast path of find_span(): base = span - degree.
    base_e = jnp.clip(jnp.floor(ue * float(nspan_e)), 0.0, float(nspan_e - 1))
    base_n = jnp.clip(jnp.floor(un * float(nspan_n)), 0.0, float(nspan_n - 1))

    ders_e = _basis_and_first_derivative(ue, base_e, deg_e, 1.0 / nspan_e)
    ders_n = _basis_and_first_derivative(un, base_n, deg_n, 1.0 / nspan_n)

    # Scatter the (degree+1) local basis values onto the full control grid via
    # exact {0,1} masks on the span base (one-hot expansion, all VPU work).
    m_e = [(base_e == float(b)).astype(jnp.float32) for b in range(nspan_e)]
    m_n = [(base_n == float(b)).astype(jnp.float32) for b in range(nspan_n)]

    def expand(masks, d, degree, nc, nbases):
        coeff = []
        for i in range(nc):
            acc = None
            for b in range(max(0, i - degree), min(nbases - 1, i) + 1):
                term = masks[b] * d[i - b]
                acc = term if acc is None else acc + term
            coeff.append(acc)
        return coeff

    ce0 = expand(m_e, ders_e[0], deg_e, nc_e, nspan_e)   # basis (east)
    ce1 = expand(m_e, ders_e[1], deg_e, nc_e, nspan_e)   # d/d(east)
    cn0 = expand(m_n, ders_n[0], deg_n, nc_n, nspan_n)   # basis (north)
    cn1 = expand(m_n, ders_n[1], deg_n, nc_n, nspan_n)   # d/d(north)

    rows = slice(r0, r0 + SUBLANES)
    s10 = [None, None, None]
    s01 = [None, None, None]

    # S_{k,t}[c] = sum_i ce_k[i] * sum_j cn_t[j] * cp[i, j, c]
    # cp values are scalars read from SMEM (broadcast for free into VPU ops).
    for c in range(4):
        a00 = None
        a10 = None
        a01 = None
        for i in range(nc_e):
            q0 = None
            q1 = None
            for j in range(nc_n):
                w = cp_ref[(i * nc_n + j) * 4 + c]
                q0 = cn0[j] * w if q0 is None else q0 + cn0[j] * w
                if c < 3:
                    q1 = cn1[j] * w if q1 is None else q1 + cn1[j] * w
            a00 = ce0[i] * q0 if a00 is None else a00 + ce0[i] * q0
            if c < 3:
                a10 = ce1[i] * q0 if a10 is None else a10 + ce1[i] * q0
                a01 = ce0[i] * q1 if a01 is None else a01 + ce0[i] * q1
        out_ref[c, rows, :] = a00           # surface point (homogeneous)
        if c < 3:
            s10[c] = a10                    # d/d(east)
            s01[c] = a01                    # d/d(north)

    # cross(d/d(east), d/d(north)), then L2-normalize (torch F.normalize, eps=1e-12)
    nx = s10[1] * s01[2] - s10[2] * s01[1]
    ny = s10[2] * s01[0] - s10[0] * s01[2]
    nz = s10[0] * s01[1] - s10[1] * s01[0]
    inv = jax.lax.rsqrt(jnp.maximum(nx * nx + ny * ny + nz * nz, 1e-24))
    out_ref[4, rows, :] = nx * inv
    out_ref[5, rows, :] = ny * inv
    out_ref[6, rows, :] = nz * inv
    out_ref[7, rows, :] = jnp.zeros_like(nx)


def _nurbs_kernel(deg_e, deg_n, nc_e, nc_n, subtiles,
                  cp_ref, ev_ref, out_ref):
    for t in range(subtiles):
        r0 = t * SUBLANES
        ue = ev_ref[0, r0:r0 + SUBLANES, :]
        un = ev_ref[1, r0:r0 + SUBLANES, :]
        _eval_subtile(deg_e, deg_n, nc_e, nc_n, cp_ref, ue, un, out_ref, r0)


# ----------------------------------------------------------------------------
# Wrapper
# ----------------------------------------------------------------------------
def nurbs_surface_points_and_normals(control_points, eval_e, eval_n,
                                     degree_e, degree_n, subtiles=2):
    control_points = control_points.astype(jnp.float32)
    eval_e = eval_e.astype(jnp.float32)
    eval_n = eval_n.astype(jnp.float32)
    nc_e, nc_n = control_points.shape[0], control_points.shape[1]

    rows_per_step = SUBLANES * subtiles
    pts_per_step = rows_per_step * LANES           # points per grid step

    n_eval = eval_e.shape[0]
    n_pad = int(pl.cdiv(n_eval, pts_per_step)) * pts_per_step
    pad = n_pad - n_eval
    if pad:
        eval_e = jnp.concatenate([eval_e, jnp.full((pad,), 0.5, jnp.float32)])
        eval_n = jnp.concatenate([eval_n, jnp.full((pad,), 0.5, jnp.float32)])

    n_rows = n_pad // LANES
    # Single pipelined input: (2, rows, 128); row-major points on (sublane, lane).
    ev = jnp.stack([eval_e.reshape(n_rows, LANES),
                    eval_n.reshape(n_rows, LANES)], axis=0)

    # Homogeneous control points, flattened, live whole in SMEM (~nc_e*nc_n*16 B).
    cp_hom = jnp.concatenate(
        [control_points, jnp.ones((nc_e, nc_n, 1), jnp.float32)], axis=-1)
    cp_flat = cp_hom.reshape(-1)

    kernel = functools.partial(_nurbs_kernel, degree_e, degree_n,
                               nc_e, nc_n, subtiles)

    out = pl.pallas_call(
        kernel,
        out_shape=jax.ShapeDtypeStruct((8, n_rows, LANES), jnp.float32),
        grid_spec=pltpu.PrefetchScalarGridSpec(
            num_scalar_prefetch=0,
            grid=(n_rows // rows_per_step,),
            in_specs=[
                pl.BlockSpec(memory_space=pltpu.MemorySpace.SMEM),
                pl.BlockSpec((2, rows_per_step, LANES), lambda i: (0, i, 0)),
            ],
            out_specs=pl.BlockSpec((8, rows_per_step, LANES),
                                   lambda i: (0, i, 0)),
        ),
        compiler_params=pltpu.CompilerParams(
            dimension_semantics=("parallel",)),
    )(cp_flat, ev)

    flat = out.reshape(8, n_pad)[:, :n_eval]
    points = flat[0:4].T     # (N, 4): x, y, z, weight(=1)
    normals = flat[4:8].T    # (N, 4): nx, ny, nz, 0
    return points, normals


# TODO(synk): the non-uniform-knot binary-search branch of find_span (a
# data-dependent while loop per point) has no clean Pallas equivalent; knot
# vectors produced by calculate_knots() are always uniform, so only the
# uniform fast path is implemented.


# ----------------------------------------------------------------------------
# Pure-JAX reference (gather-based), for correctness comparison only.
# ----------------------------------------------------------------------------
def _reference(control_points, eval_e, eval_n, degree_e, degree_n):
    control_points = control_points.astype(jnp.float32)
    eval_e = eval_e.astype(jnp.float32)
    eval_n = eval_n.astype(jnp.float32)
    nc_e, nc_n = control_points.shape[:2]
    nspan_e = nc_e - degree_e
    nspan_n = nc_n - degree_n
    base_e = jnp.clip(jnp.floor(eval_e * nspan_e), 0.0, nspan_e - 1.0)
    base_n = jnp.clip(jnp.floor(eval_n * nspan_n), 0.0, nspan_n - 1.0)
    de = _basis_and_first_derivative(eval_e, base_e, degree_e, 1.0 / nspan_e)
    dn = _basis_and_first_derivative(eval_n, base_n, degree_n, 1.0 / nspan_n)
    cp = jnp.concatenate(
        [control_points, jnp.ones((nc_e, nc_n, 1), jnp.float32)], axis=-1)
    ie = base_e.astype(jnp.int32)[:, None] + jnp.arange(degree_e + 1)[None, :]
    inn = base_n.astype(jnp.int32)[:, None] + jnp.arange(degree_n + 1)[None, :]
    cp_g = cp[ie[:, :, None], inn[:, None, :]]            # (N, R, S, 4)
    be0 = jnp.stack(de[0], axis=-1)
    be1 = jnp.stack(de[1], axis=-1)
    bn0 = jnp.stack(dn[0], axis=-1)
    bn1 = jnp.stack(dn[1], axis=-1)
    s00 = jnp.einsum("nr,ns,nrsc->nc", be0, bn0, cp_g)
    s10 = jnp.einsum("nr,ns,nrsc->nc", be1, bn0, cp_g)
    s01 = jnp.einsum("nr,ns,nrsc->nc", be0, bn1, cp_g)
    nrm = jnp.cross(s10[:, :3], s01[:, :3])
    nrm = nrm / jnp.maximum(jnp.linalg.norm(nrm, axis=-1, keepdims=True), 1e-12)
    normals = jnp.concatenate([nrm, jnp.zeros((nrm.shape[0], 1), jnp.float32)],
                              axis=-1)
    return s00, normals


if __name__ == "__main__":
    key = jax.random.PRNGKey(0)
    k1, k2, k3 = jax.random.split(key, 3)

    degree_e = degree_n = 2
    nc_e = nc_n = 8

    # Deterministic control points: regular grid in (e, n) with a small random
    # height perturbation (same shapes as the module's control_points param).
    ce = jnp.linspace(-1.0, 1.0, nc_e)
    cn = jnp.linspace(-1.0, 1.0, nc_n)
    gx, gy = jnp.meshgrid(ce, cn, indexing="ij")
    gz = 0.05 * jax.random.normal(k1, (nc_e, nc_n))
    control_points = jnp.stack([gx, gy, gz], axis=-1).astype(jnp.float32)

    n_eval = 100
    eval_e = jax.random.uniform(k2, (n_eval,), minval=0.02, maxval=0.98)
    eval_n = jax.random.uniform(k3, (n_eval,), minval=0.02, maxval=0.98)

    points, normals = nurbs_surface_points_and_normals(
        control_points, eval_e, eval_n, degree_e, degree_n)
    points, normals = jax.block_until_ready((points, normals))

    assert points.shape == (n_eval, 4) and normals.shape == (n_eval, 4)
    assert bool(jnp.all(jnp.isfinite(points)))
    assert bool(jnp.all(jnp.isfinite(normals)))
    # Homogeneous weight must be ~1 (partition of unity), normals unit length
    # with a zero fourth component — matches the PyTorch forward semantics.
    assert bool(jnp.allclose(points[:, 3], 1.0, atol=1e-4))
    assert bool(jnp.allclose(jnp.linalg.norm(normals[:, :3], axis=-1), 1.0, atol=1e-4))
    assert bool(jnp.allclose(normals[:, 3], 0.0))

    # Compare against a pure-JAX gather-based reference.
    ref_pts, ref_nrm = _reference(control_points, eval_e, eval_n,
                                  degree_e, degree_n)
    assert bool(jnp.max(jnp.abs(points - ref_pts)) < 1e-3)
    assert bool(jnp.max(jnp.abs(normals - ref_nrm)) < 1e-3)

    print("KERNEL_OK")
</pallas_src>

<mosaic_0001>
module attributes {stable_mosaic.version = 11 : i64} {
  func.func @_nurbs_kernel(%arg0: i32, %arg1: memref<256xf32, #tpu.memory_space<smem>>, %arg2: memref<2x16x128xf32, #tpu.memory_space<vmem>>, %arg3: memref<8x16x128xf32, #tpu.memory_space<vmem>>) attributes {dimension_semantics = [#tpu.dimension_semantics<parallel>], iteration_bounds = array<i64: 1>, scalar_prefetch = 0 : i64, scratch_operands = 0 : i64, tpu.core_type = #tpu.core_type<tc>, window_params = [{transform_indices = @transform_0, window_bounds = array<i64: 256>}, {transform_indices = @transform_1, window_bounds = array<i64: 2, 16, 128>}, {transform_indices = @transform_2, window_bounds = array<i64: 8, 16, 128>}]} {
    %c0 = arith.constant 0 : index
    %c0_0 = arith.constant 0 : index
    %c0_1 = arith.constant 0 : index
    %0 = vector.load %arg2[%c0, %c0_0, %c0_1] : memref<2x16x128xf32, #tpu.memory_space<vmem>>, vector<1x8x128xf32>
    %1 = vector.shape_cast %0 : vector<1x8x128xf32> to vector<8x128xf32>
    %c1 = arith.constant 1 : index
    %c0_2 = arith.constant 0 : index
    %c0_3 = arith.constant 0 : index
    %2 = vector.load %arg2[%c1, %c0_2, %c0_3] : memref<2x16x128xf32, #tpu.memory_space<vmem>>, vector<1x8x128xf32>
    %3 = vector.shape_cast %2 : vector<1x8x128xf32> to vector<8x128xf32>
    %cst = arith.constant 6.000000e+00 : f32
    %4 = vector.broadcast %cst : f32 to vector<8x128xf32>
    %5 = arith.mulf %1, %4 : vector<8x128xf32>
    %6 = math.floor %5 : vector<8x128xf32>
    %cst_4 = arith.constant 0.000000e+00 : f32
    %cst_5 = arith.constant 5.000000e+00 : f32
    %7 = vector.broadcast %cst_4 : f32 to vector<8x128xf32>
    %8 = arith.maximumf %7, %6 : vector<8x128xf32>
    %9 = vector.broadcast %cst_5 : f32 to vector<8x128xf32>
    %10 = arith.minimumf %9, %8 : vector<8x128xf32>
    %cst_6 = arith.constant 6.000000e+00 : f32
    %11 = vector.broadcast %cst_6 : f32 to vector<8x128xf32>
    %12 = arith.mulf %3, %11 : vector<8x128xf32>
    %13 = math.floor %12 : vector<8x128xf32>
    %cst_7 = arith.constant 0.000000e+00 : f32
    %cst_8 = arith.constant 5.000000e+00 : f32
    %14 = vector.broadcast %cst_7 : f32 to vector<8x128xf32>
    %15 = arith.maximumf %14, %13 : vector<8x128xf32>
    %16 = vector.broadcast %cst_8 : f32 to vector<8x128xf32>
    %17 = arith.minimumf %16, %15 : vector<8x128xf32>
    %cst_9 = arith.constant 0.000000e+00 : f32
    %18 = vector.broadcast %cst_9 : f32 to vector<8x128xf32>
    %cst_10 = arith.constant 1.000000e+00 : f32
    %19 = vector.broadcast %cst_10 : f32 to vector<8x128xf32>
    %cst_11 = arith.constant 0.000000e+00 : f32
    %20 = vector.broadcast %cst_11 : f32 to vector<8x128xf32>
    %21 = arith.addf %10, %20 : vector<8x128xf32>
    %cst_12 = arith.constant 0.166666672 : f32
    %22 = vector.broadcast %cst_12 : f32 to vector<8x128xf32>
    %23 = arith.mulf %21, %22 : vector<8x128xf32>
    %cst_13 = arith.constant 0.000000e+00 : f32
    %cst_14 = arith.constant 1.000000e+00 : f32
    %24 = vector.broadcast %cst_13 : f32 to vector<8x128xf32>
    %25 = arith.maximumf %24, %23 : vector<8x128xf32>
    %26 = vector.broadcast %cst_14 : f32 to vector<8x128xf32>
    %27 = arith.minimumf %26, %25 : vector<8x128xf32>
    %28 = arith.subf %1, %27 : vector<8x128xf32>
    %cst_15 = arith.constant 1.000000e+00 : f32
    %29 = vector.broadcast %cst_15 : f32 to vector<8x128xf32>
    %30 = arith.addf %10, %29 : vector<8x128xf32>
    %cst_16 = arith.constant 0.166666672 : f32
    %31 = vector.broadcast %cst_16 : f32 to vector<8x128xf32>
    %32 = arith.mulf %30, %31 : vector<8x128xf32>
    %cst_17 = arith.constant 0.000000e+00 : f32
    %cst_18 = arith.constant 1.000000e+00 : f32
    %33 = vector.broadcast %cst_17 : f32 to vector<8x128xf32>
    %34 = arith.maximumf %33, %32 : vector<8x128xf32>
    %35 = vector.broadcast %cst_18 : f32 to vector<8x128xf32>
    %36 = arith.minimumf %35, %34 : vector<8x128xf32>
    %37 = arith.subf %36, %1 : vector<8x128xf32>
    %38 = arith.addf %37, %28 : vector<8x128xf32>
    %39 = arith.divf %19, %38 : vector<8x128xf32>
    %40 = arith.mulf %37, %39 : vector<8x128xf32>
    %41 = arith.addf %18, %40 : vector<8x128xf32>
    %42 = arith.mulf %28, %39 : vector<8x128xf32>
    %cst_19 = arith.constant -1.000000e+00 : f32
    %43 = vector.broadcast %cst_19 : f32 to vector<8x128xf32>
    %44 = arith.addf %10, %43 : vector<8x128xf32>
    %cst_20 = arith.constant 0.166666672 : f32
    %45 = vector.broadcast %cst_20 : f32 to vector<8x128xf32>
    %46 = arith.mulf %44, %45 : vector<8x128xf32>
    %cst_21 = arith.constant 0.000000e+00 : f32
    %cst_22 = arith.constant 1.000000e+00 : f32
    %47 = vector.broadcast %cst_21 : f32 to vector<8x128xf32>
    %48 = arith.maximumf %47, %46 : vector<8x128xf32>
    %49 = vector.broadcast %cst_22 : f32 to vector<8x128xf32>
    %50 = arith.minimumf %49, %48 : vector<8x128xf32>
    %51 = arith.subf %1, %50 : vector<8x128xf32>
    %cst_23 = arith.constant 2.000000e+00 : f32
    %52 = vector.broadcast %cst_23 : f32 to vector<8x128xf32>
    %53 = arith.addf %10, %52 : vector<8x128xf32>
    %cst_24 = arith.constant 0.166666672 : f32
    %54 = vector.broadcast %cst_24 : f32 to vector<8x128xf32>
    %55 = arith.mulf %53, %54 : vector<8x128xf32>
    %cst_25 = arith.constant 0.000000e+00 : f32
    %cst_26 = arith.constant 1.000000e+00 : f32
    %56 = vector.broadcast %cst_25 : f32 to vector<8x128xf32>
    %57 = arith.maximumf %56, %55 : vector<8x128xf32>
    %58 = vector.broadcast %cst_26 : f32 to vector<8x128xf32>
    %59 = arith.minimumf %58, %57 : vector<8x128xf32>
    %60 = arith.subf %59, %1 : vector<8x128xf32>
    %61 = arith.addf %37, %51 : vector<8x128xf32>
    %62 = arith.divf %41, %61 : vector<8x128xf32>
    %63 = arith.mulf %37, %62 : vector<8x128xf32>
    %64 = arith.addf %18, %63 : vector<8x128xf32>
    %65 = arith.mulf %51, %62 : vector<8x128xf32>
    %66 = arith.addf %60, %28 : vector<8x128xf32>
    %67 = arith.divf %42, %66 : vector<8x128xf32>
    %68 = arith.mulf %60, %67 : vector<8x128xf32>
    %69 = arith.addf %65, %68 : vector<8x128xf32>
    %70 = arith.mulf %28, %67 : vector<8x128xf32>
    %cst_27 = arith.constant 0.000000e+00 : f32
    %71 = vector.broadcast %cst_27 : f32 to vector<8x128xf32>
    %72 = arith.subf %71, %19 : vector<8x128xf32>
    %73 = arith.divf %72, %61 : vector<8x128xf32>
    %74 = arith.mulf %73, %41 : vector<8x128xf32>
    %75 = arith.addf %18, %74 : vector<8x128xf32>
    %76 = arith.divf %19, %61 : vector<8x128xf32>
    %77 = arith.mulf %76, %41 : vector<8x128xf32>
    %cst_28 = arith.constant 0.000000e+00 : f32
    %78 = vector.broadcast %cst_28 : f32 to vector<8x128xf32>
    %79 = arith.subf %78, %19 : vector<8x128xf32>
    %80 = arith.divf %79, %66 : vector<8x128xf32>
    %81 = arith.mulf %80, %42 : vector<8x128xf32>
    %82 = arith.addf %77, %81 : vector<8x128xf32>
    %83 = arith.divf %19, %66 : vector<8x128xf32>
    %84 = arith.mulf %83, %42 : vector<8x128xf32>
    %cst_29 = arith.constant 2.000000e+00 : f32
    %85 = vector.broadcast %cst_29 : f32 to vector<8x128xf32>
    %86 = arith.mulf %75, %85 : vector<8x128xf32>
    %cst_30 = arith.constant 2.000000e+00 : f32
    %87 = vector.broadcast %cst_30 : f32 to vector<8x128xf32>
    %88 = arith.mulf %82, %87 : vector<8x128xf32>
    %cst_31 = arith.constant 2.000000e+00 : f32
    %89 = vector.broadcast %cst_31 : f32 to vector<8x128xf32>
    %90 = arith.mulf %84, %89 : vector<8x128xf32>
    %cst_32 = arith.constant 0.000000e+00 : f32
    %91 = vector.broadcast %cst_32 : f32 to vector<8x128xf32>
    %cst_33 = arith.constant 1.000000e+00 : f32
    %92 = vector.broadcast %cst_33 : f32 to vector<8x128xf32>
    %cst_34 = arith.constant 0.000000e+00 : f32
    %93 = vector.broadcast %cst_34 : f32 to vector<8x128xf32>
    %94 = arith.addf %17, %93 : vector<8x128xf32>
    %cst_35 = arith.constant 0.166666672 : f32
    %95 = vector.broadcast %cst_35 : f32 to vector<8x128xf32>
    %96 = arith.mulf %94, %95 : vector<8x128xf32>
    %cst_36 = arith.constant 0.000000e+00 : f32
    %cst_37 = arith.constant 1.000000e+00 : f32
    %97 = vector.broadcast %cst_36 : f32 to vector<8x128xf32>
    %98 = arith.maximumf %97, %96 : vector<8x128xf32>
    %99 = vector.broadcast %cst_37 : f32 to vector<8x128xf32>
    %100 = arith.minimumf %99, %98 : vector<8x128xf32>
    %101 = arith.subf %3, %100 : vector<8x128xf32>
    %cst_38 = arith.constant 1.000000e+00 : f32
    %102 = vector.broadcast %cst_38 : f32 to vector<8x128xf32>
    %103 = arith.addf %17, %102 : vector<8x128xf32>
    %cst_39 = arith.constant 0.166666672 : f32
    %104 = vector.broadcast %cst_39 : f32 to vector<8x128xf32>
    %105 = arith.mulf %103, %104 : vector<8x128xf32>
    %cst_40 = arith.constant 0.000000e+00 : f32
    %cst_41 = arith.constant 1.000000e+00 : f32
    %106 = vector.broadcast %cst_40 : f32 to vector<8x128xf32>
    %107 = arith.maximumf %106, %105 : vector<8x128xf32>
    %108 = vector.broadcast %cst_41 : f32 to vector<8x128xf32>
    %109 = arith.minimumf %108, %107 : vector<8x128xf32>
    %110 = arith.subf %109, %3 : vector<8x128xf32>
    %111 = arith.addf %110, %101 : vector<8x128xf32>
    %112 = arith.divf %92, %111 : vector<8x128xf32>
    %113 = arith.mulf %110, %112 : vector<8x128xf32>
    %114 = arith.addf %91, %113 : vector<8x128xf32>
    %115 = arith.mulf %101, %112 : vector<8x128xf32>
    %cst_42 = arith.constant -1.000000e+00 : f32
    %116 = vector.broadcast %cst_42 : f32 to vector<8x128xf32>
    %117 = arith.addf %17, %116 : vector<8x128xf32>
    %cst_43 = arith.constant 0.166666672 : f32
    %118 = vector.broadcast %cst_43 : f32 to vector<8x128xf32>
    %119 = arith.mulf %117, %118 : vector<8x128xf32>
    %cst_44 = arith.constant 0.000000e+00 : f32
    %cst_45 = arith.constant 1.000000e+00 : f32
    %120 = vector.broadcast %cst_44 : f32 to vector<8x128xf32>
    %121 = arith.maximumf %120, %119 : vector<8x128xf32>
    %122 = vector.broadcast %cst_45 : f32 to vector<8x128xf32>
    %123 = arith.minimumf %122, %121 : vector<8x128xf32>
    %124 = arith.subf %3, %123 : vector<8x128xf32>
    %cst_46 = arith.constant 2.000000e+00 : f32
    %125 = vector.broadcast %cst_46 : f32 to vector<8x128xf32>
    %126 = arith.addf %17, %125 : vector<8x128xf32>
    %cst_47 = arith.constant 0.166666672 : f32
    %127 = vector.broadcast %cst_47 : f32 to vector<8x128xf32>
    %128 = arith.mulf %126, %127 : vector<8x128xf32>
    %cst_48 = arith.constant 0.000000e+00 : f32
    %cst_49 = arith.constant 1.000000e+00 : f32
    %129 = vector.broadcast %cst_48 : f32 to vector<8x128xf32>
    %130 = arith.maximumf %129, %128 : vector<8x128xf32>
    %131 = vector.broadcast %cst_49 : f32 to vector<8x128xf32>
    %132 = arith.minimumf %131, %130 : vector<8x128xf32>
    %133 = arith.subf %132, %3 : vector<8x128xf32>
    %134 = arith.addf %110, %124 : vector<8x128xf32>
    %135 = arith.divf %114, %134 : vector<8x128xf32>
    %136 = arith.mulf %110, %135 : vector<8x128xf32>
    %137 = arith.addf %91, %136 : vector<8x128xf32>
    %138 = arith.mulf %124, %135 : vector<8x128xf32>
    %139 = arith.addf %133, %101 : vector<8x128xf32>
    %140 = arith.divf %115, %139 : vector<8x128xf32>
    %141 = arith.mulf %133, %140 : vector<8x128xf32>
    %142 = arith.addf %138, %141 : vector<8x128xf32>
    %143 = arith.mulf %101, %140 : vector<8x128xf32>
    %cst_50 = arith.constant 0.000000e+00 : f32
    %144 = vector.broadcast %cst_50 : f32 to vector<8x128xf32>
    %145 = arith.subf %144, %92 : vector<8x128xf32>
    %146 = arith.divf %145, %134 : vector<8x128xf32>
    %147 = arith.mulf %146, %114 : vector<8x128xf32>
    %148 = arith.addf %91, %147 : vector<8x128xf32>
    %149 = arith.divf %92, %134 : vector<8x128xf32>
    %150 = arith.mulf %149, %114 : vector<8x128xf32>
    %cst_51 = arith.constant 0.000000e+00 : f32
    %151 = vector.broadcast %cst_51 : f32 to vector<8x128xf32>
    %152 = arith.subf %151, %92 : vector<8x128xf32>
    %153 = arith.divf %152, %139 : vector<8x128xf32>
    %154 = arith.mulf %153, %115 : vector<8x128xf32>
    %155 = arith.addf %150, %154 : vector<8x128xf32>
    %156 = arith.divf %92, %139 : vector<8x128xf32>
    %157 = arith.mulf %156, %115 : vector<8x128xf32>
    %cst_52 = arith.constant 2.000000e+00 : f32
    %158 = vector.broadcast %cst_52 : f32 to vector<8x128xf32>
    %159 = arith.mulf %148, %158 : vector<8x128xf32>
    %cst_53 = arith.constant 2.000000e+00 : f32
    %160 = vector.broadcast %cst_53 : f32 to vector<8x128xf32>
    %161 = arith.mulf %155, %160 : vector<8x128xf32>
    %cst_54 = arith.constant 2.000000e+00 : f32
    %162 = vector.broadcast %cst_54 : f32 to vector<8x128xf32>
    %163 = arith.mulf %157, %162 : vector<8x128xf32>
    %cst_55 = arith.constant 0.000000e+00 : f32
    %164 = vector.broadcast %cst_55 : f32 to vector<8x128xf32>
    %165 = arith.cmpf oeq, %10, %164 : vector<8x128xf32>
    %166 = arith.extui %165 : vector<8x128xi1> to vector<8x128xi32>
    %167 = arith.sitofp %166 : vector<8x128xi32> to vector<8x128xf32>
    %cst_56 = arith.constant 1.000000e+00 : f32
    %168 = vector.broadcast %cst_56 : f32 to vector<8x128xf32>
    %169 = arith.cmpf oeq, %10, %168 : vector<8x128xf32>
    %170 = arith.extui %169 : vector<8x128xi1> to vector<8x128xi32>
    %171 = arith.sitofp %170 : vector<8x128xi32> to vector<8x128xf32>
    %cst_57 = arith.constant 2.000000e+00 : f32
    %172 = vector.broadcast %cst_57 : f32 to vector<8x128xf32>
    %173 = arith.cmpf oeq, %10, %172 : vector<8x128xf32>
    %174 = arith.extui %173 : vector<8x128xi1> to vector<8x128xi32>
    %175 = arith.sitofp %174 : vector<8x128xi32> to vector<8x128xf32>
    %cst_58 = arith.constant 3.000000e+00 : f32
    %176 = vector.broadcast %cst_58 : f32 to vector<8x128xf32>
    %177 = arith.cmpf oeq, %10, %176 : vector<8x128xf32>
    %178 = arith.extui %177 : vector<8x128xi1> to vector<8x128xi32>
    %179 = arith.sitofp %178 : vector<8x128xi32> to vector<8x128xf32>
    %cst_59 = arith.constant 4.000000e+00 : f32
    %180 = vector.broadcast %cst_59 : f32 to vector<8x128xf32>
    %181 = arith.cmpf oeq, %10, %180 : vector<8x128xf32>
    %182 = arith.extui %181 : vector<8x128xi1> to vector<8x128xi32>
    %183 = arith.sitofp %182 : vector<8x128xi32> to vector<8x128xf32>
    %cst_60 = arith.constant 5.000000e+00 : f32
    %184 = vector.broadcast %cst_60 : f32 to vector<8x128xf32>
    %185 = arith.cmpf oeq, %10, %184 : vector<8x128xf32>
    %186 = arith.extui %185 : vector<8x128xi1> to vector<8x128xi32>
    %187 = arith.sitofp %186 : vector<8x128xi32> to vector<8x128xf32>
    %cst_61 = arith.constant 0.000000e+00 : f32
    %188 = vector.broadcast %cst_61 : f32 to vector<8x128xf32>
    %189 = arith.cmpf oeq, %17, %188 : vector<8x128xf32>
    %190 = arith.extui %189 : vector<8x128xi1> to vector<8x128xi32>
    %191 = arith.sitofp %190 : vector<8x128xi32> to vector<8x128xf32>
    %cst_62 = arith.constant 1.000000e+00 : f32
    %192 = vector.broadcast %cst_62 : f32 to vector<8x128xf32>
    %193 = arith.cmpf oeq, %17, %192 : vector<8x128xf32>
    %194 = arith.extui %193 : vector<8x128xi1> to vector<8x128xi32>
    %195 = arith.sitofp %194 : vector<8x128xi32> to vector<8x128xf32>
    %cst_63 = arith.constant 2.000000e+00 : f32
    %196 = vector.broadcast %cst_63 : f32 to vector<8x128xf32>
    %197 = arith.cmpf oeq, %17, %196 : vector<8x128xf32>
    %198 = arith.extui %197 : vector<8x128xi1> to vector<8x128xi32>
    %199 = arith.sitofp %198 : vector<8x128xi32> to vector<8x128xf32>
    %cst_64 = arith.constant 3.000000e+00 : f32
    %200 = vector.broadcast %cst_64 : f32 to vector<8x128xf32>
    %201 = arith.cmpf oeq, %17, %200 : vector<8x128xf32>
    %202 = arith.extui %201 : vector<8x128xi1> to vector<8x128xi32>
    %203 = arith.sitofp %202 : vector<8x128xi32> to vector<8x128xf32>
    %cst_65 = arith.constant 4.000000e+00 : f32
    %204 = vector.broadcast %cst_65 : f32 to vector<8x128xf32>
    %205 = arith.cmpf oeq, %17, %204 : vector<8x128xf32>
    %206 = arith.extui %205 : vector<8x128xi1> to vector<8x128xi32>
    %207 = arith.sitofp %206 : vector<8x128xi32> to vector<8x128xf32>
    %cst_66 = arith.constant 5.000000e+00 : f32
    %208 = vector.broadcast %cst_66 : f32 to vector<8x128xf32>
    %209 = arith.cmpf oeq, %17, %208 : vector<8x128xf32>
    %210 = arith.extui %209 : vector<8x128xi1> to vector<8x128xi32>
    %211 = arith.sitofp %210 : vector<8x128xi32> to vector<8x128xf32>
    %212 = arith.mulf %167, %64 : vector<8x128xf32>
    %213 = arith.mulf %167, %69 : vector<8x128xf32>
    %214 = arith.mulf %171, %64 : vector<8x128xf32>
    %215 = arith.addf %213, %214 : vector<8x128xf32>
    %216 = arith.mulf %167, %70 : vector<8x128xf32>
    %217 = arith.mulf %171, %69 : vector<8x128xf32>
    %218 = arith.addf %216, %217 : vector<8x128xf32>
    %219 = arith.mulf %175, %64 : vector<8x128xf32>
    %220 = arith.addf %218, %219 : vector<8x128xf32>
    %221 = arith.mulf %171, %70 : vector<8x128xf32>
    %222 = arith.mulf %175, %69 : vector<8x128xf32>
    %223 = arith.addf %221, %222 : vector<8x128xf32>
    %224 = arith.mulf %179, %64 : vector<8x128xf32>
    %225 = arith.addf %223, %224 : vector<8x128xf32>
    %226 = arith.mulf %175, %70 : vector<8x128xf32>
    %227 = arith.mulf %179, %69 : vector<8x128xf32>
    %228 = arith.addf %226, %227 : vector<8x128xf32>
    %229 = arith.mulf %183, %64 : vector<8x128xf32>
    %230 = arith.addf %228, %229 : vector<8x128xf32>
    %231 = arith.mulf %179, %70 : vector<8x128xf32>
    %232 = arith.mulf %183, %69 : vector<8x128xf32>
    %233 = arith.addf %231, %232 : vector<8x128xf32>
    %234 = arith.mulf %187, %64 : vector<8x128xf32>
    %235 = arith.addf %233, %234 : vector<8x128xf32>
    %236 = arith.mulf %183, %70 : vector<8x128xf32>
    %237 = arith.mulf %187, %69 : vector<8x128xf32>
    %238 = arith.addf %236, %237 : vector<8x128xf32>
    %239 = arith.mulf %187, %70 : vector<8x128xf32>
    %240 = arith.mulf %167, %86 : vector<8x128xf32>
    %241 = arith.mulf %167, %88 : vector<8x128xf32>
    %242 = arith.mulf %171, %86 : vector<8x128xf32>
    %243 = arith.addf %241, %242 : vector<8x128xf32>
    %244 = arith.mulf %167, %90 : vector<8x128xf32>
    %245 = arith.mulf %171, %88 : vector<8x128xf32>
    %246 = arith.addf %244, %245 : vector<8x128xf32>
    %247 = arith.mulf %175, %86 : vector<8x128xf32>
    %248 = arith.addf %246, %247 : vector<8x128xf32>
    %249 = arith.mulf %171, %90 : vector<8x128xf32>
    %250 = arith.mulf %175, %88 : vector<8x128xf32>
    %251 = arith.addf %249, %250 : vector<8x128xf32>
    %252 = arith.mulf %179, %86 : vector<8x128xf32>
    %253 = arith.addf %251, %252 : vector<8x128xf32>
    %254 = arith.mulf %175, %90 : vector<8x128xf32>
    %255 = arith.mulf %179, %88 : vector<8x128xf32>
    %256 = arith.addf %254, %255 : vector<8x128xf32>
    %257 = arith.mulf %183, %86 : vector<8x128xf32>
    %258 = arith.addf %256, %257 : vector<8x128xf32>
    %259 = arith.mulf %179, %90 : vector<8x128xf32>
    %260 = arith.mulf %183, %88 : vector<8x128xf32>
    %261 = arith.addf %259, %260 : vector<8x128xf32>
    %262 = arith.mulf %187, %86 : vector<8x128xf32>
    %263 = arith.addf %261, %262 : vector<8x128xf32>
    %264 = arith.mulf %183, %90 : vector<8x128xf32>
    %265 = arith.mulf %187, %88 : vector<8x128xf32>
    %266 = arith.addf %264, %265 : vector<8x128xf32>
    %267 = arith.mulf %187, %90 : vector<8x128xf32>
    %268 = arith.mulf %191, %137 : vector<8x128xf32>
    %269 = arith.mulf %191, %142 : vector<8x128xf32>
    %270 = arith.mulf %195, %137 : vector<8x128xf32>
    %271 = arith.addf %269, %270 : vector<8x128xf32>
    %272 = arith.mulf %191, %143 : vector<8x128xf32>
    %273 = arith.mulf %195, %142 : vector<8x128xf32>
    %274 = arith.addf %272, %273 : vector<8x128xf32>
    %275 = arith.mulf %199, %137 : vector<8x128xf32>
    %276 = arith.addf %274, %275 : vector<8x128xf32>
    %277 = arith.mulf %195, %143 : vector<8x128xf32>
    %278 = arith.mulf %199, %142 : vector<8x128xf32>
    %279 = arith.addf %277, %278 : vector<8x128xf32>
    %280 = arith.mulf %203, %137 : vector<8x128xf32>
    %281 = arith.addf %279, %280 : vector<8x128xf32>
    %282 = arith.mulf %199, %143 : vector<8x128xf32>
    %283 = arith.mulf %203, %142 : vector<8x128xf32>
    %284 = arith.addf %282, %283 : vector<8x128xf32>
    %285 = arith.mulf %207, %137 : vector<8x128xf32>
    %286 = arith.addf %284, %285 : vector<8x128xf32>
    %287 = arith.mulf %203, %143 : vector<8x128xf32>
    %288 = arith.mulf %207, %142 : vector<8x128xf32>
    %289 = arith.addf %287, %288 : vector<8x128xf32>
    %290 = arith.mulf %211, %137 : vector<8x128xf32>
    %291 = arith.addf %289, %290 : vector<8x128xf32>
    %292 = arith.mulf %207, %143 : vector<8x128xf32>
    %293 = arith.mulf %211, %142 : vector<8x128xf32>
    %294 = arith.addf %292, %293 : vector<8x128xf32>
    %295 = arith.mulf %211, %143 : vector<8x128xf32>
    %296 = arith.mulf %191, %159 : vector<8x128xf32>
    %297 = arith.mulf %191, %161 : vector<8x128xf32>
    %298 = arith.mulf %195, %159 : vector<8x128xf32>
    %299 = arith.addf %297, %298 : vector<8x128xf32>
    %300 = arith.mulf %191, %163 : vector<8x128xf32>
    %301 = arith.mulf %195, %161 : vector<8x128xf32>
    %302 = arith.addf %300, %301 : vector<8x128xf32>
    %303 = arith.mulf %199, %159 : vector<8x128xf32>
    %304 = arith.addf %302, %303 : vector<8x128xf32>
    %305 = arith.mulf %195, %163 : vector<8x128xf32>
    %306 = arith.mulf %199, %161 : vector<8x128xf32>
    %307 = arith.addf %305, %306 : vector<8x128xf32>
    %308 = arith.mulf %203, %159 : vector<8x128xf32>
    %309 = arith.addf %307, %308 : vector<8x128xf32>
    %310 = arith.mulf %199, %163 : vector<8x128xf32>
    %311 = arith.mulf %203, %161 : vector<8x128xf32>
    %312 = arith.addf %310, %311 : vector<8x128xf32>
    %313 = arith.mulf %207, %159 : vector<8x128xf32>
    %314 = arith.addf %312, %313 : vector<8x128xf32>
    %315 = arith.mulf %203, %163 : vector<8x128xf32>
    %316 = arith.mulf %207, %161 : vector<8x128xf32>
    %317 = arith.addf %315, %316 : vector<8x128xf32>
    %318 = arith.mulf %211, %159 : vector<8x128xf32>
    %319 = arith.addf %317, %318 : vector<8x128xf32>
    %320 = arith.mulf %207, %163 : vector<8x128xf32>
    %321 = arith.mulf %211, %161 : vector<8x128xf32>
    %322 = arith.addf %320, %321 : vector<8x128xf32>
    %323 = arith.mulf %211, %163 : vector<8x128xf32>
    %c0_67 = arith.constant 0 : index
    %324 = memref.load %arg1[%c0_67] : memref<256xf32, #tpu.memory_space<smem>>
    %325 = vector.broadcast %324 : f32 to vector<8x128xf32>
    %326 = arith.mulf %268, %325 : vector<8x128xf32>
    %327 = vector.broadcast %324 : f32 to vector<8x128xf32>
    %328 = arith.mulf %296, %327 : vector<8x128xf32>
    %c4 = arith.constant 4 : index
    %329 = memref.load %arg1[%c4] : memref<256xf32, #tpu.memory_space<smem>>
    %330 = vector.broadcast %329 : f32 to vector<8x128xf32>
    %331 = arith.mulf %271, %330 : vector<8x128xf32>
    %332 = arith.addf %326, %331 : vector<8x128xf32>
    %333 = vector.broadcast %329 : f32 to vector<8x128xf32>
    %334 = arith.mulf %299, %333 : vector<8x128xf32>
    %335 = arith.addf %328, %334 : vector<8x128xf32>
    %c8 = arith.constant 8 : index
    %336 = memref.load %arg1[%c8] : memref<256xf32, #tpu.memory_space<smem>>
    %337 = vector.broadcast %336 : f32 to vector<8x128xf32>
    %338 = arith.mulf %276, %337 : vector<8x128xf32>
    %339 = arith.addf %332, %338 : vector<8x128xf32>
    %340 = vector.broadcast %336 : f32 to vector<8x128xf32>
    %341 = arith.mulf %304, %340 : vector<8x128xf32>
    %342 = arith.addf %335, %341 : vector<8x128xf32>
    %c12 = arith.constant 12 : index
    %343 = memref.load %arg1[%c12] : memref<256xf32, #tpu.memory_space<smem>>
    %344 = vector.broadcast %343 : f32 to vector<8x128xf32>
    %345 = arith.mulf %281, %344 : vector<8x128xf32>
    %346 = arith.addf %339, %345 : vector<8x128xf32>
    %347 = vector.broadcast %343 : f32 to vector<8x128xf32>
    %348 = arith.mulf %309, %347 : vector<8x128xf32>
    %349 = arith.addf %342, %348 : vector<8x128xf32>
    %c16 = arith.constant 16 : index
    %350 = memref.load %arg1[%c16] : memref<256xf32, #tpu.memory_space<smem>>
    %351 = vector.broadcast %350 : f32 to vector<8x128xf32>
    %352 = arith.mulf %286, %351 : vector<8x128xf32>
    %353 = arith.addf %346, %352 : vector<8x128xf32>
    %354 = vector.broadcast %350 : f32 to vector<8x128xf32>
    %355 = arith.mulf %314, %354 : vector<8x128xf32>
    %356 = arith.addf %349, %355 : vector<8x128xf32>
    %c20 = arith.constant 20 : index
    %357 = memref.load %arg1[%c20] : memref<256xf32, #tpu.memory_space<smem>>
    %358 = vector.broadcast %357 : f32 to vector<8x128xf32>
    %359 = arith.mulf %291, %358 : vector<8x128xf32>
    %360 = arith.addf %353, %359 : vector<8x128xf32>
    %361 = vector.broadcast %357 : f32 to vector<8x128xf32>
    %362 = arith.mulf %319, %361 : vector<8x128xf32>
    %363 = arith.addf %356, %362 : vector<8x128xf32>
    %c24 = arith.constant 24 : index
    %364 = memref.load %arg1[%c24] : memref<256xf32, #tpu.memory_space<smem>>
    %365 = vector.broadcast %364 : f32 to vector<8x128xf32>
    %366 = arith.mulf %294, %365 : vector<8x128xf32>
    %367 = arith.addf %360, %366 : vector<8x128xf32>
    %368 = vector.broadcast %364 : f32 to vector<8x128xf32>
    %369 = arith.mulf %322, %368 : vector<8x128xf32>
    %370 = arith.addf %363, %369 : vector<8x128xf32>
    %c28 = arith.constant 28 : index
    %371 = memref.load %arg1[%c28] : memref<256xf32, #tpu.memory_space<smem>>
    %372 = vector.broadcast %371 : f32 to vector<8x128xf32>
    %373 = arith.mulf %295, %372 : vector<8x128xf32>
    %374 = arith.addf %367, %373 : vector<8x128xf32>
    %375 = vector.broadcast %371 : f32 to vector<8x128xf32>
    %376 = arith.mulf %323, %375 : vector<8x128xf32>
    %377 = arith.addf %370, %376 : vector<8x128xf32>
    %378 = arith.mulf %212, %374 : vector<8x128xf32>
    %379 = arith.mulf %240, %374 : vector<8x128xf32>
    %380 = arith.mulf %212, %377 : vector<8x128xf32>
    %c32 = arith.constant 32 : index
    %381 = memref.load %arg1[%c32] : memref<256xf32, #tpu.memory_space<smem>>
    %382 = vector.broadcast %381 : f32 to vector<8x128xf32>
    %383 = arith.mulf %268, %382 : vector<8x128xf32>
    %384 = vector.broadcast %381 : f32 to vector<8x128xf32>
    %385 = arith.mulf %296, %384 : vector<8x128xf32>
    %c36 = arith.constant 36 : index
    %386 = memref.load %arg1[%c36] : memref<256xf32, #tpu.memory_space<smem>>
    %387 = vector.broadcast %386 : f32 to vector<8x128xf32>
    %388 = arith.mulf %271, %387 : vector<8x128xf32>
    %389 = arith.addf %383, %388 : vector<8x128xf32>
    %390 = vector.broadcast %386 : f32 to vector<8x128xf32>
    %391 = arith.mulf %299, %390 : vector<8x128xf32>
    %392 = arith.addf %385, %391 : vector<8x128xf32>
    %c40 = arith.constant 40 : index
    %393 = memref.load %arg1[%c40] : memref<256xf32, #tpu.memory_space<smem>>
    %394 = vector.broadcast %393 : f32 to vector<8x128xf32>
    %395 = arith.mulf %276, %394 : vector<8x128xf32>
    %396 = arith.addf %389, %395 : vector<8x128xf32>
    %397 = vector.broadcast %393 : f32 to vector<8x128xf32>
    %398 = arith.mulf %304, %397 : vector<8x128xf32>
    %399 = arith.addf %392, %398 : vector<8x128xf32>
    %c44 = arith.constant 44 : index
    %400 = memref.load %arg1[%c44] : memref<256xf32, #tpu.memory_space<smem>>
    %401 = vector.broadcast %400 : f32 to vector<8x128xf32>
    %402 = arith.mulf %281, %401 : vector<8x128xf32>
    %403 = arith.addf %396, %402 : vector<8x128xf32>
    %404 = vector.broadcast %400 : f32 to vector<8x128xf32>
    %405 = arith.mulf %309, %404 : vector<8x128xf32>
    %406 = arith.addf %399, %405 : vector<8x128xf32>
    %c48 = arith.constant 48 : index
    %407 = memref.load %arg1[%c48] : memref<256xf32, #tpu.memory_space<smem>>
    %408 = vector.broadcast %407 : f32 to vector<8x128xf32>
    %409 = arith.mulf %286, %408 : vector<8x128xf32>
    %410 = arith.addf %403, %409 : vector<8x128xf32>
    %411 = vector.broadcast %407 : f32 to vector<8x128xf32>
    %412 = arith.mulf %314, %411 : vector<8x128xf32>
    %413 = arith.addf %406, %412 : vector<8x128xf32>
    %c52 = arith.constant 52 : index
    %414 = memref.load %arg1[%c52] : memref<256xf32, #tpu.memory_space<smem>>
    %415 = vector.broadcast %414 : f32 to vector<8x128xf32>
    %416 = arith.mulf %291, %415 : vector<8x128xf32>
    %417 = arith.addf %410, %416 : vector<8x128xf32>
    %418 = vector.broadcast %414 : f32 to vector<8x128xf32>
    %419 = arith.mulf %319, %418 : vector<8x128xf32>
    %420 = arith.addf %413, %419 : vector<8x128xf32>
    %c56 = arith.constant 56 : index
    %421 = memref.load %arg1[%c56] : memref<256xf32, #tpu.memory_space<smem>>
    %422 = vector.broadcast %421 : f32 to vector<8x128xf32>
    %423 = arith.mulf %294, %422 : vector<8x128xf32>
    %424 = arith.addf %417, %423 : vector<8x128xf32>
    %425 = vector.broadcast %421 : f32 to vector<8x128xf32>
    %426 = arith.mulf %322, %425 : vector<8x128xf32>
    %427 = arith.addf %420, %426 : vector<8x128xf32>
    %c60 = arith.constant 60 : index
    %428 = memref.load %arg1[%c60] : memref<256xf32, #tpu.memory_space<smem>>
    %429 = vector.broadcast %428 : f32 to vector<8x128xf32>
    %430 = arith.mulf %295, %429 : vector<8x128xf32>
    %431 = arith.addf %424, %430 : vector<8x128xf32>
    %432 = vector.broadcast %428 : f32 to vector<8x128xf32>
    %433 = arith.mulf %323, %432 : vector<8x128xf32>
    %434 = arith.addf %427, %433 : vector<8x128xf32>
    %435 = arith.mulf %215, %431 : vector<8x128xf32>
    %436 = arith.addf %378, %435 : vector<8x128xf32>
    %437 = arith.mulf %243, %431 : vector<8x128xf32>
    %438 = arith.addf %379, %437 : vector<8x128xf32>
    %439 = arith.mulf %215, %434 : vector<8x128xf32>
    %440 = arith.addf %380, %439 : vector<8x128xf32>
    %c64 = arith.constant 64 : index
    %441 = memref.load %arg1[%c64] : memref<256xf32, #tpu.memory_space<smem>>
    %442 = vector.broadcast %441 : f32 to vector<8x128xf32>
    %443 = arith.mulf %268, %442 : vector<8x128xf32>
    %444 = vector.broadcast %441 : f32 to vector<8x128xf32>
    %445 = arith.mulf %296, %444 : vector<8x128xf32>
    %c68 = arith.constant 68 : index
    %446 = memref.load %arg1[%c68] : memref<256xf32, #tpu.memory_space<smem>>
    %447 = vector.broadcast %446 : f32 to vector<8x128xf32>
    %448 = arith.mulf %271, %447 : vector<8x128xf32>
    %449 = arith.addf %443, %448 : vector<8x128xf32>
    %450 = vector.broadcast %446 : f32 to vector<8x128xf32>
    %451 = arith.mulf %299, %450 : vector<8x128xf32>
    %452 = arith.addf %445, %451 : vector<8x128xf32>
    %c72 = arith.constant 72 : index
    %453 = memref.load %arg1[%c72] : memref<256xf32, #tpu.memory_space<smem>>
    %454 = vector.broadcast %453 : f32 to vector<8x128xf32>
    %455 = arith.mulf %276, %454 : vector<8x128xf32>
    %456 = arith.addf %449, %455 : vector<8x128xf32>
    %457 = vector.broadcast %453 : f32 to vector<8x128xf32>
    %458 = arith.mulf %304, %457 : vector<8x128xf32>
    %459 = arith.addf %452, %458 : vector<8x128xf32>
    %c76 = arith.constant 76 : index
    %460 = memref.load %arg1[%c76] : memref<256xf32, #tpu.memory_space<smem>>
    %461 = vector.broadcast %460 : f32 to vector<8x128xf32>
    %462 = arith.mulf %281, %461 : vector<8x128xf32>
    %463 = arith.addf %456, %462 : vector<8x128xf32>
    %464 = vector.broadcast %460 : f32 to vector<8x128xf32>
    %465 = arith.mulf %309, %464 : vector<8x128xf32>
    %466 = arith.addf %459, %465 : vector<8x128xf32>
    %c80 = arith.constant 80 : index
    %467 = memref.load %arg1[%c80] : memref<256xf32, #tpu.memory_space<smem>>
    %468 = vector.broadcast %467 : f32 to vector<8x128xf32>
    %469 = arith.mulf %286, %468 : vector<8x128xf32>
    %470 = arith.addf %463, %469 : vector<8x128xf32>
    %471 = vector.broadcast %467 : f32 to vector<8x128xf32>
    %472 = arith.mulf %314, %471 : vector<8x128xf32>
    %473 = arith.addf %466, %472 : vector<8x128xf32>
    %c84 = arith.constant 84 : index
    %474 = memref.load %arg1[%c84] : memref<256xf32, #tpu.memory_space<smem>>
    %475 = vector.broadcast %474 : f32 to vector<8x128xf32>
    %476 = arith.mulf %291, %475 : vector<8x128xf32>
    %477 = arith.addf %470, %476 : vector<8x128xf32>
    %478 = vector.broadcast %474 : f32 to vector<8x128xf32>
    %479 = arith.mulf %319, %478 : vector<8x128xf32>
    %480 = arith.addf %473, %479 : vector<8x128xf32>
    %c88 = arith.constant 88 : index
    %481 = memref.load %arg1[%c88] : memref<256xf32, #tpu.memory_space<smem>>
    %482 = vector.broadcast %481 : f32 to vector<8x128xf32>
    %483 = arith.mulf %294, %482 : vector<8x128xf32>
    %484 = arith.addf %477, %483 : vector<8x128xf32>
    %485 = vector.broadcast %481 : f32 to vector<8x128xf32>
    %486 = arith.mulf %322, %485 : vector<8x128xf32>
    %487 = arith.addf %480, %486 : vector<8x128xf32>
    %c92 = arith.constant 92 : index
    %488 = memref.load %arg1[%c92] : memref<256xf32, #tpu.memory_space<smem>>
    %489 = vector.broadcast %488 : f32 to vector<8x128xf32>
    %490 = arith.mulf %295, %489 : vector<8x128xf32>
    %491 = arith.addf %484, %490 : vector<8x128xf32>
    %492 = vector.broadcast %488 : f32 to vector<8x128xf32>
    %493 = arith.mulf %323, %492 : vector<8x128xf32>
    %494 = arith.addf %487, %493 : vector<8x128xf32>
    %495 = arith.mulf %220, %491 : vector<8x128xf32>
    %496 = arith.addf %436, %495 : vector<8x128xf32>
    %497 = arith.mulf %248, %491 : vector<8x128xf32>
    %498 = arith.addf %438, %497 : vector<8x128xf32>
    %499 = arith.mulf %220, %494 : vector<8x128xf32>
    %500 = arith.addf %440, %499 : vector<8x128xf32>
    %c96 = arith.constant 96 : index
    %501 = memref.load %arg1[%c96] : memref<256xf32, #tpu.memory_space<smem>>
    %502 = vector.broadcast %501 : f32 to vector<8x128xf32>
    %503 = arith.mulf %268, %502 : vector<8x128xf32>
    %504 = vector.broadcast %501 : f32 to vector<8x128xf32>
    %505 = arith.mulf %296, %504 : vector<8x128xf32>
    %c100 = arith.constant 100 : index
    %506 = memref.load %arg1[%c100] : memref<256xf32, #tpu.memory_space<smem>>
    %507 = vector.broadcast %506 : f32 to vector<8x128xf32>
    %508 = arith.mulf %271, %507 : vector<8x128xf32>
    %509 = arith.addf %503, %508 : vector<8x128xf32>
    %510 = vector.broadcast %506 : f32 to vector<8x128xf32>
    %511 = arith.mulf %299, %510 : vector<8x128xf32>
    %512 = arith.addf %505, %511 : vector<8x128xf32>
    %c104 = arith.constant 104 : index
    %513 = memref.load %arg1[%c104] : memref<256xf32, #tpu.memory_space<smem>>
    %514 = vector.broadcast %513 : f32 to vector<8x128xf32>
    %515 = arith.mulf %276, %514 : vector<8x128xf32>
    %516 = arith.addf %509, %515 : vector<8x128xf32>
    %517 = vector.broadcast %513 : f32 to vector<8x128xf32>
    %518 = arith.mulf %304, %517 : vector<8x128xf32>
    %519 = arith.addf %512, %518 : vector<8x128xf32>
    %c108 = arith.constant 108 : index
    %520 = memref.load %arg1[%c108] : memref<256xf32, #tpu.memory_space<smem>>
    %521 = vector.broadcast %520 : f32 to vector<8x128xf32>
    %522 = arith.mulf %281, %521 : vector<8x128xf32>
    %523 = arith.addf %516, %522 : vector<8x128xf32>
    %524 = vector.broadcast %520 : f32 to vector<8x128xf32>
    %525 = arith.mulf %309, %524 : vector<8x128xf32>
    %526 = arith.addf %519, %525 : vector<8x128xf32>
    %c112 = arith.constant 112 : index
    %527 = memref.load %arg1[%c112] : memref<256xf32, #tpu.memory_space<smem>>
    %528 = vector.broadcast %527 : f32 to vector<8x128xf32>
    %529 = arith.mulf %286, %528 : vector<8x128xf32>
    %530 = arith.addf %523, %529 : vector<8x128xf32>
    %531 = vector.broadcast %527 : f32 to vector<8x128xf32>
    %532 = arith.mulf %314, %531 : vector<8x128xf32>
    %533 = arith.addf %526, %532 : vector<8x128xf32>
    %c116 = arith.constant 116 : index
    %534 = memref.load %arg1[%c116] : memref<256xf32, #tpu.memory_space<smem>>
    %535 = vector.broadcast %534 : f32 to vector<8x128xf32>
    %536 = arith.mulf %291, %535 : vector<8x128xf32>
    %537 = arith.addf %530, %536 : vector<8x128xf32>
    %538 = vector.broadcast %534 : f32 to vector<8x128xf32>
    %539 = arith.mulf %319, %538 : vector<8x128xf32>
    %540 = arith.addf %533, %539 : vector<8x128xf32>
    %c120 = arith.constant 120 : index
    %541 = memref.load %arg1[%c120] : memref<256xf32, #tpu.memory_space<smem>>
    %542 = vector.broadcast %541 : f32 to vector<8x128xf32>
    %543 = arith.mulf %294, %542 : vector<8x128xf32>
    %544 = arith.addf %537, %543 : vector<8x128xf32>
    %545 = vector.broadcast %541 : f32 to vector<8x128xf32>
    %546 = arith.mulf %322, %545 : vector<8x128xf32>
    %547 = arith.addf %540, %546 : vector<8x128xf32>
    %c124 = arith.constant 124 : index
    %548 = memref.load %arg1[%c124] : memref<256xf32, #tpu.memory_space<smem>>
    %549 = vector.broadcast %548 : f32 to vector<8x128xf32>
    %550 = arith.mulf %295, %549 : vector<8x128xf32>
    %551 = arith.addf %544, %550 : vector<8x128xf32>
    %552 = vector.broadcast %548 : f32 to vector<8x128xf32>
    %553 = arith.mulf %323, %552 : vector<8x128xf32>
    %554 = arith.addf %547, %553 : vector<8x128xf32>
    %555 = arith.mulf %225, %551 : vector<8x128xf32>
    %556 = arith.addf %496, %555 : vector<8x128xf32>
    %557 = arith.mulf %253, %551 : vector<8x128xf32>
    %558 = arith.addf %498, %557 : vector<8x128xf32>
    %559 = arith.mulf %225, %554 : vector<8x128xf32>
    %560 = arith.addf %500, %559 : vector<8x128xf32>
    %c128 = arith.constant 128 : index
    %561 = memref.load %arg1[%c128] : memref<256xf32, #tpu.memory_space<smem>>
    %562 = vector.broadcast %561 : f32 to vector<8x128xf32>
    %563 = arith.mulf %268, %562 : vector<8x128xf32>
    %564 = vector.broadcast %561 : f32 to vector<8x128xf32>
    %565 = arith.mulf %296, %564 : vector<8x128xf32>
    %c132 = arith.constant 132 : index
    %566 = memref.load %arg1[%c132] : memref<256xf32, #tpu.memory_space<smem>>
    %567 = vector.broadcast %566 : f32 to vector<8x128xf32>
    %568 = arith.mulf %271, %567 : vector<8x128xf32>
    %569 = arith.addf %563, %568 : vector<8x128xf32>
    %570 = vector.broadcast %566 : f32 to vector<8x128xf32>
    %571 = arith.mulf %299, %570 : vector<8x128xf32>
    %572 = arith.addf %565, %571 : vector<8x128xf32>
    %c136 = arith.constant 136 : index
    %573 = memref.load %arg1[%c136] : memref<256xf32, #tpu.memory_space<smem>>
    %574 = vector.broadcast %573 : f32 to vector<8x128xf32>
    %575 = arith.mulf %276, %574 : vector<8x128xf32>
    %576 = arith.addf %569, %575 : vector<8x128xf32>
    %577 = vector.broadcast %573 : f32 to vector<8x128xf32>
    %578 = arith.mulf %304, %577 : vector<8x128xf32>
    %579 = arith.addf %572, %578 : vector<8x128xf32>
    %c140 = arith.constant 140 : index
    %580 = memref.load %arg1[%c140] : memref<256xf32, #tpu.memory_space<smem>>
    %581 = vector.broadcast %580 : f32 to vector<8x128xf32>
    %582 = arith.mulf %281, %581 : vector<8x128xf32>
    %583 = arith.addf %576, %582 : vector<8x128xf32>
    %584 = vector.broadcast %580 : f32 to vector<8x128xf32>
    %585 = arith.mulf %309, %584 : vector<8x128xf32>
    %586 = arith.addf %579, %585 : vector<8x128xf32>
    %c144 = arith.constant 144 : index
    %587 = memref.load %arg1[%c144] : memref<256xf32, #tpu.memory_space<smem>>
    %588 = vector.broadcast %587 : f32 to vector<8x128xf32>
    %589 = arith.mulf %286, %588 : vector<8x128xf32>
    %590 = arith.addf %583, %589 : vector<8x128xf32>
    %591 = vector.broadcast %587 : f32 to vector<8x128xf32>
    %592 = arith.mulf %314, %591 : vector<8x128xf32>
    %593 = arith.addf %586, %592 : vector<8x128xf32>
    %c148 = arith.constant 148 : index
    %594 = memref.load %arg1[%c148] : memref<256xf32, #tpu.memory_space<smem>>
    %595 = vector.broadcast %594 : f32 to vector<8x128xf32>
    %596 = arith.mulf %291, %595 : vector<8x128xf32>
    %597 = arith.addf %590, %596 : vector<8x128xf32>
    %598 = vector.broadcast %594 : f32 to vector<8x128xf32>
    %599 = arith.mulf %319, %598 : vector<8x128xf32>
    %600 = arith.addf %593, %599 : vector<8x128xf32>
    %c152 = arith.constant 152 : index
    %601 = memref.load %arg1[%c152] : memref<256xf32, #tpu.memory_space<smem>>
    %602 = vector.broadcast %601 : f32 to vector<8x128xf32>
    %603 = arith.mulf %294, %602 : vector<8x128xf32>
    %604 = arith.addf %597, %603 : vector<8x128xf32>
    %605 = vector.broadcast %601 : f32 to vector<8x128xf32>
    %606 = arith.mulf %322, %605 : vector<8x128xf32>
    %607 = arith.addf %600, %606 : vector<8x128xf32>
    %c156 = arith.constant 156 : index
    %608 = memref.load %arg1[%c156] : memref<256xf32, #tpu.memory_space<smem>>
    %609 = vector.broadcast %608 : f32 to vector<8x128xf32>
    %610 = arith.mulf %295, %609 : vector<8x128xf32>
    %611 = arith.addf %604, %610 : vector<8x128xf32>
    %612 = vector.broadcast %608 : f32 to vector<8x128xf32>
    %613 = arith.mulf %323, %612 : vector<8x128xf32>
    %614 = arith.addf %607, %613 : vector<8x128xf32>
    %615 = arith.mulf %230, %611 : vector<8x128xf32>
    %616 = arith.addf %556, %615 : vector<8x128xf32>
    %617 = arith.mulf %258, %611 : vector<8x128xf32>
    %618 = arith.addf %558, %617 : vector<8x128xf32>
    %619 = arith.mulf %230, %614 : vector<8x128xf32>
    %620 = arith.addf %560, %619 : vector<8x128xf32>
    %c160 = arith.constant 160 : index
    %621 = memref.load %arg1[%c160] : memref<256xf32, #tpu.memory_space<smem>>
    %622 = vector.broadcast %621 : f32 to vector<8x128xf32>
    %623 = arith.mulf %268, %622 : vector<8x128xf32>
    %624 = vector.broadcast %621 : f32 to vector<8x128xf32>
    %625 = arith.mulf %296, %624 : vector<8x128xf32>
    %c164 = arith.constant 164 : index
    %626 = memref.load %arg1[%c164] : memref<256xf32, #tpu.memory_space<smem>>
    %627 = vector.broadcast %626 : f32 to vector<8x128xf32>
    %628 = arith.mulf %271, %627 : vector<8x128xf32>
    %629 = arith.addf %623, %628 : vector<8x128xf32>
    %630 = vector.broadcast %626 : f32 to vector<8x128xf32>
    %631 = arith.mulf %299, %630 : vector<8x128xf32>
    %632 = arith.addf %625, %631 : vector<8x128xf32>
    %c168 = arith.constant 168 : index
    %633 = memref.load %arg1[%c168] : memref<256xf32, #tpu.memory_space<smem>>
    %634 = vector.broadcast %633 : f32 to vector<8x128xf32>
    %635 = arith.mulf %276, %634 : vector<8x128xf32>
    %636 = arith.addf %629, %635 : vector<8x128xf32>
    %637 = vector.broadcast %633 : f32 to vector<8x128xf32>
    %638 = arith.mulf %304, %637 : vector<8x128xf32>
    %639 = arith.addf %632, %638 : vector<8x128xf32>
    %c172 = arith.constant 172 : index
    %640 = memref.load %arg1[%c172] : memref<256xf32, #tpu.memory_space<smem>>
    %641 = vector.broadcast %640 : f32 to vector<8x128xf32>
    %642 = arith.mulf %281, %641 : vector<8x128xf32>
    %643 = arith.addf %636, %642 : vector<8x128xf32>
    %644 = vector.broadcast %640 : f32 to vector<8x128xf32>
    %645 = arith.mulf %309, %644 : vector<8x128xf32>
    %646 = arith.addf %639, %645 : vector<8x128xf32>
    %c176 = arith.constant 176 : index
    %647 = memref.load %arg1[%c176] : memref<256xf32, #tpu.memory_space<smem>>
    %648 = vector.broadcast %647 : f32 to vector<8x128xf32>
    %649 = arith.mulf %286, %648 : vector<8x128xf32>
    %650 = arith.addf %643, %649 : vector<8x128xf32>
    %651 = vector.broadcast %647 : f32 to vector<8x128xf32>
    %652 = arith.mulf %314, %651 : vector<8x128xf32>
    %653 = arith.addf %646, %652 : vector<8x128xf32>
    %c180 = arith.constant 180 : index
    %654 = memref.load %arg1[%c180] : memref<256xf32, #tpu.memory_space<smem>>
    %655 = vector.broadcast %654 : f32 to vector<8x128xf32>
    %656 = arith.mulf %291, %655 : vector<8x128xf32>
    %657 = arith.addf %650, %656 : vector<8x128xf32>
    %658 = vector.broadcast %654 : f32 to vector<8x128xf32>
    %659 = arith.mulf %319, %658 : vector<8x128xf32>
    %660 = arith.addf %653, %659 : vector<8x128xf32>
    %c184 = arith.constant 184 : index
    %661 = memref.load %arg1[%c184] : memref<256xf32, #tpu.memory_space<smem>>
    %662 = vector.broadcast %661 : f32 to vector<8x128xf32>
    %663 = arith.mulf %294, %662 : vector<8x128xf32>
    %664 = arith.addf %657, %663 : vector<8x128xf32>
    %665 = vector.broadcast %661 : f32 to vector<8x128xf32>
    %666 = arith.mulf %322, %665 : vector<8x128xf32>
    %667 = arith.addf %660, %666 : vector<8x128xf32>
    %c188 = arith.constant 188 : index
    %668 = memref.load %arg1[%c188] : memref<256xf32, #tpu.memory_space<smem>>
    %669 = vector.broadcast %668 : f32 to vector<8x128xf32>
    %670 = arith.mulf %295, %669 : vector<8x128xf32>
    %671 = arith.addf %664, %670 : vector<8x128xf32>
    %672 = vector.broadcast %668 : f32 to vector<8x128xf32>
    %673 = arith.mulf %323, %672 : vector<8x128xf32>
    %674 = arith.addf %667, %673 : vector<8x128xf32>
    %675 = arith.mulf %235, %671 : vector<8x128xf32>
    %676 = arith.addf %616, %675 : vector<8x128xf32>
    %677 = arith.mulf %263, %671 : vector<8x128xf32>
    %678 = arith.addf %618, %677 : vector<8x128xf32>
    %679 = arith.mulf %235, %674 : vector<8x128xf32>
    %680 = arith.addf %620, %679 : vector<8x128xf32>
    %c192 = arith.constant 192 : index
    %681 = memref.load %arg1[%c192] : memref<256xf32, #tpu.memory_space<smem>>
    %682 = vector.broadcast %681 : f32 to vector<8x128xf32>
    %683 = arith.mulf %268, %682 : vector<8x128xf32>
    %684 = vector.broadcast %681 : f32 to vector<8x128xf32>
    %685 = arith.mulf %296, %684 : vector<8x128xf32>
    %c196 = arith.constant 196 : index
    %686 = memref.load %arg1[%c196] : memref<256xf32, #tpu.memory_space<smem>>
    %687 = vector.broadcast %686 : f32 to vector<8x128xf32>
    %688 = arith.mulf %271, %687 : vector<8x128xf32>
    %689 = arith.addf %683, %688 : vector<8x128xf32>
    %690 = vector.broadcast %686 : f32 to vector<8x128xf32>
    %691 = arith.mulf %299, %690 : vector<8x128xf32>
    %692 = arith.addf %685, %691 : vector<8x128xf32>
    %c200 = arith.constant 200 : index
    %693 = memref.load %arg1[%c200] : memref<256xf32, #tpu.memory_space<smem>>
    %694 = vector.broadcast %693 : f32 to vector<8x128xf32>
    %695 = arith.mulf %276, %694 : vector<8x128xf32>
    %696 = arith.addf %689, %695 : vector<8x128xf32>
    %697 = vector.broadcast %693 : f32 to vector<8x128xf32>
    %698 = arith.mulf %304, %697 : vector<8x128xf32>
    %699 = arith.addf %692, %698 : vector<8x128xf32>
    %c204 = arith.constant 204 : index
    %700 = memref.load %arg1[%c204] : memref<256xf32, #tpu.memory_space<smem>>
    %701 = vector.broadcast %700 : f32 to vector<8x128xf32>
    %702 = arith.mulf %281, %701 : vector<8x128xf32>
    %703 = arith.addf %696, %702 : vector<8x128xf32>
    %704 = vector.broadcast %700 : f32 to vector<8x128xf32>
    %705 = arith.mulf %309, %704 : vector<8x128xf32>
    %706 = arith.addf %699, %705 : vector<8x128xf32>
    %c208 = arith.constant 208 : index
    %707 = memref.load %arg1[%c208] : memref<256xf32, #tpu.memory_space<smem>>
    %708 = vector.broadcast %707 : f32 to vector<8x128xf32>
    %709 = arith.mulf %286, %708 : vector<8x128xf32>
    %710 = arith.addf %703, %709 : vector<8x128xf32>
    %711 = vector.broadcast %707 : f32 to vector<8x128xf32>
    %712 = arith.mulf %314, %711 : vector<8x128xf32>
    %713 = arith.addf %706, %712 : vector<8x128xf32>
    %c212 = arith.constant 212 : index
    %714 = memref.load %arg1[%c212] : memref<256xf32, #tpu.memory_space<smem>>
    %715 = vector.broadcast %714 : f32 to vector<8x128xf32>
    %716 = arith.mulf %291, %715 : vector<8x128xf32>
    %717 = arith.addf %710, %716 : vector<8x128xf32>
    %718 = vector.broadcast %714 : f32 to vector<8x128xf32>
    %719 = arith.mulf %319, %718 : vector<8x128xf32>
    %720 = arith.addf %713, %719 : vector<8x128xf32>
    %c216 = arith.constant 216 : index
    %721 = memref.load %arg1[%c216] : memref<256xf32, #tpu.memory_space<smem>>
    %722 = vector.broadcast %721 : f32 to vector<8x128xf32>
    %723 = arith.mulf %294, %722 : vector<8x128xf32>
    %724 = arith.addf %717, %723 : vector<8x128xf32>
    %725 = vector.broadcast %721 : f32 to vector<8x128xf32>
    %726 = arith.mulf %322, %725 : vector<8x128xf32>
    %727 = arith.addf %720, %726 : vector<8x128xf32>
    %c220 = arith.constant 220 : index
    %728 = memref.load %arg1[%c220] : memref<256xf32, #tpu.memory_space<smem>>
    %729 = vector.broadcast %728 : f32 to vector<8x128xf32>
    %730 = arith.mulf %295, %729 : vector<8x128xf32>
    %731 = arith.addf %724, %730 : vector<8x128xf32>
    %732 = vector.broadcast %728 : f32 to vector<8x128xf32>
    %733 = arith.mulf %323, %732 : vector<8x128xf32>
    %734 = arith.addf %727, %733 : vector<8x128xf32>
    %735 = arith.mulf %238, %731 : vector<8x128xf32>
    %736 = arith.addf %676, %735 : vector<8x128xf32>
    %737 = arith.mulf %266, %731 : vector<8x128xf32>
    %738 = arith.addf %678, %737 : vector<8x128xf32>
    %739 = arith.mulf %238, %734 : vector<8x128xf32>
    %740 = arith.addf %680, %739 : vector<8x128xf32>
    %c224 = arith.constant 224 : index
    %741 = memref.load %arg1[%c224] : memref<256xf32, #tpu.memory_space<smem>>
    %742 = vector.broadcast %741 : f32 to vector<8x128xf32>
    %743 = arith.mulf %268, %742 : vector<8x128xf32>
    %744 = vector.broadcast %741 : f32 to vector<8x128xf32>
    %745 = arith.mulf %296, %744 : vector<8x128xf32>
    %c228 = arith.constant 228 : index
    %746 = memref.load %arg1[%c228] : memref<256xf32, #tpu.memory_space<smem>>
    %747 = vector.broadcast %746 : f32 to vector<8x128xf32>
    %748 = arith.mulf %271, %747 : vector<8x128xf32>
    %749 = arith.addf %743, %748 : vector<8x128xf32>
    %750 = vector.broadcast %746 : f32 to vector<8x128xf32>
    %751 = arith.mulf %299, %750 : vector<8x128xf32>
    %752 = arith.addf %745, %751 : vector<8x128xf32>
    %c232 = arith.constant 232 : index
    %753 = memref.load %arg1[%c232] : memref<256xf32, #tpu.memory_space<smem>>
    %754 = vector.broadcast %753 : f32 to vector<8x128xf32>
    %755 = arith.mulf %276, %754 : vector<8x128xf32>
    %756 = arith.addf %749, %755 : vector<8x128xf32>
    %757 = vector.broadcast %753 : f32 to vector<8x128xf32>
    %758 = arith.mulf %304, %757 : vector<8x128xf32>
    %759 = arith.addf %752, %758 : vector<8x128xf32>
    %c236 = arith.constant 236 : index
    %760 = memref.load %arg1[%c236] : memref<256xf32, #tpu.memory_space<smem>>
    %761 = vector.broadcast %760 : f32 to vector<8x128xf32>
    %762 = arith.mulf %281, %761 : vector<8x128xf32>
    %763 = arith.addf %756, %762 : vector<8x128xf32>
    %764 = vector.broadcast %760 : f32 to vector<8x128xf32>
    %765 = arith.mulf %309, %764 : vector<8x128xf32>
    %766 = arith.addf %759, %765 : vector<8x128xf32>
    %c240 = arith.constant 240 : index
    %767 = memref.load %arg1[%c240] : memref<256xf32, #tpu.memory_space<smem>>
    %768 = vector.broadcast %767 : f32 to vector<8x128xf32>
    %769 = arith.mulf %286, %768 : vector<8x128xf32>
    %770 = arith.addf %763, %769 : vector<8x128xf32>
    %771 = vector.broadcast %767 : f32 to vector<8x128xf32>
    %772 = arith.mulf %314, %771 : vector<8x128xf32>
    %773 = arith.addf %766, %772 : vector<8x128xf32>
    %c244 = arith.constant 244 : index
    %774 = memref.load %arg1[%c244] : memref<256xf32, #tpu.memory_space<smem>>
    %775 = vector.broadcast %774 : f32 to vector<8x128xf32>
    %776 = arith.mulf %291, %775 : vector<8x128xf32>
    %777 = arith.addf %770, %776 : vector<8x128xf32>
    %778 = vector.broadcast %774 : f32 to vector<8x128xf32>
    %779 = arith.mulf %319, %778 : vector<8x128xf32>
    %780 = arith.addf %773, %779 : vector<8x128xf32>
    %c248 = arith.constant 248 : index
    %781 = memref.load %arg1[%c248] : memref<256xf32, #tpu.memory_space<smem>>
    %782 = vector.broadcast %781 : f32 to vector<8x128xf32>
    %783 = arith.mulf %294, %782 : vector<8x128xf32>
    %784 = arith.addf %777, %783 : vector<8x128xf32>
    %785 = vector.broadcast %781 : f32 to vector<8x128xf32>
    %786 = arith.mulf %322, %785 : vector<8x128xf32>
    %787 = arith.addf %780, %786 : vector<8x128xf32>
    %c252 = arith.constant 252 : index
    %788 = memref.load %arg1[%c252] : memref<256xf32, #tpu.memory_space<smem>>
    %789 = vector.broadcast %788 : f32 to vector<8x128xf32>
    %790 = arith.mulf %295, %789 : vector<8x128xf32>
    %791 = arith.addf %784, %790 : vector<8x128xf32>
    %792 = vector.broadcast %788 : f32 to vector<8x128xf32>
    %793 = arith.mulf %323, %792 : vector<8x128xf32>
    %794 = arith.addf %787, %793 : vector<8x128xf32>
    %795 = arith.mulf %239, %791 : vector<8x128xf32>
    %796 = arith.addf %736, %795 : vector<8x128xf32>
    %797 = arith.mulf %267, %791 : vector<8x128xf32>
    %798 = arith.addf %738, %797 : vector<8x128xf32>
    %799 = arith.mulf %239, %794 : vector<8x128xf32>
    %800 = arith.addf %740, %799 : vector<8x128xf32>
    %c0_68 = arith.constant 0 : index
    %c0_69 = arith.constant 0 : index
    %c0_70 = arith.constant 0 : index
    %801 = vector.load %arg3[%c0_68, %c0_69, %c0_70] : memref<8x16x128xf32, #tpu.memory_space<vmem>>, vector<1x8x128xf32>
    %802 = vector.shape_cast %801 : vector<1x8x128xf32> to vector<8x128xf32>
    %803 = vector.shape_cast %796 : vector<8x128xf32> to vector<1x8x128xf32>
    tpu.vector_store %arg3[%c0_68, %c0_69, %c0_70], %803 {strides = array<i32>} : memref<8x16x128xf32, #tpu.memory_space<vmem>>, vector<1x8x128xf32>,
    %c1_71 = arith.constant 1 : index
    %804 = memref.load %arg1[%c1_71] : memref<256xf32, #tpu.memory_space<smem>>
    %805 = vector.broadcast %804 : f32 to vector<8x128xf32>
    %806 = arith.mulf %268, %805 : vector<8x128xf32>
    %807 = vector.broadcast %804 : f32 to vector<8x128xf32>
    %808 = arith.mulf %296, %807 : vector<8x128xf32>
    %c5 = arith.constant 5 : index
    %809 = memref.load %arg1[%c5] : memref<256xf32, #tpu.memory_space<smem>>
    %810 = vector.broadcast %809 : f32 to vector<8x128xf32>
    %811 = arith.mulf %271, %810 : vector<8x128xf32>
    %812 = arith.addf %806, %811 : vector<8x128xf32>
    %813 = vector.broadcast %809 : f32 to vector<8x128xf32>
    %814 = arith.mulf %299, %813 : vector<8x128xf32>
    %815 = arith.addf %808, %814 : vector<8x128xf32>
    %c9 = arith.constant 9 : index
    %816 = memref.load %arg1[%c9] : memref<256xf32, #tpu.memory_space<smem>>
    %817 = vector.broadcast %816 : f32 to vector<8x128xf32>
    %818 = arith.mulf %276, %817 : vector<8x128xf32>
    %819 = arith.addf %812, %818 : vector<8x128xf32>
    %820 = vector.broadcast %816 : f32 to vector<8x128xf32>
    %821 = arith.mulf %304, %820 : vector<8x128xf32>
    %822 = arith.addf %815, %821 : vector<8x128xf32>
    %c13 = arith.constant 13 : index
    %823 = memref.load %arg1[%c13] : memref<256xf32, #tpu.memory_space<smem>>
    %824 = vector.broadcast %823 : f32 to vector<8x128xf32>
    %825 = arith.mulf %281, %824 : vector<8x128xf32>
    %826 = arith.addf %819, %825 : vector<8x128xf32>
    %827 = vector.broadcast %823 : f32 to vector<8x128xf32>
    %828 = arith.mulf %309, %827 : vector<8x128xf32>
    %829 = arith.addf %822, %828 : vector<8x128xf32>
    %c17 = arith.constant 17 : index
    %830 = memref.load %arg1[%c17] : memref<256xf32, #tpu.memory_space<smem>>
    %831 = vector.broadcast %830 : f32 to vector<8x128xf32>
    %832 = arith.mulf %286, %831 : vector<8x128xf32>
    %833 = arith.addf %826, %832 : vector<8x128xf32>
    %834 = vector.broadcast %830 : f32 to vector<8x128xf32>
    %835 = arith.mulf %314, %834 : vector<8x128xf32>
    %836 = arith.addf %829, %835 : vector<8x128xf32>
    %c21 = arith.constant 21 : index
    %837 = memref.load %arg1[%c21] : memref<256xf32, #tpu.memory_space<smem>>
    %838 = vector.broadcast %837 : f32 to vector<8x128xf32>
    %839 = arith.mulf %291, %838 : vector<8x128xf32>
    %840 = arith.addf %833, %839 : vector<8x128xf32>
    %841 = vector.broadcast %837 : f32 to vector<8x128xf32>
    %842 = arith.mulf %319, %841 : vector<8x128xf32>
    %843 = arith.addf %836, %842 : vector<8x128xf32>
    %c25 = arith.constant 25 : index
    %844 = memref.load %arg1[%c25] : memref<256xf32, #tpu.memory_space<smem>>
    %845 = vector.broadcast %844 : f32 to vector<8x128xf32>
    %846 = arith.mulf %294, %845 : vector<8x128xf32>
    %847 = arith.addf %840, %846 : vector<8x128xf32>
    %848 = vector.broadcast %844 : f32 to vector<8x128xf32>
    %849 = arith.mulf %322, %848 : vector<8x128xf32>
    %850 = arith.addf %843, %849 : vector<8x128xf32>
    %c29 = arith.constant 29 : index
    %851 = memref.load %arg1[%c29] : memref<256xf32, #tpu.memory_space<smem>>
    %852 = vector.broadcast %851 : f32 to vector<8x128xf32>
    %853 = arith.mulf %295, %852 : vector<8x128xf32>
    %854 = arith.addf %847, %853 : vector<8x128xf32>
    %855 = vector.broadcast %851 : f32 to vector<8x128xf32>
    %856 = arith.mulf %323, %855 : vector<8x128xf32>
    %857 = arith.addf %850, %856 : vector<8x128xf32>
    %858 = arith.mulf %212, %854 : vector<8x128xf32>
    %859 = arith.mulf %240, %854 : vector<8x128xf32>
    %860 = arith.mulf %212, %857 : vector<8x128xf32>
    %c33 = arith.constant 33 : index
    %861 = memref.load %arg1[%c33] : memref<256xf32, #tpu.memory_space<smem>>
    %862 = vector.broadcast %861 : f32 to vector<8x128xf32>
    %863 = arith.mulf %268, %862 : vector<8x128xf32>
    %864 = vector.broadcast %861 : f32 to vector<8x128xf32>
    %865 = arith.mulf %296, %864 : vector<8x128xf32>
    %c37 = arith.constant 37 : index
    %866 = memref.load %arg1[%c37] : memref<256xf32, #tpu.memory_space<smem>>
    %867 = vector.broadcast %866 : f32 to vector<8x128xf32>
    %868 = arith.mulf %271, %867 : vector<8x128xf32>
    %869 = arith.addf %863, %868 : vector<8x128xf32>
    %870 = vector.broadcast %866 : f32 to vector<8x128xf32>
    %871 = arith.mulf %299, %870 : vector<8x128xf32>
    %872 = arith.addf %865, %871 : vector<8x128xf32>
    %c41 = arith.constant 41 : index
    %873 = memref.load %arg1[%c41] : memref<256xf32, #tpu.memory_space<smem>>
    %874 = vector.broadcast %873 : f32 to vector<8x128xf32>
    %875 = arith.mulf %276, %874 : vector<8x128xf32>
    %876 = arith.addf %869, %875 : vector<8x128xf32>
    %877 = vector.broadcast %873 : f32 to vector<8x128xf32>
    %878 = arith.mulf %304, %877 : vector<8x128xf32>
    %879 = arith.addf %872, %878 : vector<8x128xf32>
    %c45 = arith.constant 45 : index
    %880 = memref.load %arg1[%c45] : memref<256xf32, #tpu.memory_space<smem>>
    %881 = vector.broadcast %880 : f32 to vector<8x128xf32>
    %882 = arith.mulf %281, %881 : vector<8x128xf32>
    %883 = arith.addf %876, %882 : vector<8x128xf32>
    %884 = vector.broadcast %880 : f32 to vector<8x128xf32>
    %885 = arith.mulf %309, %884 : vector<8x128xf32>
    %886 = arith.addf %879, %885 : vector<8x128xf32>
    %c49 = arith.constant 49 : index
    %887 = memref.load %arg1[%c49] : memref<256xf32, #tpu.memory_space<smem>>
    %888 = vector.broadcast %887 : f32 to vector<8x128xf32>
    %889 = arith.mulf %286, %888 : vector<8x128xf32>
    %890 = arith.addf %883, %889 : vector<8x128xf32>
    %891 = vector.broadcast %887 : f32 to vector<8x128xf32>
    %892 = arith.mulf %314, %891 : vector<8x128xf32>
    %893 = arith.addf %886, %892 : vector<8x128xf32>
    %c53 = arith.constant 53 : index
    %894 = memref.load %arg1[%c53] : memref<256xf32, #tpu.memory_space<smem>>
    %895 = vector.broadcast %894 : f32 to vector<8x128xf32>
    %896 = arith.mulf %291, %895 : vector<8x128xf32>
    %897 = arith.addf %890, %896 : vector<8x128xf32>
    %898 = vector.broadcast %894 : f32 to vector<8x128xf32>
    %899 = arith.mulf %319, %898 : vector<8x128xf32>
    %900 = arith.addf %893, %899 : vector<8x128xf32>
    %c57 = arith.constant 57 : index
    %901 = memref.load %arg1[%c57] : memref<256xf32, #tpu.memory_space<smem>>
    %902 = vector.broadcast %901 : f32 to vector<8x128xf32>
    %903 = arith.mulf %294, %902 : vector<8x128xf32>
    %904 = arith.addf %897, %903 : vector<8x128xf32>
    %905 = vector.broadcast %901 : f32 to vector<8x128xf32>
    %906 = arith.mulf %322, %905 : vector<8x128xf32>
    %907 = arith.addf %900, %906 : vector<8x128xf32>
    %c61 = arith.constant 61 : index
    %908 = memref.load %arg1[%c61] : memref<256xf32, #tpu.memory_space<smem>>
    %909 = vector.broadcast %908 : f32 to vector<8x128xf32>
    %910 = arith.mulf %295, %909 : vector<8x128xf32>
    %911 = arith.addf %904, %910 : vector<8x128xf32>
    %912 = vector.broadcast %908 : f32 to vector<8x128xf32>
    %913 = arith.mulf %323, %912 : vector<8x128xf32>
    %914 = arith.addf %907, %913 : vector<8x128xf32>
    %915 = arith.mulf %215, %911 : vector<8x128xf32>
    %916 = arith.addf %858, %915 : vector<8x128xf32>
    %917 = arith.mulf %243, %911 : vector<8x128xf32>
    %918 = arith.addf %859, %917 : vector<8x128xf32>
    %919 = arith.mulf %215, %914 : vector<8x128xf32>
    %920 = arith.addf %860, %919 : vector<8x128xf32>
    %c65 = arith.constant 65 : index
    %921 = memref.load %arg1[%c65] : memref<256xf32, #tpu.memory_space<smem>>
    %922 = vector.broadcast %921 : f32 to vector<8x128xf32>
    %923 = arith.mulf %268, %922 : vector<8x128xf32>
    %924 = vector.broadcast %921 : f32 to vector<8x128xf32>
    %925 = arith.mulf %296, %924 : vector<8x128xf32>
    %c69 = arith.constant 69 : index
    %926 = memref.load %arg1[%c69] : memref<256xf32, #tpu.memory_space<smem>>
    %927 = vector.broadcast %926 : f32 to vector<8x128xf32>
    %928 = arith.mulf %271, %927 : vector<8x128xf32>
    %929 = arith.addf %923, %928 : vector<8x128xf32>
    %930 = vector.broadcast %926 : f32 to vector<8x128xf32>
    %931 = arith.mulf %299, %930 : vector<8x128xf32>
    %932 = arith.addf %925, %931 : vector<8x128xf32>
    %c73 = arith.constant 73 : index
    %933 = memref.load %arg1[%c73] : memref<256xf32, #tpu.memory_space<smem>>
    %934 = vector.broadcast %933 : f32 to vector<8x128xf32>
    %935 = arith.mulf %276, %934 : vector<8x128xf32>
    %936 = arith.addf %929, %935 : vector<8x128xf32>
    %937 = vector.broadcast %933 : f32 to vector<8x128xf32>
    %938 = arith.mulf %304, %937 : vector<8x128xf32>
    %939 = arith.addf %932, %938 : vector<8x128xf32>
    %c77 = arith.constant 77 : index
    %940 = memref.load %arg1[%c77] : memref<256xf32, #tpu.memory_space<smem>>
    %941 = vector.broadcast %940 : f32 to vector<8x128xf32>
    %942 = arith.mulf %281, %941 : vector<8x128xf32>
    %943 = arith.addf %936, %942 : vector<8x128xf32>
    %944 = vector.broadcast %940 : f32 to vector<8x128xf32>
    %945 = arith.mulf %309, %944 : vector<8x128xf32>
    %946 = arith.addf %939, %945 : vector<8x128xf32>
    %c81 = arith.constant 81 : index
    %947 = memref.load %arg1[%c81] : memref<256xf32, #tpu.memory_space<smem>>
    %948 = vector.broadcast %947 : f32 to vector<8x128xf32>
    %949 = arith.mulf %286, %948 : vector<8x128xf32>
    %950 = arith.addf %943, %949 : vector<8x128xf32>
    %951 = vector.broadcast %947 : f32 to vector<8x128xf32>
    %952 = arith.mulf %314, %951 : vector<8x128xf32>
    %953 = arith.addf %946, %952 : vector<8x128xf32>
    %c85 = arith.constant 85 : index
    %954 = memref.load %arg1[%c85] : memref<256xf32, #tpu.memory_space<smem>>
    %955 = vector.broadcast %954 : f32 to vector<8x128xf32>
    %956 = arith.mulf %291, %955 : vector<8x128xf32>
    %957 = arith.addf %950, %956 : vector<8x128xf32>
    %958 = vector.broadcast %954 : f32 to vector<8x128xf32>
    %959 = arith.mulf %319, %958 : vector<8x128xf32>
    %960 = arith.addf %953, %959 : vector<8x128xf32>
    %c89 = arith.constant 89 : index
    %961 = memref.load %arg1[%c89] : memref<256xf32, #tpu.memory_space<smem>>
    %962 = vector.broadcast %961 : f32 to vector<8x128xf32>
    %963 = arith.mulf %294, %962 : vector<8x128xf32>
    %964 = arith.addf %957, %963 : vector<8x128xf32>
    %965 = vector.broadcast %961 : f32 to vector<8x128xf32>
    %966 = arith.mulf %322, %965 : vector<8x128xf32>
    %967 = arith.addf %960, %966 : vector<8x128xf32>
    %c93 = arith.constant 93 : index
    %968 = memref.load %arg1[%c93] : memref<256xf32, #tpu.memory_space<smem>>
    %969 = vector.broadcast %968 : f32 to vector<8x128xf32>
    %970 = arith.mulf %295, %969 : vector<8x128xf32>
    %971 = arith.addf %964, %970 : vector<8x128xf32>
    %972 = vector.broadcast %968 : f32 to vector<8x128xf32>
    %973 = arith.mulf %323, %972 : vector<8x128xf32>
    %974 = arith.addf %967, %973 : vector<8x128xf32>
    %975 = arith.mulf %220, %971 : vector<8x128xf32>
    %976 = arith.addf %916, %975 : vector<8x128xf32>
    %977 = arith.mulf %248, %971 : vector<8x128xf32>
    %978 = arith.addf %918, %977 : vector<8x128xf32>
    %979 = arith.mulf %220, %974 : vector<8x128xf32>
    %980 = arith.addf %920, %979 : vector<8x128xf32>
    %c97 = arith.constant 97 : index
    %981 = memref.load %arg1[%c97] : memref<256xf32, #tpu.memory_space<smem>>
    %982 = vector.broadcast %981 : f32 to vector<8x128xf32>
    %983 = arith.mulf %268, %982 : vector<8x128xf32>
    %984 = vector.broadcast %981 : f32 to vector<8x128xf32>
    %985 = arith.mulf %296, %984 : vector<8x128xf32>
    %c101 = arith.constant 101 : index
    %986 = memref.load %arg1[%c101] : memref<256xf32, #tpu.memory_space<smem>>
    %987 = vector.broadcast %986 : f32 to vector<8x128xf32>
    %988 = arith.mulf %271, %987 : vector<8x128xf32>
    %989 = arith.addf %983, %988 : vector<8x128xf32>
    %990 = vector.broadcast %986 : f32 to vector<8x128xf32>
    %991 = arith.mulf %299, %990 : vector<8x128xf32>
    %992 = arith.addf %985, %991 : vector<8x128xf32>
    %c105 = arith.constant 105 : index
    %993 = memref.load %arg1[%c105] : memref<256xf32, #tpu.memory_space<smem>>
    %994 = vector.broadcast %993 : f32 to vector<8x128xf32>
    %995 = arith.mulf %276, %994 : vector<8x128xf32>
    %996 = arith.addf %989, %995 : vector<8x128xf32>
    %997 = vector.broadcast %993 : f32 to vector<8x128xf32>
    %998 = arith.mulf %304, %997 : vector<8x128xf32>
    %999 = arith.addf %992, %998 : vector<8x128xf32>
    %c109 = arith.constant 109 : index
    %1000 = memref.load %arg1[%c109] : memref<256xf32, #tpu.memory_space<smem>>
    %1001 = vector.broadcast %1000 : f32 to vector<8x128xf32>
    %1002 = arith.mulf %281, %1001 : vector<8x128xf32>
    %1003 = arith.addf %996, %1002 : vector<8x128xf32>
    %1004 = vector.broadcast %1000 : f32 to vector<8x128xf32>
    %1005 = arith.mulf %309, %1004 : vector<8x128xf32>
    %1006 = arith.addf %999, %1005 : vector<8x128xf32>
    %c113 = arith.constant 113 : index
    %1007 = memref.load %arg1[%c113] : memref<256xf32, #tpu.memory_space<smem>>
    %1008 = vector.broadcast %1007 : f32 to vector<8x128xf32>
    %1009 = arith.mulf %286, %1008 : vector<8x128xf32>
    %1010 = arith.addf %1003, %1009 : vector<8x128xf32>
    %1011 = vector.broadcast %1007 : f32 to vector<8x128xf32>
    %1012 = arith.mulf %314, %1011 : vector<8x128xf32>
    %1013 = arith.addf %1006, %1012 : vector<8x128xf32>
    %c117 = arith.constant 117 : index
    %1014 = memref.load %arg1[%c117] : memref<256xf32, #tpu.memory_space<smem>>
    %1015 = vector.broadcast %1014 : f32 to vector<8x128xf32>
    %1016 = arith.mulf %291, %1015 : vector<8x128xf32>
    %1017 = arith.addf %1010, %1016 : vector<8x128xf32>
    %1018 = vector.broadcast %1014 : f32 to vector<8x128xf32>
    %1019 = arith.mulf %319, %1018 : vector<8x128xf32>
    %1020 = arith.addf %1013, %1019 : vector<8x128xf32>
    %c121 = arith.constant 121 : index
    %1021 = memref.load %arg1[%c121] : memref<256xf32, #tpu.memory_space<smem>>
    %1022 = vector.broadcast %1021 : f32 to vector<8x128xf32>
    %1023 = arith.mulf %294, %1022 : vector<8x128xf32>
    %1024 = arith.addf %1017, %1023 : vector<8x128xf32>
    %1025 = vector.broadcast %1021 : f32 to vector<8x128xf32>
    %1026 = arith.mulf %322, %1025 : vector<8x128xf32>
    %1027 = arith.addf %1020, %1026 : vector<8x128xf32>
    %c125 = arith.constant 125 : index
    %1028 = memref.load %arg1[%c125] : memref<256xf32, #tpu.memory_space<smem>>
    %1029 = vector.broadcast %1028 : f32 to vector<8x128xf32>
    %1030 = arith.mulf %295, %1029 : vector<8x128xf32>
    %1031 = arith.addf %1024, %1030 : vector<8x128xf32>
    %1032 = vector.broadcast %1028 : f32 to vector<8x128xf32>
    %1033 = arith.mulf %323, %1032 : vector<8x128xf32>
    %1034 = arith.addf %1027, %1033 : vector<8x128xf32>
    %1035 = arith.mulf %225, %1031 : vector<8x128xf32>
    %1036 = arith.addf %976, %1035 : vector<8x128xf32>
    %1037 = arith.mulf %253, %1031 : vector<8x128xf32>
    %1038 = arith.addf %978, %1037 : vector<8x128xf32>
    %1039 = arith.mulf %225, %1034 : vector<8x128xf32>
    %1040 = arith.addf %980, %1039 : vector<8x128xf32>
    %c129 = arith.constant 129 : index
    %1041 = memref.load %arg1[%c129] : memref<256xf32, #tpu.memory_space<smem>>
    %1042 = vector.broadcast %1041 : f32 to vector<8x128xf32>
    %1043 = arith.mulf %268, %1042 : vector<8x128xf32>
    %1044 = vector.broadcast %1041 : f32 to vector<8x128xf32>
    %1045 = arith.mulf %296, %1044 : vector<8x128xf32>
    %c133 = arith.constant 133 : index
    %1046 = memref.load %arg1[%c133] : memref<256xf32, #tpu.memory_space<smem>>
    %1047 = vector.broadcast %1046 : f32 to vector<8x128xf32>
    %1048 = arith.mulf %271, %1047 : vector<8x128xf32>
    %1049 = arith.addf %1043, %1048 : vector<8x128xf32>
    %1050 = vector.broadcast %1046 : f32 to vector<8x128xf32>
    %1051 = arith.mulf %299, %1050 : vector<8x128xf32>
    %1052 = arith.addf %1045, %1051 : vector<8x128xf32>
    %c137 = arith.constant 137 : index
    %1053 = memref.load %arg1[%c137] : memref<256xf32, #tpu.memory_space<smem>>
    %1054 = vector.broadcast %1053 : f32 to vector<8x128xf32>
    %1055 = arith.mulf %276, %1054 : vector<8x128xf32>
    %1056 = arith.addf %1049, %1055 : vector<8x128xf32>
    %1057 = vector.broadcast %1053 : f32 to vector<8x128xf32>
    %1058 = arith.mulf %304, %1057 : vector<8x128xf32>
    %1059 = arith.addf %1052, %1058 : vector<8x128xf32>
    %c141 = arith.constant 141 : index
    %1060 = memref.load %arg1[%c141] : memref<256xf32, #tpu.memory_space<smem>>
    %1061 = vector.broadcast %1060 : f32 to vector<8x128xf32>
    %1062 = arith.mulf %281, %1061 : vector<8x128xf32>
    %1063 = arith.addf %1056, %1062 : vector<8x128xf32>
    %1064 = vector.broadcast %1060 : f32 to vector<8x128xf32>
    %1065 = arith.mulf %309, %1064 : vector<8x128xf32>
    %1066 = arith.addf %1059, %1065 : vector<8x128xf32>
    %c145 = arith.constant 145 : index
    %1067 = memref.load %arg1[%c145] : memref<256xf32, #tpu.memory_space<smem>>
    %1068 = vector.broadcast %1067 : f32 to vector<8x128xf32>
    %1069 = arith.mulf %286, %1068 : vector<8x128xf32>
    %1070 = arith.addf %1063, %1069 : vector<8x128xf32>
    %1071 = vector.broadcast %1067 : f32 to vector<8x128xf32>
    %1072 = arith.mulf %314, %1071 : vector<8x128xf32>
    %1073 = arith.addf %1066, %1072 : vector<8x128xf32>
    %c149 = arith.constant 149 : index
    %1074 = memref.load %arg1[%c149] : memref<256xf32, #tpu.memory_space<smem>>
    %1075 = vector.broadcast %1074 : f32 to vector<8x128xf32>
    %1076 = arith.mulf %291, %1075 : vector<8x128xf32>
    %1077 = arith.addf %1070, %1076 : vector<8x128xf32>
    %1078 = vector.broadcast %1074 : f32 to vector<8x128xf32>
    %1079 = arith.mulf %319, %1078 : vector<8x128xf32>
    %1080 = arith.addf %1073, %1079 : vector<8x128xf32>
    %c153 = arith.constant 153 : index
    %1081 = memref.load %arg1[%c153] : memref<256xf32, #tpu.memory_space<smem>>
    %1082 = vector.broadcast %1081 : f32 to vector<8x128xf32>
    %1083 = arith.mulf %294, %1082 : vector<8x128xf32>
    %1084 = arith.addf %1077, %1083 : vector<8x128xf32>
    %1085 = vector.broadcast %1081 : f32 to vector<8x128xf32>
    %1086 = arith.mulf %322, %1085 : vector<8x128xf32>
    %1087 = arith.addf %1080, %1086 : vector<8x128xf32>
    %c157 = arith.constant 157 : index
    %1088 = memref.load %arg1[%c157] : memref<256xf32, #tpu.memory_space<smem>>
    %1089 = vector.broadcast %1088 : f32 to vector<8x128xf32>
    %1090 = arith.mulf %295, %1089 : vector<8x128xf32>
    %1091 = arith.addf %1084, %1090 : vector<8x128xf32>
    %1092 = vector.broadcast %1088 : f32 to vector<8x128xf32>
    %1093 = arith.mulf %323, %1092 : vector<8x128xf32>
    %1094 = arith.addf %1087, %1093 : vector<8x128xf32>
    %1095 = arith.mulf %230, %1091 : vector<8x128xf32>
    %1096 = arith.addf %1036, %1095 : vector<8x128xf32>
    %1097 = arith.mulf %258, %1091 : vector<8x128xf32>
    %1098 = arith.addf %1038, %1097 : vector<8x128xf32>
    %1099 = arith.mulf %230, %1094 : vector<8x128xf32>
    %1100 = arith.addf %1040, %1099 : vector<8x128xf32>
    %c161 = arith.constant 161 : index
    %1101 = memref.load %arg1[%c161] : memref<256xf32, #tpu.memory_space<smem>>
    %1102 = vector.broadcast %1101 : f32 to vector<8x128xf32>
    %1103 = arith.mulf %268, %1102 : vector<8x128xf32>
    %1104 = vector.broadcast %1101 : f32 to vector<8x128xf32>
    %1105 = arith.mulf %296, %1104 : vector<8x128xf32>
    %c165 = arith.constant 165 : index
    %1106 = memref.load %arg1[%c165] : memref<256xf32, #tpu.memory_space<smem>>
    %1107 = vector.broadcast %1106 : f32 to vector<8x128xf32>
    %1108 = arith.mulf %271, %1107 : vector<8x128xf32>
    %1109 = arith.addf %1103, %1108 : vector<8x128xf32>
    %1110 = vector.broadcast %1106 : f32 to vector<8x128xf32>
    %1111 = arith.mulf %299, %1110 : vector<8x128xf32>
    %1112 = arith.addf %1105, %1111 : vector<8x128xf32>
    %c169 = arith.constant 169 : index
    %1113 = memref.load %arg1[%c169] : memref<256xf32, #tpu.memory_space<smem>>
    %1114 = vector.broadcast %1113 : f32 to vector<8x128xf32>
    %1115 = arith.mulf %276, %1114 : vector<8x128xf32>
    %1116 = arith.addf %1109, %1115 : vector<8x128xf32>
    %1117 = vector.broadcast %1113 : f32 to vector<8x128xf32>
    %1118 = arith.mulf %304, %1117 : vector<8x128xf32>
    %1119 = arith.addf %1112, %1118 : vector<8x128xf32>
    %c173 = arith.constant 173 : index
    %1120 = memref.load %arg1[%c173] : memref<256xf32, #tpu.memory_space<smem>>
    %1121 = vector.broadcast %1120 : f32 to vector<8x128xf32>
    %1122 = arith.mulf %281, %1121 : vector<8x128xf32>
    %1123 = arith.addf %1116, %1122 : vector<8x128xf32>
    %1124 = vector.broadcast %1120 : f32 to vector<8x128xf32>
    %1125 = arith.mulf %309, %1124 : vector<8x128xf32>
    %1126 = arith.addf %1119, %1125 : vector<8x128xf32>
    %c177 = arith.constant 177 : index
    %1127 = memref.load %arg1[%c177] : memref<256xf32, #tpu.memory_space<smem>>
    %1128 = vector.broadcast %1127 : f32 to vector<8x128xf32>
    %1129 = arith.mulf %286, %1128 : vector<8x128xf32>
    %1130 = arith.addf %1123, %1129 : vector<8x128xf32>
    %1131 = vector.broadcast %1127 : f32 to vector<8x128xf32>
    %1132 = arith.mulf %314, %1131 : vector<8x128xf32>
    %1133 = arith.addf %1126, %1132 : vector<8x128xf32>
    %c181 = arith.constant 181 : index
    %1134 = memref.load %arg1[%c181] : memref<256xf32, #tpu.memory_space<smem>>
    %1135 = vector.broadcast %1134 : f32 to vector<8x128xf32>
    %1136 = arith.mulf %291, %1135 : vector<8x128xf32>
    %1137 = arith.addf %1130, %1136 : vector<8x128xf32>
    %1138 = vector.broadcast %1134 : f32 to vector<8x128xf32>
    %1139 = arith.mulf %319, %1138 : vector<8x128xf32>
    %1140 = arith.addf %1133, %1139 : vector<8x128xf32>
    %c185 = arith.constant 185 : index
    %1141 = memref.load %arg1[%c185] : memref<256xf32, #tpu.memory_space<smem>>
    %1142 = vector.broadcast %1141 : f32 to vector<8x128xf32>
    %1143 = arith.mulf %294, %1142 : vector<8x128xf32>
    %1144 = arith.addf %1137, %1143 : vector<8x128xf32>
    %1145 = vector.broadcast %1141 : f32 to vector<8x128xf32>
    %1146 = arith.mulf %322, %1145 : vector<8x128xf32>
    %1147 = arith.addf %1140, %1146 : vector<8x128xf32>
    %c189 = arith.constant 189 : index
    %1148 = memref.load %arg1[%c189] : memref<256xf32, #tpu.memory_space<smem>>
    %1149 = vector.broadcast %1148 : f32 to vector<8x128xf32>
    %1150 = arith.mulf %295, %1149 : vector<8x128xf32>
    %1151 = arith.addf %1144, %1150 : vector<8x128xf32>
    %1152 = vector.broadcast %1148 : f32 to vector<8x128xf32>
    %1153 = arith.mulf %323, %1152 : vector<8x128xf32>
    %1154 = arith.addf %1147, %1153 : vector<8x128xf32>
    %1155 = arith.mulf %235, %1151 : vector<8x128xf32>
    %1156 = arith.addf %1096, %1155 : vector<8x128xf32>
    %1157 = arith.mulf %263, %1151 : vector<8x128xf32>
    %1158 = arith.addf %1098, %1157 : vector<8x128xf32>
    %1159 = arith.mulf %235, %1154 : vector<8x128xf32>
    %1160 = arith.addf %1100, %1159 : vector<8x128xf32>
    %c193 = arith.constant 193 : index
    %1161 = memref.load %arg1[%c193] : memref<256xf32, #tpu.memory_space<smem>>
    %1162 = vector.broadcast %1161 : f32 to vector<8x128xf32>
    %1163 = arith.mulf %268, %1162 : vector<8x128xf32>
    %1164 = vector.broadcast %1161 : f32 to vector<8x128xf32>
    %1165 = arith.mulf %296, %1164 : vector<8x128xf32>
    %c197 = arith.constant 197 : index
    %1166 = memref.load %arg1[%c197] : memref<256xf32, #tpu.memory_space<smem>>
    %1167 = vector.broadcast %1166 : f32 to vector<8x128xf32>
    %1168 = arith.mulf %271, %1167 : vector<8x128xf32>
    %1169 = arith.addf %1163, %1168 : vector<8x128xf32>
    %1170 = vector.broadcast %1166 : f32 to vector<8x128xf32>
    %1171 = arith.mulf %299, %1170 : vector<8x128xf32>
    %1172 = arith.addf %1165, %1171 : vector<8x128xf32>
    %c201 = arith.constant 201 : index
    %1173 = memref.load %arg1[%c201] : memref<256xf32, #tpu.memory_space<smem>>
    %1174 = vector.broadcast %1173 : f32 to vector<8x128xf32>
    %1175 = arith.mulf %276, %1174 : vector<8x128xf32>
    %1176 = arith.addf %1169, %1175 : vector<8x128xf32>
    %1177 = vector.broadcast %1173 : f32 to vector<8x128xf32>
    %1178 = arith.mulf %304, %1177 : vector<8x128xf32>
    %1179 = arith.addf %1172, %1178 : vector<8x128xf32>
    %c205 = arith.constant 205 : index
    %1180 = memref.load %arg1[%c205] : memref<256xf32, #tpu.memory_space<smem>>
    %1181 = vector.broadcast %1180 : f32 to vector<8x128xf32>
    %1182 = arith.mulf %281, %1181 : vector<8x128xf32>
    %1183 = arith.addf %1176, %1182 : vector<8x128xf32>
    %1184 = vector.broadcast %1180 : f32 to vector<8x128xf32>
    %1185 = arith.mulf %309, %1184 : vector<8x128xf32>
    %1186 = arith.addf %1179, %1185 : vector<8x128xf32>
    %c209 = arith.constant 209 : index
    %1187 = memref.load %arg1[%c209] : memref<256xf32, #tpu.memory_space<smem>>
    %1188 = vector.broadcast %1187 : f32 to vector<8x128xf32>
    %1189 = arith.mulf %286, %1188 : vector<8x128xf32>
    %1190 = arith.addf %1183, %1189 : vector<8x128xf32>
    %1191 = vector.broadcast %1187 : f32 to vector<8x128xf32>
    %1192 = arith.mulf %314, %1191 : vector<8x128xf32>
    %1193 = arith.addf %1186, %1192 : vector<8x128xf32>
    %c213 = arith.constant 213 : index
    %1194 = memref.load %arg1[%c213] : memref<256xf32, #tpu.memory_space<smem>>
    %1195 = vector.broadcast %1194 : f32 to vector<8x128xf32>
    %1196 = arith.mulf %291, %1195 : vector<8x128xf32>
    %1197 = arith.addf %1190, %1196 : vector<8x128xf32>
    %1198 = vector.broadcast %1194 : f32 to vector<8x128xf32>
    %1199 = arith.mulf %319, %1198 : vector<8x128xf32>
    %1200 = arith.addf %1193, %1199 : vector<8x128xf32>
    %c217 = arith.constant 217 : index
    %1201 = memref.load %arg1[%c217] : memref<256xf32, #tpu.memory_space<smem>>
    %1202 = vector.broadcast %1201 : f32 to vector<8x128xf32>
    %1203 = arith.mulf %294, %1202 : vector<8x128xf32>
    %1204 = arith.addf %1197, %1203 : vector<8x128xf32>
    %1205 = vector.broadcast %1201 : f32 to vector<8x128xf32>
    %1206 = arith.mulf %322, %1205 : vector<8x128xf32>
    %1207 = arith.addf %1200, %1206 : vector<8x128xf32>
    %c221 = arith.constant 221 : index
    %1208 = memref.load %arg1[%c221] : memref<256xf32, #tpu.memory_space<smem>>
    %1209 = vector.broadcast %1208 : f32 to vector<8x128xf32>
    %1210 = arith.mulf %295, %1209 : vector<8x128xf32>
    %1211 = arith.addf %1204, %1210 : vector<8x128xf32>
    %1212 = vector.broadcast %1208 : f32 to vector<8x128xf32>
    %1213 = arith.mulf %323, %1212 : vector<8x128xf32>
    %1214 = arith.addf %1207, %1213 : vector<8x128xf32>
    %1215 = arith.mulf %238, %1211 : vector<8x128xf32>
    %1216 = arith.addf %1156, %1215 : vector<8x128xf32>
    %1217 = arith.mulf %266, %1211 : vector<8x128xf32>
    %1218 = arith.addf %1158, %1217 : vector<8x128xf32>
    %1219 = arith.mulf %238, %1214 : vector<8x128xf32>
    %1220 = arith.addf %1160, %1219 : vector<8x128xf32>
    %c225 = arith.constant 225 : index
    %1221 = memref.load %arg1[%c225] : memref<256xf32, #tpu.memory_space<smem>>
    %1222 = vector.broadcast %1221 : f32 to vector<8x128xf32>
    %1223 = arith.mulf %268, %1222 : vector<8x128xf32>
    %1224 = vector.broadcast %1221 : f32 to vector<8x128xf32>
    %1225 = arith.mulf %296, %1224 : vector<8x128xf32>
    %c229 = arith.constant 229 : index
    %1226 = memref.load %arg1[%c229] : memref<256xf32, #tpu.memory_space<smem>>
    %1227 = vector.broadcast %1226 : f32 to vector<8x128xf32>
    %1228 = arith.mulf %271, %1227 : vector<8x128xf32>
    %1229 = arith.addf %1223, %1228 : vector<8x128xf32>
    %1230 = vector.broadcast %1226 : f32 to vector<8x128xf32>
    %1231 = arith.mulf %299, %1230 : vector<8x128xf32>
    %1232 = arith.addf %1225, %1231 : vector<8x128xf32>
    %c233 = arith.constant 233 : index
    %1233 = memref.load %arg1[%c233] : memref<256xf32, #tpu.memory_space<smem>>
    %1234 = vector.broadcast %1233 : f32 to vector<8x128xf32>
    %1235 = arith.mulf %276, %1234 : vector<8x128xf32>
    %1236 = arith.addf %1229, %1235 : vector<8x128xf32>
    %1237 = vector.broadcast %1233 : f32 to vector<8x128xf32>
    %1238 = arith.mulf %304, %1237 : vector<8x128xf32>
    %1239 = arith.addf %1232, %1238 : vector<8x128xf32>
    %c237 = arith.constant 237 : index
    %1240 = memref.load %arg1[%c237] : memref<256xf32, #tpu.memory_space<smem>>
    %1241 = vector.broadcast %1240 : f32 to vector<8x128xf32>
    %1242 = arith.mulf %281, %1241 : vector<8x128xf32>
    %1243 = arith.addf %1236, %1242 : vector<8x128xf32>
    %1244 = vector.broadcast %1240 : f32 to vector<8x128xf32>
    %1245 = arith.mulf %309, %1244 : vector<8x128xf32>
    %1246 = arith.addf %1239, %1245 : vector<8x128xf32>
    %c241 = arith.constant 241 : index
    %1247 = memref.load %arg1[%c241] : memref<256xf32, #tpu.memory_space<smem>>
    %1248 = vector.broadcast %1247 : f32 to vector<8x128xf32>
    %1249 = arith.mulf %286, %1248 : vector<8x128xf32>
    %1250 = arith.addf %1243, %1249 : vector<8x128xf32>
    %1251 = vector.broadcast %1247 : f32 to vector<8x128xf32>
    %1252 = arith.mulf %314, %1251 : vector<8x128xf32>
    %1253 = arith.addf %1246, %1252 : vector<8x128xf32>
    %c245 = arith.constant 245 : index
    %1254 = memref.load %arg1[%c245] : memref<256xf32, #tpu.memory_space<smem>>
    %1255 = vector.broadcast %1254 : f32 to vector<8x128xf32>
    %1256 = arith.mulf %291, %1255 : vector<8x128xf32>
    %1257 = arith.addf %1250, %1256 : vector<8x128xf32>
    %1258 = vector.broadcast %1254 : f32 to vector<8x128xf32>
    %1259 = arith.mulf %319, %1258 : vector<8x128xf32>
    %1260 = arith.addf %1253, %1259 : vector<8x128xf32>
    %c249 = arith.constant 249 : index
    %1261 = memref.load %arg1[%c249] : memref<256xf32, #tpu.memory_space<smem>>
    %1262 = vector.broadcast %1261 : f32 to vector<8x128xf32>
    %1263 = arith.mulf %294, %1262 : vector<8x128xf32>
    %1264 = arith.addf %1257, %1263 : vector<8x128xf32>
    %1265 = vector.broadcast %1261 : f32 to vector<8x128xf32>
    %1266 = arith.mulf %322, %1265 : vector<8x128xf32>
    %1267 = arith.addf %1260, %1266 : vector<8x128xf32>
    %c253 = arith.constant 253 : index
    %1268 = memref.load %arg1[%c253] : memref<256xf32, #tpu.memory_space<smem>>
    %1269 = vector.broadcast %1268 : f32 to vector<8x128xf32>
    %1270 = arith.mulf %295, %1269 : vector<8x128xf32>
    %1271 = arith.addf %1264, %1270 : vector<8x128xf32>
    %1272 = vector.broadcast %1268 : f32 to vector<8x128xf32>
    %1273 = arith.mulf %323, %1272 : vector<8x128xf32>
    %1274 = arith.addf %1267, %1273 : vector<8x128xf32>
    %1275 = arith.mulf %239, %1271 : vector<8x128xf32>
    %1276 = arith.addf %1216, %1275 : vector<8x128xf32>
    %1277 = arith.mulf %267, %1271 : vector<8x128xf32>
    %1278 = arith.addf %1218, %1277 : vector<8x128xf32>
    %1279 = arith.mulf %239, %1274 : vector<8x128xf32>
    %1280 = arith.addf %1220, %1279 : vector<8x128xf32>
    %c1_72 = arith.constant 1 : index
    %c0_73 = arith.constant 0 : index
    %c0_74 = arith.constant 0 : index
    %1281 = vector.load %arg3[%c1_72, %c0_73, %c0_74] : memref<8x16x128xf32, #tpu.memory_space<vmem>>, vector<1x8x128xf32>
    %1282 = vector.shape_cast %1281 : vector<1x8x128xf32> to vector<8x128xf32>
    %1283 = vector.shape_cast %1276 : vector<8x128xf32> to vector<1x8x128xf32>
    tpu.vector_store %arg3[%c1_72, %c0_73, %c0_74], %1283 {strides = array<i32>} : memref<8x16x128xf32, #tpu.memory_space<vmem>>, vector<1x8x128xf32>,
    %c2 = arith.constant 2 : index
    %1284 = memref.load %arg1[%c2] : memref<256xf32, #tpu.memory_space<smem>>
    %1285 = vector.broadcast %1284 : f32 to vector<8x128xf32>
    %1286 = arith.mulf %268, %1285 : vector<8x128xf32>
    %1287 = vector.broadcast %1284 : f32 to vector<8x128xf32>
    %1288 = arith.mulf %296, %1287 : vector<8x128xf32>
    %c6 = arith.constant 6 : index
    %1289 = memref.load %arg1[%c6] : memref<256xf32, #tpu.memory_space<smem>>
    %1290 = vector.broadcast %1289 : f32 to vector<8x128xf32>
    %1291 = arith.mulf %271, %1290 : vector<8x128xf32>
    %1292 = arith.addf %1286, %1291 : vector<8x128xf32>
    %1293 = vector.broadcast %1289 : f32 to vector<8x128xf32>
    %1294 = arith.mulf %299, %1293 : vector<8x128xf32>
    %1295 = arith.addf %1288, %1294 : vector<8x128xf32>
    %c10 = arith.constant 10 : index
    %1296 = memref.load %arg1[%c10] : memref<256xf32, #tpu.memory_space<smem>>
    %1297 = vector.broadcast %1296 : f32 to vector<8x128xf32>
    %1298 = arith.mulf %276, %1297 : vector<8x128xf32>
    %1299 = arith.addf %1292, %1298 : vector<8x128xf32>
    %1300 = vector.broadcast %1296 : f32 to vector<8x128xf32>
    %1301 = arith.mulf %304, %1300 : vector<8x128xf32>
    %1302 = arith.addf %1295, %1301 : vector<8x128xf32>
    %c14 = arith.constant 14 : index
    %1303 = memref.load %arg1[%c14] : memref<256xf32, #tpu.memory_space<smem>>
    %1304 = vector.broadcast %1303 : f32 to vector<8x128xf32>
    %1305 = arith.mulf %281, %1304 : vector<8x128xf32>
    %1306 = arith.addf %1299, %1305 : vector<8x128xf32>
    %1307 = vector.broadcast %1303 : f32 to vector<8x128xf32>
    %1308 = arith.mulf %309, %1307 : vector<8x128xf32>
    %1309 = arith.addf %1302, %1308 : vector<8x128xf32>
    %c18 = arith.constant 18 : index
    %1310 = memref.load %arg1[%c18] : memref<256xf32, #tpu.memory_space<smem>>
    %1311 = vector.broadcast %1310 : f32 to vector<8x128xf32>
    %1312 = arith.mulf %286, %1311 : vector<8x128xf32>
    %1313 = arith.addf %1306, %1312 : vector<8x128xf32>
    %1314 = vector.broadcast %1310 : f32 to vector<8x128xf32>
    %1315 = arith.mulf %314, %1314 : vector<8x128xf32>
    %1316 = arith.addf %1309, %1315 : vector<8x128xf32>
    %c22 = arith.constant 22 : index
    %1317 = memref.load %arg1[%c22] : memref<256xf32, #tpu.memory_space<smem>>
    %1318 = vector.broadcast %1317 : f32 to vector<8x128xf32>
    %1319 = arith.mulf %291, %1318 : vector<8x128xf32>
    %1320 = arith.addf %1313, %1319 : vector<8x128xf32>
    %1321 = vector.broadcast %1317 : f32 to vector<8x128xf32>
    %1322 = arith.mulf %319, %1321 : vector<8x128xf32>
    %1323 = arith.addf %1316, %1322 : vector<8x128xf32>
    %c26 = arith.constant 26 : index
    %1324 = memref.load %arg1[%c26] : memref<256xf32, #tpu.memory_space<smem>>
    %1325 = vector.broadcast %1324 : f32 to vector<8x128xf32>
    %1326 = arith.mulf %294, %1325 : vector<8x128xf32>
    %1327 = arith.addf %1320, %1326 : vector<8x128xf32>
    %1328 = vector.broadcast %1324 : f32 to vector<8x128xf32>
    %1329 = arith.mulf %322, %1328 : vector<8x128xf32>
    %1330 = arith.addf %1323, %1329 : vector<8x128xf32>
    %c30 = arith.constant 30 : index
    %1331 = memref.load %arg1[%c30] : memref<256xf32, #tpu.memory_space<smem>>
    %1332 = vector.broadcast %1331 : f32 to vector<8x128xf32>
    %1333 = arith.mulf %295, %1332 : vector<8x128xf32>
    %1334 = arith.addf %1327, %1333 : vector<8x128xf32>
    %1335 = vector.broadcast %1331 : f32 to vector<8x128xf32>
    %1336 = arith.mulf %323, %1335 : vector<8x128xf32>
    %1337 = arith.addf %1330, %1336 : vector<8x128xf32>
    %1338 = arith.mulf %212, %1334 : vector<8x128xf32>
    %1339 = arith.mulf %240, %1334 : vector<8x128xf32>
    %1340 = arith.mulf %212, %1337 : vector<8x128xf32>
    %c34 = arith.constant 34 : index
    %1341 = memref.load %arg1[%c34] : memref<256xf32, #tpu.memory_space<smem>>
    %1342 = vector.broadcast %1341 : f32 to vector<8x128xf32>
    %1343 = arith.mulf %268, %1342 : vector<8x128xf32>
    %1344 = vector.broadcast %1341 : f32 to vector<8x128xf32>
    %1345 = arith.mulf %296, %1344 : vector<8x128xf32>
    %c38 = arith.constant 38 : index
    %1346 = memref.load %arg1[%c38] : memref<256xf32, #tpu.memory_space<smem>>
    %1347 = vector.broadcast %1346 : f32 to vector<8x128xf32>
    %1348 = arith.mulf %271, %1347 : vector<8x128xf32>
    %1349 = arith.addf %1343, %1348 : vector<8x128xf32>
    %1350 = vector.broadcast %1346 : f32 to vector<8x128xf32>
    %1351 = arith.mulf %299, %1350 : vector<8x128xf32>
    %1352 = arith.addf %1345, %1351 : vector<8x128xf32>
    %c42 = arith.constant 42 : index
    %1353 = memref.load %arg1[%c42] : memref<256xf32, #tpu.memory_space<smem>>
    %1354 = vector.broadcast %1353 : f32 to vector<8x128xf32>
    %1355 = arith.mulf %276, %1354 : vector<8x128xf32>
    %1356 = arith.addf %1349, %1355 : vector<8x128xf32>
    %1357 = vector.broadcast %1353 : f32 to vector<8x128xf32>
    %1358 = arith.mulf %304, %1357 : vector<8x128xf32>
    %1359 = arith.addf %1352, %1358 : vector<8x128xf32>
    %c46 = arith.constant 46 : index
    %1360 = memref.load %arg1[%c46] : memref<256xf32, #tpu.memory_space<smem>>
    %1361 = vector.broadcast %1360 : f32 to vector<8x128xf32>
    %1362 = arith.mulf %281, %1361 : vector<8x128xf32>
    %1363 = arith.addf %1356, %1362 : vector<8x128xf32>
    %1364 = vector.broadcast %1360 : f32 to vector<8x128xf32>
    %1365 = arith.mulf %309, %1364 : vector<8x128xf32>
    %1366 = arith.addf %1359, %1365 : vector<8x128xf32>
    %c50 = arith.constant 50 : index
    %1367 = memref.load %arg1[%c50] : memref<256xf32, #tpu.memory_space<smem>>
    %1368 = vector.broadcast %1367 : f32 to vector<8x128xf32>
    %1369 = arith.mulf %286, %1368 : vector<8x128xf32>
    %1370 = arith.addf %1363, %1369 : vector<8x128xf32>
    %1371 = vector.broadcast %1367 : f32 to vector<8x128xf32>
    %1372 = arith.mulf %314, %1371 : vector<8x128xf32>
    %1373 = arith.addf %1366, %1372 : vector<8x128xf32>
    %c54 = arith.constant 54 : index
    %1374 = memref.load %arg1[%c54] : memref<256xf32, #tpu.memory_space<smem>>
    %1375 = vector.broadcast %1374 : f32 to vector<8x128xf32>
    %1376 = arith.mulf %291, %1375 : vector<8x128xf32>
    %1377 = arith.addf %1370, %1376 : vector<8x128xf32>
    %1378 = vector.broadcast %1374 : f32 to vector<8x128xf32>
    %1379 = arith.mulf %319, %1378 : vector<8x128xf32>
    %1380 = arith.addf %1373, %1379 : vector<8x128xf32>
    %c58 = arith.constant 58 : index
    %1381 = memref.load %arg1[%c58] : memref<256xf32, #tpu.memory_space<smem>>
    %1382 = vector.broadcast %1381 : f32 to vector<8x128xf32>
    %1383 = arith.mulf %294, %1382 : vector<8x128xf32>
    %1384 = arith.addf %1377, %1383 : vector<8x128xf32>
    %1385 = vector.broadcast %1381 : f32 to vector<8x128xf32>
    %1386 = arith.mulf %322, %1385 : vector<8x128xf32>
    %1387 = arith.addf %1380, %1386 : vector<8x128xf32>
    %c62 = arith.constant 62 : index
    %1388 = memref.load %arg1[%c62] : memref<256xf32, #tpu.memory_space<smem>>
    %1389 = vector.broadcast %1388 : f32 to vector<8x128xf32>
    %1390 = arith.mulf %295, %1389 : vector<8x128xf32>
    %1391 = arith.addf %1384, %1390 : vector<8x128xf32>
    %1392 = vector.broadcast %1388 : f32 to vector<8x128xf32>
    %1393 = arith.mulf %323, %1392 : vector<8x128xf32>
    %1394 = arith.addf %1387, %1393 : vector<8x128xf32>
    %1395 = arith.mulf %215, %1391 : vector<8x128xf32>
    %1396 = arith.addf %1338, %1395 : vector<8x128xf32>
    %1397 = arith.mulf %243, %1391 : vector<8x128xf32>
    %1398 = arith.addf %1339, %1397 : vector<8x128xf32>
    %1399 = arith.mulf %215, %1394 : vector<8x128xf32>
    %1400 = arith.addf %1340, %1399 : vector<8x128xf32>
    %c66 = arith.constant 66 : index
    %1401 = memref.load %arg1[%c66] : memref<256xf32, #tpu.memory_space<smem>>
    %1402 = vector.broadcast %1401 : f32 to vector<8x128xf32>
    %1403 = arith.mulf %268, %1402 : vector<8x128xf32>
    %1404 = vector.broadcast %1401 : f32 to vector<8x128xf32>
    %1405 = arith.mulf %296, %1404 : vector<8x128xf32>
    %c70 = arith.constant 70 : index
    %1406 = memref.load %arg1[%c70] : memref<256xf32, #tpu.memory_space<smem>>
    %1407 = vector.broadcast %1406 : f32 to vector<8x128xf32>
    %1408 = arith.mulf %271, %1407 : vector<8x128xf32>
    %1409 = arith.addf %1403, %1408 : vector<8x128xf32>
    %1410 = vector.broadcast %1406 : f32 to vector<8x128xf32>
    %1411 = arith.mulf %299, %1410 : vector<8x128xf32>
    %1412 = arith.addf %1405, %1411 : vector<8x128xf32>
    %c74 = arith.constant 74 : index
    %1413 = memref.load %arg1[%c74] : memref<256xf32, #tpu.memory_space<smem>>
    %1414 = vector.broadcast %1413 : f32 to vector<8x128xf32>
    %1415 = arith.mulf %276, %1414 : vector<8x128xf32>
    %1416 = arith.addf %1409, %1415 : vector<8x128xf32>
    %1417 = vector.broadcast %1413 : f32 to vector<8x128xf32>
    %1418 = arith.mulf %304, %1417 : vector<8x128xf32>
    %1419 = arith.addf %1412, %1418 : vector<8x128xf32>
    %c78 = arith.constant 78 : index
    %1420 = memref.load %arg1[%c78] : memref<256xf32, #tpu.memory_space<smem>>
    %1421 = vector.broadcast %1420 : f32 to vector<8x128xf32>
    %1422 = arith.mulf %281, %1421 : vector<8x128xf32>
    %1423 = arith.addf %1416, %1422 : vector<8x128xf32>
    %1424 = vector.broadcast %1420 : f32 to vector<8x128xf32>
    %1425 = arith.mulf %309, %1424 : vector<8x128xf32>
    %1426 = arith.addf %1419, %1425 : vector<8x128xf32>
    %c82 = arith.constant 82 : index
    %1427 = memref.load %arg1[%c82] : memref<256xf32, #tpu.memory_space<smem>>
    %1428 = vector.broadcast %1427 : f32 to vector<8x128xf32>
    %1429 = arith.mulf %286, %1428 : vector<8x128xf32>
    %1430 = arith.addf %1423, %1429 : vector<8x128xf32>
    %1431 = vector.broadcast %1427 : f32 to vector<8x128xf32>
    %1432 = arith.mulf %314, %1431 : vector<8x128xf32>
    %1433 = arith.addf %1426, %1432 : vector<8x128xf32>
    %c86 = arith.constant 86 : index
    %1434 = memref.load %arg1[%c86] : memref<256xf32, #tpu.memory_space<smem>>
    %1435 = vector.broadcast %1434 : f32 to vector<8x128xf32>
    %1436 = arith.mulf %291, %1435 : vector<8x128xf32>
    %1437 = arith.addf %1430, %1436 : vector<8x128xf32>
    %1438 = vector.broadcast %1434 : f32 to vector<8x128xf32>
    %1439 = arith.mulf %319, %1438 : vector<8x128xf32>
    %1440 = arith.addf %1433, %1439 : vector<8x128xf32>
    %c90 = arith.constant 90 : index
    %1441 = memref.load %arg1[%c90] : memref<256xf32, #tpu.memory_space<smem>>
    %1442 = vector.broadcast %1441 : f32 to vector<8x128xf32>
    %1443 = arith.mulf %294, %1442 : vector<8x128xf32>
    %1444 = arith.addf %1437, %1443 : vector<8x128xf32>
    %1445 = vector.broadcast %1441 : f32 to vector<8x128xf32>
    %1446 = arith.mulf %322, %1445 : vector<8x128xf32>
    %1447 = arith.addf %1440, %1446 : vector<8x128xf32>
    %c94 = arith.constant 94 : index
    %1448 = memref.load %arg1[%c94] : memref<256xf32, #tpu.memory_space<smem>>
    %1449 = vector.broadcast %1448 : f32 to vector<8x128xf32>
    %1450 = arith.mulf %295, %1449 : vector<8x128xf32>
    %1451 = arith.addf %1444, %1450 : vector<8x128xf32>
    %1452 = vector.broadcast %1448 : f32 to vector<8x128xf32>
    %1453 = arith.mulf %323, %1452 : vector<8x128xf32>
    %1454 = arith.addf %1447, %1453 : vector<8x128xf32>
    %1455 = arith.mulf %220, %1451 : vector<8x128xf32>
    %1456 = arith.addf %1396, %1455 : vector<8x128xf32>
    %1457 = arith.mulf %248, %1451 : vector<8x128xf32>
    %1458 = arith.addf %1398, %1457 : vector<8x128xf32>
    %1459 = arith.mulf %220, %1454 : vector<8x128xf32>
    %1460 = arith.addf %1400, %1459 : vector<8x128xf32>
    %c98 = arith.constant 98 : index
    %1461 = memref.load %arg1[%c98] : memref<256xf32, #tpu.memory_space<smem>>
    %1462 = vector.broadcast %1461 : f32 to vector<8x128xf32>
    %1463 = arith.mulf %268, %1462 : vector<8x128xf32>
    %1464 = vector.broadcast %1461 : f32 to vector<8x128xf32>
    %1465 = arith.mulf %296, %1464 : vector<8x128xf32>
    %c102 = arith.constant 102 : index
    %1466 = memref.load %arg1[%c102] : memref<256xf32, #tpu.memory_space<smem>>
    %1467 = vector.broadcast %1466 : f32 to vector<8x128xf32>
    %1468 = arith.mulf %271, %1467 : vector<8x128xf32>
    %1469 = arith.addf %1463, %1468 : vector<8x128xf32>
    %1470 = vector.broadcast %1466 : f32 to vector<8x128xf32>
    %1471 = arith.mulf %299, %1470 : vector<8x128xf32>
    %1472 = arith.addf %1465, %1471 : vector<8x128xf32>
    %c106 = arith.constant 106 : index
    %1473 = memref.load %arg1[%c106] : memref<256xf32, #tpu.memory_space<smem>>
    %1474 = vector.broadcast %1473 : f32 to vector<8x128xf32>
    %1475 = arith.mulf %276, %1474 : vector<8x128xf32>
    %1476 = arith.addf %1469, %1475 : vector<8x128xf32>
    %1477 = vector.broadcast %1473 : f32 to vector<8x128xf32>
    %1478 = arith.mulf %304, %1477 : vector<8x128xf32>
    %1479 = arith.addf %1472, %1478 : vector<8x128xf32>
    %c110 = arith.constant 110 : index
    %1480 = memref.load %arg1[%c110] : memref<256xf32, #tpu.memory_space<smem>>
    %1481 = vector.broadcast %1480 : f32 to vector<8x128xf32>
    %1482 = arith.mulf %281, %1481 : vector<8x128xf32>
    %1483 = arith.addf %1476, %1482 : vector<8x128xf32>
    %1484 = vector.broadcast %1480 : f32 to vector<8x128xf32>
    %1485 = arith.mulf %309, %1484 : vector<8x128xf32>
    %1486 = arith.addf %1479, %1485 : vector<8x128xf32>
    %c114 = arith.constant 114 : index
    %1487 = memref.load %arg1[%c114] : memref<256xf32, #tpu.memory_space<smem>>
    %1488 = vector.broadcast %1487 : f32 to vector<8x128xf32>
    %1489 = arith.mulf %286, %1488 : vector<8x128xf32>
    %1490 = arith.addf %1483, %1489 : vector<8x128xf32>
    %1491 = vector.broadcast %1487 : f32 to vector<8x128xf32>
    %1492 = arith.mulf %314, %1491 : vector<8x128xf32>
    %1493 = arith.addf %1486, %1492 : vector<8x128xf32>
    %c118 = arith.constant 118 : index
    %1494 = memref.load %arg1[%c118] : memref<256xf32, #tpu.memory_space<smem>>
    %1495 = vector.broadcast %1494 : f32 to vector<8x128xf32>
    %1496 = arith.mulf %291, %1495 : vector<8x128xf32>
    %1497 = arith.addf %1490, %1496 : vector<8x128xf32>
    %1498 = vector.broadcast %1494 : f32 to vector<8x128xf32>
    %1499 = arith.mulf %319, %1498 : vector<8x128xf32>
    %1500 = arith.addf %1493, %1499 : vector<8x128xf32>
    %c122 = arith.constant 122 : index
    %1501 = memref.load %arg1[%c122] : memref<256xf32, #tpu.memory_space<smem>>
    %1502 = vector.broadcast %1501 : f32 to vector<8x128xf32>
    %1503 = arith.mulf %294, %1502 : vector<8x128xf32>
    %1504 = arith.addf %1497, %1503 : vector<8x128xf32>
    %1505 = vector.broadcast %1501 : f32 to vector<8x128xf32>
    %1506 = arith.mulf %322, %1505 : vector<8x128xf32>
    %1507 = arith.addf %1500, %1506 : vector<8x128xf32>
    %c126 = arith.constant 126 : index
    %1508 = memref.load %arg1[%c126] : memref<256xf32, #tpu.memory_space<smem>>
    %1509 = vector.broadcast %1508 : f32 to vector<8x128xf32>
    %1510 = arith.mulf %295, %1509 : vector<8x128xf32>
    %1511 = arith.addf %1504, %1510 : vector<8x128xf32>
    %1512 = vector.broadcast %1508 : f32 to vector<8x128xf32>
    %1513 = arith.mulf %323, %1512 : vector<8x128xf32>
    %1514 = arith.addf %1507, %1513 : vector<8x128xf32>
    %1515 = arith.mulf %225, %1511 : vector<8x128xf32>
    %1516 = arith.addf %1456, %1515 : vector<8x128xf32>
    %1517 = arith.mulf %253, %1511 : vector<8x128xf32>
    %1518 = arith.addf %1458, %1517 : vector<8x128xf32>
    %1519 = arith.mulf %225, %1514 : vector<8x128xf32>
    %1520 = arith.addf %1460, %1519 : vector<8x128xf32>
    %c130 = arith.constant 130 : index
    %1521 = memref.load %arg1[%c130] : memref<256xf32, #tpu.memory_space<smem>>
    %1522 = vector.broadcast %1521 : f32 to vector<8x128xf32>
    %1523 = arith.mulf %268, %1522 : vector<8x128xf32>
    %1524 = vector.broadcast %1521 : f32 to vector<8x128xf32>
    %1525 = arith.mulf %296, %1524 : vector<8x128xf32>
    %c134 = arith.constant 134 : index
    %1526 = memref.load %arg1[%c134] : memref<256xf32, #tpu.memory_space<smem>>
    %1527 = vector.broadcast %1526 : f32 to vector<8x128xf32>
    %1528 = arith.mulf %271, %1527 : vector<8x128xf32>
    %1529 = arith.addf %1523, %1528 : vector<8x128xf32>
    %1530 = vector.broadcast %1526 : f32 to vector<8x128xf32>
    %1531 = arith.mulf %299, %1530 : vector<8x128xf32>
    %1532 = arith.addf %1525, %1531 : vector<8x128xf32>
    %c138 = arith.constant 138 : index
    %1533 = memref.load %arg1[%c138] : memref<256xf32, #tpu.memory_space<smem>>
    %1534 = vector.broadcast %1533 : f32 to vector<8x128xf32>
    %1535 = arith.mulf %276, %1534 : vector<8x128xf32>
    %1536 = arith.addf %1529, %1535 : vector<8x128xf32>
    %1537 = vector.broadcast %1533 : f32 to vector<8x128xf32>
    %1538 = arith.mulf %304, %1537 : vector<8x128xf32>
    %1539 = arith.addf %1532, %1538 : vector<8x128xf32>
    %c142 = arith.constant 142 : index
    %1540 = memref.load %arg1[%c142] : memref<256xf32, #tpu.memory_space<smem>>
    %1541 = vector.broadcast %1540 : f32 to vector<8x128xf32>
    %1542 = arith.mulf %281, %1541 : vector<8x128xf32>
    %1543 = arith.addf %1536, %1542 : vector<8x128xf32>
    %1544 = vector.broadcast %1540 : f32 to vector<8x128xf32>
    %1545 = arith.mulf %309, %1544 : vector<8x128xf32>
    %1546 = arith.addf %1539, %1545 : vector<8x128xf32>
    %c146 = arith.constant 146 : index
    %1547 = memref.load %arg1[%c146] : memref<256xf32, #tpu.memory_space<smem>>
    %1548 = vector.broadcast %1547 : f32 to vector<8x128xf32>
    %1549 = arith.mulf %286, %1548 : vector<8x128xf32>
    %1550 = arith.addf %1543, %1549 : vector<8x128xf32>
    %1551 = vector.broadcast %1547 : f32 to vector<8x128xf32>
    %1552 = arith.mulf %314, %1551 : vector<8x128xf32>
    %1553 = arith.addf %1546, %1552 : vector<8x128xf32>
    %c150 = arith.constant 150 : index
    %1554 = memref.load %arg1[%c150] : memref<256xf32, #tpu.memory_space<smem>>
    %1555 = vector.broadcast %1554 : f32 to vector<8x128xf32>
    %1556 = arith.mulf %291, %1555 : vector<8x128xf32>
    %1557 = arith.addf %1550, %1556 : vector<8x128xf32>
    %1558 = vector.broadcast %1554 : f32 to vector<8x128xf32>
    %1559 = arith.mulf %319, %1558 : vector<8x128xf32>
    %1560 = arith.addf %1553, %1559 : vector<8x128xf32>
    %c154 = arith.constant 154 : index
    %1561 = memref.load %arg1[%c154] : memref<256xf32, #tpu.memory_space<smem>>
    %1562 = vector.broadcast %1561 : f32 to vector<8x128xf32>
    %1563 = arith.mulf %294, %1562 : vector<8x128xf32>
    %1564 = arith.addf %1557, %1563 : vector<8x128xf32>
    %1565 = vector.broadcast %1561 : f32 to vector<8x128xf32>
    %1566 = arith.mulf %322, %1565 : vector<8x128xf32>
    %1567 = arith.addf %1560, %1566 : vector<8x128xf32>
    %c158 = arith.constant 158 : index
    %1568 = memref.load %arg1[%c158] : memref<256xf32, #tpu.memory_space<smem>>
    %1569 = vector.broadcast %1568 : f32 to vector<8x128xf32>
    %1570 = arith.mulf %295, %1569 : vector<8x128xf32>
    %1571 = arith.addf %1564, %1570 : vector<8x128xf32>
    %1572 = vector.broadcast %1568 : f32 to vector<8x128xf32>
    %1573 = arith.mulf %323, %1572 : vector<8x128xf32>
    %1574 = arith.addf %1567, %1573 : vector<8x128xf32>
    %1575 = arith.mulf %230, %1571 : vector<8x128xf32>
    %1576 = arith.addf %1516, %1575 : vector<8x128xf32>
    %1577 = arith.mulf %258, %1571 : vector<8x128xf32>
    %1578 = arith.addf %1518, %1577 : vector<8x128xf32>
    %1579 = arith.mulf %230, %1574 : vector<8x128xf32>
    %1580 = arith.addf %1520, %1579 : vector<8x128xf32>
    %c162 = arith.constant 162 : index
    %1581 = memref.load %arg1[%c162] : memref<256xf32, #tpu.memory_space<smem>>
    %1582 = vector.broadcast %1581 : f32 to vector<8x128xf32>
    %1583 = arith.mulf %268, %1582 : vector<8x128xf32>
    %1584 = vector.broadcast %1581 : f32 to vector<8x128xf32>
    %1585 = arith.mulf %296, %1584 : vector<8x128xf32>
    %c166 = arith.constant 166 : index
    %1586 = memref.load %arg1[%c166] : memref<256xf32, #tpu.memory_space<smem>>
    %1587 = vector.broadcast %1586 : f32 to vector<8x128xf32>
    %1588 = arith.mulf %271, %1587 : vector<8x128xf32>
    %1589 = arith.addf %1583, %1588 : vector<8x128xf32>
    %1590 = vector.broadcast %1586 : f32 to vector<8x128xf32>
    %1591 = arith.mulf %299, %1590 : vector<8x128xf32>
    %1592 = arith.addf %1585, %1591 : vector<8x128xf32>
    %c170 = arith.constant 170 : index
    %1593 = memref.load %arg1[%c170] : memref<256xf32, #tpu.memory_space<smem>>
    %1594 = vector.broadcast %1593 : f32 to vector<8x128xf32>
    %1595 = arith.mulf %276, %1594 : vector<8x128xf32>
    %1596 = arith.addf %1589, %1595 : vector<8x128xf32>
    %1597 = vector.broadcast %1593 : f32 to vector<8x128xf32>
    %1598 = arith.mulf %304, %1597 : vector<8x128xf32>
    %1599 = arith.addf %1592, %1598 : vector<8x128xf32>
    %c174 = arith.constant 174 : index
    %1600 = memref.load %arg1[%c174] : memref<256xf32, #tpu.memory_space<smem>>
    %1601 = vector.broadcast %1600 : f32 to vector<8x128xf32>
    %1602 = arith.mulf %281, %1601 : vector<8x128xf32>
    %1603 = arith.addf %1596, %1602 : vector<8x128xf32>
    %1604 = vector.broadcast %1600 : f32 to vector<8x128xf32>
    %1605 = arith.mulf %309, %1604 : vector<8x128xf32>
    %1606 = arith.addf %1599, %1605 : vector<8x128xf32>
    %c178 = arith.constant 178 : index
    %1607 = memref.load %arg1[%c178] : memref<256xf32, #tpu.memory_space<smem>>
    %1608 = vector.broadcast %1607 : f32 to vector<8x128xf32>
    %1609 = arith.mulf %286, %1608 : vector<8x128xf32>
    %1610 = arith.addf %1603, %1609 : vector<8x128xf32>
    %1611 = vector.broadcast %1607 : f32 to vector<8x128xf32>
    %1612 = arith.mulf %314, %1611 : vector<8x128xf32>
    %1613 = arith.addf %1606, %1612 : vector<8x128xf32>
    %c182 = arith.constant 182 : index
    %1614 = memref.load %arg1[%c182] : memref<256xf32, #tpu.memory_space<smem>>
    %1615 = vector.broadcast %1614 : f32 to vector<8x128xf32>
    %1616 = arith.mulf %291, %1615 : vector<8x128xf32>
    %1617 = arith.addf %1610, %1616 : vector<8x128xf32>
    %1618 = vector.broadcast %1614 : f32 to vector<8x128xf32>
    %1619 = arith.mulf %319, %1618 : vector<8x128xf32>
    %1620 = arith.addf %1613, %1619 : vector<8x128xf32>
    %c186 = arith.constant 186 : index
    %1621 = memref.load %arg1[%c186] : memref<256xf32, #tpu.memory_space<smem>>
    %1622 = vector.broadcast %1621 : f32 to vector<8x128xf32>
    %1623 = arith.mulf %294, %1622 : vector<8x128xf32>
    %1624 = arith.addf %1617, %1623 : vector<8x128xf32>
    %1625 = vector.broadcast %1621 : f32 to vector<8x128xf32>
    %1626 = arith.mulf %322, %1625 : vector<8x128xf32>
    %1627 = arith.addf %1620, %1626 : vector<8x128xf32>
    %c190 = arith.constant 190 : index
    %1628 = memref.load %arg1[%c190] : memref<256xf32, #tpu.memory_space<smem>>
    %1629 = vector.broadcast %1628 : f32 to vector<8x128xf32>
    %1630 = arith.mulf %295, %1629 : vector<8x128xf32>
    %1631 = arith.addf %1624, %1630 : vector<8x128xf32>
    %1632 = vector.broadcast %1628 : f32 to vector<8x128xf32>
    %1633 = arith.mulf %323, %1632 : vector<8x128xf32>
    %1634 = arith.addf %1627, %1633 : vector<8x128xf32>
    %1635 = arith.mulf %235, %1631 : vector<8x128xf32>
    %1636 = arith.addf %1576, %1635 : vector<8x128xf32>
    %1637 = arith.mulf %263, %1631 : vector<8x128xf32>
    %1638 = arith.addf %1578, %1637 : vector<8x128xf32>
    %1639 = arith.mulf %235, %1634 : vector<8x128xf32>
    %1640 = arith.addf %1580, %1639 : vector<8x128xf32>
    %c194 = arith.constant 194 : index
    %1641 = memref.load %arg1[%c194] : memref<256xf32, #tpu.memory_space<smem>>
    %1642 = vector.broadcast %1641 : f32 to vector<8x128xf32>
    %1643 = arith.mulf %268, %1642 : vector<8x128xf32>
    %1644 = vector.broadcast %1641 : f32 to vector<8x128xf32>
    %1645 = arith.mulf %296, %1644 : vector<8x128xf32>
    %c198 = arith.constant 198 : index
    %1646 = memref.load %arg1[%c198] : memref<256xf32, #tpu.memory_space<smem>>
    %1647 = vector.broadcast %1646 : f32 to vector<8x128xf32>
    %1648 = arith.mulf %271, %1647 : vector<8x128xf32>
    %1649 = arith.addf %1643, %1648 : vector<8x128xf32>
    %1650 = vector.broadcast %1646 : f32 to vector<8x128xf32>
    %1651 = arith.mulf %299, %1650 : vector<8x128xf32>
    %1652 = arith.addf %1645, %1651 : vector<8x128xf32>
    %c202 = arith.constant 202 : index
    %1653 = memref.load %arg1[%c202] : memref<256xf32, #tpu.memory_space<smem>>
    %1654 = vector.broadcast %1653 : f32 to vector<8x128xf32>
    %1655 = arith.mulf %276, %1654 : vector<8x128xf32>
    %1656 = arith.addf %1649, %1655 : vector<8x128xf32>
    %1657 = vector.broadcast %1653 : f32 to vector<8x128xf32>
    %1658 = arith.mulf %304, %1657 : vector<8x128xf32>
    %1659 = arith.addf %1652, %1658 : vector<8x128xf32>
    %c206 = arith.constant 206 : index
    %1660 = memref.load %arg1[%c206] : memref<256xf32, #tpu.memory_space<smem>>
    %1661 = vector.broadcast %1660 : f32 to vector<8x128xf32>
    %1662 = arith.mulf %281, %1661 : vector<8x128xf32>
    %1663 = arith.addf %1656, %1662 : vector<8x128xf32>
    %1664 = vector.broadcast %1660 : f32 to vector<8x128xf32>
    %1665 = arith.mulf %309, %1664 : vector<8x128xf32>
    %1666 = arith.addf %1659, %1665 : vector<8x128xf32>
    %c210 = arith.constant 210 : index
    %1667 = memref.load %arg1[%c210] : memref<256xf32, #tpu.memory_space<smem>>
    %1668 = vector.broadcast %1667 : f32 to vector<8x128xf32>
    %1669 = arith.mulf %286, %1668 : vector<8x128xf32>
    %1670 = arith.addf %1663, %1669 : vector<8x128xf32>
    %1671 = vector.broadcast %1667 : f32 to vector<8x128xf32>
    %1672 = arith.mulf %314, %1671 : vector<8x128xf32>
    %1673 = arith.addf %1666, %1672 : vector<8x128xf32>
    %c214 = arith.constant 214 : index
    %1674 = memref.load %arg1[%c214] : memref<256xf32, #tpu.memory_space<smem>>
    %1675 = vector.broadcast %1674 : f32 to vector<8x128xf32>
    %1676 = arith.mulf %291, %1675 : vector<8x128xf32>
    %1677 = arith.addf %1670, %1676 : vector<8x128xf32>
    %1678 = vector.broadcast %1674 : f32 to vector<8x128xf32>
    %1679 = arith.mulf %319, %1678 : vector<8x128xf32>
    %1680 = arith.addf %1673, %1679 : vector<8x128xf32>
    %c218 = arith.constant 218 : index
    %1681 = memref.load %arg1[%c218] : memref<256xf32, #tpu.memory_space<smem>>
    %1682 = vector.broadcast %1681 : f32 to vector<8x128xf32>
    %1683 = arith.mulf %294, %1682 : vector<8x128xf32>
    %1684 = arith.addf %1677, %1683 : vector<8x128xf32>
    %1685 = vector.broadcast %1681 : f32 to vector<8x128xf32>
    %1686 = arith.mulf %322, %1685 : vector<8x128xf32>
    %1687 = arith.addf %1680, %1686 : vector<8x128xf32>
    %c222 = arith.constant 222 : index
    %1688 = memref.load %arg1[%c222] : memref<256xf32, #tpu.memory_space<smem>>
    %1689 = vector.broadcast %1688 : f32 to vector<8x128xf32>
    %1690 = arith.mulf %295, %1689 : vector<8x128xf32>
    %1691 = arith.addf %1684, %1690 : vector<8x128xf32>
    %1692 = vector.broadcast %1688 : f32 to vector<8x128xf32>
    %1693 = arith.mulf %323, %1692 : vector<8x128xf32>
    %1694 = arith.addf %1687, %1693 : vector<8x128xf32>
    %1695 = arith.mulf %238, %1691 : vector<8x128xf32>
    %1696 = arith.addf %1636, %1695 : vector<8x128xf32>
    %1697 = arith.mulf %266, %1691 : vector<8x128xf32>
    %1698 = arith.addf %1638, %1697 : vector<8x128xf32>
    %1699 = arith.mulf %238, %1694 : vector<8x128xf32>
    %1700 = arith.addf %1640, %1699 : vector<8x128xf32>
    %c226 = arith.constant 226 : index
    %1701 = memref.load %arg1[%c226] : memref<256xf32, #tpu.memory_space<smem>>
    %1702 = vector.broadcast %1701 : f32 to vector<8x128xf32>
    %1703 = arith.mulf %268, %1702 : vector<8x128xf32>
    %1704 = vector.broadcast %1701 : f32 to vector<8x128xf32>
    %1705 = arith.mulf %296, %1704 : vector<8x128xf32>
    %c230 = arith.constant 230 : index
    %1706 = memref.load %arg1[%c230] : memref<256xf32, #tpu.memory_space<smem>>
    %1707 = vector.broadcast %1706 : f32 to vector<8x128xf32>
    %1708 = arith.mulf %271, %1707 : vector<8x128xf32>
    %1709 = arith.addf %1703, %1708 : vector<8x128xf32>
    %1710 = vector.broadcast %1706 : f32 to vector<8x128xf32>
    %1711 = arith.mulf %299, %1710 : vector<8x128xf32>
    %1712 = arith.addf %1705, %1711 : vector<8x128xf32>
    %c234 = arith.constant 234 : index
    %1713 = memref.load %arg1[%c234] : memref<256xf32, #tpu.memory_space<smem>>
    %1714 = vector.broadcast %1713 : f32 to vector<8x128xf32>
    %1715 = arith.mulf %276, %1714 : vector<8x128xf32>
    %1716 = arith.addf %1709, %1715 : vector<8x128xf32>
    %1717 = vector.broadcast %1713 : f32 to vector<8x128xf32>
    %1718 = arith.mulf %304, %1717 : vector<8x128xf32>
    %1719 = arith.addf %1712, %1718 : vector<8x128xf32>
    %c238 = arith.constant 238 : index
    %1720 = memref.load %arg1[%c238] : memref<256xf32, #tpu.memory_space<smem>>
    %1721 = vector.broadcast %1720 : f32 to vector<8x128xf32>
    %1722 = arith.mulf %281, %1721 : vector<8x128xf32>
    %1723 = arith.addf %1716, %1722 : vector<8x128xf32>
    %1724 = vector.broadcast %1720 : f32 to vector<8x128xf32>
    %1725 = arith.mulf %309, %1724 : vector<8x128xf32>
    %1726 = arith.addf %1719, %1725 : vector<8x128xf32>
    %c242 = arith.constant 242 : index
    %1727 = memref.load %arg1[%c242] : memref<256xf32, #tpu.memory_space<smem>>
    %1728 = vector.broadcast %1727 : f32 to vector<8x128xf32>
    %1729 = arith.mulf %286, %1728 : vector<8x128xf32>
    %1730 = arith.addf %1723, %1729 : vector<8x128xf32>
    %1731 = vector.broadcast %1727 : f32 to vector<8x128xf32>
    %1732 = arith.mulf %314, %1731 : vector<8x128xf32>
    %1733 = arith.addf %1726, %1732 : vector<8x128xf32>
    %c246 = arith.constant 246 : index
    %1734 = memref.load %arg1[%c246] : memref<256xf32, #tpu.memory_space<smem>>
    %1735 = vector.broadcast %1734 : f32 to vector<8x128xf32>
    %1736 = arith.mulf %291, %1735 : vector<8x128xf32>
    %1737 = arith.addf %1730, %1736 : vector<8x128xf32>
    %1738 = vector.broadcast %1734 : f32 to vector<8x128xf32>
    %1739 = arith.mulf %319, %1738 : vector<8x128xf32>
    %1740 = arith.addf %1733, %1739 : vector<8x128xf32>
    %c250 = arith.constant 250 : index
    %1741 = memref.load %arg1[%c250] : memref<256xf32, #tpu.memory_space<smem>>
    %1742 = vector.broadcast %1741 : f32 to vector<8x128xf32>
    %1743 = arith.mulf %294, %1742 : vector<8x128xf32>
    %1744 = arith.addf %1737, %1743 : vector<8x128xf32>
    %1745 = vector.broadcast %1741 : f32 to vector<8x128xf32>
    %1746 = arith.mulf %322, %1745 : vector<8x128xf32>
    %1747 = arith.addf %1740, %1746 : vector<8x128xf32>
    %c254 = arith.constant 254 : index
    %1748 = memref.load %arg1[%c254] : memref<256xf32, #tpu.memory_space<smem>>
    %1749 = vector.broadcast %1748 : f32 to vector<8x128xf32>
    %1750 = arith.mulf %295, %1749 : vector<8x128xf32>
    %1751 = arith.addf %1744, %1750 : vector<8x128xf32>
    %1752 = vector.broadcast %1748 : f32 to vector<8x128xf32>
    %1753 = arith.mulf %323, %1752 : vector<8x128xf32>
    %1754 = arith.addf %1747, %1753 : vector<8x128xf32>
    %1755 = arith.mulf %239, %1751 : vector<8x128xf32>
    %1756 = arith.addf %1696, %1755 : vector<8x128xf32>
    %1757 = arith.mulf %267, %1751 : vector<8x128xf32>
    %1758 = arith.addf %1698, %1757 : vector<8x128xf32>
    %1759 = arith.mulf %239, %1754 : vector<8x128xf32>
    %1760 = arith.addf %1700, %1759 : vector<8x128xf32>
    %c2_75 = arith.constant 2 : index
    %c0_76 = arith.constant 0 : index
    %c0_77 = arith.constant 0 : index
    %1761 = vector.load %arg3[%c2_75, %c0_76, %c0_77] : memref<8x16x128xf32, #tpu.memory_space<vmem>>, vector<1x8x128xf32>
    %1762 = vector.shape_cast %1761 : vector<1x8x128xf32> to vector<8x128xf32>
    %1763 = vector.shape_cast %1756 : vector<8x128xf32> to vector<1x8x128xf32>
    tpu.vector_store %arg3[%c2_75, %c0_76, %c0_77], %1763 {strides = array<i32>} : memref<8x16x128xf32, #tpu.memory_space<vmem>>, vector<1x8x128xf32>,
    %c3 = arith.constant 3 : index
    %1764 = memref.load %arg1[%c3] : memref<256xf32, #tpu.memory_space<smem>>
    %1765 = vector.broadcast %1764 : f32 to vector<8x128xf32>
    %1766 = arith.mulf %268, %1765 : vector<8x128xf32>
    %c7 = arith.constant 7 : index
    %1767 = memref.load %arg1[%c7] : memref<256xf32, #tpu.memory_space<smem>>
    %1768 = vector.broadcast %1767 : f32 to vector<8x128xf32>
    %1769 = arith.mulf %271, %1768 : vector<8x128xf32>
    %1770 = arith.addf %1766, %1769 : vector<8x128xf32>
    %c11 = arith.constant 11 : index
    %1771 = memref.load %arg1[%c11] : memref<256xf32, #tpu.memory_space<smem>>
    %1772 = vector.broadcast %1771 : f32 to vector<8x128xf32>
    %1773 = arith.mulf %276, %1772 : vector<8x128xf32>
    %1774 = arith.addf %1770, %1773 : vector<8x128xf32>
    %c15 = arith.constant 15 : index
    %1775 = memref.load %arg1[%c15] : memref<256xf32, #tpu.memory_space<smem>>
    %1776 = vector.broadcast %1775 : f32 to vector<8x128xf32>
    %1777 = arith.mulf %281, %1776 : vector<8x128xf32>
    %1778 = arith.addf %1774, %1777 : vector<8x128xf32>
    %c19 = arith.constant 19 : index
    %1779 = memref.load %arg1[%c19] : memref<256xf32, #tpu.memory_space<smem>>
    %1780 = vector.broadcast %1779 : f32 to vector<8x128xf32>
    %1781 = arith.mulf %286, %1780 : vector<8x128xf32>
    %1782 = arith.addf %1778, %1781 : vector<8x128xf32>
    %c23 = arith.constant 23 : index
    %1783 = memref.load %arg1[%c23] : memref<256xf32, #tpu.memory_space<smem>>
    %1784 = vector.broadcast %1783 : f32 to vector<8x128xf32>
    %1785 = arith.mulf %291, %1784 : vector<8x128xf32>
    %1786 = arith.addf %1782, %1785 : vector<8x128xf32>
    %c27 = arith.constant 27 : index
    %1787 = memref.load %arg1[%c27] : memref<256xf32, #tpu.memory_space<smem>>
    %1788 = vector.broadcast %1787 : f32 to vector<8x128xf32>
    %1789 = arith.mulf %294, %1788 : vector<8x128xf32>
    %1790 = arith.addf %1786, %1789 : vector<8x128xf32>
    %c31 = arith.constant 31 : index
    %1791 = memref.load %arg1[%c31] : memref<256xf32, #tpu.memory_space<smem>>
    %1792 = vector.broadcast %1791 : f32 to vector<8x128xf32>
    %1793 = arith.mulf %295, %1792 : vector<8x128xf32>
    %1794 = arith.addf %1790, %1793 : vector<8x128xf32>
    %1795 = arith.mulf %212, %1794 : vector<8x128xf32>
    %c35 = arith.constant 35 : index
    %1796 = memref.load %arg1[%c35] : memref<256xf32, #tpu.memory_space<smem>>
    %1797 = vector.broadcast %1796 : f32 to vector<8x128xf32>
    %1798 = arith.mulf %268, %1797 : vector<8x128xf32>
    %c39 = arith.constant 39 : index
    %1799 = memref.load %arg1[%c39] : memref<256xf32, #tpu.memory_space<smem>>
    %1800 = vector.broadcast %1799 : f32 to vector<8x128xf32>
    %1801 = arith.mulf %271, %1800 : vector<8x128xf32>
    %1802 = arith.addf %1798, %1801 : vector<8x128xf32>
    %c43 = arith.constant 43 : index
    %1803 = memref.load %arg1[%c43] : memref<256xf32, #tpu.memory_space<smem>>
    %1804 = vector.broadcast %1803 : f32 to vector<8x128xf32>
    %1805 = arith.mulf %276, %1804 : vector<8x128xf32>
    %1806 = arith.addf %1802, %1805 : vector<8x128xf32>
    %c47 = arith.constant 47 : index
    %1807 = memref.load %arg1[%c47] : memref<256xf32, #tpu.memory_space<smem>>
    %1808 = vector.broadcast %1807 : f32 to vector<8x128xf32>
    %1809 = arith.mulf %281, %1808 : vector<8x128xf32>
    %1810 = arith.addf %1806, %1809 : vector<8x128xf32>
    %c51 = arith.constant 51 : index
    %1811 = memref.load %arg1[%c51] : memref<256xf32, #tpu.memory_space<smem>>
    %1812 = vector.broadcast %1811 : f32 to vector<8x128xf32>
    %1813 = arith.mulf %286, %1812 : vector<8x128xf32>
    %1814 = arith.addf %1810, %1813 : vector<8x128xf32>
    %c55 = arith.constant 55 : index
    %1815 = memref.load %arg1[%c55] : memref<256xf32, #tpu.memory_space<smem>>
    %1816 = vector.broadcast %1815 : f32 to vector<8x128xf32>
    %1817 = arith.mulf %291, %1816 : vector<8x128xf32>
    %1818 = arith.addf %1814, %1817 : vector<8x128xf32>
    %c59 = arith.constant 59 : index
    %1819 = memref.load %arg1[%c59] : memref<256xf32, #tpu.memory_space<smem>>
    %1820 = vector.broadcast %1819 : f32 to vector<8x128xf32>
    %1821 = arith.mulf %294, %1820 : vector<8x128xf32>
    %1822 = arith.addf %1818, %1821 : vector<8x128xf32>
    %c63 = arith.constant 63 : index
    %1823 = memref.load %arg1[%c63] : memref<256xf32, #tpu.memory_space<smem>>
    %1824 = vector.broadcast %1823 : f32 to vector<8x128xf32>
    %1825 = arith.mulf %295, %1824 : vector<8x128xf32>
    %1826 = arith.addf %1822, %1825 : vector<8x128xf32>
    %1827 = arith.mulf %215, %1826 : vector<8x128xf32>
    %1828 = arith.addf %1795, %1827 : vector<8x128xf32>
    %c67 = arith.constant 67 : index
    %1829 = memref.load %arg1[%c67] : memref<256xf32, #tpu.memory_space<smem>>
    %1830 = vector.broadcast %1829 : f32 to vector<8x128xf32>
    %1831 = arith.mulf %268, %1830 : vector<8x128xf32>
    %c71 = arith.constant 71 : index
    %1832 = memref.load %arg1[%c71] : memref<256xf32, #tpu.memory_space<smem>>
    %1833 = vector.broadcast %1832 : f32 to vector<8x128xf32>
    %1834 = arith.mulf %271, %1833 : vector<8x128xf32>
    %1835 = arith.addf %1831, %1834 : vector<8x128xf32>
    %c75 = arith.constant 75 : index
    %1836 = memref.load %arg1[%c75] : memref<256xf32, #tpu.memory_space<smem>>
    %1837 = vector.broadcast %1836 : f32 to vector<8x128xf32>
    %1838 = arith.mulf %276, %1837 : vector<8x128xf32>
    %1839 = arith.addf %1835, %1838 : vector<8x128xf32>
    %c79 = arith.constant 79 : index
    %1840 = memref.load %arg1[%c79] : memref<256xf32, #tpu.memory_space<smem>>
    %1841 = vector.broadcast %1840 : f32 to vector<8x128xf32>
    %1842 = arith.mulf %281, %1841 : vector<8x128xf32>
    %1843 = arith.addf %1839, %1842 : vector<8x128xf32>
    %c83 = arith.constant 83 : index
    %1844 = memref.load %arg1[%c83] : memref<256xf32, #tpu.memory_space<smem>>
    %1845 = vector.broadcast %1844 : f32 to vector<8x128xf32>
    %1846 = arith.mulf %286, %1845 : vector<8x128xf32>
    %1847 = arith.addf %1843, %1846 : vector<8x128xf32>
    %c87 = arith.constant 87 : index
    %1848 = memref.load %arg1[%c87] : memref<256xf32, #tpu.memory_space<smem>>
    %1849 = vector.broadcast %1848 : f32 to vector<8x128xf32>
    %1850 = arith.mulf %291, %1849 : vector<8x128xf32>
    %1851 = arith.addf %1847, %1850 : vector<8x128xf32>
    %c91 = arith.constant 91 : index
    %1852 = memref.load %arg1[%c91] : memref<256xf32, #tpu.memory_space<smem>>
    %1853 = vector.broadcast %1852 : f32 to vector<8x128xf32>
    %1854 = arith.mulf %294, %1853 : vector<8x128xf32>
    %1855 = arith.addf %1851, %1854 : vector<8x128xf32>
    %c95 = arith.constant 95 : index
    %1856 = memref.load %arg1[%c95] : memref<256xf32, #tpu.memory_space<smem>>
    %1857 = vector.broadcast %1856 : f32 to vector<8x128xf32>
    %1858 = arith.mulf %295, %1857 : vector<8x128xf32>
    %1859 = arith.addf %1855, %1858 : vector<8x128xf32>
    %1860 = arith.mulf %220, %1859 : vector<8x128xf32>
    %1861 = arith.addf %1828, %1860 : vector<8x128xf32>
    %c99 = arith.constant 99 : index
    %1862 = memref.load %arg1[%c99] : memref<256xf32, #tpu.memory_space<smem>>
    %1863 = vector.broadcast %1862 : f32 to vector<8x128xf32>
    %1864 = arith.mulf %268, %1863 : vector<8x128xf32>
    %c103 = arith.constant 103 : index
    %1865 = memref.load %arg1[%c103] : memref<256xf32, #tpu.memory_space<smem>>
    %1866 = vector.broadcast %1865 : f32 to vector<8x128xf32>
    %1867 = arith.mulf %271, %1866 : vector<8x128xf32>
    %1868 = arith.addf %1864, %1867 : vector<8x128xf32>
    %c107 = arith.constant 107 : index
    %1869 = memref.load %arg1[%c107] : memref<256xf32, #tpu.memory_space<smem>>
    %1870 = vector.broadcast %1869 : f32 to vector<8x128xf32>
    %1871 = arith.mulf %276, %1870 : vector<8x128xf32>
    %1872 = arith.addf %1868, %1871 : vector<8x128xf32>
    %c111 = arith.constant 111 : index
    %1873 = memref.load %arg1[%c111] : memref<256xf32, #tpu.memory_space<smem>>
    %1874 = vector.broadcast %1873 : f32 to vector<8x128xf32>
    %1875 = arith.mulf %281, %1874 : vector<8x128xf32>
    %1876 = arith.addf %1872, %1875 : vector<8x128xf32>
    %c115 = arith.constant 115 : index
    %1877 = memref.load %arg1[%c115] : memref<256xf32, #tpu.memory_space<smem>>
    %1878 = vector.broadcast %1877 : f32 to vector<8x128xf32>
    %1879 = arith.mulf %286, %1878 : vector<8x128xf32>
    %1880 = arith.addf %1876, %1879 : vector<8x128xf32>
    %c119 = arith.constant 119 : index
    %1881 = memref.load %arg1[%c119] : memref<256xf32, #tpu.memory_space<smem>>
    %1882 = vector.broadcast %1881 : f32 to vector<8x128xf32>
    %1883 = arith.mulf %291, %1882 : vector<8x128xf32>
    %1884 = arith.addf %1880, %1883 : vector<8x128xf32>
    %c123 = arith.constant 123 : index
    %1885 = memref.load %arg1[%c123] : memref<256xf32, #tpu.memory_space<smem>>
    %1886 = vector.broadcast %1885 : f32 to vector<8x128xf32>
    %1887 = arith.mulf %294, %1886 : vector<8x128xf32>
    %1888 = arith.addf %1884, %1887 : vector<8x128xf32>
    %c127 = arith.constant 127 : index
    %1889 = memref.load %arg1[%c127] : memref<256xf32, #tpu.memory_space<smem>>
    %1890 = vector.broadcast %1889 : f32 to vector<8x128xf32>
    %1891 = arith.mulf %295, %1890 : vector<8x128xf32>
    %1892 = arith.addf %1888, %1891 : vector<8x128xf32>
    %1893 = arith.mulf %225, %1892 : vector<8x128xf32>
    %1894 = arith.addf %1861, %1893 : vector<8x128xf32>
    %c131 = arith.constant 131 : index
    %1895 = memref.load %arg1[%c131] : memref<256xf32, #tpu.memory_space<smem>>
    %1896 = vector.broadcast %1895 : f32 to vector<8x128xf32>
    %1897 = arith.mulf %268, %1896 : vector<8x128xf32>
    %c135 = arith.constant 135 : index
    %1898 = memref.load %arg1[%c135] : memref<256xf32, #tpu.memory_space<smem>>
    %1899 = vector.broadcast %1898 : f32 to vector<8x128xf32>
    %1900 = arith.mulf %271, %1899 : vector<8x128xf32>
    %1901 = arith.addf %1897, %1900 : vector<8x128xf32>
    %c139 = arith.constant 139 : index
    %1902 = memref.load %arg1[%c139] : memref<256xf32, #tpu.memory_space<smem>>
    %1903 = vector.broadcast %1902 : f32 to vector<8x128xf32>
    %1904 = arith.mulf %276, %1903 : vector<8x128xf32>
    %1905 = arith.addf %1901, %1904 : vector<8x128xf32>
    %c143 = arith.constant 143 : index
    %1906 = memref.load %arg1[%c143] : memref<256xf32, #tpu.memory_space<smem>>
    %1907 = vector.broadcast %1906 : f32 to vector<8x128xf32>
    %1908 = arith.mulf %281, %1907 : vector<8x128xf32>
    %1909 = arith.addf %1905, %1908 : vector<8x128xf32>
    %c147 = arith.constant 147 : index
    %1910 = memref.load %arg1[%c147] : memref<256xf32, #tpu.memory_space<smem>>
    %1911 = vector.broadcast %1910 : f32 to vector<8x128xf32>
    %1912 = arith.mulf %286, %1911 : vector<8x128xf32>
    %1913 = arith.addf %1909, %1912 : vector<8x128xf32>
    %c151 = arith.constant 151 : index
    %1914 = memref.load %arg1[%c151] : memref<256xf32, #tpu.memory_space<smem>>
    %1915 = vector.broadcast %1914 : f32 to vector<8x128xf32>
    %1916 = arith.mulf %291, %1915 : vector<8x128xf32>
    %1917 = arith.addf %1913, %1916 : vector<8x128xf32>
    %c155 = arith.constant 155 : index
    %1918 = memref.load %arg1[%c155] : memref<256xf32, #tpu.memory_space<smem>>
    %1919 = vector.broadcast %1918 : f32 to vector<8x128xf32>
    %1920 = arith.mulf %294, %1919 : vector<8x128xf32>
    %1921 = arith.addf %1917, %1920 : vector<8x128xf32>
    %c159 = arith.constant 159 : index
    %1922 = memref.load %arg1[%c159] : memref<256xf32, #tpu.memory_space<smem>>
    %1923 = vector.broadcast %1922 : f32 to vector<8x128xf32>
    %1924 = arith.mulf %295, %1923 : vector<8x128xf32>
    %1925 = arith.addf %1921, %1924 : vector<8x128xf32>
    %1926 = arith.mulf %230, %1925 : vector<8x128xf32>
    %1927 = arith.addf %1894, %1926 : vector<8x128xf32>
    %c163 = arith.constant 163 : index
    %1928 = memref.load %arg1[%c163] : memref<256xf32, #tpu.memory_space<smem>>
    %1929 = vector.broadcast %1928 : f32 to vector<8x128xf32>
    %1930 = arith.mulf %268, %1929 : vector<8x128xf32>
    %c167 = arith.constant 167 : index
    %1931 = memref.load %arg1[%c167] : memref<256xf32, #tpu.memory_space<smem>>
    %1932 = vector.broadcast %1931 : f32 to vector<8x128xf32>
    %1933 = arith.mulf %271, %1932 : vector<8x128xf32>
    %1934 = arith.addf %1930, %1933 : vector<8x128xf32>
    %c171 = arith.constant 171 : index
    %1935 = memref.load %arg1[%c171] : memref<256xf32, #tpu.memory_space<smem>>
    %1936 = vector.broadcast %1935 : f32 to vector<8x128xf32>
    %1937 = arith.mulf %276, %1936 : vector<8x128xf32>
    %1938 = arith.addf %1934, %1937 : vector<8x128xf32>
    %c175 = arith.constant 175 : index
    %1939 = memref.load %arg1[%c175] : memref<256xf32, #tpu.memory_space<smem>>
    %1940 = vector.broadcast %1939 : f32 to vector<8x128xf32>
    %1941 = arith.mulf %281, %1940 : vector<8x128xf32>
    %1942 = arith.addf %1938, %1941 : vector<8x128xf32>
    %c179 = arith.constant 179 : index
    %1943 = memref.load %arg1[%c179] : memref<256xf32, #tpu.memory_space<smem>>
    %1944 = vector.broadcast %1943 : f32 to vector<8x128xf32>
    %1945 = arith.mulf %286, %1944 : vector<8x128xf32>
    %1946 = arith.addf %1942, %1945 : vector<8x128xf32>
    %c183 = arith.constant 183 : index
    %1947 = memref.load %arg1[%c183] : memref<256xf32, #tpu.memory_space<smem>>
    %1948 = vector.broadcast %1947 : f32 to vector<8x128xf32>
    %1949 = arith.mulf %291, %1948 : vector<8x128xf32>
    %1950 = arith.addf %1946, %1949 : vector<8x128xf32>
    %c187 = arith.constant 187 : index
    %1951 = memref.load %arg1[%c187] : memref<256xf32, #tpu.memory_space<smem>>
    %1952 = vector.broadcast %1951 : f32 to vector<8x128xf32>
    %1953 = arith.mulf %294, %1952 : vector<8x128xf32>
    %1954 = arith.addf %1950, %1953 : vector<8x128xf32>
    %c191 = arith.constant 191 : index
    %1955 = memref.load %arg1[%c191] : memref<256xf32, #tpu.memory_space<smem>>
    %1956 = vector.broadcast %1955 : f32 to vector<8x128xf32>
    %1957 = arith.mulf %295, %1956 : vector<8x128xf32>
    %1958 = arith.addf %1954, %1957 : vector<8x128xf32>
    %1959 = arith.mulf %235, %1958 : vector<8x128xf32>
    %1960 = arith.addf %1927, %1959 : vector<8x128xf32>
    %c195 = arith.constant 195 : index
    %1961 = memref.load %arg1[%c195] : memref<256xf32, #tpu.memory_space<smem>>
    %1962 = vector.broadcast %1961 : f32 to vector<8x128xf32>
    %1963 = arith.mulf %268, %1962 : vector<8x128xf32>
    %c199 = arith.constant 199 : index
    %1964 = memref.load %arg1[%c199] : memref<256xf32, #tpu.memory_space<smem>>
    %1965 = vector.broadcast %1964 : f32 to vector<8x128xf32>
    %1966 = arith.mulf %271, %1965 : vector<8x128xf32>
    %1967 = arith.addf %1963, %1966 : vector<8x128xf32>
    %c203 = arith.constant 203 : index
    %1968 = memref.load %arg1[%c203] : memref<256xf32, #tpu.memory_space<smem>>
    %1969 = vector.broadcast %1968 : f32 to vector<8x128xf32>
    %1970 = arith.mulf %276, %1969 : vector<8x128xf32>
    %1971 = arith.addf %1967, %1970 : vector<8x128xf32>
    %c207 = arith.constant 207 : index
    %1972 = memref.load %arg1[%c207] : memref<256xf32, #tpu.memory_space<smem>>
    %1973 = vector.broadcast %1972 : f32 to vector<8x128xf32>
    %1974 = arith.mulf %281, %1973 : vector<8x128xf32>
    %1975 = arith.addf %1971, %1974 : vector<8x128xf32>
    %c211 = arith.constant 211 : index
    %1976 = memref.load %arg1[%c211] : memref<256xf32, #tpu.memory_space<smem>>
    %1977 = vector.broadcast %1976 : f32 to vector<8x128xf32>
    %1978 = arith.mulf %286, %1977 : vector<8x128xf32>
    %1979 = arith.addf %1975, %1978 : vector<8x128xf32>
    %c215 = arith.constant 215 : index
    %1980 = memref.load %arg1[%c215] : memref<256xf32, #tpu.memory_space<smem>>
    %1981 = vector.broadcast %1980 : f32 to vector<8x128xf32>
    %1982 = arith.mulf %291, %1981 : vector<8x128xf32>
    %1983 = arith.addf %1979, %1982 : vector<8x128xf32>
    %c219 = arith.constant 219 : index
    %1984 = memref.load %arg1[%c219] : memref<256xf32, #tpu.memory_space<smem>>
    %1985 = vector.broadcast %1984 : f32 to vector<8x128xf32>
    %1986 = arith.mulf %294, %1985 : vector<8x128xf32>
    %1987 = arith.addf %1983, %1986 : vector<8x128xf32>
    %c223 = arith.constant 223 : index
    %1988 = memref.load %arg1[%c223] : memref<256xf32, #tpu.memory_space<smem>>
    %1989 = vector.broadcast %1988 : f32 to vector<8x128xf32>
    %1990 = arith.mulf %295, %1989 : vector<8x128xf32>
    %1991 = arith.addf %1987, %1990 : vector<8x128xf32>
    %1992 = arith.mulf %238, %1991 : vector<8x128xf32>
    %1993 = arith.addf %1960, %1992 : vector<8x128xf32>
    %c227 = arith.constant 227 : index
    %1994 = memref.load %arg1[%c227] : memref<256xf32, #tpu.memory_space<smem>>
    %1995 = vector.broadcast %1994 : f32 to vector<8x128xf32>
    %1996 = arith.mulf %268, %1995 : vector<8x128xf32>
    %c231 = arith.constant 231 : index
    %1997 = memref.load %arg1[%c231] : memref<256xf32, #tpu.memory_space<smem>>
    %1998 = vector.broadcast %1997 : f32 to vector<8x128xf32>
    %1999 = arith.mulf %271, %1998 : vector<8x128xf32>
    %2000 = arith.addf %1996, %1999 : vector<8x128xf32>
    %c235 = arith.constant 235 : index
    %2001 = memref.load %arg1[%c235] : memref<256xf32, #tpu.memory_space<smem>>
    %2002 = vector.broadcast %2001 : f32 to vector<8x128xf32>
    %2003 = arith.mulf %276, %2002 : vector<8x128xf32>
    %2004 = arith.addf %2000, %2003 : vector<8x128xf32>
    %c239 = arith.constant 239 : index
    %2005 = memref.load %arg1[%c239] : memref<256xf32, #tpu.memory_space<smem>>
    %2006 = vector.broadcast %2005 : f32 to vector<8x128xf32>
    %2007 = arith.mulf %281, %2006 : vector<8x128xf32>
    %2008 = arith.addf %2004, %2007 : vector<8x128xf32>
    %c243 = arith.constant 243 : index
    %2009 = memref.load %arg1[%c243] : memref<256xf32, #tpu.memory_space<smem>>
    %2010 = vector.broadcast %2009 : f32 to vector<8x128xf32>
    %2011 = arith.mulf %286, %2010 : vector<8x128xf32>
    %2012 = arith.addf %2008, %2011 : vector<8x128xf32>
    %c247 = arith.constant 247 : index
    %2013 = memref.load %arg1[%c247] : memref<256xf32, #tpu.memory_space<smem>>
    %2014 = vector.broadcast %2013 : f32 to vector<8x128xf32>
    %2015 = arith.mulf %291, %2014 : vector<8x128xf32>
    %2016 = arith.addf %2012, %2015 : vector<8x128xf32>
    %c251 = arith.constant 251 : index
    %2017 = memref.load %arg1[%c251] : memref<256xf32, #tpu.memory_space<smem>>
    %2018 = vector.broadcast %2017 : f32 to vector<8x128xf32>
    %2019 = arith.mulf %294, %2018 : vector<8x128xf32>
    %2020 = arith.addf %2016, %2019 : vector<8x128xf32>
    %c255 = arith.constant 255 : index
    %2021 = memref.load %arg1[%c255] : memref<256xf32, #tpu.memory_space<smem>>
    %2022 = vector.broadcast %2021 : f32 to vector<8x128xf32>
    %2023 = arith.mulf %295, %2022 : vector<8x128xf32>
    %2024 = arith.addf %2020, %2023 : vector<8x128xf32>
    %2025 = arith.mulf %239, %2024 : vector<8x128xf32>
    %2026 = arith.addf %1993, %2025 : vector<8x128xf32>
    %c3_78 = arith.constant 3 : index
    %c0_79 = arith.constant 0 : index
    %c0_80 = arith.constant 0 : index
    %2027 = vector.load %arg3[%c3_78, %c0_79, %c0_80] : memref<8x16x128xf32, #tpu.memory_space<vmem>>, vector<1x8x128xf32>
    %2028 = vector.shape_cast %2027 : vector<1x8x128xf32> to vector<8x128xf32>
    %2029 = vector.shape_cast %2026 : vector<8x128xf32> to vector<1x8x128xf32>
    tpu.vector_store %arg3[%c3_78, %c0_79, %c0_80], %2029 {strides = array<i32>} : memref<8x16x128xf32, #tpu.memory_space<vmem>>, vector<1x8x128xf32>,
    %2030 = arith.mulf %1278, %1760 : vector<8x128xf32>
    %2031 = arith.mulf %1758, %1280 : vector<8x128xf32>
    %2032 = arith.subf %2030, %2031 : vector<8x128xf32>
    %2033 = arith.mulf %1758, %800 : vector<8x128xf32>
    %2034 = arith.mulf %798, %1760 : vector<8x128xf32>
    %2035 = arith.subf %2033, %2034 : vector<8x128xf32>
    %2036 = arith.mulf %798, %1280 : vector<8x128xf32>
    %2037 = arith.mulf %1278, %800 : vector<8x128xf32>
    %2038 = arith.subf %2036, %2037 : vector<8x128xf32>
    %2039 = arith.mulf %2032, %2032 : vector<8x128xf32>
    %2040 = arith.mulf %2035, %2035 : vector<8x128xf32>
    %2041 = arith.addf %2039, %2040 : vector<8x128xf32>
    %2042 = arith.mulf %2038, %2038 : vector<8x128xf32>
    %2043 = arith.addf %2041, %2042 : vector<8x128xf32>
    %cst_81 = arith.constant 1.000000e-24 : f32
    %2044 = vector.broadcast %cst_81 : f32 to vector<8x128xf32>
    %2045 = arith.maximumf %2043, %2044 : vector<8x128xf32>
    %2046 = math.rsqrt %2045 : vector<8x128xf32>
    %2047 = arith.mulf %2032, %2046 : vector<8x128xf32>
    %c4_82 = arith.constant 4 : index
    %c0_83 = arith.constant 0 : index
    %c0_84 = arith.constant 0 : index
    %2048 = vector.load %arg3[%c4_82, %c0_83, %c0_84] : memref<8x16x128xf32, #tpu.memory_space<vmem>>, vector<1x8x128xf32>
    %2049 = vector.shape_cast %2048 : vector<1x8x128xf32> to vector<8x128xf32>
    %2050 = vector.shape_cast %2047 : vector<8x128xf32> to vector<1x8x128xf32>
    tpu.vector_store %arg3[%c4_82, %c0_83, %c0_84], %2050 {strides = array<i32>} : memref<8x16x128xf32, #tpu.memory_space<vmem>>, vector<1x8x128xf32>,
    %2051 = arith.mulf %2035, %2046 : vector<8x128xf32>
    %c5_85 = arith.constant 5 : index
    %c0_86 = arith.constant 0 : index
    %c0_87 = arith.constant 0 : index
    %2052 = vector.load %arg3[%c5_85, %c0_86, %c0_87] : memref<8x16x128xf32, #tpu.memory_space<vmem>>, vector<1x8x128xf32>
    %2053 = vector.shape_cast %2052 : vector<1x8x128xf32> to vector<8x128xf32>
    %2054 = vector.shape_cast %2051 : vector<8x128xf32> to vector<1x8x128xf32>
    tpu.vector_store %arg3[%c5_85, %c0_86, %c0_87], %2054 {strides = array<i32>} : memref<8x16x128xf32, #tpu.memory_space<vmem>>, vector<1x8x128xf32>,
    %2055 = arith.mulf %2038, %2046 : vector<8x128xf32>
    %c6_88 = arith.constant 6 : index
    %c0_89 = arith.constant 0 : index
    %c0_90 = arith.constant 0 : index
    %2056 = vector.load %arg3[%c6_88, %c0_89, %c0_90] : memref<8x16x128xf32, #tpu.memory_space<vmem>>, vector<1x8x128xf32>
    %2057 = vector.shape_cast %2056 : vector<1x8x128xf32> to vector<8x128xf32>
    %2058 = vector.shape_cast %2055 : vector<8x128xf32> to vector<1x8x128xf32>
    tpu.vector_store %arg3[%c6_88, %c0_89, %c0_90], %2058 {strides = array<i32>} : memref<8x16x128xf32, #tpu.memory_space<vmem>>, vector<1x8x128xf32>,
    %cst_91 = arith.constant 0.000000e+00 : f32
    %2059 = vector.broadcast %cst_91 : f32 to vector<8x128xf32>
    %c7_92 = arith.constant 7 : index
    %c0_93 = arith.constant 0 : index
    %c0_94 = arith.constant 0 : index
    %2060 = vector.load %arg3[%c7_92, %c0_93, %c0_94] : memref<8x16x128xf32, #tpu.memory_space<vmem>>, vector<1x8x128xf32>
    %2061 = vector.shape_cast %2060 : vector<1x8x128xf32> to vector<8x128xf32>
    %2062 = vector.shape_cast %2059 : vector<8x128xf32> to vector<1x8x128xf32>
    tpu.vector_store %arg3[%c7_92, %c0_93, %c0_94], %2062 {strides = array<i32>} : memref<8x16x128xf32, #tpu.memory_space<vmem>>, vector<1x8x128xf32>,
    %c0_95 = arith.constant 0 : index
    %c8_96 = arith.constant 8 : index
    %c0_97 = arith.constant 0 : index
    %2063 = vector.load %arg2[%c0_95, %c8_96, %c0_97] : memref<2x16x128xf32, #tpu.memory_space<vmem>>, vector<1x8x128xf32>
    %2064 = vector.shape_cast %2063 : vector<1x8x128xf32> to vector<8x128xf32>
    %c1_98 = arith.constant 1 : index
    %c8_99 = arith.constant 8 : index
    %c0_100 = arith.constant 0 : index
    %2065 = vector.load %arg2[%c1_98, %c8_99, %c0_100] : memref<2x16x128xf32, #tpu.memory_space<vmem>>, vector<1x8x128xf32>
    %2066 = vector.shape_cast %2065 : vector<1x8x128xf32> to vector<8x128xf32>
    %cst_101 = arith.constant 6.000000e+00 : f32
    %2067 = vector.broadcast %cst_101 : f32 to vector<8x128xf32>
    %2068 = arith.mulf %2064, %2067 : vector<8x128xf32>
    %2069 = math.floor %2068 : vector<8x128xf32>
    %cst_102 = arith.constant 0.000000e+00 : f32
    %cst_103 = arith.constant 5.000000e+00 : f32
    %2070 = vector.broadcast %cst_102 : f32 to vector<8x128xf32>
    %2071 = arith.maximumf %2070, %2069 : vector<8x128xf32>
    %2072 = vector.broadcast %cst_103 : f32 to vector<8x128xf32>
    %2073 = arith.minimumf %2072, %2071 : vector<8x128xf32>
    %cst_104 = arith.constant 6.000000e+00 : f32
    %2074 = vector.broadcast %cst_104 : f32 to vector<8x128xf32>
    %2075 = arith.mulf %2066, %2074 : vector<8x128xf32>
    %2076 = math.floor %2075 : vector<8x128xf32>
    %cst_105 = arith.constant 0.000000e+00 : f32
    %cst_106 = arith.constant 5.000000e+00 : f32
    %2077 = vector.broadcast %cst_105 : f32 to vector<8x128xf32>
    %2078 = arith.maximumf %2077, %2076 : vector<8x128xf32>
    %2079 = vector.broadcast %cst_106 : f32 to vector<8x128xf32>
    %2080 = arith.minimumf %2079, %2078 : vector<8x128xf32>
    %cst_107 = arith.constant 0.000000e+00 : f32
    %2081 = vector.broadcast %cst_107 : f32 to vector<8x128xf32>
    %cst_108 = arith.constant 1.000000e+00 : f32
    %2082 = vector.broadcast %cst_108 : f32 to vector<8x128xf32>
    %cst_109 = arith.constant 0.000000e+00 : f32
    %2083 = vector.broadcast %cst_109 : f32 to vector<8x128xf32>
    %2084 = arith.addf %2073, %2083 : vector<8x128xf32>
    %cst_110 = arith.constant 0.166666672 : f32
    %2085 = vector.broadcast %cst_110 : f32 to vector<8x128xf32>
    %2086 = arith.mulf %2084, %2085 : vector<8x128xf32>
    %cst_111 = arith.constant 0.000000e+00 : f32
    %cst_112 = arith.constant 1.000000e+00 : f32
    %2087 = vector.broadcast %cst_111 : f32 to vector<8x128xf32>
    %2088 = arith.maximumf %2087, %2086 : vector<8x128xf32>
    %2089 = vector.broadcast %cst_112 : f32 to vector<8x128xf32>
    %2090 = arith.minimumf %2089, %2088 : vector<8x128xf32>
    %2091 = arith.subf %2064, %2090 : vector<8x128xf32>
    %cst_113 = arith.constant 1.000000e+00 : f32
    %2092 = vector.broadcast %cst_113 : f32 to vector<8x128xf32>
    %2093 = arith.addf %2073, %2092 : vector<8x128xf32>
    %cst_114 = arith.constant 0.166666672 : f32
    %2094 = vector.broadcast %cst_114 : f32 to vector<8x128xf32>
    %2095 = arith.mulf %2093, %2094 : vector<8x128xf32>
    %cst_115 = arith.constant 0.000000e+00 : f32
    %cst_116 = arith.constant 1.000000e+00 : f32
    %2096 = vector.broadcast %cst_115 : f32 to vector<8x128xf32>
    %2097 = arith.maximumf %2096, %2095 : vector<8x128xf32>
    %2098 = vector.broadcast %cst_116 : f32 to vector<8x128xf32>
    %2099 = arith.minimumf %2098, %2097 : vector<8x128xf32>
    %2100 = arith.subf %2099, %2064 : vector<8x128xf32>
    %2101 = arith.addf %2100, %2091 : vector<8x128xf32>
    %2102 = arith.divf %2082, %2101 : vector<8x128xf32>
    %2103 = arith.mulf %2100, %2102 : vector<8x128xf32>
    %2104 = arith.addf %2081, %2103 : vector<8x128xf32>
    %2105 = arith.mulf %2091, %2102 : vector<8x128xf32>
    %cst_117 = arith.constant -1.000000e+00 : f32
    %2106 = vector.broadcast %cst_117 : f32 to vector<8x128xf32>
    %2107 = arith.addf %2073, %2106 : vector<8x128xf32>
    %cst_118 = arith.constant 0.166666672 : f32
    %2108 = vector.broadcast %cst_118 : f32 to vector<8x128xf32>
    %2109 = arith.mulf %2107, %2108 : vector<8x128xf32>
    %cst_119 = arith.constant 0.000000e+00 : f32
    %cst_120 = arith.constant 1.000000e+00 : f32
    %2110 = vector.broadcast %cst_119 : f32 to vector<8x128xf32>
    %2111 = arith.maximumf %2110, %2109 : vector<8x128xf32>
    %2112 = vector.broadcast %cst_120 : f32 to vector<8x128xf32>
    %2113 = arith.minimumf %2112, %2111 : vector<8x128xf32>
    %2114 = arith.subf %2064, %2113 : vector<8x128xf32>
    %cst_121 = arith.constant 2.000000e+00 : f32
    %2115 = vector.broadcast %cst_121 : f32 to vector<8x128xf32>
    %2116 = arith.addf %2073, %2115 : vector<8x128xf32>
    %cst_122 = arith.constant 0.166666672 : f32
    %2117 = vector.broadcast %cst_122 : f32 to vector<8x128xf32>
    %2118 = arith.mulf %2116, %2117 : vector<8x128xf32>
    %cst_123 = arith.constant 0.000000e+00 : f32
    %cst_124 = arith.constant 1.000000e+00 : f32
    %2119 = vector.broadcast %cst_123 : f32 to vector<8x128xf32>
    %2120 = arith.maximumf %2119, %2118 : vector<8x128xf32>
    %2121 = vector.broadcast %cst_124 : f32 to vector<8x128xf32>
    %2122 = arith.minimumf %2121, %2120 : vector<8x128xf32>
    %2123 = arith.subf %2122, %2064 : vector<8x128xf32>
    %2124 = arith.addf %2100, %2114 : vector<8x128xf32>
    %2125 = arith.divf %2104, %2124 : vector<8x128xf32>
    %2126 = arith.mulf %2100, %2125 : vector<8x128xf32>
    %2127 = arith.addf %2081, %2126 : vector<8x128xf32>
    %2128 = arith.mulf %2114, %2125 : vector<8x128xf32>
    %2129 = arith.addf %2123, %2091 : vector<8x128xf32>
    %2130 = arith.divf %2105, %2129 : vector<8x128xf32>
    %2131 = arith.mulf %2123, %2130 : vector<8x128xf32>
    %2132 = arith.addf %2128, %2131 : vector<8x128xf32>
    %2133 = arith.mulf %2091, %2130 : vector<8x128xf32>
    %cst_125 = arith.constant 0.000000e+00 : f32
    %2134 = vector.broadcast %cst_125 : f32 to vector<8x128xf32>
    %2135 = arith.subf %2134, %2082 : vector<8x128xf32>
    %2136 = arith.divf %2135, %2124 : vector<8x128xf32>
    %2137 = arith.mulf %2136, %2104 : vector<8x128xf32>
    %2138 = arith.addf %2081, %2137 : vector<8x128xf32>
    %2139 = arith.divf %2082, %2124 : vector<8x128xf32>
    %2140 = arith.mulf %2139, %2104 : vector<8x128xf32>
    %cst_126 = arith.constant 0.000000e+00 : f32
    %2141 = vector.broadcast %cst_126 : f32 to vector<8x128xf32>
    %2142 = arith.subf %2141, %2082 : vector<8x128xf32>
    %2143 = arith.divf %2142, %2129 : vector<8x128xf32>
    %2144 = arith.mulf %2143, %2105 : vector<8x128xf32>
    %2145 = arith.addf %2140, %2144 : vector<8x128xf32>
    %2146 = arith.divf %2082, %2129 : vector<8x128xf32>
    %2147 = arith.mulf %2146, %2105 : vector<8x128xf32>
    %cst_127 = arith.constant 2.000000e+00 : f32
    %2148 = vector.broadcast %cst_127 : f32 to vector<8x128xf32>
    %2149 = arith.mulf %2138, %2148 : vector<8x128xf32>
    %cst_128 = arith.constant 2.000000e+00 : f32
    %2150 = vector.broadcast %cst_128 : f32 to vector<8x128xf32>
    %2151 = arith.mulf %2145, %2150 : vector<8x128xf32>
    %cst_129 = arith.constant 2.000000e+00 : f32
    %2152 = vector.broadcast %cst_129 : f32 to vector<8x128xf32>
    %2153 = arith.mulf %2147, %2152 : vector<8x128xf32>
    %cst_130 = arith.constant 0.000000e+00 : f32
    %2154 = vector.broadcast %cst_130 : f32 to vector<8x128xf32>
    %cst_131 = arith.constant 1.000000e+00 : f32
    %2155 = vector.broadcast %cst_131 : f32 to vector<8x128xf32>
    %cst_132 = arith.constant 0.000000e+00 : f32
    %2156 = vector.broadcast %cst_132 : f32 to vector<8x128xf32>
    %2157 = arith.addf %2080, %2156 : vector<8x128xf32>
    %cst_133 = arith.constant 0.166666672 : f32
    %2158 = vector.broadcast %cst_133 : f32 to vector<8x128xf32>
    %2159 = arith.mulf %2157, %2158 : vector<8x128xf32>
    %cst_134 = arith.constant 0.000000e+00 : f32
    %cst_135 = arith.constant 1.000000e+00 : f32
    %2160 = vector.broadcast %cst_134 : f32 to vector<8x128xf32>
    %2161 = arith.maximumf %2160, %2159 : vector<8x128xf32>
    %2162 = vector.broadcast %cst_135 : f32 to vector<8x128xf32>
    %2163 = arith.minimumf %2162, %2161 : vector<8x128xf32>
    %2164 = arith.subf %2066, %2163 : vector<8x128xf32>
    %cst_136 = arith.constant 1.000000e+00 : f32
    %2165 = vector.broadcast %cst_136 : f32 to vector<8x128xf32>
    %2166 = arith.addf %2080, %2165 : vector<8x128xf32>
    %cst_137 = arith.constant 0.166666672 : f32
    %2167 = vector.broadcast %cst_137 : f32 to vector<8x128xf32>
    %2168 = arith.mulf %2166, %2167 : vector<8x128xf32>
    %cst_138 = arith.constant 0.000000e+00 : f32
    %cst_139 = arith.constant 1.000000e+00 : f32
    %2169 = vector.broadcast %cst_138 : f32 to vector<8x128xf32>
    %2170 = arith.maximumf %2169, %2168 : vector<8x128xf32>
    %2171 = vector.broadcast %cst_139 : f32 to vector<8x128xf32>
    %2172 = arith.minimumf %2171, %2170 : vector<8x128xf32>
    %2173 = arith.subf %2172, %2066 : vector<8x128xf32>
    %2174 = arith.addf %2173, %2164 : vector<8x128xf32>
    %2175 = arith.divf %2155, %2174 : vector<8x128xf32>
    %2176 = arith.mulf %2173, %2175 : vector<8x128xf32>
    %2177 = arith.addf %2154, %2176 : vector<8x128xf32>
    %2178 = arith.mulf %2164, %2175 : vector<8x128xf32>
    %cst_140 = arith.constant -1.000000e+00 : f32
    %2179 = vector.broadcast %cst_140 : f32 to vector<8x128xf32>
    %2180 = arith.addf %2080, %2179 : vector<8x128xf32>
    %cst_141 = arith.constant 0.166666672 : f32
    %2181 = vector.broadcast %cst_141 : f32 to vector<8x128xf32>
    %2182 = arith.mulf %2180, %2181 : vector<8x128xf32>
    %cst_142 = arith.constant 0.000000e+00 : f32
    %cst_143 = arith.constant 1.000000e+00 : f32
    %2183 = vector.broadcast %cst_142 : f32 to vector<8x128xf32>
    %2184 = arith.maximumf %2183, %2182 : vector<8x128xf32>
    %2185 = vector.broadcast %cst_143 : f32 to vector<8x128xf32>
    %2186 = arith.minimumf %2185, %2184 : vector<8x128xf32>
    %2187 = arith.subf %2066, %2186 : vector<8x128xf32>
    %cst_144 = arith.constant 2.000000e+00 : f32
    %2188 = vector.broadcast %cst_144 : f32 to vector<8x128xf32>
    %2189 = arith.addf %2080, %2188 : vector<8x128xf32>
    %cst_145 = arith.constant 0.166666672 : f32
    %2190 = vector.broadcast %cst_145 : f32 to vector<8x128xf32>
    %2191 = arith.mulf %2189, %2190 : vector<8x128xf32>
    %cst_146 = arith.constant 0.000000e+00 : f32
    %cst_147 = arith.constant 1.000000e+00 : f32
    %2192 = vector.broadcast %cst_146 : f32 to vector<8x128xf32>
    %2193 = arith.maximumf %2192, %2191 : vector<8x128xf32>
    %2194 = vector.broadcast %cst_147 : f32 to vector<8x128xf32>
    %2195 = arith.minimumf %2194, %2193 : vector<8x128xf32>
    %2196 = arith.subf %2195, %2066 : vector<8x128xf32>
    %2197 = arith.addf %2173, %2187 : vector<8x128xf32>
    %2198 = arith.divf %2177, %2197 : vector<8x128xf32>
    %2199 = arith.mulf %2173, %2198 : vector<8x128xf32>
    %2200 = arith.addf %2154, %2199 : vector<8x128xf32>
    %2201 = arith.mulf %2187, %2198 : vector<8x128xf32>
    %2202 = arith.addf %2196, %2164 : vector<8x128xf32>
    %2203 = arith.divf %2178, %2202 : vector<8x128xf32>
    %2204 = arith.mulf %2196, %2203 : vector<8x128xf32>
    %2205 = arith.addf %2201, %2204 : vector<8x128xf32>
    %2206 = arith.mulf %2164, %2203 : vector<8x128xf32>
    %cst_148 = arith.constant 0.000000e+00 : f32
    %2207 = vector.broadcast %cst_148 : f32 to vector<8x128xf32>
    %2208 = arith.subf %2207, %2155 : vector<8x128xf32>
    %2209 = arith.divf %2208, %2197 : vector<8x128xf32>
    %2210 = arith.mulf %2209, %2177 : vector<8x128xf32>
    %2211 = arith.addf %2154, %2210 : vector<8x128xf32>
    %2212 = arith.divf %2155, %2197 : vector<8x128xf32>
    %2213 = arith.mulf %2212, %2177 : vector<8x128xf32>
    %cst_149 = arith.constant 0.000000e+00 : f32
    %2214 = vector.broadcast %cst_149 : f32 to vector<8x128xf32>
    %2215 = arith.subf %2214, %2155 : vector<8x128xf32>
    %2216 = arith.divf %2215, %2202 : vector<8x128xf32>
    %2217 = arith.mulf %2216, %2178 : vector<8x128xf32>
    %2218 = arith.addf %2213, %2217 : vector<8x128xf32>
    %2219 = arith.divf %2155, %2202 : vector<8x128xf32>
    %2220 = arith.mulf %2219, %2178 : vector<8x128xf32>
    %cst_150 = arith.constant 2.000000e+00 : f32
    %2221 = vector.broadcast %cst_150 : f32 to vector<8x128xf32>
    %2222 = arith.mulf %2211, %2221 : vector<8x128xf32>
    %cst_151 = arith.constant 2.000000e+00 : f32
    %2223 = vector.broadcast %cst_151 : f32 to vector<8x128xf32>
    %2224 = arith.mulf %2218, %2223 : vector<8x128xf32>
    %cst_152 = arith.constant 2.000000e+00 : f32
    %2225 = vector.broadcast %cst_152 : f32 to vector<8x128xf32>
    %2226 = arith.mulf %2220, %2225 : vector<8x128xf32>
    %cst_153 = arith.constant 0.000000e+00 : f32
    %2227 = vector.broadcast %cst_153 : f32 to vector<8x128xf32>
    %2228 = arith.cmpf oeq, %2073, %2227 : vector<8x128xf32>
    %2229 = arith.extui %2228 : vector<8x128xi1> to vector<8x128xi32>
    %2230 = arith.sitofp %2229 : vector<8x128xi32> to vector<8x128xf32>
    %cst_154 = arith.constant 1.000000e+00 : f32
    %2231 = vector.broadcast %cst_154 : f32 to vector<8x128xf32>
    %2232 = arith.cmpf oeq, %2073, %2231 : vector<8x128xf32>
    %2233 = arith.extui %2232 : vector<8x128xi1> to vector<8x128xi32>
    %2234 = arith.sitofp %2233 : vector<8x128xi32> to vector<8x128xf32>
    %cst_155 = arith.constant 2.000000e+00 : f32
    %2235 = vector.broadcast %cst_155 : f32 to vector<8x128xf32>
    %2236 = arith.cmpf oeq, %2073, %2235 : vector<8x128xf32>
    %2237 = arith.extui %2236 : vector<8x128xi1> to vector<8x128xi32>
    %2238 = arith.sitofp %2237 : vector<8x128xi32> to vector<8x128xf32>
    %cst_156 = arith.constant 3.000000e+00 : f32
    %2239 = vector.broadcast %cst_156 : f32 to vector<8x128xf32>
    %2240 = arith.cmpf oeq, %2073, %2239 : vector<8x128xf32>
    %2241 = arith.extui %2240 : vector<8x128xi1> to vector<8x128xi32>
    %2242 = arith.sitofp %2241 : vector<8x128xi32> to vector<8x128xf32>
    %cst_157 = arith.constant 4.000000e+00 : f32
    %2243 = vector.broadcast %cst_157 : f32 to vector<8x128xf32>
    %2244 = arith.cmpf oeq, %2073, %2243 : vector<8x128xf32>
    %2245 = arith.extui %2244 : vector<8x128xi1> to vector<8x128xi32>
    %2246 = arith.sitofp %2245 : vector<8x128xi32> to vector<8x128xf32>
    %cst_158 = arith.constant 5.000000e+00 : f32
    %2247 = vector.broadcast %cst_158 : f32 to vector<8x128xf32>
    %2248 = arith.cmpf oeq, %2073, %2247 : vector<8x128xf32>
    %2249 = arith.extui %2248 : vector<8x128xi1> to vector<8x128xi32>
    %2250 = arith.sitofp %2249 : vector<8x128xi32> to vector<8x128xf32>
    %cst_159 = arith.constant 0.000000e+00 : f32
    %2251 = vector.broadcast %cst_159 : f32 to vector<8x128xf32>
    %2252 = arith.cmpf oeq, %2080, %2251 : vector<8x128xf32>
    %2253 = arith.extui %2252 : vector<8x128xi1> to vector<8x128xi32>
    %2254 = arith.sitofp %2253 : vector<8x128xi32> to vector<8x128xf32>
    %cst_160 = arith.constant 1.000000e+00 : f32
    %2255 = vector.broadcast %cst_160 : f32 to vector<8x128xf32>
    %2256 = arith.cmpf oeq, %2080, %2255 : vector<8x128xf32>
    %2257 = arith.extui %2256 : vector<8x128xi1> to vector<8x128xi32>
    %2258 = arith.sitofp %2257 : vector<8x128xi32> to vector<8x128xf32>
    %cst_161 = arith.constant 2.000000e+00 : f32
    %2259 = vector.broadcast %cst_161 : f32 to vector<8x128xf32>
    %2260 = arith.cmpf oeq, %2080, %2259 : vector<8x128xf32>
    %2261 = arith.extui %2260 : vector<8x128xi1> to vector<8x128xi32>
    %2262 = arith.sitofp %2261 : vector<8x128xi32> to vector<8x128xf32>
    %cst_162 = arith.constant 3.000000e+00 : f32
    %2263 = vector.broadcast %cst_162 : f32 to vector<8x128xf32>
    %2264 = arith.cmpf oeq, %2080, %2263 : vector<8x128xf32>
    %2265 = arith.extui %2264 : vector<8x128xi1> to vector<8x128xi32>
    %2266 = arith.sitofp %2265 : vector<8x128xi32> to vector<8x128xf32>
    %cst_163 = arith.constant 4.000000e+00 : f32
    %2267 = vector.broadcast %cst_163 : f32 to vector<8x128xf32>
    %2268 = arith.cmpf oeq, %2080, %2267 : vector<8x128xf32>
    %2269 = arith.extui %2268 : vector<8x128xi1> to vector<8x128xi32>
    %2270 = arith.sitofp %2269 : vector<8x128xi32> to vector<8x128xf32>
    %cst_164 = arith.constant 5.000000e+00 : f32
    %2271 = vector.broadcast %cst_164 : f32 to vector<8x128xf32>
    %2272 = arith.cmpf oeq, %2080, %2271 : vector<8x128xf32>
    %2273 = arith.extui %2272 : vector<8x128xi1> to vector<8x128xi32>
    %2274 = arith.sitofp %2273 : vector<8x128xi32> to vector<8x128xf32>
    %2275 = arith.mulf %2230, %2127 : vector<8x128xf32>
    %2276 = arith.mulf %2230, %2132 : vector<8x128xf32>
    %2277 = arith.mulf %2234, %2127 : vector<8x128xf32>
    %2278 = arith.addf %2276, %2277 : vector<8x128xf32>
    %2279 = arith.mulf %2230, %2133 : vector<8x128xf32>
    %2280 = arith.mulf %2234, %2132 : vector<8x128xf32>
    %2281 = arith.addf %2279, %2280 : vector<8x128xf32>
    %2282 = arith.mulf %2238, %2127 : vector<8x128xf32>
    %2283 = arith.addf %2281, %2282 : vector<8x128xf32>
    %2284 = arith.mulf %2234, %2133 : vector<8x128xf32>
    %2285 = arith.mulf %2238, %2132 : vector<8x128xf32>
    %2286 = arith.addf %2284, %2285 : vector<8x128xf32>
    %2287 = arith.mulf %2242, %2127 : vector<8x128xf32>
    %2288 = arith.addf %2286, %2287 : vector<8x128xf32>
    %2289 = arith.mulf %2238, %2133 : vector<8x128xf32>
    %2290 = arith.mulf %2242, %2132 : vector<8x128xf32>
    %2291 = arith.addf %2289, %2290 : vector<8x128xf32>
    %2292 = arith.mulf %2246, %2127 : vector<8x128xf32>
    %2293 = arith.addf %2291, %2292 : vector<8x128xf32>
    %2294 = arith.mulf %2242, %2133 : vector<8x128xf32>
    %2295 = arith.mulf %2246, %2132 : vector<8x128xf32>
    %2296 = arith.addf %2294, %2295 : vector<8x128xf32>
    %2297 = arith.mulf %2250, %2127 : vector<8x128xf32>
    %2298 = arith.addf %2296, %2297 : vector<8x128xf32>
    %2299 = arith.mulf %2246, %2133 : vector<8x128xf32>
    %2300 = arith.mulf %2250, %2132 : vector<8x128xf32>
    %2301 = arith.addf %2299, %2300 : vector<8x128xf32>
    %2302 = arith.mulf %2250, %2133 : vector<8x128xf32>
    %2303 = arith.mulf %2230, %2149 : vector<8x128xf32>
    %2304 = arith.mulf %2230, %2151 : vector<8x128xf32>
    %2305 = arith.mulf %2234, %2149 : vector<8x128xf32>
    %2306 = arith.addf %2304, %2305 : vector<8x128xf32>
    %2307 = arith.mulf %2230, %2153 : vector<8x128xf32>
    %2308 = arith.mulf %2234, %2151 : vector<8x128xf32>
    %2309 = arith.addf %2307, %2308 : vector<8x128xf32>
    %2310 = arith.mulf %2238, %2149 : vector<8x128xf32>
    %2311 = arith.addf %2309, %2310 : vector<8x128xf32>
    %2312 = arith.mulf %2234, %2153 : vector<8x128xf32>
    %2313 = arith.mulf %2238, %2151 : vector<8x128xf32>
    %2314 = arith.addf %2312, %2313 : vector<8x128xf32>
    %2315 = arith.mulf %2242, %2149 : vector<8x128xf32>
    %2316 = arith.addf %2314, %2315 : vector<8x128xf32>
    %2317 = arith.mulf %2238, %2153 : vector<8x128xf32>
    %2318 = arith.mulf %2242, %2151 : vector<8x128xf32>
    %2319 = arith.addf %2317, %2318 : vector<8x128xf32>
    %2320 = arith.mulf %2246, %2149 : vector<8x128xf32>
    %2321 = arith.addf %2319, %2320 : vector<8x128xf32>
    %2322 = arith.mulf %2242, %2153 : vector<8x128xf32>
    %2323 = arith.mulf %2246, %2151 : vector<8x128xf32>
    %2324 = arith.addf %2322, %2323 : vector<8x128xf32>
    %2325 = arith.mulf %2250, %2149 : vector<8x128xf32>
    %2326 = arith.addf %2324, %2325 : vector<8x128xf32>
    %2327 = arith.mulf %2246, %2153 : vector<8x128xf32>
    %2328 = arith.mulf %2250, %2151 : vector<8x128xf32>
    %2329 = arith.addf %2327, %2328 : vector<8x128xf32>
    %2330 = arith.mulf %2250, %2153 : vector<8x128xf32>
    %2331 = arith.mulf %2254, %2200 : vector<8x128xf32>
    %2332 = arith.mulf %2254, %2205 : vector<8x128xf32>
    %2333 = arith.mulf %2258, %2200 : vector<8x128xf32>
    %2334 = arith.addf %2332, %2333 : vector<8x128xf32>
    %2335 = arith.mulf %2254, %2206 : vector<8x128xf32>
    %2336 = arith.mulf %2258, %2205 : vector<8x128xf32>
    %2337 = arith.addf %2335, %2336 : vector<8x128xf32>
    %2338 = arith.mulf %2262, %2200 : vector<8x128xf32>
    %2339 = arith.addf %2337, %2338 : vector<8x128xf32>
    %2340 = arith.mulf %2258, %2206 : vector<8x128xf32>
    %2341 = arith.mulf %2262, %2205 : vector<8x128xf32>
    %2342 = arith.addf %2340, %2341 : vector<8x128xf32>
    %2343 = arith.mulf %2266, %2200 : vector<8x128xf32>
    %2344 = arith.addf %2342, %2343 : vector<8x128xf32>
    %2345 = arith.mulf %2262, %2206 : vector<8x128xf32>
    %2346 = arith.mulf %2266, %2205 : vector<8x128xf32>
    %2347 = arith.addf %2345, %2346 : vector<8x128xf32>
    %2348 = arith.mulf %2270, %2200 : vector<8x128xf32>
    %2349 = arith.addf %2347, %2348 : vector<8x128xf32>
    %2350 = arith.mulf %2266, %2206 : vector<8x128xf32>
    %2351 = arith.mulf %2270, %2205 : vector<8x128xf32>
    %2352 = arith.addf %2350, %2351 : vector<8x128xf32>
    %2353 = arith.mulf %2274, %2200 : vector<8x128xf32>
    %2354 = arith.addf %2352, %2353 : vector<8x128xf32>
    %2355 = arith.mulf %2270, %2206 : vector<8x128xf32>
    %2356 = arith.mulf %2274, %2205 : vector<8x128xf32>
    %2357 = arith.addf %2355, %2356 : vector<8x128xf32>
    %2358 = arith.mulf %2274, %2206 : vector<8x128xf32>
    %2359 = arith.mulf %2254, %2222 : vector<8x128xf32>
    %2360 = arith.mulf %2254, %2224 : vector<8x128xf32>
    %2361 = arith.mulf %2258, %2222 : vector<8x128xf32>
    %2362 = arith.addf %2360, %2361 : vector<8x128xf32>
    %2363 = arith.mulf %2254, %2226 : vector<8x128xf32>
    %2364 = arith.mulf %2258, %2224 : vector<8x128xf32>
    %2365 = arith.addf %2363, %2364 : vector<8x128xf32>
    %2366 = arith.mulf %2262, %2222 : vector<8x128xf32>
    %2367 = arith.addf %2365, %2366 : vector<8x128xf32>
    %2368 = arith.mulf %2258, %2226 : vector<8x128xf32>
    %2369 = arith.mulf %2262, %2224 : vector<8x128xf32>
    %2370 = arith.addf %2368, %2369 : vector<8x128xf32>
    %2371 = arith.mulf %2266, %2222 : vector<8x128xf32>
    %2372 = arith.addf %2370, %2371 : vector<8x128xf32>
    %2373 = arith.mulf %2262, %2226 : vector<8x128xf32>
    %2374 = arith.mulf %2266, %2224 : vector<8x128xf32>
    %2375 = arith.addf %2373, %2374 : vector<8x128xf32>
    %2376 = arith.mulf %2270, %2222 : vector<8x128xf32>
    %2377 = arith.addf %2375, %2376 : vector<8x128xf32>
    %2378 = arith.mulf %2266, %2226 : vector<8x128xf32>
    %2379 = arith.mulf %2270, %2224 : vector<8x128xf32>
    %2380 = arith.addf %2378, %2379 : vector<8x128xf32>
    %2381 = arith.mulf %2274, %2222 : vector<8x128xf32>
    %2382 = arith.addf %2380, %2381 : vector<8x128xf32>
    %2383 = arith.mulf %2270, %2226 : vector<8x128xf32>
    %2384 = arith.mulf %2274, %2224 : vector<8x128xf32>
    %2385 = arith.addf %2383, %2384 : vector<8x128xf32>
    %2386 = arith.mulf %2274, %2226 : vector<8x128xf32>
    %c0_165 = arith.constant 0 : index
    %2387 = memref.load %arg1[%c0_165] : memref<256xf32, #tpu.memory_space<smem>>
    %2388 = vector.broadcast %2387 : f32 to vector<8x128xf32>
    %2389 = arith.mulf %2331, %2388 : vector<8x128xf32>
    %2390 = vector.broadcast %2387 : f32 to vector<8x128xf32>
    %2391 = arith.mulf %2359, %2390 : vector<8x128xf32>
    %c4_166 = arith.constant 4 : index
    %2392 = memref.load %arg1[%c4_166] : memref<256xf32, #tpu.memory_space<smem>>
    %2393 = vector.broadcast %2392 : f32 to vector<8x128xf32>
    %2394 = arith.mulf %2334, %2393 : vector<8x128xf32>
    %2395 = arith.addf %2389, %2394 : vector<8x128xf32>
    %2396 = vector.broadcast %2392 : f32 to vector<8x128xf32>
    %2397 = arith.mulf %2362, %2396 : vector<8x128xf32>
    %2398 = arith.addf %2391, %2397 : vector<8x128xf32>
    %c8_167 = arith.constant 8 : index
    %2399 = memref.load %arg1[%c8_167] : memref<256xf32, #tpu.memory_space<smem>>
    %2400 = vector.broadcast %2399 : f32 to vector<8x128xf32>
    %2401 = arith.mulf %2339, %2400 : vector<8x128xf32>
    %2402 = arith.addf %2395, %2401 : vector<8x128xf32>
    %2403 = vector.broadcast %2399 : f32 to vector<8x128xf32>
    %2404 = arith.mulf %2367, %2403 : vector<8x128xf32>
    %2405 = arith.addf %2398, %2404 : vector<8x128xf32>
    %c12_168 = arith.constant 12 : index
    %2406 = memref.load %arg1[%c12_168] : memref<256xf32, #tpu.memory_space<smem>>
    %2407 = vector.broadcast %2406 : f32 to vector<8x128xf32>
    %2408 = arith.mulf %2344, %2407 : vector<8x128xf32>
    %2409 = arith.addf %2402, %2408 : vector<8x128xf32>
    %2410 = vector.broadcast %2406 : f32 to vector<8x128xf32>
    %2411 = arith.mulf %2372, %2410 : vector<8x128xf32>
    %2412 = arith.addf %2405, %2411 : vector<8x128xf32>
    %c16_169 = arith.constant 16 : index
    %2413 = memref.load %arg1[%c16_169] : memref<256xf32, #tpu.memory_space<smem>>
    %2414 = vector.broadcast %2413 : f32 to vector<8x128xf32>
    %2415 = arith.mulf %2349, %2414 : vector<8x128xf32>
    %2416 = arith.addf %2409, %2415 : vector<8x128xf32>
    %2417 = vector.broadcast %2413 : f32 to vector<8x128xf32>
    %2418 = arith.mulf %2377, %2417 : vector<8x128xf32>
    %2419 = arith.addf %2412, %2418 : vector<8x128xf32>
    %c20_170 = arith.constant 20 : index
    %2420 = memref.load %arg1[%c20_170] : memref<256xf32, #tpu.memory_space<smem>>
    %2421 = vector.broadcast %2420 : f32 to vector<8x128xf32>
    %2422 = arith.mulf %2354, %2421 : vector<8x128xf32>
    %2423 = arith.addf %2416, %2422 : vector<8x128xf32>
    %2424 = vector.broadcast %2420 : f32 to vector<8x128xf32>
    %2425 = arith.mulf %2382, %2424 : vector<8x128xf32>
    %2426 = arith.addf %2419, %2425 : vector<8x128xf32>
    %c24_171 = arith.constant 24 : index
    %2427 = memref.load %arg1[%c24_171] : memref<256xf32, #tpu.memory_space<smem>>
    %2428 = vector.broadcast %2427 : f32 to vector<8x128xf32>
    %2429 = arith.mulf %2357, %2428 : vector<8x128xf32>
    %2430 = arith.addf %2423, %2429 : vector<8x128xf32>
    %2431 = vector.broadcast %2427 : f32 to vector<8x128xf32>
    %2432 = arith.mulf %2385, %2431 : vector<8x128xf32>
    %2433 = arith.addf %2426, %2432 : vector<8x128xf32>
    %c28_172 = arith.constant 28 : index
    %2434 = memref.load %arg1[%c28_172] : memref<256xf32, #tpu.memory_space<smem>>
    %2435 = vector.broadcast %2434 : f32 to vector<8x128xf32>
    %2436 = arith.mulf %2358, %2435 : vector<8x128xf32>
    %2437 = arith.addf %2430, %2436 : vector<8x128xf32>
    %2438 = vector.broadcast %2434 : f32 to vector<8x128xf32>
    %2439 = arith.mulf %2386, %2438 : vector<8x128xf32>
    %2440 = arith.addf %2433, %2439 : vector<8x128xf32>
    %2441 = arith.mulf %2275, %2437 : vector<8x128xf32>
    %2442 = arith.mulf %2303, %2437 : vector<8x128xf32>
    %2443 = arith.mulf %2275, %2440 : vector<8x128xf32>
    %c32_173 = arith.constant 32 : index
    %2444 = memref.load %arg1[%c32_173] : memref<256xf32, #tpu.memory_space<smem>>
    %2445 = vector.broadcast %2444 : f32 to vector<8x128xf32>
    %2446 = arith.mulf %2331, %2445 : vector<8x128xf32>
    %2447 = vector.broadcast %2444 : f32 to vector<8x128xf32>
    %2448 = arith.mulf %2359, %2447 : vector<8x128xf32>
    %c36_174 = arith.constant 36 : index
    %2449 = memref.load %arg1[%c36_174] : memref<256xf32, #tpu.memory_space<smem>>
    %2450 = vector.broadcast %2449 : f32 to vector<8x128xf32>
    %2451 = arith.mulf %2334, %2450 : vector<8x128xf32>
    %2452 = arith.addf %2446, %2451 : vector<8x128xf32>
    %2453 = vector.broadcast %2449 : f32 to vector<8x128xf32>
    %2454 = arith.mulf %2362, %2453 : vector<8x128xf32>
    %2455 = arith.addf %2448, %2454 : vector<8x128xf32>
    %c40_175 = arith.constant 40 : index
    %2456 = memref.load %arg1[%c40_175] : memref<256xf32, #tpu.memory_space<smem>>
    %2457 = vector.broadcast %2456 : f32 to vector<8x128xf32>
    %2458 = arith.mulf %2339, %2457 : vector<8x128xf32>
    %2459 = arith.addf %2452, %2458 : vector<8x128xf32>
    %2460 = vector.broadcast %2456 : f32 to vector<8x128xf32>
    %2461 = arith.mulf %2367, %2460 : vector<8x128xf32>
    %2462 = arith.addf %2455, %2461 : vector<8x128xf32>
    %c44_176 = arith.constant 44 : index
    %2463 = memref.load %arg1[%c44_176] : memref<256xf32, #tpu.memory_space<smem>>
    %2464 = vector.broadcast %2463 : f32 to vector<8x128xf32>
    %2465 = arith.mulf %2344, %2464 : vector<8x128xf32>
    %2466 = arith.addf %2459, %2465 : vector<8x128xf32>
    %2467 = vector.broadcast %2463 : f32 to vector<8x128xf32>
    %2468 = arith.mulf %2372, %2467 : vector<8x128xf32>
    %2469 = arith.addf %2462, %2468 : vector<8x128xf32>
    %c48_177 = arith.constant 48 : index
    %2470 = memref.load %arg1[%c48_177] : memref<256xf32, #tpu.memory_space<smem>>
    %2471 = vector.broadcast %2470 : f32 to vector<8x128xf32>
    %2472 = arith.mulf %2349, %2471 : vector<8x128xf32>
    %2473 = arith.addf %2466, %2472 : vector<8x128xf32>
    %2474 = vector.broadcast %2470 : f32 to vector<8x128xf32>
    %2475 = arith.mulf %2377, %2474 : vector<8x128xf32>
    %2476 = arith.addf %2469, %2475 : vector<8x128xf32>
    %c52_178 = arith.constant 52 : index
    %2477 = memref.load %arg1[%c52_178] : memref<256xf32, #tpu.memory_space<smem>>
    %2478 = vector.broadcast %2477 : f32 to vector<8x128xf32>
    %2479 = arith.mulf %2354, %2478 : vector<8x128xf32>
    %2480 = arith.addf %2473, %2479 : vector<8x128xf32>
    %2481 = vector.broadcast %2477 : f32 to vector<8x128xf32>
    %2482 = arith.mulf %2382, %2481 : vector<8x128xf32>
    %2483 = arith.addf %2476, %2482 : vector<8x128xf32>
    %c56_179 = arith.constant 56 : index
    %2484 = memref.load %arg1[%c56_179] : memref<256xf32, #tpu.memory_space<smem>>
    %2485 = vector.broadcast %2484 : f32 to vector<8x128xf32>
    %2486 = arith.mulf %2357, %2485 : vector<8x128xf32>
    %2487 = arith.addf %2480, %2486 : vector<8x128xf32>
    %2488 = vector.broadcast %2484 : f32 to vector<8x128xf32>
    %2489 = arith.mulf %2385, %2488 : vector<8x128xf32>
    %2490 = arith.addf %2483, %2489 : vector<8x128xf32>
    %c60_180 = arith.constant 60 : index
    %2491 = memref.load %arg1[%c60_180] : memref<256xf32, #tpu.memory_space<smem>>
    %2492 = vector.broadcast %2491 : f32 to vector<8x128xf32>
    %2493 = arith.mulf %2358, %2492 : vector<8x128xf32>
    %2494 = arith.addf %2487, %2493 : vector<8x128xf32>
    %2495 = vector.broadcast %2491 : f32 to vector<8x128xf32>
    %2496 = arith.mulf %2386, %2495 : vector<8x128xf32>
    %2497 = arith.addf %2490, %2496 : vector<8x128xf32>
    %2498 = arith.mulf %2278, %2494 : vector<8x128xf32>
    %2499 = arith.addf %2441, %2498 : vector<8x128xf32>
    %2500 = arith.mulf %2306, %2494 : vector<8x128xf32>
    %2501 = arith.addf %2442, %2500 : vector<8x128xf32>
    %2502 = arith.mulf %2278, %2497 : vector<8x128xf32>
    %2503 = arith.addf %2443, %2502 : vector<8x128xf32>
    %c64_181 = arith.constant 64 : index
    %2504 = memref.load %arg1[%c64_181] : memref<256xf32, #tpu.memory_space<smem>>
    %2505 = vector.broadcast %2504 : f32 to vector<8x128xf32>
    %2506 = arith.mulf %2331, %2505 : vector<8x128xf32>
    %2507 = vector.broadcast %2504 : f32 to vector<8x128xf32>
    %2508 = arith.mulf %2359, %2507 : vector<8x128xf32>
    %c68_182 = arith.constant 68 : index
    %2509 = memref.load %arg1[%c68_182] : memref<256xf32, #tpu.memory_space<smem>>
    %2510 = vector.broadcast %2509 : f32 to vector<8x128xf32>
    %2511 = arith.mulf %2334, %2510 : vector<8x128xf32>
    %2512 = arith.addf %2506, %2511 : vector<8x128xf32>
    %2513 = vector.broadcast %2509 : f32 to vector<8x128xf32>
    %2514 = arith.mulf %2362, %2513 : vector<8x128xf32>
    %2515 = arith.addf %2508, %2514 : vector<8x128xf32>
    %c72_183 = arith.constant 72 : index
    %2516 = memref.load %arg1[%c72_183] : memref<256xf32, #tpu.memory_space<smem>>
    %2517 = vector.broadcast %2516 : f32 to vector<8x128xf32>
    %2518 = arith.mulf %2339, %2517 : vector<8x128xf32>
    %2519 = arith.addf %2512, %2518 : vector<8x128xf32>
    %2520 = vector.broadcast %2516 : f32 to vector<8x128xf32>
    %2521 = arith.mulf %2367, %2520 : vector<8x128xf32>
    %2522 = arith.addf %2515, %2521 : vector<8x128xf32>
    %c76_184 = arith.constant 76 : index
    %2523 = memref.load %arg1[%c76_184] : memref<256xf32, #tpu.memory_space<smem>>
    %2524 = vector.broadcast %2523 : f32 to vector<8x128xf32>
    %2525 = arith.mulf %2344, %2524 : vector<8x128xf32>
    %2526 = arith.addf %2519, %2525 : vector<8x128xf32>
    %2527 = vector.broadcast %2523 : f32 to vector<8x128xf32>
    %2528 = arith.mulf %2372, %2527 : vector<8x128xf32>
    %2529 = arith.addf %2522, %2528 : vector<8x128xf32>
    %c80_185 = arith.constant 80 : index
    %2530 = memref.load %arg1[%c80_185] : memref<256xf32, #tpu.memory_space<smem>>
    %2531 = vector.broadcast %2530 : f32 to vector<8x128xf32>
    %2532 = arith.mulf %2349, %2531 : vector<8x128xf32>
    %2533 = arith.addf %2526, %2532 : vector<8x128xf32>
    %2534 = vector.broadcast %2530 : f32 to vector<8x128xf32>
    %2535 = arith.mulf %2377, %2534 : vector<8x128xf32>
    %2536 = arith.addf %2529, %2535 : vector<8x128xf32>
    %c84_186 = arith.constant 84 : index
    %2537 = memref.load %arg1[%c84_186] : memref<256xf32, #tpu.memory_space<smem>>
    %2538 = vector.broadcast %2537 : f32 to vector<8x128xf32>
    %2539 = arith.mulf %2354, %2538 : vector<8x128xf32>
    %2540 = arith.addf %2533, %2539 : vector<8x128xf32>
    %2541 = vector.broadcast %2537 : f32 to vector<8x128xf32>
    %2542 = arith.mulf %2382, %2541 : vector<8x128xf32>
    %2543 = arith.addf %2536, %2542 : vector<8x128xf32>
    %c88_187 = arith.constant 88 : index
    %2544 = memref.load %arg1[%c88_187] : memref<256xf32, #tpu.memory_space<smem>>
    %2545 = vector.broadcast %2544 : f32 to vector<8x128xf32>
    %2546 = arith.mulf %2357, %2545 : vector<8x128xf32>
    %2547 = arith.addf %2540, %2546 : vector<8x128xf32>
    %2548 = vector.broadcast %2544 : f32 to vector<8x128xf32>
    %2549 = arith.mulf %2385, %2548 : vector<8x128xf32>
    %2550 = arith.addf %2543, %2549 : vector<8x128xf32>
    %c92_188 = arith.constant 92 : index
    %2551 = memref.load %arg1[%c92_188] : memref<256xf32, #tpu.memory_space<smem>>
    %2552 = vector.broadcast %2551 : f32 to vector<8x128xf32>
    %2553 = arith.mulf %2358, %2552 : vector<8x128xf32>
    %2554 = arith.addf %2547, %2553 : vector<8x128xf32>
    %2555 = vector.broadcast %2551 : f32 to vector<8x128xf32>
    %2556 = arith.mulf %2386, %2555 : vector<8x128xf32>
    %2557 = arith.addf %2550, %2556 : vector<8x128xf32>
    %2558 = arith.mulf %2283, %2554 : vector<8x128xf32>
    %2559 = arith.addf %2499, %2558 : vector<8x128xf32>
    %2560 = arith.mulf %2311, %2554 : vector<8x128xf32>
    %2561 = arith.addf %2501, %2560 : vector<8x128xf32>
    %2562 = arith.mulf %2283, %2557 : vector<8x128xf32>
    %2563 = arith.addf %2503, %2562 : vector<8x128xf32>
    %c96_189 = arith.constant 96 : index
    %2564 = memref.load %arg1[%c96_189] : memref<256xf32, #tpu.memory_space<smem>>
    %2565 = vector.broadcast %2564 : f32 to vector<8x128xf32>
    %2566 = arith.mulf %2331, %2565 : vector<8x128xf32>
    %2567 = vector.broadcast %2564 : f32 to vector<8x128xf32>
    %2568 = arith.mulf %2359, %2567 : vector<8x128xf32>
    %c100_190 = arith.constant 100 : index
    %2569 = memref.load %arg1[%c100_190] : memref<256xf32, #tpu.memory_space<smem>>
    %2570 = vector.broadcast %2569 : f32 to vector<8x128xf32>
    %2571 = arith.mulf %2334, %2570 : vector<8x128xf32>
    %2572 = arith.addf %2566, %2571 : vector<8x128xf32>
    %2573 = vector.broadcast %2569 : f32 to vector<8x128xf32>
    %2574 = arith.mulf %2362, %2573 : vector<8x128xf32>
    %2575 = arith.addf %2568, %2574 : vector<8x128xf32>
    %c104_191 = arith.constant 104 : index
    %2576 = memref.load %arg1[%c104_191] : memref<256xf32, #tpu.memory_space<smem>>
    %2577 = vector.broadcast %2576 : f32 to vector<8x128xf32>
    %2578 = arith.mulf %2339, %2577 : vector<8x128xf32>
    %2579 = arith.addf %2572, %2578 : vector<8x128xf32>
    %2580 = vector.broadcast %2576 : f32 to vector<8x128xf32>
    %2581 = arith.mulf %2367, %2580 : vector<8x128xf32>
    %2582 = arith.addf %2575, %2581 : vector<8x128xf32>
    %c108_192 = arith.constant 108 : index
    %2583 = memref.load %arg1[%c108_192] : memref<256xf32, #tpu.memory_space<smem>>
    %2584 = vector.broadcast %2583 : f32 to vector<8x128xf32>
    %2585 = arith.mulf %2344, %2584 : vector<8x128xf32>
    %2586 = arith.addf %2579, %2585 : vector<8x128xf32>
    %2587 = vector.broadcast %2583 : f32 to vector<8x128xf32>
    %2588 = arith.mulf %2372, %2587 : vector<8x128xf32>
    %2589 = arith.addf %2582, %2588 : vector<8x128xf32>
    %c112_193 = arith.constant 112 : index
    %2590 = memref.load %arg1[%c112_193] : memref<256xf32, #tpu.memory_space<smem>>
    %2591 = vector.broadcast %2590 : f32 to vector<8x128xf32>
    %2592 = arith.mulf %2349, %2591 : vector<8x128xf32>
    %2593 = arith.addf %2586, %2592 : vector<8x128xf32>
    %2594 = vector.broadcast %2590 : f32 to vector<8x128xf32>
    %2595 = arith.mulf %2377, %2594 : vector<8x128xf32>
    %2596 = arith.addf %2589, %2595 : vector<8x128xf32>
    %c116_194 = arith.constant 116 : index
    %2597 = memref.load %arg1[%c116_194] : memref<256xf32, #tpu.memory_space<smem>>
    %2598 = vector.broadcast %2597 : f32 to vector<8x128xf32>
    %2599 = arith.mulf %2354, %2598 : vector<8x128xf32>
    %2600 = arith.addf %2593, %2599 : vector<8x128xf32>
    %2601 = vector.broadcast %2597 : f32 to vector<8x128xf32>
    %2602 = arith.mulf %2382, %2601 : vector<8x128xf32>
    %2603 = arith.addf %2596, %2602 : vector<8x128xf32>
    %c120_195 = arith.constant 120 : index
    %2604 = memref.load %arg1[%c120_195] : memref<256xf32, #tpu.memory_space<smem>>
    %2605 = vector.broadcast %2604 : f32 to vector<8x128xf32>
    %2606 = arith.mulf %2357, %2605 : vector<8x128xf32>
    %2607 = arith.addf %2600, %2606 : vector<8x128xf32>
    %2608 = vector.broadcast %2604 : f32 to vector<8x128xf32>
    %2609 = arith.mulf %2385, %2608 : vector<8x128xf32>
    %2610 = arith.addf %2603, %2609 : vector<8x128xf32>
    %c124_196 = arith.constant 124 : index
    %2611 = memref.load %arg1[%c124_196] : memref<256xf32, #tpu.memory_space<smem>>
    %2612 = vector.broadcast %2611 : f32 to vector<8x128xf32>
    %2613 = arith.mulf %2358, %2612 : vector<8x128xf32>
    %2614 = arith.addf %2607, %2613 : vector<8x128xf32>
    %2615 = vector.broadcast %2611 : f32 to vector<8x128xf32>
    %2616 = arith.mulf %2386, %2615 : vector<8x128xf32>
    %2617 = arith.addf %2610, %2616 : vector<8x128xf32>
    %2618 = arith.mulf %2288, %2614 : vector<8x128xf32>
    %2619 = arith.addf %2559, %2618 : vector<8x128xf32>
    %2620 = arith.mulf %2316, %2614 : vector<8x128xf32>
    %2621 = arith.addf %2561, %2620 : vector<8x128xf32>
    %2622 = arith.mulf %2288, %2617 : vector<8x128xf32>
    %2623 = arith.addf %2563, %2622 : vector<8x128xf32>
    %c128_197 = arith.constant 128 : index
    %2624 = memref.load %arg1[%c128_197] : memref<256xf32, #tpu.memory_space<smem>>
    %2625 = vector.broadcast %2624 : f32 to vector<8x128xf32>
    %2626 = arith.mulf %2331, %2625 : vector<8x128xf32>
    %2627 = vector.broadcast %2624 : f32 to vector<8x128xf32>
    %2628 = arith.mulf %2359, %2627 : vector<8x128xf32>
    %c132_198 = arith.constant 132 : index
    %2629 = memref.load %arg1[%c132_198] : memref<256xf32, #tpu.memory_space<smem>>
    %2630 = vector.broadcast %2629 : f32 to vector<8x128xf32>
    %2631 = arith.mulf %2334, %2630 : vector<8x128xf32>
    %2632 = arith.addf %2626, %2631 : vector<8x128xf32>
    %2633 = vector.broadcast %2629 : f32 to vector<8x128xf32>
    %2634 = arith.mulf %2362, %2633 : vector<8x128xf32>
    %2635 = arith.addf %2628, %2634 : vector<8x128xf32>
    %c136_199 = arith.constant 136 : index
    %2636 = memref.load %arg1[%c136_199] : memref<256xf32, #tpu.memory_space<smem>>
    %2637 = vector.broadcast %2636 : f32 to vector<8x128xf32>
    %2638 = arith.mulf %2339, %2637 : vector<8x128xf32>
    %2639 = arith.addf %2632, %2638 : vector<8x128xf32>
    %2640 = vector.broadcast %2636 : f32 to vector<8x128xf32>
    %2641 = arith.mulf %2367, %2640 : vector<8x128xf32>
    %2642 = arith.addf %2635, %2641 : vector<8x128xf32>
    %c140_200 = arith.constant 140 : index
    %2643 = memref.load %arg1[%c140_200] : memref<256xf32, #tpu.memory_space<smem>>
    %2644 = vector.broadcast %2643 : f32 to vector<8x128xf32>
    %2645 = arith.mulf %2344, %2644 : vector<8x128xf32>
    %2646 = arith.addf %2639, %2645 : vector<8x128xf32>
    %2647 = vector.broadcast %2643 : f32 to vector<8x128xf32>
    %2648 = arith.mulf %2372, %2647 : vector<8x128xf32>
    %2649 = arith.addf %2642, %2648 : vector<8x128xf32>
    %c144_201 = arith.constant 144 : index
    %2650 = memref.load %arg1[%c144_201] : memref<256xf32, #tpu.memory_space<smem>>
    %2651 = vector.broadcast %2650 : f32 to vector<8x128xf32>
    %2652 = arith.mulf %2349, %2651 : vector<8x128xf32>
    %2653 = arith.addf %2646, %2652 : vector<8x128xf32>
    %2654 = vector.broadcast %2650 : f32 to vector<8x128xf32>
    %2655 = arith.mulf %2377, %2654 : vector<8x128xf32>
    %2656 = arith.addf %2649, %2655 : vector<8x128xf32>
    %c148_202 = arith.constant 148 : index
    %2657 = memref.load %arg1[%c148_202] : memref<256xf32, #tpu.memory_space<smem>>
    %2658 = vector.broadcast %2657 : f32 to vector<8x128xf32>
    %2659 = arith.mulf %2354, %2658 : vector<8x128xf32>
    %2660 = arith.addf %2653, %2659 : vector<8x128xf32>
    %2661 = vector.broadcast %2657 : f32 to vector<8x128xf32>
    %2662 = arith.mulf %2382, %2661 : vector<8x128xf32>
    %2663 = arith.addf %2656, %2662 : vector<8x128xf32>
    %c152_203 = arith.constant 152 : index
    %2664 = memref.load %arg1[%c152_203] : memref<256xf32, #tpu.memory_space<smem>>
    %2665 = vector.broadcast %2664 : f32 to vector<8x128xf32>
    %2666 = arith.mulf %2357, %2665 : vector<8x128xf32>
    %2667 = arith.addf %2660, %2666 : vector<8x128xf32>
    %2668 = vector.broadcast %2664 : f32 to vector<8x128xf32>
    %2669 = arith.mulf %2385, %2668 : vector<8x128xf32>
    %2670 = arith.addf %2663, %2669 : vector<8x128xf32>
    %c156_204 = arith.constant 156 : index
    %2671 = memref.load %arg1[%c156_204] : memref<256xf32, #tpu.memory_space<smem>>
    %2672 = vector.broadcast %2671 : f32 to vector<8x128xf32>
    %2673 = arith.mulf %2358, %2672 : vector<8x128xf32>
    %2674 = arith.addf %2667, %2673 : vector<8x128xf32>
    %2675 = vector.broadcast %2671 : f32 to vector<8x128xf32>
    %2676 = arith.mulf %2386, %2675 : vector<8x128xf32>
    %2677 = arith.addf %2670, %2676 : vector<8x128xf32>
    %2678 = arith.mulf %2293, %2674 : vector<8x128xf32>
    %2679 = arith.addf %2619, %2678 : vector<8x128xf32>
    %2680 = arith.mulf %2321, %2674 : vector<8x128xf32>
    %2681 = arith.addf %2621, %2680 : vector<8x128xf32>
    %2682 = arith.mulf %2293, %2677 : vector<8x128xf32>
    %2683 = arith.addf %2623, %2682 : vector<8x128xf32>
    %c160_205 = arith.constant 160 : index
    %2684 = memref.load %arg1[%c160_205] : memref<256xf32, #tpu.memory_space<smem>>
    %2685 = vector.broadcast %2684 : f32 to vector<8x128xf32>
    %2686 = arith.mulf %2331, %2685 : vector<8x128xf32>
    %2687 = vector.broadcast %2684 : f32 to vector<8x128xf32>
    %2688 = arith.mulf %2359, %2687 : vector<8x128xf32>
    %c164_206 = arith.constant 164 : index
    %2689 = memref.load %arg1[%c164_206] : memref<256xf32, #tpu.memory_space<smem>>
    %2690 = vector.broadcast %2689 : f32 to vector<8x128xf32>
    %2691 = arith.mulf %2334, %2690 : vector<8x128xf32>
    %2692 = arith.addf %2686, %2691 : vector<8x128xf32>
    %2693 = vector.broadcast %2689 : f32 to vector<8x128xf32>
    %2694 = arith.mulf %2362, %2693 : vector<8x128xf32>
    %2695 = arith.addf %2688, %2694 : vector<8x128xf32>
    %c168_207 = arith.constant 168 : index
    %2696 = memref.load %arg1[%c168_207] : memref<256xf32, #tpu.memory_space<smem>>
    %2697 = vector.broadcast %2696 : f32 to vector<8x128xf32>
    %2698 = arith.mulf %2339, %2697 : vector<8x128xf32>
    %2699 = arith.addf %2692, %2698 : vector<8x128xf32>
    %2700 = vector.broadcast %2696 : f32 to vector<8x128xf32>
    %2701 = arith.mulf %2367, %2700 : vector<8x128xf32>
    %2702 = arith.addf %2695, %2701 : vector<8x128xf32>
    %c172_208 = arith.constant 172 : index
    %2703 = memref.load %arg1[%c172_208] : memref<256xf32, #tpu.memory_space<smem>>
    %2704 = vector.broadcast %2703 : f32 to vector<8x128xf32>
    %2705 = arith.mulf %2344, %2704 : vector<8x128xf32>
    %2706 = arith.addf %2699, %2705 : vector<8x128xf32>
    %2707 = vector.broadcast %2703 : f32 to vector<8x128xf32>
    %2708 = arith.mulf %2372, %2707 : vector<8x128xf32>
    %2709 = arith.addf %2702, %2708 : vector<8x128xf32>
    %c176_209 = arith.constant 176 : index
    %2710 = memref.load %arg1[%c176_209] : memref<256xf32, #tpu.memory_space<smem>>
    %2711 = vector.broadcast %2710 : f32 to vector<8x128xf32>
    %2712 = arith.mulf %2349, %2711 : vector<8x128xf32>
    %2713 = arith.addf %2706, %2712 : vector<8x128xf32>
    %2714 = vector.broadcast %2710 : f32 to vector<8x128xf32>
    %2715 = arith.mulf %2377, %2714 : vector<8x128xf32>
    %2716 = arith.addf %2709, %2715 : vector<8x128xf32>
    %c180_210 = arith.constant 180 : index
    %2717 = memref.load %arg1[%c180_210] : memref<256xf32, #tpu.memory_space<smem>>
    %2718 = vector.broadcast %2717 : f32 to vector<8x128xf32>
    %2719 = arith.mulf %2354, %2718 : vector<8x128xf32>
    %2720 = arith.addf %2713, %2719 : vector<8x128xf32>
    %2721 = vector.broadcast %2717 : f32 to vector<8x128xf32>
    %2722 = arith.mulf %2382, %2721 : vector<8x128xf32>
    %2723 = arith.addf %2716, %2722 : vector<8x128xf32>
    %c184_211 = arith.constant 184 : index
    %2724 = memref.load %arg1[%c184_211] : memref<256xf32, #tpu.memory_space<smem>>
    %2725 = vector.broadcast %2724 : f32 to vector<8x128xf32>
    %2726 = arith.mulf %2357, %2725 : vector<8x128xf32>
    %2727 = arith.addf %2720, %2726 : vector<8x128xf32>
    %2728 = vector.broadcast %2724 : f32 to vector<8x128xf32>
    %2729 = arith.mulf %2385, %2728 : vector<8x128xf32>
    %2730 = arith.addf %2723, %2729 : vector<8x128xf32>
    %c188_212 = arith.constant 188 : index
    %2731 = memref.load %arg1[%c188_212] : memref<256xf32, #tpu.memory_space<smem>>
    %2732 = vector.broadcast %2731 : f32 to vector<8x128xf32>
    %2733 = arith.mulf %2358, %2732 : vector<8x128xf32>
    %2734 = arith.addf %2727, %2733 : vector<8x128xf32>
    %2735 = vector.broadcast %2731 : f32 to vector<8x128xf32>
    %2736 = arith.mulf %2386, %2735 : vector<8x128xf32>
    %2737 = arith.addf %2730, %2736 : vector<8x128xf32>
    %2738 = arith.mulf %2298, %2734 : vector<8x128xf32>
    %2739 = arith.addf %2679, %2738 : vector<8x128xf32>
    %2740 = arith.mulf %2326, %2734 : vector<8x128xf32>
    %2741 = arith.addf %2681, %2740 : vector<8x128xf32>
    %2742 = arith.mulf %2298, %2737 : vector<8x128xf32>
    %2743 = arith.addf %2683, %2742 : vector<8x128xf32>
    %c192_213 = arith.constant 192 : index
    %2744 = memref.load %arg1[%c192_213] : memref<256xf32, #tpu.memory_space<smem>>
    %2745 = vector.broadcast %2744 : f32 to vector<8x128xf32>
    %2746 = arith.mulf %2331, %2745 : vector<8x128xf32>
    %2747 = vector.broadcast %2744 : f32 to vector<8x128xf32>
    %2748 = arith.mulf %2359, %2747 : vector<8x128xf32>
    %c196_214 = arith.constant 196 : index
    %2749 = memref.load %arg1[%c196_214] : memref<256xf32, #tpu.memory_space<smem>>
    %2750 = vector.broadcast %2749 : f32 to vector<8x128xf32>
    %2751 = arith.mulf %2334, %2750 : vector<8x128xf32>
    %2752 = arith.addf %2746, %2751 : vector<8x128xf32>
    %2753 = vector.broadcast %2749 : f32 to vector<8x128xf32>
    %2754 = arith.mulf %2362, %2753 : vector<8x128xf32>
    %2755 = arith.addf %2748, %2754 : vector<8x128xf32>
    %c200_215 = arith.constant 200 : index
    %2756 = memref.load %arg1[%c200_215] : memref<256xf32, #tpu.memory_space<smem>>
    %2757 = vector.broadcast %2756 : f32 to vector<8x128xf32>
    %2758 = arith.mulf %2339, %2757 : vector<8x128xf32>
    %2759 = arith.addf %2752, %2758 : vector<8x128xf32>
    %2760 = vector.broadcast %2756 : f32 to vector<8x128xf32>
    %2761 = arith.mulf %2367, %2760 : vector<8x128xf32>
    %2762 = arith.addf %2755, %2761 : vector<8x128xf32>
    %c204_216 = arith.constant 204 : index
    %2763 = memref.load %arg1[%c204_216] : memref<256xf32, #tpu.memory_space<smem>>
    %2764 = vector.broadcast %2763 : f32 to vector<8x128xf32>
    %2765 = arith.mulf %2344, %2764 : vector<8x128xf32>
    %2766 = arith.addf %2759, %2765 : vector<8x128xf32>
    %2767 = vector.broadcast %2763 : f32 to vector<8x128xf32>
    %2768 = arith.mulf %2372, %2767 : vector<8x128xf32>
    %2769 = arith.addf %2762, %2768 : vector<8x128xf32>
    %c208_217 = arith.constant 208 : index
    %2770 = memref.load %arg1[%c208_217] : memref<256xf32, #tpu.memory_space<smem>>
    %2771 = vector.broadcast %2770 : f32 to vector<8x128xf32>
    %2772 = arith.mulf %2349, %2771 : vector<8x128xf32>
    %2773 = arith.addf %2766, %2772 : vector<8x128xf32>
    %2774 = vector.broadcast %2770 : f32 to vector<8x128xf32>
    %2775 = arith.mulf %2377, %2774 : vector<8x128xf32>
    %2776 = arith.addf %2769, %2775 : vector<8x128xf32>
    %c212_218 = arith.constant 212 : index
    %2777 = memref.load %arg1[%c212_218] : memref<256xf32, #tpu.memory_space<smem>>
    %2778 = vector.broadcast %2777 : f32 to vector<8x128xf32>
    %2779 = arith.mulf %2354, %2778 : vector<8x128xf32>
    %2780 = arith.addf %2773, %2779 : vector<8x128xf32>
    %2781 = vector.broadcast %2777 : f32 to vector<8x128xf32>
    %2782 = arith.mulf %2382, %2781 : vector<8x128xf32>
    %2783 = arith.addf %2776, %2782 : vector<8x128xf32>
    %c216_219 = arith.constant 216 : index
    %2784 = memref.load %arg1[%c216_219] : memref<256xf32, #tpu.memory_space<smem>>
    %2785 = vector.broadcast %2784 : f32 to vector<8x128xf32>
    %2786 = arith.mulf %2357, %2785 : vector<8x128xf32>
    %2787 = arith.addf %2780, %2786 : vector<8x128xf32>
    %2788 = vector.broadcast %2784 : f32 to vector<8x128xf32>
    %2789 = arith.mulf %2385, %2788 : vector<8x128xf32>
    %2790 = arith.addf %2783, %2789 : vector<8x128xf32>
    %c220_220 = arith.constant 220 : index
    %2791 = memref.load %arg1[%c220_220] : memref<256xf32, #tpu.memory_space<smem>>
    %2792 = vector.broadcast %2791 : f32 to vector<8x128xf32>
    %2793 = arith.mulf %2358, %2792 : vector<8x128xf32>
    %2794 = arith.addf %2787, %2793 : vector<8x128xf32>
    %2795 = vector.broadcast %2791 : f32 to vector<8x128xf32>
    %2796 = arith.mulf %2386, %2795 : vector<8x128xf32>
    %2797 = arith.addf %2790, %2796 : vector<8x128xf32>
    %2798 = arith.mulf %2301, %2794 : vector<8x128xf32>
    %2799 = arith.addf %2739, %2798 : vector<8x128xf32>
    %2800 = arith.mulf %2329, %2794 : vector<8x128xf32>
    %2801 = arith.addf %2741, %2800 : vector<8x128xf32>
    %2802 = arith.mulf %2301, %2797 : vector<8x128xf32>
    %2803 = arith.addf %2743, %2802 : vector<8x128xf32>
    %c224_221 = arith.constant 224 : index
    %2804 = memref.load %arg1[%c224_221] : memref<256xf32, #tpu.memory_space<smem>>
    %2805 = vector.broadcast %2804 : f32 to vector<8x128xf32>
    %2806 = arith.mulf %2331, %2805 : vector<8x128xf32>
    %2807 = vector.broadcast %2804 : f32 to vector<8x128xf32>
    %2808 = arith.mulf %2359, %2807 : vector<8x128xf32>
    %c228_222 = arith.constant 228 : index
    %2809 = memref.load %arg1[%c228_222] : memref<256xf32, #tpu.memory_space<smem>>
    %2810 = vector.broadcast %2809 : f32 to vector<8x128xf32>
    %2811 = arith.mulf %2334, %2810 : vector<8x128xf32>
    %2812 = arith.addf %2806, %2811 : vector<8x128xf32>
    %2813 = vector.broadcast %2809 : f32 to vector<8x128xf32>
    %2814 = arith.mulf %2362, %2813 : vector<8x128xf32>
    %2815 = arith.addf %2808, %2814 : vector<8x128xf32>
    %c232_223 = arith.constant 232 : index
    %2816 = memref.load %arg1[%c232_223] : memref<256xf32, #tpu.memory_space<smem>>
    %2817 = vector.broadcast %2816 : f32 to vector<8x128xf32>
    %2818 = arith.mulf %2339, %2817 : vector<8x128xf32>
    %2819 = arith.addf %2812, %2818 : vector<8x128xf32>
    %2820 = vector.broadcast %2816 : f32 to vector<8x128xf32>
    %2821 = arith.mulf %2367, %2820 : vector<8x128xf32>
    %2822 = arith.addf %2815, %2821 : vector<8x128xf32>
    %c236_224 = arith.constant 236 : index
    %2823 = memref.load %arg1[%c236_224] : memref<256xf32, #tpu.memory_space<smem>>
    %2824 = vector.broadcast %2823 : f32 to vector<8x128xf32>
    %2825 = arith.mulf %2344, %2824 : vector<8x128xf32>
    %2826 = arith.addf %2819, %2825 : vector<8x128xf32>
    %2827 = vector.broadcast %2823 : f32 to vector<8x128xf32>
    %2828 = arith.mulf %2372, %2827 : vector<8x128xf32>
    %2829 = arith.addf %2822, %2828 : vector<8x128xf32>
    %c240_225 = arith.constant 240 : index
    %2830 = memref.load %arg1[%c240_225] : memref<256xf32, #tpu.memory_space<smem>>
    %2831 = vector.broadcast %2830 : f32 to vector<8x128xf32>
    %2832 = arith.mulf %2349, %2831 : vector<8x128xf32>
    %2833 = arith.addf %2826, %2832 : vector<8x128xf32>
    %2834 = vector.broadcast %2830 : f32 to vector<8x128xf32>
    %2835 = arith.mulf %2377, %2834 : vector<8x128xf32>
    %2836 = arith.addf %2829, %2835 : vector<8x128xf32>
    %c244_226 = arith.constant 244 : index
    %2837 = memref.load %arg1[%c244_226] : memref<256xf32, #tpu.memory_space<smem>>
    %2838 = vector.broadcast %2837 : f32 to vector<8x128xf32>
    %2839 = arith.mulf %2354, %2838 : vector<8x128xf32>
    %2840 = arith.addf %2833, %2839 : vector<8x128xf32>
    %2841 = vector.broadcast %2837 : f32 to vector<8x128xf32>
    %2842 = arith.mulf %2382, %2841 : vector<8x128xf32>
    %2843 = arith.addf %2836, %2842 : vector<8x128xf32>
    %c248_227 = arith.constant 248 : index
    %2844 = memref.load %arg1[%c248_227] : memref<256xf32, #tpu.memory_space<smem>>
    %2845 = vector.broadcast %2844 : f32 to vector<8x128xf32>
    %2846 = arith.mulf %2357, %2845 : vector<8x128xf32>
    %2847 = arith.addf %2840, %2846 : vector<8x128xf32>
    %2848 = vector.broadcast %2844 : f32 to vector<8x128xf32>
    %2849 = arith.mulf %2385, %2848 : vector<8x128xf32>
    %2850 = arith.addf %2843, %2849 : vector<8x128xf32>
    %c252_228 = arith.constant 252 : index
    %2851 = memref.load %arg1[%c252_228] : memref<256xf32, #tpu.memory_space<smem>>
    %2852 = vector.broadcast %2851 : f32 to vector<8x128xf32>
    %2853 = arith.mulf %2358, %2852 : vector<8x128xf32>
    %2854 = arith.addf %2847, %2853 : vector<8x128xf32>
    %2855 = vector.broadcast %2851 : f32 to vector<8x128xf32>
    %2856 = arith.mulf %2386, %2855 : vector<8x128xf32>
    %2857 = arith.addf %2850, %2856 : vector<8x128xf32>
    %2858 = arith.mulf %2302, %2854 : vector<8x128xf32>
    %2859 = arith.addf %2799, %2858 : vector<8x128xf32>
    %2860 = arith.mulf %2330, %2854 : vector<8x128xf32>
    %2861 = arith.addf %2801, %2860 : vector<8x128xf32>
    %2862 = arith.mulf %2302, %2857 : vector<8x128xf32>
    %2863 = arith.addf %2803, %2862 : vector<8x128xf32>
    %c0_229 = arith.constant 0 : index
    %c8_230 = arith.constant 8 : index
    %c0_231 = arith.constant 0 : index
    %2864 = vector.load %arg3[%c0_229, %c8_230, %c0_231] : memref<8x16x128xf32, #tpu.memory_space<vmem>>, vector<1x8x128xf32>
    %2865 = vector.shape_cast %2864 : vector<1x8x128xf32> to vector<8x128xf32>
    %2866 = vector.shape_cast %2859 : vector<8x128xf32> to vector<1x8x128xf32>
    tpu.vector_store %arg3[%c0_229, %c8_230, %c0_231], %2866 {strides = array<i32>} : memref<8x16x128xf32, #tpu.memory_space<vmem>>, vector<1x8x128xf32>,
    %c1_232 = arith.constant 1 : index
    %2867 = memref.load %arg1[%c1_232] : memref<256xf32, #tpu.memory_space<smem>>
    %2868 = vector.broadcast %2867 : f32 to vector<8x128xf32>
    %2869 = arith.mulf %2331, %2868 : vector<8x128xf32>
    %2870 = vector.broadcast %2867 : f32 to vector<8x128xf32>
    %2871 = arith.mulf %2359, %2870 : vector<8x128xf32>
    %c5_233 = arith.constant 5 : index
    %2872 = memref.load %arg1[%c5_233] : memref<256xf32, #tpu.memory_space<smem>>
    %2873 = vector.broadcast %2872 : f32 to vector<8x128xf32>
    %2874 = arith.mulf %2334, %2873 : vector<8x128xf32>
    %2875 = arith.addf %2869, %2874 : vector<8x128xf32>
    %2876 = vector.broadcast %2872 : f32 to vector<8x128xf32>
    %2877 = arith.mulf %2362, %2876 : vector<8x128xf32>
    %2878 = arith.addf %2871, %2877 : vector<8x128xf32>
    %c9_234 = arith.constant 9 : index
    %2879 = memref.load %arg1[%c9_234] : memref<256xf32, #tpu.memory_space<smem>>
    %2880 = vector.broadcast %2879 : f32 to vector<8x128xf32>
    %2881 = arith.mulf %2339, %2880 : vector<8x128xf32>
    %2882 = arith.addf %2875, %2881 : vector<8x128xf32>
    %2883 = vector.broadcast %2879 : f32 to vector<8x128xf32>
    %2884 = arith.mulf %2367, %2883 : vector<8x128xf32>
    %2885 = arith.addf %2878, %2884 : vector<8x128xf32>
    %c13_235 = arith.constant 13 : index
    %2886 = memref.load %arg1[%c13_235] : memref<256xf32, #tpu.memory_space<smem>>
    %2887 = vector.broadcast %2886 : f32 to vector<8x128xf32>
    %2888 = arith.mulf %2344, %2887 : vector<8x128xf32>
    %2889 = arith.addf %2882, %2888 : vector<8x128xf32>
    %2890 = vector.broadcast %2886 : f32 to vector<8x128xf32>
    %2891 = arith.mulf %2372, %2890 : vector<8x128xf32>
    %2892 = arith.addf %2885, %2891 : vector<8x128xf32>
    %c17_236 = arith.constant 17 : index
    %2893 = memref.load %arg1[%c17_236] : memref<256xf32, #tpu.memory_space<smem>>
    %2894 = vector.broadcast %2893 : f32 to vector<8x128xf32>
    %2895 = arith.mulf %2349, %2894 : vector<8x128xf32>
    %2896 = arith.addf %2889, %2895 : vector<8x128xf32>
    %2897 = vector.broadcast %2893 : f32 to vector<8x128xf32>
    %2898 = arith.mulf %2377, %2897 : vector<8x128xf32>
    %2899 = arith.addf %2892, %2898 : vector<8x128xf32>
    %c21_237 = arith.constant 21 : index
    %2900 = memref.load %arg1[%c21_237] : memref<256xf32, #tpu.memory_space<smem>>
    %2901 = vector.broadcast %2900 : f32 to vector<8x128xf32>
    %2902 = arith.mulf %2354, %2901 : vector<8x128xf32>
    %2903 = arith.addf %2896, %2902 : vector<8x128xf32>
    %2904 = vector.broadcast %2900 : f32 to vector<8x128xf32>
    %2905 = arith.mulf %2382, %2904 : vector<8x128xf32>
    %2906 = arith.addf %2899, %2905 : vector<8x128xf32>
    %c25_238 = arith.constant 25 : index
    %2907 = memref.load %arg1[%c25_238] : memref<256xf32, #tpu.memory_space<smem>>
    %2908 = vector.broadcast %2907 : f32 to vector<8x128xf32>
    %2909 = arith.mulf %2357, %2908 : vector<8x128xf32>
    %2910 = arith.addf %2903, %2909 : vector<8x128xf32>
    %2911 = vector.broadcast %2907 : f32 to vector<8x128xf32>
    %2912 = arith.mulf %2385, %2911 : vector<8x128xf32>
    %2913 = arith.addf %2906, %2912 : vector<8x128xf32>
    %c29_239 = arith.constant 29 : index
    %2914 = memref.load %arg1[%c29_239] : memref<256xf32, #tpu.memory_space<smem>>
    %2915 = vector.broadcast %2914 : f32 to vector<8x128xf32>
    %2916 = arith.mulf %2358, %2915 : vector<8x128xf32>
    %2917 = arith.addf %2910, %2916 : vector<8x128xf32>
    %2918 = vector.broadcast %2914 : f32 to vector<8x128xf32>
    %2919 = arith.mulf %2386, %2918 : vector<8x128xf32>
    %2920 = arith.addf %2913, %2919 : vector<8x128xf32>
    %2921 = arith.mulf %2275, %2917 : vector<8x128xf32>
    %2922 = arith.mulf %2303, %2917 : vector<8x128xf32>
    %2923 = arith.mulf %2275, %2920 : vector<8x128xf32>
    %c33_240 = arith.constant 33 : index
    %2924 = memref.load %arg1[%c33_240] : memref<256xf32, #tpu.memory_space<smem>>
    %2925 = vector.broadcast %2924 : f32 to vector<8x128xf32>
    %2926 = arith.mulf %2331, %2925 : vector<8x128xf32>
    %2927 = vector.broadcast %2924 : f32 to vector<8x128xf32>
    %2928 = arith.mulf %2359, %2927 : vector<8x128xf32>
    %c37_241 = arith.constant 37 : index
    %2929 = memref.load %arg1[%c37_241] : memref<256xf32, #tpu.memory_space<smem>>
    %2930 = vector.broadcast %2929 : f32 to vector<8x128xf32>
    %2931 = arith.mulf %2334, %2930 : vector<8x128xf32>
    %2932 = arith.addf %2926, %2931 : vector<8x128xf32>
    %2933 = vector.broadcast %2929 : f32 to vector<8x128xf32>
    %2934 = arith.mulf %2362, %2933 : vector<8x128xf32>
    %2935 = arith.addf %2928, %2934 : vector<8x128xf32>
    %c41_242 = arith.constant 41 : index
    %2936 = memref.load %arg1[%c41_242] : memref<256xf32, #tpu.memory_space<smem>>
    %2937 = vector.broadcast %2936 : f32 to vector<8x128xf32>
    %2938 = arith.mulf %2339, %2937 : vector<8x128xf32>
    %2939 = arith.addf %2932, %2938 : vector<8x128xf32>
    %2940 = vector.broadcast %2936 : f32 to vector<8x128xf32>
    %2941 = arith.mulf %2367, %2940 : vector<8x128xf32>
    %2942 = arith.addf %2935, %2941 : vector<8x128xf32>
    %c45_243 = arith.constant 45 : index
    %2943 = memref.load %arg1[%c45_243] : memref<256xf32, #tpu.memory_space<smem>>
    %2944 = vector.broadcast %2943 : f32 to vector<8x128xf32>
    %2945 = arith.mulf %2344, %2944 : vector<8x128xf32>
    %2946 = arith.addf %2939, %2945 : vector<8x128xf32>
    %2947 = vector.broadcast %2943 : f32 to vector<8x128xf32>
    %2948 = arith.mulf %2372, %2947 : vector<8x128xf32>
    %2949 = arith.addf %2942, %2948 : vector<8x128xf32>
    %c49_244 = arith.constant 49 : index
    %2950 = memref.load %arg1[%c49_244] : memref<256xf32, #tpu.memory_space<smem>>
    %2951 = vector.broadcast %2950 : f32 to vector<8x128xf32>
    %2952 = arith.mulf %2349, %2951 : vector<8x128xf32>
    %2953 = arith.addf %2946, %2952 : vector<8x128xf32>
    %2954 = vector.broadcast %2950 : f32 to vector<8x128xf32>
    %2955 = arith.mulf %2377, %2954 : vector<8x128xf32>
    %2956 = arith.addf %2949, %2955 : vector<8x128xf32>
    %c53_245 = arith.constant 53 : index
    %2957 = memref.load %arg1[%c53_245] : memref<256xf32, #tpu.memory_space<smem>>
    %2958 = vector.broadcast %2957 : f32 to vector<8x128xf32>
    %2959 = arith.mulf %2354, %2958 : vector<8x128xf32>
    %2960 = arith.addf %2953, %2959 : vector<8x128xf32>
    %2961 = vector.broadcast %2957 : f32 to vector<8x128xf32>
    %2962 = arith.mulf %2382, %2961 : vector<8x128xf32>
    %2963 = arith.addf %2956, %2962 : vector<8x128xf32>
    %c57_246 = arith.constant 57 : index
    %2964 = memref.load %arg1[%c57_246] : memref<256xf32, #tpu.memory_space<smem>>
    %2965 = vector.broadcast %2964 : f32 to vector<8x128xf32>
    %2966 = arith.mulf %2357, %2965 : vector<8x128xf32>
    %2967 = arith.addf %2960, %2966 : vector<8x128xf32>
    %2968 = vector.broadcast %2964 : f32 to vector<8x128xf32>
    %2969 = arith.mulf %2385, %2968 : vector<8x128xf32>
    %2970 = arith.addf %2963, %2969 : vector<8x128xf32>
    %c61_247 = arith.constant 61 : index
    %2971 = memref.load %arg1[%c61_247] : memref<256xf32, #tpu.memory_space<smem>>
    %2972 = vector.broadcast %2971 : f32 to vector<8x128xf32>
    %2973 = arith.mulf %2358, %2972 : vector<8x128xf32>
    %2974 = arith.addf %2967, %2973 : vector<8x128xf32>
    %2975 = vector.broadcast %2971 : f32 to vector<8x128xf32>
    %2976 = arith.mulf %2386, %2975 : vector<8x128xf32>
    %2977 = arith.addf %2970, %2976 : vector<8x128xf32>
    %2978 = arith.mulf %2278, %2974 : vector<8x128xf32>
    %2979 = arith.addf %2921, %2978 : vector<8x128xf32>
    %2980 = arith.mulf %2306, %2974 : vector<8x128xf32>
    %2981 = arith.addf %2922, %2980 : vector<8x128xf32>
    %2982 = arith.mulf %2278, %2977 : vector<8x128xf32>
    %2983 = arith.addf %2923, %2982 : vector<8x128xf32>
    %c65_248 = arith.constant 65 : index
    %2984 = memref.load %arg1[%c65_248] : memref<256xf32, #tpu.memory_space<smem>>
    %2985 = vector.broadcast %2984 : f32 to vector<8x128xf32>
    %2986 = arith.mulf %2331, %2985 : vector<8x128xf32>
    %2987 = vector.broadcast %2984 : f32 to vector<8x128xf32>
    %2988 = arith.mulf %2359, %2987 : vector<8x128xf32>
    %c69_249 = arith.constant 69 : index
    %2989 = memref.load %arg1[%c69_249] : memref<256xf32, #tpu.memory_space<smem>>
    %2990 = vector.broadcast %2989 : f32 to vector<8x128xf32>
    %2991 = arith.mulf %2334, %2990 : vector<8x128xf32>
    %2992 = arith.addf %2986, %2991 : vector<8x128xf32>
    %2993 = vector.broadcast %2989 : f32 to vector<8x128xf32>
    %2994 = arith.mulf %2362, %2993 : vector<8x128xf32>
    %2995 = arith.addf %2988, %2994 : vector<8x128xf32>
    %c73_250 = arith.constant 73 : index
    %2996 = memref.load %arg1[%c73_250] : memref<256xf32, #tpu.memory_space<smem>>
    %2997 = vector.broadcast %2996 : f32 to vector<8x128xf32>
    %2998 = arith.mulf %2339, %2997 : vector<8x128xf32>
    %2999 = arith.addf %2992, %2998 : vector<8x128xf32>
    %3000 = vector.broadcast %2996 : f32 to vector<8x128xf32>
    %3001 = arith.mulf %2367, %3000 : vector<8x128xf32>
    %3002 = arith.addf %2995, %3001 : vector<8x128xf32>
    %c77_251 = arith.constant 77 : index
    %3003 = memref.load %arg1[%c77_251] : memref<256xf32, #tpu.memory_space<smem>>
    %3004 = vector.broadcast %3003 : f32 to vector<8x128xf32>
    %3005 = arith.mulf %2344, %3004 : vector<8x128xf32>
    %3006 = arith.addf %2999, %3005 : vector<8x128xf32>
    %3007 = vector.broadcast %3003 : f32 to vector<8x128xf32>
    %3008 = arith.mulf %2372, %3007 : vector<8x128xf32>
    %3009 = arith.addf %3002, %3008 : vector<8x128xf32>
    %c81_252 = arith.constant 81 : index
    %3010 = memref.load %arg1[%c81_252] : memref<256xf32, #tpu.memory_space<smem>>
    %3011 = vector.broadcast %3010 : f32 to vector<8x128xf32>
    %3012 = arith.mulf %2349, %3011 : vector<8x128xf32>
    %3013 = arith.addf %3006, %3012 : vector<8x128xf32>
    %3014 = vector.broadcast %3010 : f32 to vector<8x128xf32>
    %3015 = arith.mulf %2377, %3014 : vector<8x128xf32>
    %3016 = arith.addf %3009, %3015 : vector<8x128xf32>
    %c85_253 = arith.constant 85 : index
    %3017 = memref.load %arg1[%c85_253] : memref<256xf32, #tpu.memory_space<smem>>
    %3018 = vector.broadcast %3017 : f32 to vector<8x128xf32>
    %3019 = arith.mulf %2354, %3018 : vector<8x128xf32>
    %3020 = arith.addf %3013, %3019 : vector<8x128xf32>
    %3021 = vector.broadcast %3017 : f32 to vector<8x128xf32>
    %3022 = arith.mulf %2382, %3021 : vector<8x128xf32>
    %3023 = arith.addf %3016, %3022 : vector<8x128xf32>
    %c89_254 = arith.constant 89 : index
    %3024 = memref.load %arg1[%c89_254] : memref<256xf32, #tpu.memory_space<smem>>
    %3025 = vector.broadcast %3024 : f32 to vector<8x128xf32>
    %3026 = arith.mulf %2357, %3025 : vector<8x128xf32>
    %3027 = arith.addf %3020, %3026 : vector<8x128xf32>
    %3028 = vector.broadcast %3024 : f32 to vector<8x128xf32>
    %3029 = arith.mulf %2385, %3028 : vector<8x128xf32>
    %3030 = arith.addf %3023, %3029 : vector<8x128xf32>
    %c93_255 = arith.constant 93 : index
    %3031 = memref.load %arg1[%c93_255] : memref<256xf32, #tpu.memory_space<smem>>
    %3032 = vector.broadcast %3031 : f32 to vector<8x128xf32>
    %3033 = arith.mulf %2358, %3032 : vector<8x128xf32>
    %3034 = arith.addf %3027, %3033 : vector<8x128xf32>
    %3035 = vector.broadcast %3031 : f32 to vector<8x128xf32>
    %3036 = arith.mulf %2386, %3035 : vector<8x128xf32>
    %3037 = arith.addf %3030, %3036 : vector<8x128xf32>
    %3038 = arith.mulf %2283, %3034 : vector<8x128xf32>
    %3039 = arith.addf %2979, %3038 : vector<8x128xf32>
    %3040 = arith.mulf %2311, %3034 : vector<8x128xf32>
    %3041 = arith.addf %2981, %3040 : vector<8x128xf32>
    %3042 = arith.mulf %2283, %3037 : vector<8x128xf32>
    %3043 = arith.addf %2983, %3042 : vector<8x128xf32>
    %c97_256 = arith.constant 97 : index
    %3044 = memref.load %arg1[%c97_256] : memref<256xf32, #tpu.memory_space<smem>>
    %3045 = vector.broadcast %3044 : f32 to vector<8x128xf32>
    %3046 = arith.mulf %2331, %3045 : vector<8x128xf32>
    %3047 = vector.broadcast %3044 : f32 to vector<8x128xf32>
    %3048 = arith.mulf %2359, %3047 : vector<8x128xf32>
    %c101_257 = arith.constant 101 : index
    %3049 = memref.load %arg1[%c101_257] : memref<256xf32, #tpu.memory_space<smem>>
    %3050 = vector.broadcast %3049 : f32 to vector<8x128xf32>
    %3051 = arith.mulf %2334, %3050 : vector<8x128xf32>
    %3052 = arith.addf %3046, %3051 : vector<8x128xf32>
    %3053 = vector.broadcast %3049 : f32 to vector<8x128xf32>
    %3054 = arith.mulf %2362, %3053 : vector<8x128xf32>
    %3055 = arith.addf %3048, %3054 : vector<8x128xf32>
    %c105_258 = arith.constant 105 : index
    %3056 = memref.load %arg1[%c105_258] : memref<256xf32, #tpu.memory_space<smem>>
    %3057 = vector.broadcast %3056 : f32 to vector<8x128xf32>
    %3058 = arith.mulf %2339, %3057 : vector<8x128xf32>
    %3059 = arith.addf %3052, %3058 : vector<8x128xf32>
    %3060 = vector.broadcast %3056 : f32 to vector<8x128xf32>
    %3061 = arith.mulf %2367, %3060 : vector<8x128xf32>
    %3062 = arith.addf %3055, %3061 : vector<8x128xf32>
    %c109_259 = arith.constant 109 : index
    %3063 = memref.load %arg1[%c109_259] : memref<256xf32, #tpu.memory_space<smem>>
    %3064 = vector.broadcast %3063 : f32 to vector<8x128xf32>
    %3065 = arith.mulf %2344, %3064 : vector<8x128xf32>
    %3066 = arith.addf %3059, %3065 : vector<8x128xf32>
    %3067 = vector.broadcast %3063 : f32 to vector<8x128xf32>
    %3068 = arith.mulf %2372, %3067 : vector<8x128xf32>
    %3069 = arith.addf %3062, %3068 : vector<8x128xf32>
    %c113_260 = arith.constant 113 : index
    %3070 = memref.load %arg1[%c113_260] : memref<256xf32, #tpu.memory_space<smem>>
    %3071 = vector.broadcast %3070 : f32 to vector<8x128xf32>
    %3072 = arith.mulf %2349, %3071 : vector<8x128xf32>
    %3073 = arith.addf %3066, %3072 : vector<8x128xf32>
    %3074 = vector.broadcast %3070 : f32 to vector<8x128xf32>
    %3075 = arith.mulf %2377, %3074 : vector<8x128xf32>
    %3076 = arith.addf %3069, %3075 : vector<8x128xf32>
    %c117_261 = arith.constant 117 : index
    %3077 = memref.load %arg1[%c117_261] : memref<256xf32, #tpu.memory_space<smem>>
    %3078 = vector.broadcast %3077 : f32 to vector<8x128xf32>
    %3079 = arith.mulf %2354, %3078 : vector<8x128xf32>
    %3080 = arith.addf %3073, %3079 : vector<8x128xf32>
    %3081 = vector.broadcast %3077 : f32 to vector<8x128xf32>
    %3082 = arith.mulf %2382, %3081 : vector<8x128xf32>
    %3083 = arith.addf %3076, %3082 : vector<8x128xf32>
    %c121_262 = arith.constant 121 : index
    %3084 = memref.load %arg1[%c121_262] : memref<256xf32, #tpu.memory_space<smem>>
    %3085 = vector.broadcast %3084 : f32 to vector<8x128xf32>
    %3086 = arith.mulf %2357, %3085 : vector<8x128xf32>
    %3087 = arith.addf %3080, %3086 : vector<8x128xf32>
    %3088 = vector.broadcast %3084 : f32 to vector<8x128xf32>
    %3089 = arith.mulf %2385, %3088 : vector<8x128xf32>
    %3090 = arith.addf %3083, %3089 : vector<8x128xf32>
    %c125_263 = arith.constant 125 : index
    %3091 = memref.load %arg1[%c125_263] : memref<256xf32, #tpu.memory_space<smem>>
    %3092 = vector.broadcast %3091 : f32 to vector<8x128xf32>
    %3093 = arith.mulf %2358, %3092 : vector<8x128xf32>
    %3094 = arith.addf %3087, %3093 : vector<8x128xf32>
    %3095 = vector.broadcast %3091 : f32 to vector<8x128xf32>
    %3096 = arith.mulf %2386, %3095 : vector<8x128xf32>
    %3097 = arith.addf %3090, %3096 : vector<8x128xf32>
    %3098 = arith.mulf %2288, %3094 : vector<8x128xf32>
    %3099 = arith.addf %3039, %3098 : vector<8x128xf32>
    %3100 = arith.mulf %2316, %3094 : vector<8x128xf32>
    %3101 = arith.addf %3041, %3100 : vector<8x128xf32>
    %3102 = arith.mulf %2288, %3097 : vector<8x128xf32>
    %3103 = arith.addf %3043, %3102 : vector<8x128xf32>
    %c129_264 = arith.constant 129 : index
    %3104 = memref.load %arg1[%c129_264] : memref<256xf32, #tpu.memory_space<smem>>
    %3105 = vector.broadcast %3104 : f32 to vector<8x128xf32>
    %3106 = arith.mulf %2331, %3105 : vector<8x128xf32>
    %3107 = vector.broadcast %3104 : f32 to vector<8x128xf32>
    %3108 = arith.mulf %2359, %3107 : vector<8x128xf32>
    %c133_265 = arith.constant 133 : index
    %3109 = memref.load %arg1[%c133_265] : memref<256xf32, #tpu.memory_space<smem>>
    %3110 = vector.broadcast %3109 : f32 to vector<8x128xf32>
    %3111 = arith.mulf %2334, %3110 : vector<8x128xf32>
    %3112 = arith.addf %3106, %3111 : vector<8x128xf32>
    %3113 = vector.broadcast %3109 : f32 to vector<8x128xf32>
    %3114 = arith.mulf %2362, %3113 : vector<8x128xf32>
    %3115 = arith.addf %3108, %3114 : vector<8x128xf32>
    %c137_266 = arith.constant 137 : index
    %3116 = memref.load %arg1[%c137_266] : memref<256xf32, #tpu.memory_space<smem>>
    %3117 = vector.broadcast %3116 : f32 to vector<8x128xf32>
    %3118 = arith.mulf %2339, %3117 : vector<8x128xf32>
    %3119 = arith.addf %3112, %3118 : vector<8x128xf32>
    %3120 = vector.broadcast %3116 : f32 to vector<8x128xf32>
    %3121 = arith.mulf %2367, %3120 : vector<8x128xf32>
    %3122 = arith.addf %3115, %3121 : vector<8x128xf32>
    %c141_267 = arith.constant 141 : index
    %3123 = memref.load %arg1[%c141_267] : memref<256xf32, #tpu.memory_space<smem>>
    %3124 = vector.broadcast %3123 : f32 to vector<8x128xf32>
    %3125 = arith.mulf %2344, %3124 : vector<8x128xf32>
    %3126 = arith.addf %3119, %3125 : vector<8x128xf32>
    %3127 = vector.broadcast %3123 : f32 to vector<8x128xf32>
    %3128 = arith.mulf %2372, %3127 : vector<8x128xf32>
    %3129 = arith.addf %3122, %3128 : vector<8x128xf32>
    %c145_268 = arith.constant 145 : index
    %3130 = memref.load %arg1[%c145_268] : memref<256xf32, #tpu.memory_space<smem>>
    %3131 = vector.broadcast %3130 : f32 to vector<8x128xf32>
    %3132 = arith.mulf %2349, %3131 : vector<8x128xf32>
    %3133 = arith.addf %3126, %3132 : vector<8x128xf32>
    %3134 = vector.broadcast %3130 : f32 to vector<8x128xf32>
    %3135 = arith.mulf %2377, %3134 : vector<8x128xf32>
    %3136 = arith.addf %3129, %3135 : vector<8x128xf32>
    %c149_269 = arith.constant 149 : index
    %3137 = memref.load %arg1[%c149_269] : memref<256xf32, #tpu.memory_space<smem>>
    %3138 = vector.broadcast %3137 : f32 to vector<8x128xf32>
    %3139 = arith.mulf %2354, %3138 : vector<8x128xf32>
    %3140 = arith.addf %3133, %3139 : vector<8x128xf32>
    %3141 = vector.broadcast %3137 : f32 to vector<8x128xf32>
    %3142 = arith.mulf %2382, %3141 : vector<8x128xf32>
    %3143 = arith.addf %3136, %3142 : vector<8x128xf32>
    %c153_270 = arith.constant 153 : index
    %3144 = memref.load %arg1[%c153_270] : memref<256xf32, #tpu.memory_space<smem>>
    %3145 = vector.broadcast %3144 : f32 to vector<8x128xf32>
    %3146 = arith.mulf %2357, %3145 : vector<8x128xf32>
    %3147 = arith.addf %3140, %3146 : vector<8x128xf32>
    %3148 = vector.broadcast %3144 : f32 to vector<8x128xf32>
    %3149 = arith.mulf %2385, %3148 : vector<8x128xf32>
    %3150 = arith.addf %3143, %3149 : vector<8x128xf32>
    %c157_271 = arith.constant 157 : index
    %3151 = memref.load %arg1[%c157_271] : memref<256xf32, #tpu.memory_space<smem>>
    %3152 = vector.broadcast %3151 : f32 to vector<8x128xf32>
    %3153 = arith.mulf %2358, %3152 : vector<8x128xf32>
    %3154 = arith.addf %3147, %3153 : vector<8x128xf32>
    %3155 = vector.broadcast %3151 : f32 to vector<8x128xf32>
    %3156 = arith.mulf %2386, %3155 : vector<8x128xf32>
    %3157 = arith.addf %3150, %3156 : vector<8x128xf32>
    %3158 = arith.mulf %2293, %3154 : vector<8x128xf32>
    %3159 = arith.addf %3099, %3158 : vector<8x128xf32>
    %3160 = arith.mulf %2321, %3154 : vector<8x128xf32>
    %3161 = arith.addf %3101, %3160 : vector<8x128xf32>
    %3162 = arith.mulf %2293, %3157 : vector<8x128xf32>
    %3163 = arith.addf %3103, %3162 : vector<8x128xf32>
    %c161_272 = arith.constant 161 : index
    %3164 = memref.load %arg1[%c161_272] : memref<256xf32, #tpu.memory_space<smem>>
    %3165 = vector.broadcast %3164 : f32 to vector<8x128xf32>
    %3166 = arith.mulf %2331, %3165 : vector<8x128xf32>
    %3167 = vector.broadcast %3164 : f32 to vector<8x128xf32>
    %3168 = arith.mulf %2359, %3167 : vector<8x128xf32>
    %c165_273 = arith.constant 165 : index
    %3169 = memref.load %arg1[%c165_273] : memref<256xf32, #tpu.memory_space<smem>>
    %3170 = vector.broadcast %3169 : f32 to vector<8x128xf32>
    %3171 = arith.mulf %2334, %3170 : vector<8x128xf32>
    %3172 = arith.addf %3166, %3171 : vector<8x128xf32>
    %3173 = vector.broadcast %3169 : f32 to vector<8x128xf32>
    %3174 = arith.mulf %2362, %3173 : vector<8x128xf32>
    %3175 = arith.addf %3168, %3174 : vector<8x128xf32>
    %c169_274 = arith.constant 169 : index
    %3176 = memref.load %arg1[%c169_274] : memref<256xf32, #tpu.memory_space<smem>>
    %3177 = vector.broadcast %3176 : f32 to vector<8x128xf32>
    %3178 = arith.mulf %2339, %3177 : vector<8x128xf32>
    %3179 = arith.addf %3172, %3178 : vector<8x128xf32>
    %3180 = vector.broadcast %3176 : f32 to vector<8x128xf32>
    %3181 = arith.mulf %2367, %3180 : vector<8x128xf32>
    %3182 = arith.addf %3175, %3181 : vector<8x128xf32>
    %c173_275 = arith.constant 173 : index
    %3183 = memref.load %arg1[%c173_275] : memref<256xf32, #tpu.memory_space<smem>>
    %3184 = vector.broadcast %3183 : f32 to vector<8x128xf32>
    %3185 = arith.mulf %2344, %3184 : vector<8x128xf32>
    %3186 = arith.addf %3179, %3185 : vector<8x128xf32>
    %3187 = vector.broadcast %3183 : f32 to vector<8x128xf32>
    %3188 = arith.mulf %2372, %3187 : vector<8x128xf32>
    %3189 = arith.addf %3182, %3188 : vector<8x128xf32>
    %c177_276 = arith.constant 177 : index
    %3190 = memref.load %arg1[%c177_276] : memref<256xf32, #tpu.memory_space<smem>>
    %3191 = vector.broadcast %3190 : f32 to vector<8x128xf32>
    %3192 = arith.mulf %2349, %3191 : vector<8x128xf32>
    %3193 = arith.addf %3186, %3192 : vector<8x128xf32>
    %3194 = vector.broadcast %3190 : f32 to vector<8x128xf32>
    %3195 = arith.mulf %2377, %3194 : vector<8x128xf32>
    %3196 = arith.addf %3189, %3195 : vector<8x128xf32>
    %c181_277 = arith.constant 181 : index
    %3197 = memref.load %arg1[%c181_277] : memref<256xf32, #tpu.memory_space<smem>>
    %3198 = vector.broadcast %3197 : f32 to vector<8x128xf32>
    %3199 = arith.mulf %2354, %3198 : vector<8x128xf32>
    %3200 = arith.addf %3193, %3199 : vector<8x128xf32>
    %3201 = vector.broadcast %3197 : f32 to vector<8x128xf32>
    %3202 = arith.mulf %2382, %3201 : vector<8x128xf32>
    %3203 = arith.addf %3196, %3202 : vector<8x128xf32>
    %c185_278 = arith.constant 185 : index
    %3204 = memref.load %arg1[%c185_278] : memref<256xf32, #tpu.memory_space<smem>>
    %3205 = vector.broadcast %3204 : f32 to vector<8x128xf32>
    %3206 = arith.mulf %2357, %3205 : vector<8x128xf32>
    %3207 = arith.addf %3200, %3206 : vector<8x128xf32>
    %3208 = vector.broadcast %3204 : f32 to vector<8x128xf32>
    %3209 = arith.mulf %2385, %3208 : vector<8x128xf32>
    %3210 = arith.addf %3203, %3209 : vector<8x128xf32>
    %c189_279 = arith.constant 189 : index
    %3211 = memref.load %arg1[%c189_279] : memref<256xf32, #tpu.memory_space<smem>>
    %3212 = vector.broadcast %3211 : f32 to vector<8x128xf32>
    %3213 = arith.mulf %2358, %3212 : vector<8x128xf32>
    %3214 = arith.addf %3207, %3213 : vector<8x128xf32>
    %3215 = vector.broadcast %3211 : f32 to vector<8x128xf32>
    %3216 = arith.mulf %2386, %3215 : vector<8x128xf32>
    %3217 = arith.addf %3210, %3216 : vector<8x128xf32>
    %3218 = arith.mulf %2298, %3214 : vector<8x128xf32>
    %3219 = arith.addf %3159, %3218 : vector<8x128xf32>
    %3220 = arith.mulf %2326, %3214 : vector<8x128xf32>
    %3221 = arith.addf %3161, %3220 : vector<8x128xf32>
    %3222 = arith.mulf %2298, %3217 : vector<8x128xf32>
    %3223 = arith.addf %3163, %3222 : vector<8x128xf32>
    %c193_280 = arith.constant 193 : index
    %3224 = memref.load %arg1[%c193_280] : memref<256xf32, #tpu.memory_space<smem>>
    %3225 = vector.broadcast %3224 : f32 to vector<8x128xf32>
    %3226 = arith.mulf %2331, %3225 : vector<8x128xf32>
    %3227 = vector.broadcast %3224 : f32 to vector<8x128xf32>
    %3228 = arith.mulf %2359, %3227 : vector<8x128xf32>
    %c197_281 = arith.constant 197 : index
    %3229 = memref.load %arg1[%c197_281] : memref<256xf32, #tpu.memory_space<smem>>
    %3230 = vector.broadcast %3229 : f32 to vector<8x128xf32>
    %3231 = arith.mulf %2334, %3230 : vector<8x128xf32>
    %3232 = arith.addf %3226, %3231 : vector<8x128xf32>
    %3233 = vector.broadcast %3229 : f32 to vector<8x128xf32>
    %3234 = arith.mulf %2362, %3233 : vector<8x128xf32>
    %3235 = arith.addf %3228, %3234 : vector<8x128xf32>
    %c201_282 = arith.constant 201 : index
    %3236 = memref.load %arg1[%c201_282] : memref<256xf32, #tpu.memory_space<smem>>
    %3237 = vector.broadcast %3236 : f32 to vector<8x128xf32>
    %3238 = arith.mulf %2339, %3237 : vector<8x128xf32>
    %3239 = arith.addf %3232, %3238 : vector<8x128xf32>
    %3240 = vector.broadcast %3236 : f32 to vector<8x128xf32>
    %3241 = arith.mulf %2367, %3240 : vector<8x128xf32>
    %3242 = arith.addf %3235, %3241 : vector<8x128xf32>
    %c205_283 = arith.constant 205 : index
    %3243 = memref.load %arg1[%c205_283] : memref<256xf32, #tpu.memory_space<smem>>
    %3244 = vector.broadcast %3243 : f32 to vector<8x128xf32>
    %3245 = arith.mulf %2344, %3244 : vector<8x128xf32>
    %3246 = arith.addf %3239, %3245 : vector<8x128xf32>
    %3247 = vector.broadcast %3243 : f32 to vector<8x128xf32>
    %3248 = arith.mulf %2372, %3247 : vector<8x128xf32>
    %3249 = arith.addf %3242, %3248 : vector<8x128xf32>
    %c209_284 = arith.constant 209 : index
    %3250 = memref.load %arg1[%c209_284] : memref<256xf32, #tpu.memory_space<smem>>
    %3251 = vector.broadcast %3250 : f32 to vector<8x128xf32>
    %3252 = arith.mulf %2349, %3251 : vector<8x128xf32>
    %3253 = arith.addf %3246, %3252 : vector<8x128xf32>
    %3254 = vector.broadcast %3250 : f32 to vector<8x128xf32>
    %3255 = arith.mulf %2377, %3254 : vector<8x128xf32>
    %3256 = arith.addf %3249, %3255 : vector<8x128xf32>
    %c213_285 = arith.constant 213 : index
    %3257 = memref.load %arg1[%c213_285] : memref<256xf32, #tpu.memory_space<smem>>
    %3258 = vector.broadcast %3257 : f32 to vector<8x128xf32>
    %3259 = arith.mulf %2354, %3258 : vector<8x128xf32>
    %3260 = arith.addf %3253, %3259 : vector<8x128xf32>
    %3261 = vector.broadcast %3257 : f32 to vector<8x128xf32>
    %3262 = arith.mulf %2382, %3261 : vector<8x128xf32>
    %3263 = arith.addf %3256, %3262 : vector<8x128xf32>
    %c217_286 = arith.constant 217 : index
    %3264 = memref.load %arg1[%c217_286] : memref<256xf32, #tpu.memory_space<smem>>
    %3265 = vector.broadcast %3264 : f32 to vector<8x128xf32>
    %3266 = arith.mulf %2357, %3265 : vector<8x128xf32>
    %3267 = arith.addf %3260, %3266 : vector<8x128xf32>
    %3268 = vector.broadcast %3264 : f32 to vector<8x128xf32>
    %3269 = arith.mulf %2385, %3268 : vector<8x128xf32>
    %3270 = arith.addf %3263, %3269 : vector<8x128xf32>
    %c221_287 = arith.constant 221 : index
    %3271 = memref.load %arg1[%c221_287] : memref<256xf32, #tpu.memory_space<smem>>
    %3272 = vector.broadcast %3271 : f32 to vector<8x128xf32>
    %3273 = arith.mulf %2358, %3272 : vector<8x128xf32>
    %3274 = arith.addf %3267, %3273 : vector<8x128xf32>
    %3275 = vector.broadcast %3271 : f32 to vector<8x128xf32>
    %3276 = arith.mulf %2386, %3275 : vector<8x128xf32>
    %3277 = arith.addf %3270, %3276 : vector<8x128xf32>
    %3278 = arith.mulf %2301, %3274 : vector<8x128xf32>
    %3279 = arith.addf %3219, %3278 : vector<8x128xf32>
    %3280 = arith.mulf %2329, %3274 : vector<8x128xf32>
    %3281 = arith.addf %3221, %3280 : vector<8x128xf32>
    %3282 = arith.mulf %2301, %3277 : vector<8x128xf32>
    %3283 = arith.addf %3223, %3282 : vector<8x128xf32>
    %c225_288 = arith.constant 225 : index
    %3284 = memref.load %arg1[%c225_288] : memref<256xf32, #tpu.memory_space<smem>>
    %3285 = vector.broadcast %3284 : f32 to vector<8x128xf32>
    %3286 = arith.mulf %2331, %3285 : vector<8x128xf32>
    %3287 = vector.broadcast %3284 : f32 to vector<8x128xf32>
    %3288 = arith.mulf %2359, %3287 : vector<8x128xf32>
    %c229_289 = arith.constant 229 : index
    %3289 = memref.load %arg1[%c229_289] : memref<256xf32, #tpu.memory_space<smem>>
    %3290 = vector.broadcast %3289 : f32 to vector<8x128xf32>
    %3291 = arith.mulf %2334, %3290 : vector<8x128xf32>
    %3292 = arith.addf %3286, %3291 : vector<8x128xf32>
    %3293 = vector.broadcast %3289 : f32 to vector<8x128xf32>
    %3294 = arith.mulf %2362, %3293 : vector<8x128xf32>
    %3295 = arith.addf %3288, %3294 : vector<8x128xf32>
    %c233_290 = arith.constant 233 : index
    %3296 = memref.load %arg1[%c233_290] : memref<256xf32, #tpu.memory_space<smem>>
    %3297 = vector.broadcast %3296 : f32 to vector<8x128xf32>
    %3298 = arith.mulf %2339, %3297 : vector<8x128xf32>
    %3299 = arith.addf %3292, %3298 : vector<8x128xf32>
    %3300 = vector.broadcast %3296 : f32 to vector<8x128xf32>
    %3301 = arith.mulf %2367, %3300 : vector<8x128xf32>
    %3302 = arith.addf %3295, %3301 : vector<8x128xf32>
    %c237_291 = arith.constant 237 : index
    %3303 = memref.load %arg1[%c237_291] : memref<256xf32, #tpu.memory_space<smem>>
    %3304 = vector.broadcast %3303 : f32 to vector<8x128xf32>
    %3305 = arith.mulf %2344, %3304 : vector<8x128xf32>
    %3306 = arith.addf %3299, %3305 : vector<8x128xf32>
    %3307 = vector.broadcast %3303 : f32 to vector<8x128xf32>
    %3308 = arith.mulf %2372, %3307 : vector<8x128xf32>
    %3309 = arith.addf %3302, %3308 : vector<8x128xf32>
    %c241_292 = arith.constant 241 : index
    %3310 = memref.load %arg1[%c241_292] : memref<256xf32, #tpu.memory_space<smem>>
    %3311 = vector.broadcast %3310 : f32 to vector<8x128xf32>
    %3312 = arith.mulf %2349, %3311 : vector<8x128xf32>
    %3313 = arith.addf %3306, %3312 : vector<8x128xf32>
    %3314 = vector.broadcast %3310 : f32 to vector<8x128xf32>
    %3315 = arith.mulf %2377, %3314 : vector<8x128xf32>
    %3316 = arith.addf %3309, %3315 : vector<8x128xf32>
    %c245_293 = arith.constant 245 : index
    %3317 = memref.load %arg1[%c245_293] : memref<256xf32, #tpu.memory_space<smem>>
    %3318 = vector.broadcast %3317 : f32 to vector<8x128xf32>
    %3319 = arith.mulf %2354, %3318 : vector<8x128xf32>
    %3320 = arith.addf %3313, %3319 : vector<8x128xf32>
    %3321 = vector.broadcast %3317 : f32 to vector<8x128xf32>
    %3322 = arith.mulf %2382, %3321 : vector<8x128xf32>
    %3323 = arith.addf %3316, %3322 : vector<8x128xf32>
    %c249_294 = arith.constant 249 : index
    %3324 = memref.load %arg1[%c249_294] : memref<256xf32, #tpu.memory_space<smem>>
    %3325 = vector.broadcast %3324 : f32 to vector<8x128xf32>
    %3326 = arith.mulf %2357, %3325 : vector<8x128xf32>
    %3327 = arith.addf %3320, %3326 : vector<8x128xf32>
    %3328 = vector.broadcast %3324 : f32 to vector<8x128xf32>
    %3329 = arith.mulf %2385, %3328 : vector<8x128xf32>
    %3330 = arith.addf %3323, %3329 : vector<8x128xf32>
    %c253_295 = arith.constant 253 : index
    %3331 = memref.load %arg1[%c253_295] : memref<256xf32, #tpu.memory_space<smem>>
    %3332 = vector.broadcast %3331 : f32 to vector<8x128xf32>
    %3333 = arith.mulf %2358, %3332 : vector<8x128xf32>
    %3334 = arith.addf %3327, %3333 : vector<8x128xf32>
    %3335 = vector.broadcast %3331 : f32 to vector<8x128xf32>
    %3336 = arith.mulf %2386, %3335 : vector<8x128xf32>
    %3337 = arith.addf %3330, %3336 : vector<8x128xf32>
    %3338 = arith.mulf %2302, %3334 : vector<8x128xf32>
    %3339 = arith.addf %3279, %3338 : vector<8x128xf32>
    %3340 = arith.mulf %2330, %3334 : vector<8x128xf32>
    %3341 = arith.addf %3281, %3340 : vector<8x128xf32>
    %3342 = arith.mulf %2302, %3337 : vector<8x128xf32>
    %3343 = arith.addf %3283, %3342 : vector<8x128xf32>
    %c1_296 = arith.constant 1 : index
    %c8_297 = arith.constant 8 : index
    %c0_298 = arith.constant 0 : index
    %3344 = vector.load %arg3[%c1_296, %c8_297, %c0_298] : memref<8x16x128xf32, #tpu.memory_space<vmem>>, vector<1x8x128xf32>
    %3345 = vector.shape_cast %3344 : vector<1x8x128xf32> to vector<8x128xf32>
    %3346 = vector.shape_cast %3339 : vector<8x128xf32> to vector<1x8x128xf32>
    tpu.vector_store %arg3[%c1_296, %c8_297, %c0_298], %3346 {strides = array<i32>} : memref<8x16x128xf32, #tpu.memory_space<vmem>>, vector<1x8x128xf32>,
    %c2_299 = arith.constant 2 : index
    %3347 = memref.load %arg1[%c2_299] : memref<256xf32, #tpu.memory_space<smem>>
    %3348 = vector.broadcast %3347 : f32 to vector<8x128xf32>
    %3349 = arith.mulf %2331, %3348 : vector<8x128xf32>
    %3350 = vector.broadcast %3347 : f32 to vector<8x128xf32>
    %3351 = arith.mulf %2359, %3350 : vector<8x128xf32>
    %c6_300 = arith.constant 6 : index
    %3352 = memref.load %arg1[%c6_300] : memref<256xf32, #tpu.memory_space<smem>>
    %3353 = vector.broadcast %3352 : f32 to vector<8x128xf32>
    %3354 = arith.mulf %2334, %3353 : vector<8x128xf32>
    %3355 = arith.addf %3349, %3354 : vector<8x128xf32>
    %3356 = vector.broadcast %3352 : f32 to vector<8x128xf32>
    %3357 = arith.mulf %2362, %3356 : vector<8x128xf32>
    %3358 = arith.addf %3351, %3357 : vector<8x128xf32>
    %c10_301 = arith.constant 10 : index
    %3359 = memref.load %arg1[%c10_301] : memref<256xf32, #tpu.memory_space<smem>>
    %3360 = vector.broadcast %3359 : f32 to vector<8x128xf32>
    %3361 = arith.mulf %2339, %3360 : vector<8x128xf32>
    %3362 = arith.addf %3355, %3361 : vector<8x128xf32>
    %3363 = vector.broadcast %3359 : f32 to vector<8x128xf32>
    %3364 = arith.mulf %2367, %3363 : vector<8x128xf32>
    %3365 = arith.addf %3358, %3364 : vector<8x128xf32>
    %c14_302 = arith.constant 14 : index
    %3366 = memref.load %arg1[%c14_302] : memref<256xf32, #tpu.memory_space<smem>>
    %3367 = vector.broadcast %3366 : f32 to vector<8x128xf32>
    %3368 = arith.mulf %2344, %3367 : vector<8x128xf32>
    %3369 = arith.addf %3362, %3368 : vector<8x128xf32>
    %3370 = vector.broadcast %3366 : f32 to vector<8x128xf32>
    %3371 = arith.mulf %2372, %3370 : vector<8x128xf32>
    %3372 = arith.addf %3365, %3371 : vector<8x128xf32>
    %c18_303 = arith.constant 18 : index
    %3373 = memref.load %arg1[%c18_303] : memref<256xf32, #tpu.memory_space<smem>>
    %3374 = vector.broadcast %3373 : f32 to vector<8x128xf32>
    %3375 = arith.mulf %2349, %3374 : vector<8x128xf32>
    %3376 = arith.addf %3369, %3375 : vector<8x128xf32>
    %3377 = vector.broadcast %3373 : f32 to vector<8x128xf32>
    %3378 = arith.mulf %2377, %3377 : vector<8x128xf32>
    %3379 = arith.addf %3372, %3378 : vector<8x128xf32>
    %c22_304 = arith.constant 22 : index
    %3380 = memref.load %arg1[%c22_304] : memref<256xf32, #tpu.memory_space<smem>>
    %3381 = vector.broadcast %3380 : f32 to vector<8x128xf32>
    %3382 = arith.mulf %2354, %3381 : vector<8x128xf32>
    %3383 = arith.addf %3376, %3382 : vector<8x128xf32>
    %3384 = vector.broadcast %3380 : f32 to vector<8x128xf32>
    %3385 = arith.mulf %2382, %3384 : vector<8x128xf32>
    %3386 = arith.addf %3379, %3385 : vector<8x128xf32>
    %c26_305 = arith.constant 26 : index
    %3387 = memref.load %arg1[%c26_305] : memref<256xf32, #tpu.memory_space<smem>>
    %3388 = vector.broadcast %3387 : f32 to vector<8x128xf32>
    %3389 = arith.mulf %2357, %3388 : vector<8x128xf32>
    %3390 = arith.addf %3383, %3389 : vector<8x128xf32>
    %3391 = vector.broadcast %3387 : f32 to vector<8x128xf32>
    %3392 = arith.mulf %2385, %3391 : vector<8x128xf32>
    %3393 = arith.addf %3386, %3392 : vector<8x128xf32>
    %c30_306 = arith.constant 30 : index
    %3394 = memref.load %arg1[%c30_306] : memref<256xf32, #tpu.memory_space<smem>>
    %3395 = vector.broadcast %3394 : f32 to vector<8x128xf32>
    %3396 = arith.mulf %2358, %3395 : vector<8x128xf32>
    %3397 = arith.addf %3390, %3396 : vector<8x128xf32>
    %3398 = vector.broadcast %3394 : f32 to vector<8x128xf32>
    %3399 = arith.mulf %2386, %3398 : vector<8x128xf32>
    %3400 = arith.addf %3393, %3399 : vector<8x128xf32>
    %3401 = arith.mulf %2275, %3397 : vector<8x128xf32>
    %3402 = arith.mulf %2303, %3397 : vector<8x128xf32>
    %3403 = arith.mulf %2275, %3400 : vector<8x128xf32>
    %c34_307 = arith.constant 34 : index
    %3404 = memref.load %arg1[%c34_307] : memref<256xf32, #tpu.memory_space<smem>>
    %3405 = vector.broadcast %3404 : f32 to vector<8x128xf32>
    %3406 = arith.mulf %2331, %3405 : vector<8x128xf32>
    %3407 = vector.broadcast %3404 : f32 to vector<8x128xf32>
    %3408 = arith.mulf %2359, %3407 : vector<8x128xf32>
    %c38_308 = arith.constant 38 : index
    %3409 = memref.load %arg1[%c38_308] : memref<256xf32, #tpu.memory_space<smem>>
    %3410 = vector.broadcast %3409 : f32 to vector<8x128xf32>
    %3411 = arith.mulf %2334, %3410 : vector<8x128xf32>
    %3412 = arith.addf %3406, %3411 : vector<8x128xf32>
    %3413 = vector.broadcast %3409 : f32 to vector<8x128xf32>
    %3414 = arith.mulf %2362, %3413 : vector<8x128xf32>
    %3415 = arith.addf %3408, %3414 : vector<8x128xf32>
    %c42_309 = arith.constant 42 : index
    %3416 = memref.load %arg1[%c42_309] : memref<256xf32, #tpu.memory_space<smem>>
    %3417 = vector.broadcast %3416 : f32 to vector<8x128xf32>
    %3418 = arith.mulf %2339, %3417 : vector<8x128xf32>
    %3419 = arith.addf %3412, %3418 : vector<8x128xf32>
    %3420 = vector.broadcast %3416 : f32 to vector<8x128xf32>
    %3421 = arith.mulf %2367, %3420 : vector<8x128xf32>
    %3422 = arith.addf %3415, %3421 : vector<8x128xf32>
    %c46_310 = arith.constant 46 : index
    %3423 = memref.load %arg1[%c46_310] : memref<256xf32, #tpu.memory_space<smem>>
    %3424 = vector.broadcast %3423 : f32 to vector<8x128xf32>
    %3425 = arith.mulf %2344, %3424 : vector<8x128xf32>
    %3426 = arith.addf %3419, %3425 : vector<8x128xf32>
    %3427 = vector.broadcast %3423 : f32 to vector<8x128xf32>
    %3428 = arith.mulf %2372, %3427 : vector<8x128xf32>
    %3429 = arith.addf %3422, %3428 : vector<8x128xf32>
    %c50_311 = arith.constant 50 : index
    %3430 = memref.load %arg1[%c50_311] : memref<256xf32, #tpu.memory_space<smem>>
    %3431 = vector.broadcast %3430 : f32 to vector<8x128xf32>
    %3432 = arith.mulf %2349, %3431 : vector<8x128xf32>
    %3433 = arith.addf %3426, %3432 : vector<8x128xf32>
    %3434 = vector.broadcast %3430 : f32 to vector<8x128xf32>
    %3435 = arith.mulf %2377, %3434 : vector<8x128xf32>
    %3436 = arith.addf %3429, %3435 : vector<8x128xf32>
    %c54_312 = arith.constant 54 : index
    %3437 = memref.load %arg1[%c54_312] : memref<256xf32, #tpu.memory_space<smem>>
    %3438 = vector.broadcast %3437 : f32 to vector<8x128xf32>
    %3439 = arith.mulf %2354, %3438 : vector<8x128xf32>
    %3440 = arith.addf %3433, %3439 : vector<8x128xf32>
    %3441 = vector.broadcast %3437 : f32 to vector<8x128xf32>
    %3442 = arith.mulf %2382, %3441 : vector<8x128xf32>
    %3443 = arith.addf %3436, %3442 : vector<8x128xf32>
    %c58_313 = arith.constant 58 : index
    %3444 = memref.load %arg1[%c58_313] : memref<256xf32, #tpu.memory_space<smem>>
    %3445 = vector.broadcast %3444 : f32 to vector<8x128xf32>
    %3446 = arith.mulf %2357, %3445 : vector<8x128xf32>
    %3447 = arith.addf %3440, %3446 : vector<8x128xf32>
    %3448 = vector.broadcast %3444 : f32 to vector<8x128xf32>
    %3449 = arith.mulf %2385, %3448 : vector<8x128xf32>
    %3450 = arith.addf %3443, %3449 : vector<8x128xf32>
    %c62_314 = arith.constant 62 : index
    %3451 = memref.load %arg1[%c62_314] : memref<256xf32, #tpu.memory_space<smem>>
    %3452 = vector.broadcast %3451 : f32 to vector<8x128xf32>
    %3453 = arith.mulf %2358, %3452 : vector<8x128xf32>
    %3454 = arith.addf %3447, %3453 : vector<8x128xf32>
    %3455 = vector.broadcast %3451 : f32 to vector<8x128xf32>
    %3456 = arith.mulf %2386, %3455 : vector<8x128xf32>
    %3457 = arith.addf %3450, %3456 : vector<8x128xf32>
    %3458 = arith.mulf %2278, %3454 : vector<8x128xf32>
    %3459 = arith.addf %3401, %3458 : vector<8x128xf32>
    %3460 = arith.mulf %2306, %3454 : vector<8x128xf32>
    %3461 = arith.addf %3402, %3460 : vector<8x128xf32>
    %3462 = arith.mulf %2278, %3457 : vector<8x128xf32>
    %3463 = arith.addf %3403, %3462 : vector<8x128xf32>
    %c66_315 = arith.constant 66 : index
    %3464 = memref.load %arg1[%c66_315] : memref<256xf32, #tpu.memory_space<smem>>
    %3465 = vector.broadcast %3464 : f32 to vector<8x128xf32>
    %3466 = arith.mulf %2331, %3465 : vector<8x128xf32>
    %3467 = vector.broadcast %3464 : f32 to vector<8x128xf32>
    %3468 = arith.mulf %2359, %3467 : vector<8x128xf32>
    %c70_316 = arith.constant 70 : index
    %3469 = memref.load %arg1[%c70_316] : memref<256xf32, #tpu.memory_space<smem>>
    %3470 = vector.broadcast %3469 : f32 to vector<8x128xf32>
    %3471 = arith.mulf %2334, %3470 : vector<8x128xf32>
    %3472 = arith.addf %3466, %3471 : vector<8x128xf32>
    %3473 = vector.broadcast %3469 : f32 to vector<8x128xf32>
    %3474 = arith.mulf %2362, %3473 : vector<8x128xf32>
    %3475 = arith.addf %3468, %3474 : vector<8x128xf32>
    %c74_317 = arith.constant 74 : index
    %3476 = memref.load %arg1[%c74_317] : memref<256xf32, #tpu.memory_space<smem>>
    %3477 = vector.broadcast %3476 : f32 to vector<8x128xf32>
    %3478 = arith.mulf %2339, %3477 : vector<8x128xf32>
    %3479 = arith.addf %3472, %3478 : vector<8x128xf32>
    %3480 = vector.broadcast %3476 : f32 to vector<8x128xf32>
    %3481 = arith.mulf %2367, %3480 : vector<8x128xf32>
    %3482 = arith.addf %3475, %3481 : vector<8x128xf32>
    %c78_318 = arith.constant 78 : index
    %3483 = memref.load %arg1[%c78_318] : memref<256xf32, #tpu.memory_space<smem>>
    %3484 = vector.broadcast %3483 : f32 to vector<8x128xf32>
    %3485 = arith.mulf %2344, %3484 : vector<8x128xf32>
    %3486 = arith.addf %3479, %3485 : vector<8x128xf32>
    %3487 = vector.broadcast %3483 : f32 to vector<8x128xf32>
    %3488 = arith.mulf %2372, %3487 : vector<8x128xf32>
    %3489 = arith.addf %3482, %3488 : vector<8x128xf32>
    %c82_319 = arith.constant 82 : index
    %3490 = memref.load %arg1[%c82_319] : memref<256xf32, #tpu.memory_space<smem>>
    %3491 = vector.broadcast %3490 : f32 to vector<8x128xf32>
    %3492 = arith.mulf %2349, %3491 : vector<8x128xf32>
    %3493 = arith.addf %3486, %3492 : vector<8x128xf32>
    %3494 = vector.broadcast %3490 : f32 to vector<8x128xf32>
    %3495 = arith.mulf %2377, %3494 : vector<8x128xf32>
    %3496 = arith.addf %3489, %3495 : vector<8x128xf32>
    %c86_320 = arith.constant 86 : index
    %3497 = memref.load %arg1[%c86_320] : memref<256xf32, #tpu.memory_space<smem>>
    %3498 = vector.broadcast %3497 : f32 to vector<8x128xf32>
    %3499 = arith.mulf %2354, %3498 : vector<8x128xf32>
    %3500 = arith.addf %3493, %3499 : vector<8x128xf32>
    %3501 = vector.broadcast %3497 : f32 to vector<8x128xf32>
    %3502 = arith.mulf %2382, %3501 : vector<8x128xf32>
    %3503 = arith.addf %3496, %3502 : vector<8x128xf32>
    %c90_321 = arith.constant 90 : index
    %3504 = memref.load %arg1[%c90_321] : memref<256xf32, #tpu.memory_space<smem>>
    %3505 = vector.broadcast %3504 : f32 to vector<8x128xf32>
    %3506 = arith.mulf %2357, %3505 : vector<8x128xf32>
    %3507 = arith.addf %3500, %3506 : vector<8x128xf32>
    %3508 = vector.broadcast %3504 : f32 to vector<8x128xf32>
    %3509 = arith.mulf %2385, %3508 : vector<8x128xf32>
    %3510 = arith.addf %3503, %3509 : vector<8x128xf32>
    %c94_322 = arith.constant 94 : index
    %3511 = memref.load %arg1[%c94_322] : memref<256xf32, #tpu.memory_space<smem>>
    %3512 = vector.broadcast %3511 : f32 to vector<8x128xf32>
    %3513 = arith.mulf %2358, %3512 : vector<8x128xf32>
    %3514 = arith.addf %3507, %3513 : vector<8x128xf32>
    %3515 = vector.broadcast %3511 : f32 to vector<8x128xf32>
    %3516 = arith.mulf %2386, %3515 : vector<8x128xf32>
    %3517 = arith.addf %3510, %3516 : vector<8x128xf32>
    %3518 = arith.mulf %2283, %3514 : vector<8x128xf32>
    %3519 = arith.addf %3459, %3518 : vector<8x128xf32>
    %3520 = arith.mulf %2311, %3514 : vector<8x128xf32>
    %3521 = arith.addf %3461, %3520 : vector<8x128xf32>
    %3522 = arith.mulf %2283, %3517 : vector<8x128xf32>
    %3523 = arith.addf %3463, %3522 : vector<8x128xf32>
    %c98_323 = arith.constant 98 : index
    %3524 = memref.load %arg1[%c98_323] : memref<256xf32, #tpu.memory_space<smem>>
    %3525 = vector.broadcast %3524 : f32 to vector<8x128xf32>
    %3526 = arith.mulf %2331, %3525 : vector<8x128xf32>
    %3527 = vector.broadcast %3524 : f32 to vector<8x128xf32>
    %3528 = arith.mulf %2359, %3527 : vector<8x128xf32>
    %c102_324 = arith.constant 102 : index
    %3529 = memref.load %arg1[%c102_324] : memref<256xf32, #tpu.memory_space<smem>>
    %3530 = vector.broadcast %3529 : f32 to vector<8x128xf32>
    %3531 = arith.mulf %2334, %3530 : vector<8x128xf32>
    %3532 = arith.addf %3526, %3531 : vector<8x128xf32>
    %3533 = vector.broadcast %3529 : f32 to vector<8x128xf32>
    %3534 = arith.mulf %2362, %3533 : vector<8x128xf32>
    %3535 = arith.addf %3528, %3534 : vector<8x128xf32>
    %c106_325 = arith.constant 106 : index
    %3536 = memref.load %arg1[%c106_325] : memref<256xf32, #tpu.memory_space<smem>>
    %3537 = vector.broadcast %3536 : f32 to vector<8x128xf32>
    %3538 = arith.mulf %2339, %3537 : vector<8x128xf32>
    %3539 = arith.addf %3532, %3538 : vector<8x128xf32>
    %3540 = vector.broadcast %3536 : f32 to vector<8x128xf32>
    %3541 = arith.mulf %2367, %3540 : vector<8x128xf32>
    %3542 = arith.addf %3535, %3541 : vector<8x128xf32>
    %c110_326 = arith.constant 110 : index
    %3543 = memref.load %arg1[%c110_326] : memref<256xf32, #tpu.memory_space<smem>>
    %3544 = vector.broadcast %3543 : f32 to vector<8x128xf32>
    %3545 = arith.mulf %2344, %3544 : vector<8x128xf32>
    %3546 = arith.addf %3539, %3545 : vector<8x128xf32>
    %3547 = vector.broadcast %3543 : f32 to vector<8x128xf32>
    %3548 = arith.mulf %2372, %3547 : vector<8x128xf32>
    %3549 = arith.addf %3542, %3548 : vector<8x128xf32>
    %c114_327 = arith.constant 114 : index
    %3550 = memref.load %arg1[%c114_327] : memref<256xf32, #tpu.memory_space<smem>>
    %3551 = vector.broadcast %3550 : f32 to vector<8x128xf32>
    %3552 = arith.mulf %2349, %3551 : vector<8x128xf32>
    %3553 = arith.addf %3546, %3552 : vector<8x128xf32>
    %3554 = vector.broadcast %3550 : f32 to vector<8x128xf32>
    %3555 = arith.mulf %2377, %3554 : vector<8x128xf32>
    %3556 = arith.addf %3549, %3555 : vector<8x128xf32>
    %c118_328 = arith.constant 118 : index
    %3557 = memref.load %arg1[%c118_328] : memref<256xf32, #tpu.memory_space<smem>>
    %3558 = vector.broadcast %3557 : f32 to vector<8x128xf32>
    %3559 = arith.mulf %2354, %3558 : vector<8x128xf32>
    %3560 = arith.addf %3553, %3559 : vector<8x128xf32>
    %3561 = vector.broadcast %3557 : f32 to vector<8x128xf32>
    %3562 = arith.mulf %2382, %3561 : vector<8x128xf32>
    %3563 = arith.addf %3556, %3562 : vector<8x128xf32>
    %c122_329 = arith.constant 122 : index
    %3564 = memref.load %arg1[%c122_329] : memref<256xf32, #tpu.memory_space<smem>>
    %3565 = vector.broadcast %3564 : f32 to vector<8x128xf32>
    %3566 = arith.mulf %2357, %3565 : vector<8x128xf32>
    %3567 = arith.addf %3560, %3566 : vector<8x128xf32>
    %3568 = vector.broadcast %3564 : f32 to vector<8x128xf32>
    %3569 = arith.mulf %2385, %3568 : vector<8x128xf32>
    %3570 = arith.addf %3563, %3569 : vector<8x128xf32>
    %c126_330 = arith.constant 126 : index
    %3571 = memref.load %arg1[%c126_330] : memref<256xf32, #tpu.memory_space<smem>>
    %3572 = vector.broadcast %3571 : f32 to vector<8x128xf32>
    %3573 = arith.mulf %2358, %3572 : vector<8x128xf32>
    %3574 = arith.addf %3567, %3573 : vector<8x128xf32>
    %3575 = vector.broadcast %3571 : f32 to vector<8x128xf32>
    %3576 = arith.mulf %2386, %3575 : vector<8x128xf32>
    %3577 = arith.addf %3570, %3576 : vector<8x128xf32>
    %3578 = arith.mulf %2288, %3574 : vector<8x128xf32>
    %3579 = arith.addf %3519, %3578 : vector<8x128xf32>
    %3580 = arith.mulf %2316, %3574 : vector<8x128xf32>
    %3581 = arith.addf %3521, %3580 : vector<8x128xf32>
    %3582 = arith.mulf %2288, %3577 : vector<8x128xf32>
    %3583 = arith.addf %3523, %3582 : vector<8x128xf32>
    %c130_331 = arith.constant 130 : index
    %3584 = memref.load %arg1[%c130_331] : memref<256xf32, #tpu.memory_space<smem>>
    %3585 = vector.broadcast %3584 : f32 to vector<8x128xf32>
    %3586 = arith.mulf %2331, %3585 : vector<8x128xf32>
    %3587 = vector.broadcast %3584 : f32 to vector<8x128xf32>
    %3588 = arith.mulf %2359, %3587 : vector<8x128xf32>
    %c134_332 = arith.constant 134 : index
    %3589 = memref.load %arg1[%c134_332] : memref<256xf32, #tpu.memory_space<smem>>
    %3590 = vector.broadcast %3589 : f32 to vector<8x128xf32>
    %3591 = arith.mulf %2334, %3590 : vector<8x128xf32>
    %3592 = arith.addf %3586, %3591 : vector<8x128xf32>
    %3593 = vector.broadcast %3589 : f32 to vector<8x128xf32>
    %3594 = arith.mulf %2362, %3593 : vector<8x128xf32>
    %3595 = arith.addf %3588, %3594 : vector<8x128xf32>
    %c138_333 = arith.constant 138 : index
    %3596 = memref.load %arg1[%c138_333] : memref<256xf32, #tpu.memory_space<smem>>
    %3597 = vector.broadcast %3596 : f32 to vector<8x128xf32>
    %3598 = arith.mulf %2339, %3597 : vector<8x128xf32>
    %3599 = arith.addf %3592, %3598 : vector<8x128xf32>
    %3600 = vector.broadcast %3596 : f32 to vector<8x128xf32>
    %3601 = arith.mulf %2367, %3600 : vector<8x128xf32>
    %3602 = arith.addf %3595, %3601 : vector<8x128xf32>
    %c142_334 = arith.constant 142 : index
    %3603 = memref.load %arg1[%c142_334] : memref<256xf32, #tpu.memory_space<smem>>
    %3604 = vector.broadcast %3603 : f32 to vector<8x128xf32>
    %3605 = arith.mulf %2344, %3604 : vector<8x128xf32>
    %3606 = arith.addf %3599, %3605 : vector<8x128xf32>
    %3607 = vector.broadcast %3603 : f32 to vector<8x128xf32>
    %3608 = arith.mulf %2372, %3607 : vector<8x128xf32>
    %3609 = arith.addf %3602, %3608 : vector<8x128xf32>
    %c146_335 = arith.constant 146 : index
    %3610 = memref.load %arg1[%c146_335] : memref<256xf32, #tpu.memory_space<smem>>
    %3611 = vector.broadcast %3610 : f32 to vector<8x128xf32>
    %3612 = arith.mulf %2349, %3611 : vector<8x128xf32>
    %3613 = arith.addf %3606, %3612 : vector<8x128xf32>
    %3614 = vector.broadcast %3610 : f32 to vector<8x128xf32>
    %3615 = arith.mulf %2377, %3614 : vector<8x128xf32>
    %3616 = arith.addf %3609, %3615 : vector<8x128xf32>
    %c150_336 = arith.constant 150 : index
    %3617 = memref.load %arg1[%c150_336] : memref<256xf32, #tpu.memory_space<smem>>
    %3618 = vector.broadcast %3617 : f32 to vector<8x128xf32>
    %3619 = arith.mulf %2354, %3618 : vector<8x128xf32>
    %3620 = arith.addf %3613, %3619 : vector<8x128xf32>
    %3621 = vector.broadcast %3617 : f32 to vector<8x128xf32>
    %3622 = arith.mulf %2382, %3621 : vector<8x128xf32>
    %3623 = arith.addf %3616, %3622 : vector<8x128xf32>
    %c154_337 = arith.constant 154 : index
    %3624 = memref.load %arg1[%c154_337] : memref<256xf32, #tpu.memory_space<smem>>
    %3625 = vector.broadcast %3624 : f32 to vector<8x128xf32>
    %3626 = arith.mulf %2357, %3625 : vector<8x128xf32>
    %3627 = arith.addf %3620, %3626 : vector<8x128xf32>
    %3628 = vector.broadcast %3624 : f32 to vector<8x128xf32>
    %3629 = arith.mulf %2385, %3628 : vector<8x128xf32>
    %3630 = arith.addf %3623, %3629 : vector<8x128xf32>
    %c158_338 = arith.constant 158 : index
    %3631 = memref.load %arg1[%c158_338] : memref<256xf32, #tpu.memory_space<smem>>
    %3632 = vector.broadcast %3631 : f32 to vector<8x128xf32>
    %3633 = arith.mulf %2358, %3632 : vector<8x128xf32>
    %3634 = arith.addf %3627, %3633 : vector<8x128xf32>
    %3635 = vector.broadcast %3631 : f32 to vector<8x128xf32>
    %3636 = arith.mulf %2386, %3635 : vector<8x128xf32>
    %3637 = arith.addf %3630, %3636 : vector<8x128xf32>
    %3638 = arith.mulf %2293, %3634 : vector<8x128xf32>
    %3639 = arith.addf %3579, %3638 : vector<8x128xf32>
    %3640 = arith.mulf %2321, %3634 : vector<8x128xf32>
    %3641 = arith.addf %3581, %3640 : vector<8x128xf32>
    %3642 = arith.mulf %2293, %3637 : vector<8x128xf32>
    %3643 = arith.addf %3583, %3642 : vector<8x128xf32>
    %c162_339 = arith.constant 162 : index
    %3644 = memref.load %arg1[%c162_339] : memref<256xf32, #tpu.memory_space<smem>>
    %3645 = vector.broadcast %3644 : f32 to vector<8x128xf32>
    %3646 = arith.mulf %2331, %3645 : vector<8x128xf32>
    %3647 = vector.broadcast %3644 : f32 to vector<8x128xf32>
    %3648 = arith.mulf %2359, %3647 : vector<8x128xf32>
    %c166_340 = arith.constant 166 : index
    %3649 = memref.load %arg1[%c166_340] : memref<256xf32, #tpu.memory_space<smem>>
    %3650 = vector.broadcast %3649 : f32 to vector<8x128xf32>
    %3651 = arith.mulf %2334, %3650 : vector<8x128xf32>
    %3652 = arith.addf %3646, %3651 : vector<8x128xf32>
    %3653 = vector.broadcast %3649 : f32 to vector<8x128xf32>
    %3654 = arith.mulf %2362, %3653 : vector<8x128xf32>
    %3655 = arith.addf %3648, %3654 : vector<8x128xf32>
    %c170_341 = arith.constant 170 : index
    %3656 = memref.load %arg1[%c170_341] : memref<256xf32, #tpu.memory_space<smem>>
    %3657 = vector.broadcast %3656 : f32 to vector<8x128xf32>
    %3658 = arith.mulf %2339, %3657 : vector<8x128xf32>
    %3659 = arith.addf %3652, %3658 : vector<8x128xf32>
    %3660 = vector.broadcast %3656 : f32 to vector<8x128xf32>
    %3661 = arith.mulf %2367, %3660 : vector<8x128xf32>
    %3662 = arith.addf %3655, %3661 : vector<8x128xf32>
    %c174_342 = arith.constant 174 : index
    %3663 = memref.load %arg1[%c174_342] : memref<256xf32, #tpu.memory_space<smem>>
    %3664 = vector.broadcast %3663 : f32 to vector<8x128xf32>
    %3665 = arith.mulf %2344, %3664 : vector<8x128xf32>
    %3666 = arith.addf %3659, %3665 : vector<8x128xf32>
    %3667 = vector.broadcast %3663 : f32 to vector<8x128xf32>
    %3668 = arith.mulf %2372, %3667 : vector<8x128xf32>
    %3669 = arith.addf %3662, %3668 : vector<8x128xf32>
    %c178_343 = arith.constant 178 : index
    %3670 = memref.load %arg1[%c178_343] : memref<256xf32, #tpu.memory_space<smem>>
    %3671 = vector.broadcast %3670 : f32 to vector<8x128xf32>
    %3672 = arith.mulf %2349, %3671 : vector<8x128xf32>
    %3673 = arith.addf %3666, %3672 : vector<8x128xf32>
    %3674 = vector.broadcast %3670 : f32 to vector<8x128xf32>
    %3675 = arith.mulf %2377, %3674 : vector<8x128xf32>
    %3676 = arith.addf %3669, %3675 : vector<8x128xf32>
    %c182_344 = arith.constant 182 : index
    %3677 = memref.load %arg1[%c182_344] : memref<256xf32, #tpu.memory_space<smem>>
    %3678 = vector.broadcast %3677 : f32 to vector<8x128xf32>
    %3679 = arith.mulf %2354, %3678 : vector<8x128xf32>
    %3680 = arith.addf %3673, %3679 : vector<8x128xf32>
    %3681 = vector.broadcast %3677 : f32 to vector<8x128xf32>
    %3682 = arith.mulf %2382, %3681 : vector<8x128xf32>
    %3683 = arith.addf %3676, %3682 : vector<8x128xf32>
    %c186_345 = arith.constant 186 : index
    %3684 = memref.load %arg1[%c186_345] : memref<256xf32, #tpu.memory_space<smem>>
    %3685 = vector.broadcast %3684 : f32 to vector<8x128xf32>
    %3686 = arith.mulf %2357, %3685 : vector<8x128xf32>
    %3687 = arith.addf %3680, %3686 : vector<8x128xf32>
    %3688 = vector.broadcast %3684 : f32 to vector<8x128xf32>
    %3689 = arith.mulf %2385, %3688 : vector<8x128xf32>
    %3690 = arith.addf %3683, %3689 : vector<8x128xf32>
    %c190_346 = arith.constant 190 : index
    %3691 = memref.load %arg1[%c190_346] : memref<256xf32, #tpu.memory_space<smem>>
    %3692 = vector.broadcast %3691 : f32 to vector<8x128xf32>
    %3693 = arith.mulf %2358, %3692 : vector<8x128xf32>
    %3694 = arith.addf %3687, %3693 : vector<8x128xf32>
    %3695 = vector.broadcast %3691 : f32 to vector<8x128xf32>
    %3696 = arith.mulf %2386, %3695 : vector<8x128xf32>
    %3697 = arith.addf %3690, %3696 : vector<8x128xf32>
    %3698 = arith.mulf %2298, %3694 : vector<8x128xf32>
    %3699 = arith.addf %3639, %3698 : vector<8x128xf32>
    %3700 = arith.mulf %2326, %3694 : vector<8x128xf32>
    %3701 = arith.addf %3641, %3700 : vector<8x128xf32>
    %3702 = arith.mulf %2298, %3697 : vector<8x128xf32>
    %3703 = arith.addf %3643, %3702 : vector<8x128xf32>
    %c194_347 = arith.constant 194 : index
    %3704 = memref.load %arg1[%c194_347] : memref<256xf32, #tpu.memory_space<smem>>
    %3705 = vector.broadcast %3704 : f32 to vector<8x128xf32>
    %3706 = arith.mulf %2331, %3705 : vector<8x128xf32>
    %3707 = vector.broadcast %3704 : f32 to vector<8x128xf32>
    %3708 = arith.mulf %2359, %3707 : vector<8x128xf32>
    %c198_348 = arith.constant 198 : index
    %3709 = memref.load %arg1[%c198_348] : memref<256xf32, #tpu.memory_space<smem>>
    %3710 = vector.broadcast %3709 : f32 to vector<8x128xf32>
    %3711 = arith.mulf %2334, %3710 : vector<8x128xf32>
    %3712 = arith.addf %3706, %3711 : vector<8x128xf32>
    %3713 = vector.broadcast %3709 : f32 to vector<8x128xf32>
    %3714 = arith.mulf %2362, %3713 : vector<8x128xf32>
    %3715 = arith.addf %3708, %3714 : vector<8x128xf32>
    %c202_349 = arith.constant 202 : index
    %3716 = memref.load %arg1[%c202_349] : memref<256xf32, #tpu.memory_space<smem>>
    %3717 = vector.broadcast %3716 : f32 to vector<8x128xf32>
    %3718 = arith.mulf %2339, %3717 : vector<8x128xf32>
    %3719 = arith.addf %3712, %3718 : vector<8x128xf32>
    %3720 = vector.broadcast %3716 : f32 to vector<8x128xf32>
    %3721 = arith.mulf %2367, %3720 : vector<8x128xf32>
    %3722 = arith.addf %3715, %3721 : vector<8x128xf32>
    %c206_350 = arith.constant 206 : index
    %3723 = memref.load %arg1[%c206_350] : memref<256xf32, #tpu.memory_space<smem>>
    %3724 = vector.broadcast %3723 : f32 to vector<8x128xf32>
    %3725 = arith.mulf %2344, %3724 : vector<8x128xf32>
    %3726 = arith.addf %3719, %3725 : vector<8x128xf32>
    %3727 = vector.broadcast %3723 : f32 to vector<8x128xf32>
    %3728 = arith.mulf %2372, %3727 : vector<8x128xf32>
    %3729 = arith.addf %3722, %3728 : vector<8x128xf32>
    %c210_351 = arith.constant 210 : index
    %3730 = memref.load %arg1[%c210_351] : memref<256xf32, #tpu.memory_space<smem>>
    %3731 = vector.broadcast %3730 : f32 to vector<8x128xf32>
    %3732 = arith.mulf %2349, %3731 : vector<8x128xf32>
    %3733 = arith.addf %3726, %3732 : vector<8x128xf32>
    %3734 = vector.broadcast %3730 : f32 to vector<8x128xf32>
    %3735 = arith.mulf %2377, %3734 : vector<8x128xf32>
    %3736 = arith.addf %3729, %3735 : vector<8x128xf32>
    %c214_352 = arith.constant 214 : index
    %3737 = memref.load %arg1[%c214_352] : memref<256xf32, #tpu.memory_space<smem>>
    %3738 = vector.broadcast %3737 : f32 to vector<8x128xf32>
    %3739 = arith.mulf %2354, %3738 : vector<8x128xf32>
    %3740 = arith.addf %3733, %3739 : vector<8x128xf32>
    %3741 = vector.broadcast %3737 : f32 to vector<8x128xf32>
    %3742 = arith.mulf %2382, %3741 : vector<8x128xf32>
    %3743 = arith.addf %3736, %3742 : vector<8x128xf32>
    %c218_353 = arith.constant 218 : index
    %3744 = memref.load %arg1[%c218_353] : memref<256xf32, #tpu.memory_space<smem>>
    %3745 = vector.broadcast %3744 : f32 to vector<8x128xf32>
    %3746 = arith.mulf %2357, %3745 : vector<8x128xf32>
    %3747 = arith.addf %3740, %3746 : vector<8x128xf32>
    %3748 = vector.broadcast %3744 : f32 to vector<8x128xf32>
    %3749 = arith.mulf %2385, %3748 : vector<8x128xf32>
    %3750 = arith.addf %3743, %3749 : vector<8x128xf32>
    %c222_354 = arith.constant 222 : index
    %3751 = memref.load %arg1[%c222_354] : memref<256xf32, #tpu.memory_space<smem>>
    %3752 = vector.broadcast %3751 : f32 to vector<8x128xf32>
    %3753 = arith.mulf %2358, %3752 : vector<8x128xf32>
    %3754 = arith.addf %3747, %3753 : vector<8x128xf32>
    %3755 = vector.broadcast %3751 : f32 to vector<8x128xf32>
    %3756 = arith.mulf %2386, %3755 : vector<8x128xf32>
    %3757 = arith.addf %3750, %3756 : vector<8x128xf32>
    %3758 = arith.mulf %2301, %3754 : vector<8x128xf32>
    %3759 = arith.addf %3699, %3758 : vector<8x128xf32>
    %3760 = arith.mulf %2329, %3754 : vector<8x128xf32>
    %3761 = arith.addf %3701, %3760 : vector<8x128xf32>
    %3762 = arith.mulf %2301, %3757 : vector<8x128xf32>
    %3763 = arith.addf %3703, %3762 : vector<8x128xf32>
    %c226_355 = arith.constant 226 : index
    %3764 = memref.load %arg1[%c226_355] : memref<256xf32, #tpu.memory_space<smem>>
    %3765 = vector.broadcast %3764 : f32 to vector<8x128xf32>
    %3766 = arith.mulf %2331, %3765 : vector<8x128xf32>
    %3767 = vector.broadcast %3764 : f32 to vector<8x128xf32>
    %3768 = arith.mulf %2359, %3767 : vector<8x128xf32>
    %c230_356 = arith.constant 230 : index
    %3769 = memref.load %arg1[%c230_356] : memref<256xf32, #tpu.memory_space<smem>>
    %3770 = vector.broadcast %3769 : f32 to vector<8x128xf32>
    %3771 = arith.mulf %2334, %3770 : vector<8x128xf32>
    %3772 = arith.addf %3766, %3771 : vector<8x128xf32>
    %3773 = vector.broadcast %3769 : f32 to vector<8x128xf32>
    %3774 = arith.mulf %2362, %3773 : vector<8x128xf32>
    %3775 = arith.addf %3768, %3774 : vector<8x128xf32>
    %c234_357 = arith.constant 234 : index
    %3776 = memref.load %arg1[%c234_357] : memref<256xf32, #tpu.memory_space<smem>>
    %3777 = vector.broadcast %3776 : f32 to vector<8x128xf32>
    %3778 = arith.mulf %2339, %3777 : vector<8x128xf32>
    %3779 = arith.addf %3772, %3778 : vector<8x128xf32>
    %3780 = vector.broadcast %3776 : f32 to vector<8x128xf32>
    %3781 = arith.mulf %2367, %3780 : vector<8x128xf32>
    %3782 = arith.addf %3775, %3781 : vector<8x128xf32>
    %c238_358 = arith.constant 238 : index
    %3783 = memref.load %arg1[%c238_358] : memref<256xf32, #tpu.memory_space<smem>>
    %3784 = vector.broadcast %3783 : f32 to vector<8x128xf32>
    %3785 = arith.mulf %2344, %3784 : vector<8x128xf32>
    %3786 = arith.addf %3779, %3785 : vector<8x128xf32>
    %3787 = vector.broadcast %3783 : f32 to vector<8x128xf32>
    %3788 = arith.mulf %2372, %3787 : vector<8x128xf32>
    %3789 = arith.addf %3782, %3788 : vector<8x128xf32>
    %c242_359 = arith.constant 242 : index
    %3790 = memref.load %arg1[%c242_359] : memref<256xf32, #tpu.memory_space<smem>>
    %3791 = vector.broadcast %3790 : f32 to vector<8x128xf32>
    %3792 = arith.mulf %2349, %3791 : vector<8x128xf32>
    %3793 = arith.addf %3786, %3792 : vector<8x128xf32>
    %3794 = vector.broadcast %3790 : f32 to vector<8x128xf32>
    %3795 = arith.mulf %2377, %3794 : vector<8x128xf32>
    %3796 = arith.addf %3789, %3795 : vector<8x128xf32>
    %c246_360 = arith.constant 246 : index
    %3797 = memref.load %arg1[%c246_360] : memref<256xf32, #tpu.memory_space<smem>>
    %3798 = vector.broadcast %3797 : f32 to vector<8x128xf32>
    %3799 = arith.mulf %2354, %3798 : vector<8x128xf32>
    %3800 = arith.addf %3793, %3799 : vector<8x128xf32>
    %3801 = vector.broadcast %3797 : f32 to vector<8x128xf32>
    %3802 = arith.mulf %2382, %3801 : vector<8x128xf32>
    %3803 = arith.addf %3796, %3802 : vector<8x128xf32>
    %c250_361 = arith.constant 250 : index
    %3804 = memref.load %arg1[%c250_361] : memref<256xf32, #tpu.memory_space<smem>>
    %3805 = vector.broadcast %3804 : f32 to vector<8x128xf32>
    %3806 = arith.mulf %2357, %3805 : vector<8x128xf32>
    %3807 = arith.addf %3800, %3806 : vector<8x128xf32>
    %3808 = vector.broadcast %3804 : f32 to vector<8x128xf32>
    %3809 = arith.mulf %2385, %3808 : vector<8x128xf32>
    %3810 = arith.addf %3803, %3809 : vector<8x128xf32>
    %c254_362 = arith.constant 254 : index
    %3811 = memref.load %arg1[%c254_362] : memref<256xf32, #tpu.memory_space<smem>>
    %3812 = vector.broadcast %3811 : f32 to vector<8x128xf32>
    %3813 = arith.mulf %2358, %3812 : vector<8x128xf32>
    %3814 = arith.addf %3807, %3813 : vector<8x128xf32>
    %3815 = vector.broadcast %3811 : f32 to vector<8x128xf32>
    %3816 = arith.mulf %2386, %3815 : vector<8x128xf32>
    %3817 = arith.addf %3810, %3816 : vector<8x128xf32>
    %3818 = arith.mulf %2302, %3814 : vector<8x128xf32>
    %3819 = arith.addf %3759, %3818 : vector<8x128xf32>
    %3820 = arith.mulf %2330, %3814 : vector<8x128xf32>
    %3821 = arith.addf %3761, %3820 : vector<8x128xf32>
    %3822 = arith.mulf %2302, %3817 : vector<8x128xf32>
    %3823 = arith.addf %3763, %3822 : vector<8x128xf32>
    %c2_363 = arith.constant 2 : index
    %c8_364 = arith.constant 8 : index
    %c0_365 = arith.constant 0 : index
    %3824 = vector.load %arg3[%c2_363, %c8_364, %c0_365] : memref<8x16x128xf32, #tpu.memory_space<vmem>>, vector<1x8x128xf32>
    %3825 = vector.shape_cast %3824 : vector<1x8x128xf32> to vector<8x128xf32>
    %3826 = vector.shape_cast %3819 : vector<8x128xf32> to vector<1x8x128xf32>
    tpu.vector_store %arg3[%c2_363, %c8_364, %c0_365], %3826 {strides = array<i32>} : memref<8x16x128xf32, #tpu.memory_space<vmem>>, vector<1x8x128xf32>,
    %c3_366 = arith.constant 3 : index
    %3827 = memref.load %arg1[%c3_366] : memref<256xf32, #tpu.memory_space<smem>>
    %3828 = vector.broadcast %3827 : f32 to vector<8x128xf32>
    %3829 = arith.mulf %2331, %3828 : vector<8x128xf32>
    %c7_367 = arith.constant 7 : index
    %3830 = memref.load %arg1[%c7_367] : memref<256xf32, #tpu.memory_space<smem>>
    %3831 = vector.broadcast %3830 : f32 to vector<8x128xf32>
    %3832 = arith.mulf %2334, %3831 : vector<8x128xf32>
    %3833 = arith.addf %3829, %3832 : vector<8x128xf32>
    %c11_368 = arith.constant 11 : index
    %3834 = memref.load %arg1[%c11_368] : memref<256xf32, #tpu.memory_space<smem>>
    %3835 = vector.broadcast %3834 : f32 to vector<8x128xf32>
    %3836 = arith.mulf %2339, %3835 : vector<8x128xf32>
    %3837 = arith.addf %3833, %3836 : vector<8x128xf32>
    %c15_369 = arith.constant 15 : index
    %3838 = memref.load %arg1[%c15_369] : memref<256xf32, #tpu.memory_space<smem>>
    %3839 = vector.broadcast %3838 : f32 to vector<8x128xf32>
    %3840 = arith.mulf %2344, %3839 : vector<8x128xf32>
    %3841 = arith.addf %3837, %3840 : vector<8x128xf32>
    %c19_370 = arith.constant 19 : index
    %3842 = memref.load %arg1[%c19_370] : memref<256xf32, #tpu.memory_space<smem>>
    %3843 = vector.broadcast %3842 : f32 to vector<8x128xf32>
    %3844 = arith.mulf %2349, %3843 : vector<8x128xf32>
    %3845 = arith.addf %3841, %3844 : vector<8x128xf32>
    %c23_371 = arith.constant 23 : index
    %3846 = memref.load %arg1[%c23_371] : memref<256xf32, #tpu.memory_space<smem>>
    %3847 = vector.broadcast %3846 : f32 to vector<8x128xf32>
    %3848 = arith.mulf %2354, %3847 : vector<8x128xf32>
    %3849 = arith.addf %3845, %3848 : vector<8x128xf32>
    %c27_372 = arith.constant 27 : index
    %3850 = memref.load %arg1[%c27_372] : memref<256xf32, #tpu.memory_space<smem>>
    %3851 = vector.broadcast %3850 : f32 to vector<8x128xf32>
    %3852 = arith.mulf %2357, %3851 : vector<8x128xf32>
    %3853 = arith.addf %3849, %3852 : vector<8x128xf32>
    %c31_373 = arith.constant 31 : index
    %3854 = memref.load %arg1[%c31_373] : memref<256xf32, #tpu.memory_space<smem>>
    %3855 = vector.broadcast %3854 : f32 to vector<8x128xf32>
    %3856 = arith.mulf %2358, %3855 : vector<8x128xf32>
    %3857 = arith.addf %3853, %3856 : vector<8x128xf32>
    %3858 = arith.mulf %2275, %3857 : vector<8x128xf32>
    %c35_374 = arith.constant 35 : index
    %3859 = memref.load %arg1[%c35_374] : memref<256xf32, #tpu.memory_space<smem>>
    %3860 = vector.broadcast %3859 : f32 to vector<8x128xf32>
    %3861 = arith.mulf %2331, %3860 : vector<8x128xf32>
    %c39_375 = arith.constant 39 : index
    %3862 = memref.load %arg1[%c39_375] : memref<256xf32, #tpu.memory_space<smem>>
    %3863 = vector.broadcast %3862 : f32 to vector<8x128xf32>
    %3864 = arith.mulf %2334, %3863 : vector<8x128xf32>
    %3865 = arith.addf %3861, %3864 : vector<8x128xf32>
    %c43_376 = arith.constant 43 : index
    %3866 = memref.load %arg1[%c43_376] : memref<256xf32, #tpu.memory_space<smem>>
    %3867 = vector.broadcast %3866 : f32 to vector<8x128xf32>
    %3868 = arith.mulf %2339, %3867 : vector<8x128xf32>
    %3869 = arith.addf %3865, %3868 : vector<8x128xf32>
    %c47_377 = arith.constant 47 : index
    %3870 = memref.load %arg1[%c47_377] : memref<256xf32, #tpu.memory_space<smem>>
    %3871 = vector.broadcast %3870 : f32 to vector<8x128xf32>
    %3872 = arith.mulf %2344, %3871 : vector<8x128xf32>
    %3873 = arith.addf %3869, %3872 : vector<8x128xf32>
    %c51_378 = arith.constant 51 : index
    %3874 = memref.load %arg1[%c51_378] : memref<256xf32, #tpu.memory_space<smem>>
    %3875 = vector.broadcast %3874 : f32 to vector<8x128xf32>
    %3876 = arith.mulf %2349, %3875 : vector<8x128xf32>
    %3877 = arith.addf %3873, %3876 : vector<8x128xf32>
    %c55_379 = arith.constant 55 : index
    %3878 = memref.load %arg1[%c55_379] : memref<256xf32, #tpu.memory_space<smem>>
    %3879 = vector.broadcast %3878 : f32 to vector<8x128xf32>
    %3880 = arith.mulf %2354, %3879 : vector<8x128xf32>
    %3881 = arith.addf %3877, %3880 : vector<8x128xf32>
    %c59_380 = arith.constant 59 : index
    %3882 = memref.load %arg1[%c59_380] : memref<256xf32, #tpu.memory_space<smem>>
    %3883 = vector.broadcast %3882 : f32 to vector<8x128xf32>
    %3884 = arith.mulf %2357, %3883 : vector<8x128xf32>
    %3885 = arith.addf %3881, %3884 : vector<8x128xf32>
    %c63_381 = arith.constant 63 : index
    %3886 = memref.load %arg1[%c63_381] : memref<256xf32, #tpu.memory_space<smem>>
    %3887 = vector.broadcast %3886 : f32 to vector<8x128xf32>
    %3888 = arith.mulf %2358, %3887 : vector<8x128xf32>
    %3889 = arith.addf %3885, %3888 : vector<8x128xf32>
    %3890 = arith.mulf %2278, %3889 : vector<8x128xf32>
    %3891 = arith.addf %3858, %3890 : vector<8x128xf32>
    %c67_382 = arith.constant 67 : index
    %3892 = memref.load %arg1[%c67_382] : memref<256xf32, #tpu.memory_space<smem>>
    %3893 = vector.broadcast %3892 : f32 to vector<8x128xf32>
    %3894 = arith.mulf %2331, %3893 : vector<8x128xf32>
    %c71_383 = arith.constant 71 : index
    %3895 = memref.load %arg1[%c71_383] : memref<256xf32, #tpu.memory_space<smem>>
    %3896 = vector.broadcast %3895 : f32 to vector<8x128xf32>
    %3897 = arith.mulf %2334, %3896 : vector<8x128xf32>
    %3898 = arith.addf %3894, %3897 : vector<8x128xf32>
    %c75_384 = arith.constant 75 : index
    %3899 = memref.load %arg1[%c75_384] : memref<256xf32, #tpu.memory_space<smem>>
    %3900 = vector.broadcast %3899 : f32 to vector<8x128xf32>
    %3901 = arith.mulf %2339, %3900 : vector<8x128xf32>
    %3902 = arith.addf %3898, %3901 : vector<8x128xf32>
    %c79_385 = arith.constant 79 : index
    %3903 = memref.load %arg1[%c79_385] : memref<256xf32, #tpu.memory_space<smem>>
    %3904 = vector.broadcast %3903 : f32 to vector<8x128xf32>
    %3905 = arith.mulf %2344, %3904 : vector<8x128xf32>
    %3906 = arith.addf %3902, %3905 : vector<8x128xf32>
    %c83_386 = arith.constant 83 : index
    %3907 = memref.load %arg1[%c83_386] : memref<256xf32, #tpu.memory_space<smem>>
    %3908 = vector.broadcast %3907 : f32 to vector<8x128xf32>
    %3909 = arith.mulf %2349, %3908 : vector<8x128xf32>
    %3910 = arith.addf %3906, %3909 : vector<8x128xf32>
    %c87_387 = arith.constant 87 : index
    %3911 = memref.load %arg1[%c87_387] : memref<256xf32, #tpu.memory_space<smem>>
    %3912 = vector.broadcast %3911 : f32 to vector<8x128xf32>
    %3913 = arith.mulf %2354, %3912 : vector<8x128xf32>
    %3914 = arith.addf %3910, %3913 : vector<8x128xf32>
    %c91_388 = arith.constant 91 : index
    %3915 = memref.load %arg1[%c91_388] : memref<256xf32, #tpu.memory_space<smem>>
    %3916 = vector.broadcast %3915 : f32 to vector<8x128xf32>
    %3917 = arith.mulf %2357, %3916 : vector<8x128xf32>
    %3918 = arith.addf %3914, %3917 : vector<8x128xf32>
    %c95_389 = arith.constant 95 : index
    %3919 = memref.load %arg1[%c95_389] : memref<256xf32, #tpu.memory_space<smem>>
    %3920 = vector.broadcast %3919 : f32 to vector<8x128xf32>
    %3921 = arith.mulf %2358, %3920 : vector<8x128xf32>
    %3922 = arith.addf %3918, %3921 : vector<8x128xf32>
    %3923 = arith.mulf %2283, %3922 : vector<8x128xf32>
    %3924 = arith.addf %3891, %3923 : vector<8x128xf32>
    %c99_390 = arith.constant 99 : index
    %3925 = memref.load %arg1[%c99_390] : memref<256xf32, #tpu.memory_space<smem>>
    %3926 = vector.broadcast %3925 : f32 to vector<8x128xf32>
    %3927 = arith.mulf %2331, %3926 : vector<8x128xf32>
    %c103_391 = arith.constant 103 : index
    %3928 = memref.load %arg1[%c103_391] : memref<256xf32, #tpu.memory_space<smem>>
    %3929 = vector.broadcast %3928 : f32 to vector<8x128xf32>
    %3930 = arith.mulf %2334, %3929 : vector<8x128xf32>
    %3931 = arith.addf %3927, %3930 : vector<8x128xf32>
    %c107_392 = arith.constant 107 : index
    %3932 = memref.load %arg1[%c107_392] : memref<256xf32, #tpu.memory_space<smem>>
    %3933 = vector.broadcast %3932 : f32 to vector<8x128xf32>
    %3934 = arith.mulf %2339, %3933 : vector<8x128xf32>
    %3935 = arith.addf %3931, %3934 : vector<8x128xf32>
    %c111_393 = arith.constant 111 : index
    %3936 = memref.load %arg1[%c111_393] : memref<256xf32, #tpu.memory_space<smem>>
    %3937 = vector.broadcast %3936 : f32 to vector<8x128xf32>
    %3938 = arith.mulf %2344, %3937 : vector<8x128xf32>
    %3939 = arith.addf %3935, %3938 : vector<8x128xf32>
    %c115_394 = arith.constant 115 : index
    %3940 = memref.load %arg1[%c115_394] : memref<256xf32, #tpu.memory_space<smem>>
    %3941 = vector.broadcast %3940 : f32 to vector<8x128xf32>
    %3942 = arith.mulf %2349, %3941 : vector<8x128xf32>
    %3943 = arith.addf %3939, %3942 : vector<8x128xf32>
    %c119_395 = arith.constant 119 : index
    %3944 = memref.load %arg1[%c119_395] : memref<256xf32, #tpu.memory_space<smem>>
    %3945 = vector.broadcast %3944 : f32 to vector<8x128xf32>
    %3946 = arith.mulf %2354, %3945 : vector<8x128xf32>
    %3947 = arith.addf %3943, %3946 : vector<8x128xf32>
    %c123_396 = arith.constant 123 : index
    %3948 = memref.load %arg1[%c123_396] : memref<256xf32, #tpu.memory_space<smem>>
    %3949 = vector.broadcast %3948 : f32 to vector<8x128xf32>
    %3950 = arith.mulf %2357, %3949 : vector<8x128xf32>
    %3951 = arith.addf %3947, %3950 : vector<8x128xf32>
    %c127_397 = arith.constant 127 : index
    %3952 = memref.load %arg1[%c127_397] : memref<256xf32, #tpu.memory_space<smem>>
    %3953 = vector.broadcast %3952 : f32 to vector<8x128xf32>
    %3954 = arith.mulf %2358, %3953 : vector<8x128xf32>
    %3955 = arith.addf %3951, %3954 : vector<8x128xf32>
    %3956 = arith.mulf %2288, %3955 : vector<8x128xf32>
    %3957 = arith.addf %3924, %3956 : vector<8x128xf32>
    %c131_398 = arith.constant 131 : index
    %3958 = memref.load %arg1[%c131_398] : memref<256xf32, #tpu.memory_space<smem>>
    %3959 = vector.broadcast %3958 : f32 to vector<8x128xf32>
    %3960 = arith.mulf %2331, %3959 : vector<8x128xf32>
    %c135_399 = arith.constant 135 : index
    %3961 = memref.load %arg1[%c135_399] : memref<256xf32, #tpu.memory_space<smem>>
    %3962 = vector.broadcast %3961 : f32 to vector<8x128xf32>
    %3963 = arith.mulf %2334, %3962 : vector<8x128xf32>
    %3964 = arith.addf %3960, %3963 : vector<8x128xf32>
    %c139_400 = arith.constant 139 : index
    %3965 = memref.load %arg1[%c139_400] : memref<256xf32, #tpu.memory_space<smem>>
    %3966 = vector.broadcast %3965 : f32 to vector<8x128xf32>
    %3967 = arith.mulf %2339, %3966 : vector<8x128xf32>
    %3968 = arith.addf %3964, %3967 : vector<8x128xf32>
    %c143_401 = arith.constant 143 : index
    %3969 = memref.load %arg1[%c143_401] : memref<256xf32, #tpu.memory_space<smem>>
    %3970 = vector.broadcast %3969 : f32 to vector<8x128xf32>
    %3971 = arith.mulf %2344, %3970 : vector<8x128xf32>
    %3972 = arith.addf %3968, %3971 : vector<8x128xf32>
    %c147_402 = arith.constant 147 : index
    %3973 = memref.load %arg1[%c147_402] : memref<256xf32, #tpu.memory_space<smem>>
    %3974 = vector.broadcast %3973 : f32 to vector<8x128xf32>
    %3975 = arith.mulf %2349, %3974 : vector<8x128xf32>
    %3976 = arith.addf %3972, %3975 : vector<8x128xf32>
    %c151_403 = arith.constant 151 : index
    %3977 = memref.load %arg1[%c151_403] : memref<256xf32, #tpu.memory_space<smem>>
    %3978 = vector.broadcast %3977 : f32 to vector<8x128xf32>
    %3979 = arith.mulf %2354, %3978 : vector<8x128xf32>
    %3980 = arith.addf %3976, %3979 : vector<8x128xf32>
    %c155_404 = arith.constant 155 : index
    %3981 = memref.load %arg1[%c155_404] : memref<256xf32, #tpu.memory_space<smem>>
    %3982 = vector.broadcast %3981 : f32 to vector<8x128xf32>
    %3983 = arith.mulf %2357, %3982 : vector<8x128xf32>
    %3984 = arith.addf %3980, %3983 : vector<8x128xf32>
    %c159_405 = arith.constant 159 : index
    %3985 = memref.load %arg1[%c159_405] : memref<256xf32, #tpu.memory_space<smem>>
    %3986 = vector.broadcast %3985 : f32 to vector<8x128xf32>
    %3987 = arith.mulf %2358, %3986 : vector<8x128xf32>
    %3988 = arith.addf %3984, %3987 : vector<8x128xf32>
    %3989 = arith.mulf %2293, %3988 : vector<8x128xf32>
    %3990 = arith.addf %3957, %3989 : vector<8x128xf32>
    %c163_406 = arith.constant 163 : index
    %3991 = memref.load %arg1[%c163_406] : memref<256xf32, #tpu.memory_space<smem>>
    %3992 = vector.broadcast %3991 : f32 to vector<8x128xf32>
    %3993 = arith.mulf %2331, %3992 : vector<8x128xf32>
    %c167_407 = arith.constant 167 : index
    %3994 = memref.load %arg1[%c167_407] : memref<256xf32, #tpu.memory_space<smem>>
    %3995 = vector.broadcast %3994 : f32 to vector<8x128xf32>
    %3996 = arith.mulf %2334, %3995 : vector<8x128xf32>
    %3997 = arith.addf %3993, %3996 : vector<8x128xf32>
    %c171_408 = arith.constant 171 : index
    %3998 = memref.load %arg1[%c171_408] : memref<256xf32, #tpu.memory_space<smem>>
    %3999 = vector.broadcast %3998 : f32 to vector<8x128xf32>
    %4000 = arith.mulf %2339, %3999 : vector<8x128xf32>
    %4001 = arith.addf %3997, %4000 : vector<8x128xf32>
    %c175_409 = arith.constant 175 : index
    %4002 = memref.load %arg1[%c175_409] : memref<256xf32, #tpu.memory_space<smem>>
    %4003 = vector.broadcast %4002 : f32 to vector<8x128xf32>
    %4004 = arith.mulf %2344, %4003 : vector<8x128xf32>
    %4005 = arith.addf %4001, %4004 : vector<8x128xf32>
    %c179_410 = arith.constant 179 : index
    %4006 = memref.load %arg1[%c179_410] : memref<256xf32, #tpu.memory_space<smem>>
    %4007 = vector.broadcast %4006 : f32 to vector<8x128xf32>
    %4008 = arith.mulf %2349, %4007 : vector<8x128xf32>
    %4009 = arith.addf %4005, %4008 : vector<8x128xf32>
    %c183_411 = arith.constant 183 : index
    %4010 = memref.load %arg1[%c183_411] : memref<256xf32, #tpu.memory_space<smem>>
    %4011 = vector.broadcast %4010 : f32 to vector<8x128xf32>
    %4012 = arith.mulf %2354, %4011 : vector<8x128xf32>
    %4013 = arith.addf %4009, %4012 : vector<8x128xf32>
    %c187_412 = arith.constant 187 : index
    %4014 = memref.load %arg1[%c187_412] : memref<256xf32, #tpu.memory_space<smem>>
    %4015 = vector.broadcast %4014 : f32 to vector<8x128xf32>
    %4016 = arith.mulf %2357, %4015 : vector<8x128xf32>
    %4017 = arith.addf %4013, %4016 : vector<8x128xf32>
    %c191_413 = arith.constant 191 : index
    %4018 = memref.load %arg1[%c191_413] : memref<256xf32, #tpu.memory_space<smem>>
    %4019 = vector.broadcast %4018 : f32 to vector<8x128xf32>
    %4020 = arith.mulf %2358, %4019 : vector<8x128xf32>
    %4021 = arith.addf %4017, %4020 : vector<8x128xf32>
    %4022 = arith.mulf %2298, %4021 : vector<8x128xf32>
    %4023 = arith.addf %3990, %4022 : vector<8x128xf32>
    %c195_414 = arith.constant 195 : index
    %4024 = memref.load %arg1[%c195_414] : memref<256xf32, #tpu.memory_space<smem>>
    %4025 = vector.broadcast %4024 : f32 to vector<8x128xf32>
    %4026 = arith.mulf %2331, %4025 : vector<8x128xf32>
    %c199_415 = arith.constant 199 : index
    %4027 = memref.load %arg1[%c199_415] : memref<256xf32, #tpu.memory_space<smem>>
    %4028 = vector.broadcast %4027 : f32 to vector<8x128xf32>
    %4029 = arith.mulf %2334, %4028 : vector<8x128xf32>
    %4030 = arith.addf %4026, %4029 : vector<8x128xf32>
    %c203_416 = arith.constant 203 : index
    %4031 = memref.load %arg1[%c203_416] : memref<256xf32, #tpu.memory_space<smem>>
    %4032 = vector.broadcast %4031 : f32 to vector<8x128xf32>
    %4033 = arith.mulf %2339, %4032 : vector<8x128xf32>
    %4034 = arith.addf %4030, %4033 : vector<8x128xf32>
    %c207_417 = arith.constant 207 : index
    %4035 = memref.load %arg1[%c207_417] : memref<256xf32, #tpu.memory_space<smem>>
    %4036 = vector.broadcast %4035 : f32 to vector<8x128xf32>
    %4037 = arith.mulf %2344, %4036 : vector<8x128xf32>
    %4038 = arith.addf %4034, %4037 : vector<8x128xf32>
    %c211_418 = arith.constant 211 : index
    %4039 = memref.load %arg1[%c211_418] : memref<256xf32, #tpu.memory_space<smem>>
    %4040 = vector.broadcast %4039 : f32 to vector<8x128xf32>
    %4041 = arith.mulf %2349, %4040 : vector<8x128xf32>
    %4042 = arith.addf %4038, %4041 : vector<8x128xf32>
    %c215_419 = arith.constant 215 : index
    %4043 = memref.load %arg1[%c215_419] : memref<256xf32, #tpu.memory_space<smem>>
    %4044 = vector.broadcast %4043 : f32 to vector<8x128xf32>
    %4045 = arith.mulf %2354, %4044 : vector<8x128xf32>
    %4046 = arith.addf %4042, %4045 : vector<8x128xf32>
    %c219_420 = arith.constant 219 : index
    %4047 = memref.load %arg1[%c219_420] : memref<256xf32, #tpu.memory_space<smem>>
    %4048 = vector.broadcast %4047 : f32 to vector<8x128xf32>
    %4049 = arith.mulf %2357, %4048 : vector<8x128xf32>
    %4050 = arith.addf %4046, %4049 : vector<8x128xf32>
    %c223_421 = arith.constant 223 : index
    %4051 = memref.load %arg1[%c223_421] : memref<256xf32, #tpu.memory_space<smem>>
    %4052 = vector.broadcast %4051 : f32 to vector<8x128xf32>
    %4053 = arith.mulf %2358, %4052 : vector<8x128xf32>
    %4054 = arith.addf %4050, %4053 : vector<8x128xf32>
    %4055 = arith.mulf %2301, %4054 : vector<8x128xf32>
    %4056 = arith.addf %4023, %4055 : vector<8x128xf32>
    %c227_422 = arith.constant 227 : index
    %4057 = memref.load %arg1[%c227_422] : memref<256xf32, #tpu.memory_space<smem>>
    %4058 = vector.broadcast %4057 : f32 to vector<8x128xf32>
    %4059 = arith.mulf %2331, %4058 : vector<8x128xf32>
    %c231_423 = arith.constant 231 : index
    %4060 = memref.load %arg1[%c231_423] : memref<256xf32, #tpu.memory_space<smem>>
    %4061 = vector.broadcast %4060 : f32 to vector<8x128xf32>
    %4062 = arith.mulf %2334, %4061 : vector<8x128xf32>
    %4063 = arith.addf %4059, %4062 : vector<8x128xf32>
    %c235_424 = arith.constant 235 : index
    %4064 = memref.load %arg1[%c235_424] : memref<256xf32, #tpu.memory_space<smem>>
    %4065 = vector.broadcast %4064 : f32 to vector<8x128xf32>
    %4066 = arith.mulf %2339, %4065 : vector<8x128xf32>
    %4067 = arith.addf %4063, %4066 : vector<8x128xf32>
    %c239_425 = arith.constant 239 : index
    %4068 = memref.load %arg1[%c239_425] : memref<256xf32, #tpu.memory_space<smem>>
    %4069 = vector.broadcast %4068 : f32 to vector<8x128xf32>
    %4070 = arith.mulf %2344, %4069 : vector<8x128xf32>
    %4071 = arith.addf %4067, %4070 : vector<8x128xf32>
    %c243_426 = arith.constant 243 : index
    %4072 = memref.load %arg1[%c243_426] : memref<256xf32, #tpu.memory_space<smem>>
    %4073 = vector.broadcast %4072 : f32 to vector<8x128xf32>
    %4074 = arith.mulf %2349, %4073 : vector<8x128xf32>
    %4075 = arith.addf %4071, %4074 : vector<8x128xf32>
    %c247_427 = arith.constant 247 : index
    %4076 = memref.load %arg1[%c247_427] : memref<256xf32, #tpu.memory_space<smem>>
    %4077 = vector.broadcast %4076 : f32 to vector<8x128xf32>
    %4078 = arith.mulf %2354, %4077 : vector<8x128xf32>
    %4079 = arith.addf %4075, %4078 : vector<8x128xf32>
    %c251_428 = arith.constant 251 : index
    %4080 = memref.load %arg1[%c251_428] : memref<256xf32, #tpu.memory_space<smem>>
    %4081 = vector.broadcast %4080 : f32 to vector<8x128xf32>
    %4082 = arith.mulf %2357, %4081 : vector<8x128xf32>
    %4083 = arith.addf %4079, %4082 : vector<8x128xf32>
    %c255_429 = arith.constant 255 : index
    %4084 = memref.load %arg1[%c255_429] : memref<256xf32, #tpu.memory_space<smem>>
    %4085 = vector.broadcast %4084 : f32 to vector<8x128xf32>
    %4086 = arith.mulf %2358, %4085 : vector<8x128xf32>
    %4087 = arith.addf %4083, %4086 : vector<8x128xf32>
    %4088 = arith.mulf %2302, %4087 : vector<8x128xf32>
    %4089 = arith.addf %4056, %4088 : vector<8x128xf32>
    %c3_430 = arith.constant 3 : index
    %c8_431 = arith.constant 8 : index
    %c0_432 = arith.constant 0 : index
    %4090 = vector.load %arg3[%c3_430, %c8_431, %c0_432] : memref<8x16x128xf32, #tpu.memory_space<vmem>>, vector<1x8x128xf32>
    %4091 = vector.shape_cast %4090 : vector<1x8x128xf32> to vector<8x128xf32>
    %4092 = vector.shape_cast %4089 : vector<8x128xf32> to vector<1x8x128xf32>
    tpu.vector_store %arg3[%c3_430, %c8_431, %c0_432], %4092 {strides = array<i32>} : memref<8x16x128xf32, #tpu.memory_space<vmem>>, vector<1x8x128xf32>,
    %4093 = arith.mulf %3341, %3823 : vector<8x128xf32>
    %4094 = arith.mulf %3821, %3343 : vector<8x128xf32>
    %4095 = arith.subf %4093, %4094 : vector<8x128xf32>
    %4096 = arith.mulf %3821, %2863 : vector<8x128xf32>
    %4097 = arith.mulf %2861, %3823 : vector<8x128xf32>
    %4098 = arith.subf %4096, %4097 : vector<8x128xf32>
    %4099 = arith.mulf %2861, %3343 : vector<8x128xf32>
    %4100 = arith.mulf %3341, %2863 : vector<8x128xf32>
    %4101 = arith.subf %4099, %4100 : vector<8x128xf32>
    %4102 = arith.mulf %4095, %4095 : vector<8x128xf32>
    %4103 = arith.mulf %4098, %4098 : vector<8x128xf32>
    %4104 = arith.addf %4102, %4103 : vector<8x128xf32>
    %4105 = arith.mulf %4101, %4101 : vector<8x128xf32>
    %4106 = arith.addf %4104, %4105 : vector<8x128xf32>
    %cst_433 = arith.constant 1.000000e-24 : f32
    %4107 = vector.broadcast %cst_433 : f32 to vector<8x128xf32>
    %4108 = arith.maximumf %4106, %4107 : vector<8x128xf32>
    %4109 = math.rsqrt %4108 : vector<8x128xf32>
    %4110 = arith.mulf %4095, %4109 : vector<8x128xf32>
    %c4_434 = arith.constant 4 : index
    %c8_435 = arith.constant 8 : index
    %c0_436 = arith.constant 0 : index
    %4111 = vector.load %arg3[%c4_434, %c8_435, %c0_436] : memref<8x16x128xf32, #tpu.memory_space<vmem>>, vector<1x8x128xf32>
    %4112 = vector.shape_cast %4111 : vector<1x8x128xf32> to vector<8x128xf32>
    %4113 = vector.shape_cast %4110 : vector<8x128xf32> to vector<1x8x128xf32>
    tpu.vector_store %arg3[%c4_434, %c8_435, %c0_436], %4113 {strides = array<i32>} : memref<8x16x128xf32, #tpu.memory_space<vmem>>, vector<1x8x128xf32>,
    %4114 = arith.mulf %4098, %4109 : vector<8x128xf32>
    %c5_437 = arith.constant 5 : index
    %c8_438 = arith.constant 8 : index
    %c0_439 = arith.constant 0 : index
    %4115 = vector.load %arg3[%c5_437, %c8_438, %c0_439] : memref<8x16x128xf32, #tpu.memory_space<vmem>>, vector<1x8x128xf32>
    %4116 = vector.shape_cast %4115 : vector<1x8x128xf32> to vector<8x128xf32>
    %4117 = vector.shape_cast %4114 : vector<8x128xf32> to vector<1x8x128xf32>
    tpu.vector_store %arg3[%c5_437, %c8_438, %c0_439], %4117 {strides = array<i32>} : memref<8x16x128xf32, #tpu.memory_space<vmem>>, vector<1x8x128xf32>,
    %4118 = arith.mulf %4101, %4109 : vector<8x128xf32>
    %c6_440 = arith.constant 6 : index
    %c8_441 = arith.constant 8 : index
    %c0_442 = arith.constant 0 : index
    %4119 = vector.load %arg3[%c6_440, %c8_441, %c0_442] : memref<8x16x128xf32, #tpu.memory_space<vmem>>, vector<1x8x128xf32>
    %4120 = vector.shape_cast %4119 : vector<1x8x128xf32> to vector<8x128xf32>
    %4121 = vector.shape_cast %4118 : vector<8x128xf32> to vector<1x8x128xf32>
    tpu.vector_store %arg3[%c6_440, %c8_441, %c0_442], %4121 {strides = array<i32>} : memref<8x16x128xf32, #tpu.memory_space<vmem>>, vector<1x8x128xf32>,
    %cst_443 = arith.constant 0.000000e+00 : f32
    %4122 = vector.broadcast %cst_443 : f32 to vector<8x128xf32>
    %c7_444 = arith.constant 7 : index
    %c8_445 = arith.constant 8 : index
    %c0_446 = arith.constant 0 : index
    %4123 = vector.load %arg3[%c7_444, %c8_445, %c0_446] : memref<8x16x128xf32, #tpu.memory_space<vmem>>, vector<1x8x128xf32>
    %4124 = vector.shape_cast %4123 : vector<1x8x128xf32> to vector<8x128xf32>
    %4125 = vector.shape_cast %4122 : vector<8x128xf32> to vector<1x8x128xf32>
    tpu.vector_store %arg3[%c7_444, %c8_445, %c0_446], %4125 {strides = array<i32>} : memref<8x16x128xf32, #tpu.memory_space<vmem>>, vector<1x8x128xf32>,
    return
  }
  func.func @transform_0(%arg0: i32) -> i32 {
    %c0_i32 = arith.constant 0 : i32
    %c0_i32_0 = arith.constant 0 : i32
    return %c0_i32 : i32
  }
  func.func @transform_1(%arg0: i32) -> (i32, i32, i32) {
    %c0_i32 = arith.constant 0 : i32
    %c0_i32_0 = arith.constant 0 : i32
    %c0_i32_1 = arith.constant 0 : i32
    return %c0_i32, %arg0, %c0_i32_0 : i32, i32, i32
  }
  func.func @transform_2(%arg0: i32) -> (i32, i32, i32) {
    %c0_i32 = arith.constant 0 : i32
    %c0_i32_0 = arith.constant 0 : i32
    %c0_i32_1 = arith.constant 0 : i32
    return %c0_i32, %arg0, %c0_i32_0 : i32, i32, i32
  }
}

</mosaic_0001>

<llo_original>
// kernel: tpu_custom_call.1
$region0: #{tpu_custom_call.1}
  #allocation0 [shape = 'u32[]', space=smem, size = 0x4, offset = 0x4, fixed_abs, tag = 'smem constant byte address 0x4 - core index']
  #allocation1 [shape = 'u32[144,128]{1,0:T(1,128)}', space=vmem, size = 0x12000, scoped, tag = 'internal scratch']
  %s0 = inlined_call_operand.hbm [shape: f32[256], index: 0, kind: input, shape index: {}]
  %s1 = inlined_call_operand.hbm [shape: f32[2,16,128], index: 1, kind: input, shape index: {}]
  %s2 = inlined_call_operand.hbm [shape: f32[8,16,128], index: 2, kind: output, shape index: {}]
  %s3 = sld [smem:[#allocation0]]
  $region26: #{tpu_custom_call.1} parent=0
    _
  %s5 = ssub.s32 1, %s3
  %s6 = scalar_select 0, %s5, %s3
  $region1: #{tpu_custom_call.1} parent=0
    #allocation2 [shape = 'u8[1024]{0}', space=smem, size = 0x400, scoped, tag = 'input window, operand 0, single buffered']
    #allocation3 [shape = 's32[1]{0}', space=sflag, size = 0x4, scoped, tag = 'scoped memory for tpu_custom_call.1']
    #allocation4 [shape = 's32[1]{0}', space=sflag, size = 0x4, scoped, tag = 'scoped memory for tpu_custom_call.1']
    #allocation5 [shape = 's32[1]{0}', space=sflag, size = 0x4, scoped, tag = 'scoped memory for tpu_custom_call.1']
    #allocation6 [shape = 'u8[16384]{0}', space=vmem, size = 0x4000, scoped, tag = 'input window, operand 1, single buffered']
    #allocation7 [shape = 'u8[65536]{0}', space=vmem, size = 0x10000, scoped, tag = 'output window, operand 0, single buffered']
    %7 = vsyncpa [#allocation5], 0
    %8 = vsyncpa [#allocation3], 0
    %9 = vsyncpa [#allocation4], 0
    // Predicated region
    $region2: #{tpu_custom_call.1} parent=1 // pred_check
      _
    $region3: #{tpu_custom_call.1} parent=1 // pred_check_branch
      %11 = sbr.rel (0) target = $region5
    $region4: #{tpu_custom_call.1} parent=1 // pred_region
      %s13 = ssub.s32 32, 32
      %14 = vsyncadd [#allocation5], %s13
      %17 = dma.hbm_to_smem %s0, 32, [#allocation2], [#allocation5]
    $region5: #{tpu_custom_call.1} parent=1 // pred_fallthru
      _
    // Predicated region
    $region6: #{tpu_custom_call.1} parent=1 // pred_check
      _
    $region7: #{tpu_custom_call.1} parent=1 // pred_check_branch
      %19 = sbr.rel (0) target = $region9
    $region8: #{tpu_custom_call.1} parent=1 // pred_region
      %s21 = ssub.s32 512, 512
      %22 = vsyncadd [#allocation3], %s21
      %s23 = sshll.u32 [#allocation6], 4
      %s24 = int_to_ptr.vmem [resolvable:$true] %s23
      %29 = dma.hbm_to_vmem [thread:$0]  %s1, 512, %s24, [#allocation3], 128, 128, 8
    $region9: #{tpu_custom_call.1} parent=1 // pred_fallthru
      _
    // Predicated region
    $region10: #{tpu_custom_call.1} parent=1 // pred_check
      _
    $region11: #{tpu_custom_call.1} parent=1 // pred_check_branch
      %31 = sbr.rel (0) target = $region13
    $region12: #{tpu_custom_call.1} parent=1 // pred_region
      %32 = dma.done [#allocation5], 32
    $region13: #{tpu_custom_call.1} parent=1 // pred_fallthru
      _
    // Predicated region
    $region14: #{tpu_custom_call.1} parent=1 // pred_check
      _
    $region15: #{tpu_custom_call.1} parent=1 // pred_check_branch
      %34 = sbr.rel (0) target = $region17
    $region16: #{tpu_custom_call.1} parent=1 // pred_region
      %35 = dma.done [#allocation3], 512
    $region17: #{tpu_custom_call.1} parent=1 // pred_fallthru
      _
    %36 = sfence
    %v37 = vld [vmem:[#allocation6] sm:$0xff]
    %s38 = scalar_lea.vmem [#allocation6], 16
    %v39 = vld [vmem:[%s38] sm:$0xff]
    %v40 = vmul.f32 %v37, 6.0
    %v41 = vfloor.f32 %v40
    %v42 = vmax.f32 %v41, 0.0
    %v43 = vmin.f32 %v42, 5.0
    %v44 = vmul.f32 %v39, 6.0
    %v45 = vfloor.f32 %v44
    %v46 = vmax.f32 %v45, 0.0
    %v47 = vmin.f32 %v46, 5.0
    %v48 = vadd.f32 %v43, 0.0
    %v49 = vmul.f32 %v48, 0.16666667
    %v50 = vmax.f32 %v49, 0.0
    %v51 = vmin.f32 %v50, 1.0
    %v52 = vsub.f32 %v37, %v51
    %v53 = vadd.f32 %v43, 1.0
    %v54 = vmul.f32 %v53, 0.16666667
    %v55 = vmax.f32 %v54, 0.0
    %v56 = vmin.f32 %v55, 1.0
    %v57 = vsub.f32 %v56, %v37
    %v58 = vadd.f32 %v57, %v52
    %v59 = vrcp.pop %v58
    %v60 = vmul.f32 1.0, %v59
    %v61 = vmul.f32 %v57, %v60
    %v62 = vadd.f32 %v61, 0.0
    %v63 = vmul.f32 %v52, %v60
    %v64 = vadd.f32 %v43, -1.0
    %v65 = vmul.f32 %v64, 0.16666667
    %v66 = vmax.f32 %v65, 0.0
    %v67 = vmin.f32 %v66, 1.0
    %v68 = vsub.f32 %v37, %v67
    %v69 = vadd.f32 %v43, 2.0
    %v70 = vmul.f32 %v69, 0.16666667
    %v71 = vmax.f32 %v70, 0.0
    %v72 = vmin.f32 %v71, 1.0
    %v73 = vsub.f32 %v72, %v37
    %v74 = vadd.f32 %v57, %v68
    %v75 = vrcp.pop %v74
    %v76 = vmul.f32 %v62, %v75
    %v77 = vmul.f32 %v57, %v76
    %v78 = vadd.f32 %v77, 0.0
    %v79 = vmul.f32 %v68, %v76
    %v80 = vadd.f32 %v73, %v52
    %v81 = vrcp.pop %v80
    %v82 = vmul.f32 %v63, %v81
    %v83 = vmul.f32 %v73, %v82
    %v84 = vadd.f32 %v79, %v83
    %v85 = vmul.f32 %v52, %v82
    %v86 = vmul.f32 -1.0, %v75
    %v87 = vmul.f32 %v86, %v62
    %v88 = vadd.f32 %v87, 0.0
    %v89 = vmul.f32 1.0, %v75
    %v90 = vmul.f32 %v89, %v62
    %v91 = vmul.f32 -1.0, %v81
    %v92 = vmul.f32 %v91, %v63
    %v93 = vadd.f32 %v90, %v92
    %v94 = vmul.f32 1.0, %v81
    %v95 = vmul.f32 %v94, %v63
    %v96 = vmul.f32 %v88, 2.0
    %v97 = vmul.f32 %v93, 2.0
    %v98 = vmul.f32 %v95, 2.0
    %v99 = vadd.f32 %v47, 0.0
    %v100 = vmul.f32 %v99, 0.16666667
    %v101 = vmax.f32 %v100, 0.0
    %v102 = vmin.f32 %v101, 1.0
    %v103 = vsub.f32 %v39, %v102
    %v104 = vadd.f32 %v47, 1.0
    %v105 = vmul.f32 %v104, 0.16666667
    %v106 = vmax.f32 %v105, 0.0
    %v107 = vmin.f32 %v106, 1.0
    %v108 = vsub.f32 %v107, %v39
    %v109 = vadd.f32 %v108, %v103
    %v110 = vrcp.pop %v109
    %v111 = vmul.f32 1.0, %v110
    %v112 = vmul.f32 %v108, %v111
    %v113 = vadd.f32 %v112, 0.0
    %v114 = vmul.f32 %v103, %v111
    %v115 = vadd.f32 %v47, -1.0
    %v116 = vmul.f32 %v115, 0.16666667
    %v117 = vmax.f32 %v116, 0.0
    %v118 = vmin.f32 %v117, 1.0
    %v119 = vsub.f32 %v39, %v118
    %v120 = vadd.f32 %v47, 2.0
    %v121 = vmul.f32 %v120, 0.16666667
    %v122 = vmax.f32 %v121, 0.0
    %v123 = vmin.f32 %v122, 1.0
    %v124 = vsub.f32 %v123, %v39
    %v125 = vadd.f32 %v108, %v119
    %v126 = vrcp.pop %v125
    %v127 = vmul.f32 %v113, %v126
    %v128 = vmul.f32 %v108, %v127
    %v129 = vadd.f32 %v128, 0.0
    %v130 = vmul.f32 %v119, %v127
    %v131 = vadd.f32 %v124, %v103
    %v132 = vrcp.pop %v131
    %v133 = vmul.f32 %v114, %v132
    %v134 = vmul.f32 %v124, %v133
    %v135 = vadd.f32 %v130, %v134
    %v136 = vmul.f32 %v103, %v133
    %v137 = vmul.f32 -1.0, %v126
    %v138 = vmul.f32 %v137, %v113
    %v139 = vadd.f32 %v138, 0.0
    %v140 = vmul.f32 1.0, %v126
    %v141 = vmul.f32 %v140, %v113
    %v142 = vmul.f32 -1.0, %v132
    %v143 = vmul.f32 %v142, %v114
    %v144 = vadd.f32 %v141, %v143
    %v145 = vmul.f32 1.0, %v132
    %v146 = vmul.f32 %v145, %v114
    %v147 = vmul.f32 %v139, 2.0
    %v148 = vmul.f32 %v144, 2.0
    %v149 = vmul.f32 %v146, 2.0
    %vm150 = vcmp.eq.f32.partialorder %v43, 0.0
    %v151 = vsel %vm150, 1, 0
    %v152 = vcvt.s32.f32 %v151
    %vm153 = vcmp.eq.f32.partialorder %v43, 1.0
    %v154 = vsel %vm153, 1, 0
    %v155 = vcvt.s32.f32 %v154
    %vm156 = vcmp.eq.f32.partialorder %v43, 2.0
    %v157 = vsel %vm156, 1, 0
    %v158 = vcvt.s32.f32 %v157
    %vm159 = vcmp.eq.f32.partialorder %v43, 3.0
    %v160 = vsel %vm159, 1, 0
    %v161 = vcvt.s32.f32 %v160
    %vm162 = vcmp.eq.f32.partialorder %v43, 4.0
    %v163 = vsel %vm162, 1, 0
    %v164 = vcvt.s32.f32 %v163
    %vm165 = vcmp.eq.f32.partialorder %v43, 5.0
    %v166 = vsel %vm165, 1, 0
    %v167 = vcvt.s32.f32 %v166
    %vm168 = vcmp.eq.f32.partialorder %v47, 0.0
    %v169 = vsel %vm168, 1, 0
    %v170 = vcvt.s32.f32 %v169
    %vm171 = vcmp.eq.f32.partialorder %v47, 1.0
    %v172 = vsel %vm171, 1, 0
    %v173 = vcvt.s32.f32 %v172
    %vm174 = vcmp.eq.f32.partialorder %v47, 2.0
    %v175 = vsel %vm174, 1, 0
    %v176 = vcvt.s32.f32 %v175
    %vm177 = vcmp.eq.f32.partialorder %v47, 3.0
    %v178 = vsel %vm177, 1, 0
    %v179 = vcvt.s32.f32 %v178
    %vm180 = vcmp.eq.f32.partialorder %v47, 4.0
    %v181 = vsel %vm180, 1, 0
    %v182 = vcvt.s32.f32 %v181
    %vm183 = vcmp.eq.f32.partialorder %v47, 5.0
    %v184 = vsel %vm183, 1, 0
    %v185 = vcvt.s32.f32 %v184
    %v186 = vmul.f32 %v152, %v78
    %v187 = vmul.f32 %v152, %v84
    %v188 = vmul.f32 %v155, %v78
    %v189 = vadd.f32 %v187, %v188
    %v190 = vmul.f32 %v152, %v85
    %v191 = vmul.f32 %v155, %v84
    %v192 = vadd.f32 %v190, %v191
    %v193 = vmul.f32 %v158, %v78
    %v194 = vadd.f32 %v192, %v193
    %v195 = vmul.f32 %v155, %v85
    %v196 = vmul.f32 %v158, %v84
    %v197 = vadd.f32 %v195, %v196
    %v198 = vmul.f32 %v161, %v78
    %v199 = vadd.f32 %v197, %v198
    %v200 = vmul.f32 %v158, %v85
    %v201 = vmul.f32 %v161, %v84
    %v202 = vadd.f32 %v200, %v201
    %v203 = vmul.f32 %v164, %v78
    %v204 = vadd.f32 %v202, %v203
    %v205 = vmul.f32 %v161, %v85
    %v206 = vmul.f32 %v164, %v84
    %v207 = vadd.f32 %v205, %v206
    %v208 = vmul.f32 %v167, %v78
    %v209 = vadd.f32 %v207, %v208
    %v210 = vmul.f32 %v164, %v85
    %v211 = vmul.f32 %v167, %v84
    %v212 = vadd.f32 %v210, %v211
    %v213 = vmul.f32 %v167, %v85
    %v214 = vmul.f32 %v152, %v96
    %v215 = vmul.f32 %v152, %v97
    %v216 = vmul.f32 %v155, %v96
    %v217 = vadd.f32 %v215, %v216
    %v218 = vmul.f32 %v152, %v98
    %v219 = vmul.f32 %v155, %v97
    %v220 = vadd.f32 %v218, %v219
    %v221 = vmul.f32 %v158, %v96
    %v222 = vadd.f32 %v220, %v221
    %v223 = vmul.f32 %v155, %v98
    %v224 = vmul.f32 %v158, %v97
    %v225 = vadd.f32 %v223, %v224
    %v226 = vmul.f32 %v161, %v96
    %v227 = vadd.f32 %v225, %v226
    %v228 = vmul.f32 %v158, %v98
    %v229 = vmul.f32 %v161, %v97
    %v230 = vadd.f32 %v228, %v229
    %v231 = vmul.f32 %v164, %v96
    %v232 = vadd.f32 %v230, %v231
    %v233 = vmul.f32 %v161, %v98
    %v234 = vmul.f32 %v164, %v97
    %v235 = vadd.f32 %v233, %v234
    %v236 = vmul.f32 %v167, %v96
    %v237 = vadd.f32 %v235, %v236
    %v238 = vmul.f32 %v164, %v98
    %v239 = vmul.f32 %v167, %v97
    %v240 = vadd.f32 %v238, %v239
    %v241 = vmul.f32 %v167, %v98
    %v242 = vmul.f32 %v170, %v129
    %v243 = vmul.f32 %v170, %v135
    %v244 = vmul.f32 %v173, %v129
    %v245 = vadd.f32 %v243, %v244
    %v246 = vmul.f32 %v170, %v136
    %v247 = vmul.f32 %v173, %v135
    %v248 = vadd.f32 %v246, %v247
    %v249 = vmul.f32 %v176, %v129
    %v250 = vadd.f32 %v248, %v249
    %v251 = vmul.f32 %v173, %v136
    %v252 = vmul.f32 %v176, %v135
    %v253 = vadd.f32 %v251, %v252
    %v254 = vmul.f32 %v179, %v129
    %v255 = vadd.f32 %v253, %v254
    %v256 = vmul.f32 %v176, %v136
    %v257 = vmul.f32 %v179, %v135
    %v258 = vadd.f32 %v256, %v257
    %v259 = vmul.f32 %v182, %v129
    %v260 = vadd.f32 %v258, %v259
    %v261 = vmul.f32 %v179, %v136
    %v262 = vmul.f32 %v182, %v135
    %v263 = vadd.f32 %v261, %v262
    %v264 = vmul.f32 %v185, %v129
    %v265 = vadd.f32 %v263, %v264
    %v266 = vmul.f32 %v182, %v136
    %v267 = vmul.f32 %v185, %v135
    %v268 = vadd.f32 %v266, %v267
    %v269 = vmul.f32 %v185, %v136
    %v270 = vmul.f32 %v170, %v147
    %v271 = vmul.f32 %v170, %v148
    %v272 = vmul.f32 %v173, %v147
    %v273 = vadd.f32 %v271, %v272
    %v274 = vmul.f32 %v170, %v149
    %v275 = vmul.f32 %v173, %v148
    %v276 = vadd.f32 %v274, %v275
    %v277 = vmul.f32 %v176, %v147
    %v278 = vadd.f32 %v276, %v277
    %v279 = vmul.f32 %v173, %v149
    %v280 = vmul.f32 %v176, %v148
    %v281 = vadd.f32 %v279, %v280
    %v282 = vmul.f32 %v179, %v147
    %v283 = vadd.f32 %v281, %v282
    %v284 = vmul.f32 %v176, %v149
    %v285 = vmul.f32 %v179, %v148
    %v286 = vadd.f32 %v284, %v285
    %v287 = vmul.f32 %v182, %v147
    %v288 = vadd.f32 %v286, %v287
    %v289 = vmul.f32 %v179, %v149
    %v290 = vmul.f32 %v182, %v148
    %v291 = vadd.f32 %v289, %v290
    %v292 = vmul.f32 %v185, %v147
    %v293 = vadd.f32 %v291, %v292
    %v294 = vmul.f32 %v182, %v149
    %v295 = vmul.f32 %v185, %v148
    %v296 = vadd.f32 %v294, %v295
    %v297 = vmul.f32 %v185, %v149
    %s298 = sld [smem:[#allocation2]]
    %v299 = vstv %s298
    %v300 = vmul.f32 %v242, %v299
    %v301 = vmul.f32 %v270, %v299
    %s302 = sld [smem:[#allocation2 + $0x4]]
    %v303 = vstv %s302
    %v304 = vmul.f32 %v245, %v303
    %v305 = vadd.f32 %v300, %v304
    %v306 = vmul.f32 %v273, %v303
    %v307 = vadd.f32 %v301, %v306
    %s308 = sld [smem:[#allocation2 + $0x8]]
    %v309 = vstv %s308
    %v310 = vmul.f32 %v250, %v309
    %v311 = vadd.f32 %v305, %v310
    %v312 = vmul.f32 %v278, %v309
    %v313 = vadd.f32 %v307, %v312
    %s314 = sld [smem:[#allocation2 + $0xc]]
    %v315 = vstv %s314
    %v316 = vmul.f32 %v255, %v315
    %v317 = vadd.f32 %v311, %v316
    %v318 = vmul.f32 %v283, %v315
    %v319 = vadd.f32 %v313, %v318
    %s320 = sld [smem:[#allocation2 + $0x10]]
    %v321 = vstv %s320
    %v322 = vmul.f32 %v260, %v321
    %v323 = vadd.f32 %v317, %v322
    %v324 = vmul.f32 %v288, %v321
    %v325 = vadd.f32 %v319, %v324
    %s326 = sld [smem:[#allocation2 + $0x14]]
    %v327 = vstv %s326
    %v328 = vmul.f32 %v265, %v327
    %v329 = vadd.f32 %v323, %v328
    %v330 = vmul.f32 %v293, %v327
    %v331 = vadd.f32 %v325, %v330
    %s332 = sld [smem:[#allocation2 + $0x18]]
    %v333 = vstv %s332
    %v334 = vmul.f32 %v268, %v333
    %v335 = vadd.f32 %v329, %v334
    %v336 = vmul.f32 %v296, %v333
    %v337 = vadd.f32 %v331, %v336
    %s338 = sld [smem:[#allocation2 + $0x1c]]
    %v339 = vstv %s338
    %v340 = vmul.f32 %v269, %v339
    %v341 = vadd.f32 %v335, %v340
    %v342 = vmul.f32 %v297, %v339
    %v343 = vadd.f32 %v337, %v342
    %v344 = vmul.f32 %v186, %v341
    %v345 = vmul.f32 %v214, %v341
    %v346 = vmul.f32 %v186, %v343
    %s347 = sld [smem:[#allocation2 + $0x20]]
    %v348 = vstv %s347
    %v349 = vmul.f32 %v242, %v348
    %v350 = vmul.f32 %v270, %v348
    %s351 = sld [smem:[#allocation2 + $0x24]]
    %v352 = vstv %s351
    %v353 = vmul.f32 %v245, %v352
    %v354 = vadd.f32 %v349, %v353
    %v355 = vmul.f32 %v273, %v352
    %v356 = vadd.f32 %v350, %v355
    %s357 = sld [smem:[#allocation2 + $0x28]]
    %v358 = vstv %s357
    %v359 = vmul.f32 %v250, %v358
    %v360 = vadd.f32 %v354, %v359
    %v361 = vmul.f32 %v278, %v358
    %v362 = vadd.f32 %v356, %v361
    %s363 = sld [smem:[#allocation2 + $0x2c]]
    %v364 = vstv %s363
    %v365 = vmul.f32 %v255, %v364
    %v366 = vadd.f32 %v360, %v365
    %v367 = vmul.f32 %v283, %v364
    %v368 = vadd.f32 %v362, %v367
    %s369 = sld [smem:[#allocation2 + $0x30]]
    %v370 = vstv %s369
    %v371 = vmul.f32 %v260, %v370
    %v372 = vadd.f32 %v366, %v371
    %v373 = vmul.f32 %v288, %v370
    %v374 = vadd.f32 %v368, %v373
    %s375 = sld [smem:[#allocation2 + $0x34]]
    %v376 = vstv %s375
    %v377 = vmul.f32 %v265, %v376
    %v378 = vadd.f32 %v372, %v377
    %v379 = vmul.f32 %v293, %v376
    %v380 = vadd.f32 %v374, %v379
    %s381 = sld [smem:[#allocation2 + $0x38]]
    %v382 = vstv %s381
    %v383 = vmul.f32 %v268, %v382
    %v384 = vadd.f32 %v378, %v383
    %v385 = vmul.f32 %v296, %v382
    %v386 = vadd.f32 %v380, %v385
    %s387 = sld [smem:[#allocation2 + $0x3c]]
    %v388 = vstv %s387
    %v389 = vmul.f32 %v269, %v388
    %v390 = vadd.f32 %v384, %v389
    %v391 = vmul.f32 %v297, %v388
    %v392 = vadd.f32 %v386, %v391
    %v393 = vmul.f32 %v189, %v390
    %v394 = vadd.f32 %v344, %v393
    %v395 = vmul.f32 %v217, %v390
    %v396 = vadd.f32 %v345, %v395
    %v397 = vmul.f32 %v189, %v392
    %v398 = vadd.f32 %v346, %v397
    %s399 = sld [smem:[#allocation2 + $0x40]]
    %v400 = vstv %s399
    %v401 = vmul.f32 %v242, %v400
    %v402 = vmul.f32 %v270, %v400
    %s403 = sld [smem:[#allocation2 + $0x44]]
    %v404 = vstv %s403
    %v405 = vmul.f32 %v245, %v404
    %v406 = vadd.f32 %v401, %v405
    %v407 = vmul.f32 %v273, %v404
    %v408 = vadd.f32 %v402, %v407
    %s409 = sld [smem:[#allocation2 + $0x48]]
    %v410 = vstv %s409
    %v411 = vmul.f32 %v250, %v410
    %v412 = vadd.f32 %v406, %v411
    %v413 = vmul.f32 %v278, %v410
    %v414 = vadd.f32 %v408, %v413
    %s415 = sld [smem:[#allocation2 + $0x4c]]
    %v416 = vstv %s415
    %v417 = vmul.f32 %v255, %v416
    %v418 = vadd.f32 %v412, %v417
    %v419 = vmul.f32 %v283, %v416
    %v420 = vadd.f32 %v414, %v419
    %s421 = sld [smem:[#allocation2 + $0x50]]
    %v422 = vstv %s421
    %v423 = vmul.f32 %v260, %v422
    %v424 = vadd.f32 %v418, %v423
    %v425 = vmul.f32 %v288, %v422
    %v426 = vadd.f32 %v420, %v425
    %s427 = sld [smem:[#allocation2 + $0x54]]
    %v428 = vstv %s427
    %v429 = vmul.f32 %v265, %v428
    %v430 = vadd.f32 %v424, %v429
    %v431 = vmul.f32 %v293, %v428
    %v432 = vadd.f32 %v426, %v431
    %s433 = sld [smem:[#allocation2 + $0x58]]
    %v434 = vstv %s433
    %v435 = vmul.f32 %v268, %v434
    %v436 = vadd.f32 %v430, %v435
    %v437 = vmul.f32 %v296, %v434
    %v438 = vadd.f32 %v432, %v437
    %s439 = sld [smem:[#allocation2 + $0x5c]]
    %v440 = vstv %s439
    %v441 = vmul.f32 %v269, %v440
    %v442 = vadd.f32 %v436, %v441
    %v443 = vmul.f32 %v297, %v440
    %v444 = vadd.f32 %v438, %v443
    %v445 = vmul.f32 %v194, %v442
    %v446 = vadd.f32 %v394, %v445
    %v447 = vmul.f32 %v222, %v442
    %v448 = vadd.f32 %v396, %v447
    %v449 = vmul.f32 %v194, %v444
    %v450 = vadd.f32 %v398, %v449
    %s451 = sld [smem:[#allocation2 + $0x60]]
    %v452 = vstv %s451
    %v453 = vmul.f32 %v242, %v452
    %v454 = vmul.f32 %v270, %v452
    %s455 = sld [smem:[#allocation2 + $0x64]]
    %v456 = vstv %s455
    %v457 = vmul.f32 %v245, %v456
    %v458 = vadd.f32 %v453, %v457
    %v459 = vmul.f32 %v273, %v456
    %v460 = vadd.f32 %v454, %v459
    %s461 = sld [smem:[#allocation2 + $0x68]]
    %v462 = vstv %s461
    %v463 = vmul.f32 %v250, %v462
    %v464 = vadd.f32 %v458, %v463
    %v465 = vmul.f32 %v278, %v462
    %v466 = vadd.f32 %v460, %v465
    %s467 = sld [smem:[#allocation2 + $0x6c]]
    %v468 = vstv %s467
    %v469 = vmul.f32 %v255, %v468
    %v470 = vadd.f32 %v464, %v469
    %v471 = vmul.f32 %v283, %v468
    %v472 = vadd.f32 %v466, %v471
    %s473 = sld [smem:[#allocation2 + $0x70]]
    %v474 = vstv %s473
    %v475 = vmul.f32 %v260, %v474
    %v476 = vadd.f32 %v470, %v475
    %v477 = vmul.f32 %v288, %v474
    %v478 = vadd.f32 %v472, %v477
    %s479 = sld [smem:[#allocation2 + $0x74]]
    %v480 = vstv %s479
    %v481 = vmul.f32 %v265, %v480
    %v482 = vadd.f32 %v476, %v481
    %v483 = vmul.f32 %v293, %v480
    %v484 = vadd.f32 %v478, %v483
    %s485 = sld [smem:[#allocation2 + $0x78]]
    %v486 = vstv %s485
    %v487 = vmul.f32 %v268, %v486
    %v488 = vadd.f32 %v482, %v487
    %v489 = vmul.f32 %v296, %v486
    %v490 = vadd.f32 %v484, %v489
    %s491 = sld [smem:[#allocation2 + $0x7c]]
    %v492 = vstv %s491
    %v493 = vmul.f32 %v269, %v492
    %v494 = vadd.f32 %v488, %v493
    %v495 = vmul.f32 %v297, %v492
    %v496 = vadd.f32 %v490, %v495
    %v497 = vmul.f32 %v199, %v494
    %v498 = vadd.f32 %v446, %v497
    %v499 = vmul.f32 %v227, %v494
    %v500 = vadd.f32 %v448, %v499
    %v501 = vmul.f32 %v199, %v496
    %v502 = vadd.f32 %v450, %v501
    %s503 = sld [smem:[#allocation2 + $0x80]]
    %v504 = vstv %s503
    %v505 = vmul.f32 %v242, %v504
    %v506 = vmul.f32 %v270, %v504
    %s507 = sld [smem:[#allocation2 + $0x84]]
    %v508 = vstv %s507
    %v509 = vmul.f32 %v245, %v508
    %v510 = vadd.f32 %v505, %v509
    %v511 = vmul.f32 %v273, %v508
    %v512 = vadd.f32 %v506, %v511
    %s513 = sld [smem:[#allocation2 + $0x88]]
    %v514 = vstv %s513
    %v515 = vmul.f32 %v250, %v514
    %v516 = vadd.f32 %v510, %v515
    %v517 = vmul.f32 %v278, %v514
    %v518 = vadd.f32 %v512, %v517
    %s519 = sld [smem:[#allocation2 + $0x8c]]
    %v520 = vstv %s519
    %v521 = vmul.f32 %v255, %v520
    %v522 = vadd.f32 %v516, %v521
    %v523 = vmul.f32 %v283, %v520
    %v524 = vadd.f32 %v518, %v523
    %s525 = sld [smem:[#allocation2 + $0x90]]
    %v526 = vstv %s525
    %v527 = vmul.f32 %v260, %v526
    %v528 = vadd.f32 %v522, %v527
    %v529 = vmul.f32 %v288, %v526
    %v530 = vadd.f32 %v524, %v529
    %s531 = sld [smem:[#allocation2 + $0x94]]
    %v532 = vstv %s531
    %v533 = vmul.f32 %v265, %v532
    %v534 = vadd.f32 %v528, %v533
    %v535 = vmul.f32 %v293, %v532
    %v536 = vadd.f32 %v530, %v535
    %s537 = sld [smem:[#allocation2 + $0x98]]
    %v538 = vstv %s537
    %v539 = vmul.f32 %v268, %v538
    %v540 = vadd.f32 %v534, %v539
    %v541 = vmul.f32 %v296, %v538
    %v542 = vadd.f32 %v536, %v541
    %s543 = sld [smem:[#allocation2 + $0x9c]]
    %v544 = vstv %s543
    %v545 = vmul.f32 %v269, %v544
    %v546 = vadd.f32 %v540, %v545
    %v547 = vmul.f32 %v297, %v544
    %v548 = vadd.f32 %v542, %v547
    %v549 = vmul.f32 %v204, %v546
    %v550 = vadd.f32 %v498, %v549
    %v551 = vmul.f32 %v232, %v546
    %v552 = vadd.f32 %v500, %v551
    %v553 = vmul.f32 %v204, %v548
    %v554 = vadd.f32 %v502, %v553
    %s555 = sld [smem:[#allocation2 + $0xa0]]
    %v556 = vstv %s555
    %v557 = vmul.f32 %v242, %v556
    %v558 = vmul.f32 %v270, %v556
    %s559 = sld [smem:[#allocation2 + $0xa4]]
    %v560 = vstv %s559
    %v561 = vmul.f32 %v245, %v560
    %v562 = vadd.f32 %v557, %v561
    %v563 = vmul.f32 %v273, %v560
    %v564 = vadd.f32 %v558, %v563
    %s565 = sld [smem:[#allocation2 + $0xa8]]
    %v566 = vstv %s565
    %v567 = vmul.f32 %v250, %v566
    %v568 = vadd.f32 %v562, %v567
    %v569 = vmul.f32 %v278, %v566
    %v570 = vadd.f32 %v564, %v569
    %s571 = sld [smem:[#allocation2 + $0xac]]
    %v572 = vstv %s571
    %v573 = vmul.f32 %v255, %v572
    %v574 = vadd.f32 %v568, %v573
    %v575 = vmul.f32 %v283, %v572
    %v576 = vadd.f32 %v570, %v575
    %s577 = sld [smem:[#allocation2 + $0xb0]]
    %v578 = vstv %s577
    %v579 = vmul.f32 %v260, %v578
    %v580 = vadd.f32 %v574, %v579
    %v581 = vmul.f32 %v288, %v578
    %v582 = vadd.f32 %v576, %v581
    %s583 = sld [smem:[#allocation2 + $0xb4]]
    %v584 = vstv %s583
    %v585 = vmul.f32 %v265, %v584
    %v586 = vadd.f32 %v580, %v585
    %v587 = vmul.f32 %v293, %v584
    %v588 = vadd.f32 %v582, %v587
    %s589 = sld [smem:[#allocation2 + $0xb8]]
    %v590 = vstv %s589
    %v591 = vmul.f32 %v268, %v590
    %v592 = vadd.f32 %v586, %v591
    %v593 = vmul.f32 %v296, %v590
    %v594 = vadd.f32 %v588, %v593
    %s595 = sld [smem:[#allocation2 + $0xbc]]
    %v596 = vstv %s595
    %v597 = vmul.f32 %v269, %v596
    %v598 = vadd.f32 %v592, %v597
    %v599 = vmul.f32 %v297, %v596
    %v600 = vadd.f32 %v594, %v599
    %v601 = vmul.f32 %v209, %v598
    %v602 = vadd.f32 %v550, %v601
    %v603 = vmul.f32 %v237, %v598
    %v604 = vadd.f32 %v552, %v603
    %v605 = vmul.f32 %v209, %v600
    %v606 = vadd.f32 %v554, %v605
    %s607 = sld [smem:[#allocation2 + $0xc0]]
    %v608 = vstv %s607
    %v609 = vmul.f32 %v242, %v608
    %v610 = vmul.f32 %v270, %v608
    %s611 = sld [smem:[#allocation2 + $0xc4]]
    %v612 = vstv %s611
    %v613 = vmul.f32 %v245, %v612
    %v614 = vadd.f32 %v609, %v613
    %v615 = vmul.f32 %v273, %v612
    %v616 = vadd.f32 %v610, %v615
    %s617 = sld [smem:[#allocation2 + $0xc8]]
    %v618 = vstv %s617
    %v619 = vmul.f32 %v250, %v618
    %v620 = vadd.f32 %v614, %v619
    %v621 = vmul.f32 %v278, %v618
    %v622 = vadd.f32 %v616, %v621
    %s623 = sld [smem:[#allocation2 + $0xcc]]
    %v624 = vstv %s623
    %v625 = vmul.f32 %v255, %v624
    %v626 = vadd.f32 %v620, %v625
    %v627 = vmul.f32 %v283, %v624
    %v628 = vadd.f32 %v622, %v627
    %s629 = sld [smem:[#allocation2 + $0xd0]]
    %v630 = vstv %s629
    %v631 = vmul.f32 %v260, %v630
    %v632 = vadd.f32 %v626, %v631
    %v633 = vmul.f32 %v288, %v630
    %v634 = vadd.f32 %v628, %v633
    %s635 = sld [smem:[#allocation2 + $0xd4]]
    %v636 = vstv %s635
    %v637 = vmul.f32 %v265, %v636
    %v638 = vadd.f32 %v632, %v637
    %v639 = vmul.f32 %v293, %v636
    %v640 = vadd.f32 %v634, %v639
    %s641 = sld [smem:[#allocation2 + $0xd8]]
    %v642 = vstv %s641
    %v643 = vmul.f32 %v268, %v642
    %v644 = vadd.f32 %v638, %v643
    %v645 = vmul.f32 %v296, %v642
    %v646 = vadd.f32 %v640, %v645
    %s647 = sld [smem:[#allocation2 + $0xdc]]
    %v648 = vstv %s647
    %v649 = vmul.f32 %v269, %v648
    %v650 = vadd.f32 %v644, %v649
    %v651 = vmul.f32 %v297, %v648
    %v652 = vadd.f32 %v646, %v651
    %v653 = vmul.f32 %v212, %v650
    %v654 = vadd.f32 %v602, %v653
    %v655 = vmul.f32 %v240, %v650
    %v656 = vadd.f32 %v604, %v655
    %v657 = vmul.f32 %v212, %v652
    %v658 = vadd.f32 %v606, %v657
    %s659 = sld [smem:[#allocation2 + $0xe0]]
    %v660 = vstv %s659
    %v661 = vmul.f32 %v242, %v660
    %v662 = vmul.f32 %v270, %v660
    %s663 = sld [smem:[#allocation2 + $0xe4]]
    %v664 = vstv %s663
    %v665 = vmul.f32 %v245, %v664
    %v666 = vadd.f32 %v661, %v665
    %v667 = vmul.f32 %v273, %v664
    %v668 = vadd.f32 %v662, %v667
    %s669 = sld [smem:[#allocation2 + $0xe8]]
    %v670 = vstv %s669
    %v671 = vmul.f32 %v250, %v670
    %v672 = vadd.f32 %v666, %v671
    %v673 = vmul.f32 %v278, %v670
    %v674 = vadd.f32 %v668, %v673
    %s675 = sld [smem:[#allocation2 + $0xec]]
    %v676 = vstv %s675
    %v677 = vmul.f32 %v255, %v676
    %v678 = vadd.f32 %v672, %v677
    %v679 = vmul.f32 %v283, %v676
    %v680 = vadd.f32 %v674, %v679
    %s681 = sld [smem:[#allocation2 + $0xf0]]
    %v682 = vstv %s681
    %v683 = vmul.f32 %v260, %v682
    %v684 = vadd.f32 %v678, %v683
    %v685 = vmul.f32 %v288, %v682
    %v686 = vadd.f32 %v680, %v685
    %s687 = sld [smem:[#allocation2 + $0xf4]]
    %v688 = vstv %s687
    %v689 = vmul.f32 %v265, %v688
    %v690 = vadd.f32 %v684, %v689
    %v691 = vmul.f32 %v293, %v688
    %v692 = vadd.f32 %v686, %v691
    %s693 = sld [smem:[#allocation2 + $0xf8]]
    %v694 = vstv %s693
    %v695 = vmul.f32 %v268, %v694
    %v696 = vadd.f32 %v690, %v695
    %v697 = vmul.f32 %v296, %v694
    %v698 = vadd.f32 %v692, %v697
    %s699 = sld [smem:[#allocation2 + $0xfc]]
    %v700 = vstv %s699
    %v701 = vmul.f32 %v269, %v700
    %v702 = vadd.f32 %v696, %v701
    %v703 = vmul.f32 %v297, %v700
    %v704 = vadd.f32 %v698, %v703
    %v705 = vmul.f32 %v213, %v702
    %v706 = vadd.f32 %v654, %v705
    %v707 = vmul.f32 %v241, %v702
    %v708 = vadd.f32 %v656, %v707
    %v709 = vmul.f32 %v213, %v704
    %v710 = vadd.f32 %v658, %v709
    %711 = vst [vmem:[#allocation7] sm:$0xff] %v706
    %s712 = sld [smem:[#allocation2 + $0x1]]
    %v713 = vstv %s712
    %v714 = vmul.f32 %v242, %v713
    %v715 = vmul.f32 %v270, %v713
    %s716 = sld [smem:[#allocation2 + $0x5]]
    %v717 = vstv %s716
    %v718 = vmul.f32 %v245, %v717
    %v719 = vadd.f32 %v714, %v718
    %v720 = vmul.f32 %v273, %v717
    %v721 = vadd.f32 %v715, %v720
    %s722 = sld [smem:[#allocation2 + $0x9]]
    %v723 = vstv %s722
    %v724 = vmul.f32 %v250, %v723
    %v725 = vadd.f32 %v719, %v724
    %v726 = vmul.f32 %v278, %v723
    %v727 = vadd.f32 %v721, %v726
    %s728 = sld [smem:[#allocation2 + $0xd]]
    %v729 = vstv %s728
    %v730 = vmul.f32 %v255, %v729
    %v731 = vadd.f32 %v725, %v730
    %v732 = vmul.f32 %v283, %v729
    %v733 = vadd.f32 %v727, %v732
    %s734 = sld [smem:[#allocation2 + $0x11]]
    %v735 = vstv %s734
    %v736 = vmul.f32 %v260, %v735
    %v737 = vadd.f32 %v731, %v736
    %v738 = vmul.f32 %v288, %v735
    %v739 = vadd.f32 %v733, %v738
    %s740 = sld [smem:[#allocation2 + $0x15]]
    %v741 = vstv %s740
    %v742 = vmul.f32 %v265, %v741
    %v743 = vadd.f32 %v737, %v742
    %v744 = vmul.f32 %v293, %v741
    %v745 = vadd.f32 %v739, %v744
    %s746 = sld [smem:[#allocation2 + $0x19]]
    %v747 = vstv %s746
    %v748 = vmul.f32 %v268, %v747
    %v749 = vadd.f32 %v743, %v748
    %v750 = vmul.f32 %v296, %v747
    %v751 = vadd.f32 %v745, %v750
    %s752 = sld [smem:[#allocation2 + $0x1d]]
    %v753 = vstv %s752
    %v754 = vmul.f32 %v269, %v753
    %v755 = vadd.f32 %v749, %v754
    %v756 = vmul.f32 %v297, %v753
    %v757 = vadd.f32 %v751, %v756
    %v758 = vmul.f32 %v186, %v755
    %v759 = vmul.f32 %v214, %v755
    %v760 = vmul.f32 %v186, %v757
    %s761 = sld [smem:[#allocation2 + $0x21]]
    %v762 = vstv %s761
    %v763 = vmul.f32 %v242, %v762
    %v764 = vmul.f32 %v270, %v762
    %s765 = sld [smem:[#allocation2 + $0x25]]
    %v766 = vstv %s765
    %v767 = vmul.f32 %v245, %v766
    %v768 = vadd.f32 %v763, %v767
    %v769 = vmul.f32 %v273, %v766
    %v770 = vadd.f32 %v764, %v769
    %s771 = sld [smem:[#allocation2 + $0x29]]
    %v772 = vstv %s771
    %v773 = vmul.f32 %v250, %v772
    %v774 = vadd.f32 %v768, %v773
    %v775 = vmul.f32 %v278, %v772
    %v776 = vadd.f32 %v770, %v775
    %s777 = sld [smem:[#allocation2 + $0x2d]]
    %v778 = vstv %s777
    %v779 = vmul.f32 %v255, %v778
    %v780 = vadd.f32 %v774, %v779
    %v781 = vmul.f32 %v283, %v778
    %v782 = vadd.f32 %v776, %v781
    %s783 = sld [smem:[#allocation2 + $0x31]]
    %v784 = vstv %s783
    %v785 = vmul.f32 %v260, %v784
    %v786 = vadd.f32 %v780, %v785
    %v787 = vmul.f32 %v288, %v784
    %v788 = vadd.f32 %v782, %v787
    %s789 = sld [smem:[#allocation2 + $0x35]]
    %v790 = vstv %s789
    %v791 = vmul.f32 %v265, %v790
    %v792 = vadd.f32 %v786, %v791
    %v793 = vmul.f32 %v293, %v790
    %v794 = vadd.f32 %v788, %v793
    %s795 = sld [smem:[#allocation2 + $0x39]]
    %v796 = vstv %s795
    %v797 = vmul.f32 %v268, %v796
    %v798 = vadd.f32 %v792, %v797
    %v799 = vmul.f32 %v296, %v796
    %v800 = vadd.f32 %v794, %v799
    %s801 = sld [smem:[#allocation2 + $0x3d]]
    %v802 = vstv %s801
    %v803 = vmul.f32 %v269, %v802
    %v804 = vadd.f32 %v798, %v803
    %v805 = vmul.f32 %v297, %v802
    %v806 = vadd.f32 %v800, %v805
    %v807 = vmul.f32 %v189, %v804
    %v808 = vadd.f32 %v758, %v807
    %v809 = vmul.f32 %v217, %v804
    %v810 = vadd.f32 %v759, %v809
    %v811 = vmul.f32 %v189, %v806
    %v812 = vadd.f32 %v760, %v811
    %s813 = sld [smem:[#allocation2 + $0x41]]
    %v814 = vstv %s813
    %v815 = vmul.f32 %v242, %v814
    %v816 = vmul.f32 %v270, %v814
    %s817 = sld [smem:[#allocation2 + $0x45]]
    %v818 = vstv %s817
    %v819 = vmul.f32 %v245, %v818
    %v820 = vadd.f32 %v815, %v819
    %v821 = vmul.f32 %v273, %v818
    %v822 = vadd.f32 %v816, %v821
    %s823 = sld [smem:[#allocation2 + $0x49]]
    %v824 = vstv %s823
    %v825 = vmul.f32 %v250, %v824
    %v826 = vadd.f32 %v820, %v825
    %v827 = vmul.f32 %v278, %v824
    %v828 = vadd.f32 %v822, %v827
    %s829 = sld [smem:[#allocation2 + $0x4d]]
    %v830 = vstv %s829
    %v831 = vmul.f32 %v255, %v830
    %v832 = vadd.f32 %v826, %v831
    %v833 = vmul.f32 %v283, %v830
    %v834 = vadd.f32 %v828, %v833
    %s835 = sld [smem:[#allocation2 + $0x51]]
    %v836 = vstv %s835
    %v837 = vmul.f32 %v260, %v836
    %v838 = vadd.f32 %v832, %v837
    %v839 = vmul.f32 %v288, %v836
    %v840 = vadd.f32 %v834, %v839
    %s841 = sld [smem:[#allocation2 + $0x55]]
    %v842 = vstv %s841
    %v843 = vmul.f32 %v265, %v842
    %v844 = vadd.f32 %v838, %v843
    %v845 = vmul.f32 %v293, %v842
    %v846 = vadd.f32 %v840, %v845
    %s847 = sld [smem:[#allocation2 + $0x59]]
    %v848 = vstv %s847
    %v849 = vmul.f32 %v268, %v848
    %v850 = vadd.f32 %v844, %v849
    %v851 = vmul.f32 %v296, %v848
    %v852 = vadd.f32 %v846, %v851
    %s853 = sld [smem:[#allocation2 + $0x5d]]
    %v854 = vstv %s853
    %v855 = vmul.f32 %v269, %v854
    %v856 = vadd.f32 %v850, %v855
    %v857 = vmul.f32 %v297, %v854
    %v858 = vadd.f32 %v852, %v857
    %v859 = vmul.f32 %v194, %v856
    %v860 = vadd.f32 %v808, %v859
    %v861 = vmul.f32 %v222, %v856
    %v862 = vadd.f32 %v810, %v861
    %v863 = vmul.f32 %v194, %v858
    %v864 = vadd.f32 %v812, %v863
    %s865 = sld [smem:[#allocation2 + $0x61]]
    %v866 = vstv %s865
    %v867 = vmul.f32 %v242, %v866
    %v868 = vmul.f32 %v270, %v866
    %s869 = sld [smem:[#allocation2 + $0x65]]
    %v870 = vstv %s869
    %v871 = vmul.f32 %v245, %v870
    %v872 = vadd.f32 %v867, %v871
    %v873 = vmul.f32 %v273, %v870
    %v874 = vadd.f32 %v868, %v873
    %s875 = sld [smem:[#allocation2 + $0x69]]
    %v876 = vstv %s875
    %v877 = vmul.f32 %v250, %v876
    %v878 = vadd.f32 %v872, %v877
    %v879 = vmul.f32 %v278, %v876
    %v880 = vadd.f32 %v874, %v879
    %s881 = sld [smem:[#allocation2 + $0x6d]]
    %v882 = vstv %s881
    %v883 = vmul.f32 %v255, %v882
    %v884 = vadd.f32 %v878, %v883
    %v885 = vmul.f32 %v283, %v882
    %v886 = vadd.f32 %v880, %v885
    %s887 = sld [smem:[#allocation2 + $0x71]]
    %v888 = vstv %s887
    %v889 = vmul.f32 %v260, %v888
    %v890 = vadd.f32 %v884, %v889
    %v891 = vmul.f32 %v288, %v888
    %v892 = vadd.f32 %v886, %v891
    %s893 = sld [smem:[#allocation2 + $0x75]]
    %v894 = vstv %s893
    %v895 = vmul.f32 %v265, %v894
    %v896 = vadd.f32 %v890, %v895
    %v897 = vmul.f32 %v293, %v894
    %v898 = vadd.f32 %v892, %v897
    %s899 = sld [smem:[#allocation2 + $0x79]]
    %v900 = vstv %s899
    %v901 = vmul.f32 %v268, %v900
    %v902 = vadd.f32 %v896, %v901
    %v903 = vmul.f32 %v296, %v900
    %v904 = vadd.f32 %v898, %v903
    %s905 = sld [smem:[#allocation2 + $0x7d]]
    %v906 = vstv %s905
    %v907 = vmul.f32 %v269, %v906
    %v908 = vadd.f32 %v902, %v907
    %v909 = vmul.f32 %v297, %v906
    %v910 = vadd.f32 %v904, %v909
    %v911 = vmul.f32 %v199, %v908
    %v912 = vadd.f32 %v860, %v911
    %v913 = vmul.f32 %v227, %v908
    %v914 = vadd.f32 %v862, %v913
    %v915 = vmul.f32 %v199, %v910
    %v916 = vadd.f32 %v864, %v915
    %s917 = sld [smem:[#allocation2 + $0x81]]
    %v918 = vstv %s917
    %v919 = vmul.f32 %v242, %v918
    %v920 = vmul.f32 %v270, %v918
    %s921 = sld [smem:[#allocation2 + $0x85]]
    %v922 = vstv %s921
    %v923 = vmul.f32 %v245, %v922
    %v924 = vadd.f32 %v919, %v923
    %v925 = vmul.f32 %v273, %v922
    %v926 = vadd.f32 %v920, %v925
    %s927 = sld [smem:[#allocation2 + $0x89]]
    %v928 = vstv %s927
    %v929 = vmul.f32 %v250, %v928
    %v930 = vadd.f32 %v924, %v929
    %v931 = vmul.f32 %v278, %v928
    %v932 = vadd.f32 %v926, %v931
    %s933 = sld [smem:[#allocation2 + $0x8d]]
    %v934 = vstv %s933
    %v935 = vmul.f32 %v255, %v934
    %v936 = vadd.f32 %v930, %v935
    %v937 = vmul.f32 %v283, %v934
    %v938 = vadd.f32 %v932, %v937
    %s939 = sld [smem:[#allocation2 + $0x91]]
    %v940 = vstv %s939
    %v941 = vmul.f32 %v260, %v940
    %v942 = vadd.f32 %v936, %v941
    %v943 = vmul.f32 %v288, %v940
    %v944 = vadd.f32 %v938, %v943
    %s945 = sld [smem:[#allocation2 + $0x95]]
    %v946 = vstv %s945
    %v947 = vmul.f32 %v265, %v946
    %v948 = vadd.f32 %v942, %v947
    %v949 = vmul.f32 %v293, %v946
    %v950 = vadd.f32 %v944, %v949
    %s951 = sld [smem:[#allocation2 + $0x99]]
    %v952 = vstv %s951
    %v953 = vmul.f32 %v268, %v952
    %v954 = vadd.f32 %v948, %v953
    %v955 = vmul.f32 %v296, %v952
    %v956 = vadd.f32 %v950, %v955
    %s957 = sld [smem:[#allocation2 + $0x9d]]
    %v958 = vstv %s957
    %v959 = vmul.f32 %v269, %v958
    %v960 = vadd.f32 %v954, %v959
    %v961 = vmul.f32 %v297, %v958
    %v962 = vadd.f32 %v956, %v961
    %v963 = vmul.f32 %v204, %v960
    %v964 = vadd.f32 %v912, %v963
    %v965 = vmul.f32 %v232, %v960
    %v966 = vadd.f32 %v914, %v965
    %v967 = vmul.f32 %v204, %v962
    %v968 = vadd.f32 %v916, %v967
    %s969 = sld [smem:[#allocation2 + $0xa1]]
    %v970 = vstv %s969
    %v971 = vmul.f32 %v242, %v970
    %v972 = vmul.f32 %v270, %v970
    %s973 = sld [smem:[#allocation2 + $0xa5]]
    %v974 = vstv %s973
    %v975 = vmul.f32 %v245, %v974
    %v976 = vadd.f32 %v971, %v975
    %v977 = vmul.f32 %v273, %v974
    %v978 = vadd.f32 %v972, %v977
    %s979 = sld [smem:[#allocation2 + $0xa9]]
    %v980 = vstv %s979
    %v981 = vmul.f32 %v250, %v980
    %v982 = vadd.f32 %v976, %v981
    %v983 = vmul.f32 %v278, %v980
    %v984 = vadd.f32 %v978, %v983
    %s985 = sld [smem:[#allocation2 + $0xad]]
    %v986 = vstv %s985
    %v987 = vmul.f32 %v255, %v986
    %v988 = vadd.f32 %v982, %v987
    %v989 = vmul.f32 %v283, %v986
    %v990 = vadd.f32 %v984, %v989
    %s991 = sld [smem:[#allocation2 + $0xb1]]
    %v992 = vstv %s991
    %v993 = vmul.f32 %v260, %v992
    %v994 = vadd.f32 %v988, %v993
    %v995 = vmul.f32 %v288, %v992
    %v996 = vadd.f32 %v990, %v995
    %s997 = sld [smem:[#allocation2 + $0xb5]]
    %v998 = vstv %s997
    %v999 = vmul.f32 %v265, %v998
    %v1000 = vadd.f32 %v994, %v999
    %v1001 = vmul.f32 %v293, %v998
    %v1002 = vadd.f32 %v996, %v1001
    %s1003 = sld [smem:[#allocation2 + $0xb9]]
    %v1004 = vstv %s1003
    %v1005 = vmul.f32 %v268, %v1004
    %v1006 = vadd.f32 %v1000, %v1005
    %v1007 = vmul.f32 %v296, %v1004
    %v1008 = vadd.f32 %v1002, %v1007
    %s1009 = sld [smem:[#allocation2 + $0xbd]]
    %v1010 = vstv %s1009
    %v1011 = vmul.f32 %v269, %v1010
    %v1012 = vadd.f32 %v1006, %v1011
    %v1013 = vmul.f32 %v297, %v1010
    %v1014 = vadd.f32 %v1008, %v1013
    %v1015 = vmul.f32 %v209, %v1012
    %v1016 = vadd.f32 %v964, %v1015
    %v1017 = vmul.f32 %v237, %v1012
    %v1018 = vadd.f32 %v966, %v1017
    %v1019 = vmul.f32 %v209, %v1014
    %v1020 = vadd.f32 %v968, %v1019
    %s1021 = sld [smem:[#allocation2 + $0xc1]]
    %v1022 = vstv %s1021
    %v1023 = vmul.f32 %v242, %v1022
    %v1024 = vmul.f32 %v270, %v1022
    %s1025 = sld [smem:[#allocation2 + $0xc5]]
    %v1026 = vstv %s1025
    %v1027 = vmul.f32 %v245, %v1026
    %v1028 = vadd.f32 %v1023, %v1027
    %v1029 = vmul.f32 %v273, %v1026
    %v1030 = vadd.f32 %v1024, %v1029
    %s1031 = sld [smem:[#allocation2 + $0xc9]]
    %v1032 = vstv %s1031
    %v1033 = vmul.f32 %v250, %v1032
    %v1034 = vadd.f32 %v1028, %v1033
    %v1035 = vmul.f32 %v278, %v1032
    %v1036 = vadd.f32 %v1030, %v1035
    %s1037 = sld [smem:[#allocation2 + $0xcd]]
    %v1038 = vstv %s1037
    %v1039 = vmul.f32 %v255, %v1038
    %v1040 = vadd.f32 %v1034, %v1039
    %v1041 = vmul.f32 %v283, %v1038
    %v1042 = vadd.f32 %v1036, %v1041
    %s1043 = sld [smem:[#allocation2 + $0xd1]]
    %v1044 = vstv %s1043
    %v1045 = vmul.f32 %v260, %v1044
    %v1046 = vadd.f32 %v1040, %v1045
    %v1047 = vmul.f32 %v288, %v1044
    %v1048 = vadd.f32 %v1042, %v1047
    %s1049 = sld [smem:[#allocation2 + $0xd5]]
    %v1050 = vstv %s1049
    %v1051 = vmul.f32 %v265, %v1050
    %v1052 = vadd.f32 %v1046, %v1051
    %v1053 = vmul.f32 %v293, %v1050
    %v1054 = vadd.f32 %v1048, %v1053
    %s1055 = sld [smem:[#allocation2 + $0xd9]]
    %v1056 = vstv %s1055
    %v1057 = vmul.f32 %v268, %v1056
    %v1058 = vadd.f32 %v1052, %v1057
    %v1059 = vmul.f32 %v296, %v1056
    %v1060 = vadd.f32 %v1054, %v1059
    %s1061 = sld [smem:[#allocation2 + $0xdd]]
    %v1062 = vstv %s1061
    %v1063 = vmul.f32 %v269, %v1062
    %v1064 = vadd.f32 %v1058, %v1063
    %v1065 = vmul.f32 %v297, %v1062
    %v1066 = vadd.f32 %v1060, %v1065
    %v1067 = vmul.f32 %v212, %v1064
    %v1068 = vadd.f32 %v1016, %v1067
    %v1069 = vmul.f32 %v240, %v1064
    %v1070 = vadd.f32 %v1018, %v1069
    %v1071 = vmul.f32 %v212, %v1066
    %v1072 = vadd.f32 %v1020, %v1071
    %s1073 = sld [smem:[#allocation2 + $0xe1]]
    %v1074 = vstv %s1073
    %v1075 = vmul.f32 %v242, %v1074
    %v1076 = vmul.f32 %v270, %v1074
    %s1077 = sld [smem:[#allocation2 + $0xe5]]
    %v1078 = vstv %s1077
    %v1079 = vmul.f32 %v245, %v1078
    %v1080 = vadd.f32 %v1075, %v1079
    %v1081 = vmul.f32 %v273, %v1078
    %v1082 = vadd.f32 %v1076, %v1081
    %s1083 = sld [smem:[#allocation2 + $0xe9]]
    %v1084 = vstv %s1083
    %v1085 = vmul.f32 %v250, %v1084
    %v1086 = vadd.f32 %v1080, %v1085
    %v1087 = vmul.f32 %v278, %v1084
    %v1088 = vadd.f32 %v1082, %v1087
    %s1089 = sld [smem:[#allocation2 + $0xed]]
    %v1090 = vstv %s1089
    %v1091 = vmul.f32 %v255, %v1090
    %v1092 = vadd.f32 %v1086, %v1091
    %v1093 = vmul.f32 %v283, %v1090
    %v1094 = vadd.f32 %v1088, %v1093
    %s1095 = sld [smem:[#allocation2 + $0xf1]]
    %v1096 = vstv %s1095
    %v1097 = vmul.f32 %v260, %v1096
    %v1098 = vadd.f32 %v1092, %v1097
    %v1099 = vmul.f32 %v288, %v1096
    %v1100 = vadd.f32 %v1094, %v1099
    %s1101 = sld [smem:[#allocation2 + $0xf5]]
    %v1102 = vstv %s1101
    %v1103 = vmul.f32 %v265, %v1102
    %v1104 = vadd.f32 %v1098, %v1103
    %v1105 = vmul.f32 %v293, %v1102
    %v1106 = vadd.f32 %v1100, %v1105
    %s1107 = sld [smem:[#allocation2 + $0xf9]]
    %v1108 = vstv %s1107
    %v1109 = vmul.f32 %v268, %v1108
    %v1110 = vadd.f32 %v1104, %v1109
    %v1111 = vmul.f32 %v296, %v1108
    %v1112 = vadd.f32 %v1106, %v1111
    %s1113 = sld [smem:[#allocation2 + $0xfd]]
    %v1114 = vstv %s1113
    %v1115 = vmul.f32 %v269, %v1114
    %v1116 = vadd.f32 %v1110, %v1115
    %v1117 = vmul.f32 %v297, %v1114
    %v1118 = vadd.f32 %v1112, %v1117
    %v1119 = vmul.f32 %v213, %v1116
    %v1120 = vadd.f32 %v1068, %v1119
    %v1121 = vmul.f32 %v241, %v1116
    %v1122 = vadd.f32 %v1070, %v1121
    %v1123 = vmul.f32 %v213, %v1118
    %v1124 = vadd.f32 %v1072, %v1123
    %s1125 = scalar_lea.vmem [#allocation7], 16
    %1126 = vst [vmem:[%s1125] sm:$0xff] %v1120
    %s1127 = sld [smem:[#allocation2 + $0x2]]
    %v1128 = vstv %s1127
    %v1129 = vmul.f32 %v242, %v1128
    %v1130 = vmul.f32 %v270, %v1128
    %s1131 = sld [smem:[#allocation2 + $0x6]]
    %v1132 = vstv %s1131
    %v1133 = vmul.f32 %v245, %v1132
    %v1134 = vadd.f32 %v1129, %v1133
    %v1135 = vmul.f32 %v273, %v1132
    %v1136 = vadd.f32 %v1130, %v1135
    %s1137 = sld [smem:[#allocation2 + $0xa]]
    %v1138 = vstv %s1137
    %v1139 = vmul.f32 %v250, %v1138
    %v1140 = vadd.f32 %v1134, %v1139
    %v1141 = vmul.f32 %v278, %v1138
    %v1142 = vadd.f32 %v1136, %v1141
    %s1143 = sld [smem:[#allocation2 + $0xe]]
    %v1144 = vstv %s1143
    %v1145 = vmul.f32 %v255, %v1144
    %v1146 = vadd.f32 %v1140, %v1145
    %v1147 = vmul.f32 %v283, %v1144
    %v1148 = vadd.f32 %v1142, %v1147
    %s1149 = sld [smem:[#allocation2 + $0x12]]
    %v1150 = vstv %s1149
    %v1151 = vmul.f32 %v260, %v1150
    %v1152 = vadd.f32 %v1146, %v1151
    %v1153 = vmul.f32 %v288, %v1150
    %v1154 = vadd.f32 %v1148, %v1153
    %s1155 = sld [smem:[#allocation2 + $0x16]]
    %v1156 = vstv %s1155
    %v1157 = vmul.f32 %v265, %v1156
    %v1158 = vadd.f32 %v1152, %v1157
    %v1159 = vmul.f32 %v293, %v1156
    %v1160 = vadd.f32 %v1154, %v1159
    %s1161 = sld [smem:[#allocation2 + $0x1a]]
    %v1162 = vstv %s1161
    %v1163 = vmul.f32 %v268, %v1162
    %v1164 = vadd.f32 %v1158, %v1163
    %v1165 = vmul.f32 %v296, %v1162
    %v1166 = vadd.f32 %v1160, %v1165
    %s1167 = sld [smem:[#allocation2 + $0x1e]]
    %v1168 = vstv %s1167
    %v1169 = vmul.f32 %v269, %v1168
    %v1170 = vadd.f32 %v1164, %v1169
    %v1171 = vmul.f32 %v297, %v1168
    %v1172 = vadd.f32 %v1166, %v1171
    %v1173 = vmul.f32 %v186, %v1170
    %v1174 = vmul.f32 %v214, %v1170
    %v1175 = vmul.f32 %v186, %v1172
    %s1176 = sld [smem:[#allocation2 + $0x22]]
    %v1177 = vstv %s1176
    %v1178 = vmul.f32 %v242, %v1177
    %v1179 = vmul.f32 %v270, %v1177
    %s1180 = sld [smem:[#allocation2 + $0x26]]
    %v1181 = vstv %s1180
    %v1182 = vmul.f32 %v245, %v1181
    %v1183 = vadd.f32 %v1178, %v1182
    %v1184 = vmul.f32 %v273, %v1181
    %v1185 = vadd.f32 %v1179, %v1184
    %s1186 = sld [smem:[#allocation2 + $0x2a]]
    %v1187 = vstv %s1186
    %v1188 = vmul.f32 %v250, %v1187
    %v1189 = vadd.f32 %v1183, %v1188
    %v1190 = vmul.f32 %v278, %v1187
    %v1191 = vadd.f32 %v1185, %v1190
    %s1192 = sld [smem:[#allocation2 + $0x2e]]
    %v1193 = vstv %s1192
    %v1194 = vmul.f32 %v255, %v1193
    %v1195 = vadd.f32 %v1189, %v1194
    %v1196 = vmul.f32 %v283, %v1193
    %v1197 = vadd.f32 %v1191, %v1196
    %s1198 = sld [smem:[#allocation2 + $0x32]]
    %v1199 = vstv %s1198
    %v1200 = vmul.f32 %v260, %v1199
    %v1201 = vadd.f32 %v1195, %v1200
    %v1202 = vmul.f32 %v288, %v1199
    %v1203 = vadd.f32 %v1197, %v1202
    %s1204 = sld [smem:[#allocation2 + $0x36]]
    %v1205 = vstv %s1204
    %v1206 = vmul.f32 %v265, %v1205
    %v1207 = vadd.f32 %v1201, %v1206
    %v1208 = vmul.f32 %v293, %v1205
    %v1209 = vadd.f32 %v1203, %v1208
    %s1210 = sld [smem:[#allocation2 + $0x3a]]
    %v1211 = vstv %s1210
    %v1212 = vmul.f32 %v268, %v1211
    %v1213 = vadd.f32 %v1207, %v1212
    %v1214 = vmul.f32 %v296, %v1211
    %v1215 = vadd.f32 %v1209, %v1214
    %s1216 = sld [smem:[#allocation2 + $0x3e]]
    %v1217 = vstv %s1216
    %v1218 = vmul.f32 %v269, %v1217
    %v1219 = vadd.f32 %v1213, %v1218
    %v1220 = vmul.f32 %v297, %v1217
    %v1221 = vadd.f32 %v1215, %v1220
    %v1222 = vmul.f32 %v189, %v1219
    %v1223 = vadd.f32 %v1173, %v1222
    %v1224 = vmul.f32 %v217, %v1219
    %v1225 = vadd.f32 %v1174, %v1224
    %v1226 = vmul.f32 %v189, %v1221
    %v1227 = vadd.f32 %v1175, %v1226
    %s1228 = sld [smem:[#allocation2 + $0x42]]
    %v1229 = vstv %s1228
    %v1230 = vmul.f32 %v242, %v1229
    %v1231 = vmul.f32 %v270, %v1229
    %s1232 = sld [smem:[#allocation2 + $0x46]]
    %v1233 = vstv %s1232
    %v1234 = vmul.f32 %v245, %v1233
    %v1235 = vadd.f32 %v1230, %v1234
    %v1236 = vmul.f32 %v273, %v1233
    %v1237 = vadd.f32 %v1231, %v1236
    %s1238 = sld [smem:[#allocation2 + $0x4a]]
    %v1239 = vstv %s1238
    %v1240 = vmul.f32 %v250, %v1239
    %v1241 = vadd.f32 %v1235, %v1240
    %v1242 = vmul.f32 %v278, %v1239
    %v1243 = vadd.f32 %v1237, %v1242
    %s1244 = sld [smem:[#allocation2 + $0x4e]]
    %v1245 = vstv %s1244
    %v1246 = vmul.f32 %v255, %v1245
    %v1247 = vadd.f32 %v1241, %v1246
    %v1248 = vmul.f32 %v283, %v1245
    %v1249 = vadd.f32 %v1243, %v1248
    %s1250 = sld [smem:[#allocation2 + $0x52]]
    %v1251 = vstv %s1250
    %v1252 = vmul.f32 %v260, %v1251
    %v1253 = vadd.f32 %v1247, %v1252
    %v1254 = vmul.f32 %v288, %v1251
    %v1255 = vadd.f32 %v1249, %v1254
    %s1256 = sld [smem:[#allocation2 + $0x56]]
    %v1257 = vstv %s1256
    %v1258 = vmul.f32 %v265, %v1257
    %v1259 = vadd.f32 %v1253, %v1258
    %v1260 = vmul.f32 %v293, %v1257
    %v1261 = vadd.f32 %v1255, %v1260
    %s1262 = sld [smem:[#allocation2 + $0x5a]]
    %v1263 = vstv %s1262
    %v1264 = vmul.f32 %v268, %v1263
    %v1265 = vadd.f32 %v1259, %v1264
    %v1266 = vmul.f32 %v296, %v1263
    %v1267 = vadd.f32 %v1261, %v1266
    %s1268 = sld [smem:[#allocation2 + $0x5e]]
    %v1269 = vstv %s1268
    %v1270 = vmul.f32 %v269, %v1269
    %v1271 = vadd.f32 %v1265, %v1270
    %v1272 = vmul.f32 %v297, %v1269
    %v1273 = vadd.f32 %v1267, %v1272
    %v1274 = vmul.f32 %v194, %v1271
    %v1275 = vadd.f32 %v1223, %v1274
    %v1276 = vmul.f32 %v222, %v1271
    %v1277 = vadd.f32 %v1225, %v1276
    %v1278 = vmul.f32 %v194, %v1273
    %v1279 = vadd.f32 %v1227, %v1278
    %s1280 = sld [smem:[#allocation2 + $0x62]]
    %v1281 = vstv %s1280
    %v1282 = vmul.f32 %v242, %v1281
    %v1283 = vmul.f32 %v270, %v1281
    %s1284 = sld [smem:[#allocation2 + $0x66]]
    %v1285 = vstv %s1284
    %v1286 = vmul.f32 %v245, %v1285
    %v1287 = vadd.f32 %v1282, %v1286
    %v1288 = vmul.f32 %v273, %v1285
    %v1289 = vadd.f32 %v1283, %v1288
    %s1290 = sld [smem:[#allocation2 + $0x6a]]
    %v1291 = vstv %s1290
    %v1292 = vmul.f32 %v250, %v1291
    %v1293 = vadd.f32 %v1287, %v1292
    %v1294 = vmul.f32 %v278, %v1291
    %v1295 = vadd.f32 %v1289, %v1294
    %s1296 = sld [smem:[#allocation2 + $0x6e]]
    %v1297 = vstv %s1296
    %v1298 = vmul.f32 %v255, %v1297
    %v1299 = vadd.f32 %v1293, %v1298
    %v1300 = vmul.f32 %v283, %v1297
    %v1301 = vadd.f32 %v1295, %v1300
    %s1302 = sld [smem:[#allocation2 + $0x72]]
    %v1303 = vstv %s1302
    %v1304 = vmul.f32 %v260, %v1303
    %v1305 = vadd.f32 %v1299, %v1304
    %v1306 = vmul.f32 %v288, %v1303
    %v1307 = vadd.f32 %v1301, %v1306
    %s1308 = sld [smem:[#allocation2 + $0x76]]
    %v1309 = vstv %s1308
    %v1310 = vmul.f32 %v265, %v1309
    %v1311 = vadd.f32 %v1305, %v1310
    %v1312 = vmul.f32 %v293, %v1309
    %v1313 = vadd.f32 %v1307, %v1312
    %s1314 = sld [smem:[#allocation2 + $0x7a]]
    %v1315 = vstv %s1314
    %v1316 = vmul.f32 %v268, %v1315
    %v1317 = vadd.f32 %v1311, %v1316
    %v1318 = vmul.f32 %v296, %v1315
    %v1319 = vadd.f32 %v1313, %v1318
    %s1320 = sld [smem:[#allocation2 + $0x7e]]
    %v1321 = vstv %s1320
    %v1322 = vmul.f32 %v269, %v1321
    %v1323 = vadd.f32 %v1317, %v1322
    %v1324 = vmul.f32 %v297, %v1321
    %v1325 = vadd.f32 %v1319, %v1324
    %v1326 = vmul.f32 %v199, %v1323
    %v1327 = vadd.f32 %v1275, %v1326
    %v1328 = vmul.f32 %v227, %v1323
    %v1329 = vadd.f32 %v1277, %v1328
    %v1330 = vmul.f32 %v199, %v1325
    %v1331 = vadd.f32 %v1279, %v1330
    %s1332 = sld [smem:[#allocation2 + $0x82]]
    %v1333 = vstv %s1332
    %v1334 = vmul.f32 %v242, %v1333
    %v1335 = vmul.f32 %v270, %v1333
    %s1336 = sld [smem:[#allocation2 + $0x86]]
    %v1337 = vstv %s1336
    %v1338 = vmul.f32 %v245, %v1337
    %v1339 = vadd.f32 %v1334, %v1338
    %v1340 = vmul.f32 %v273, %v1337
    %v1341 = vadd.f32 %v1335, %v1340
    %s1342 = sld [smem:[#allocation2 + $0x8a]]
    %v1343 = vstv %s1342
    %v1344 = vmul.f32 %v250, %v1343
    %v1345 = vadd.f32 %v1339, %v1344
    %v1346 = vmul.f32 %v278, %v1343
    %v1347 = vadd.f32 %v1341, %v1346
    %s1348 = sld [smem:[#allocation2 + $0x8e]]
    %v1349 = vstv %s1348
    %v1350 = vmul.f32 %v255, %v1349
    %v1351 = vadd.f32 %v1345, %v1350
    %v1352 = vmul.f32 %v283, %v1349
    %v1353 = vadd.f32 %v1347, %v1352
    %s1354 = sld [smem:[#allocation2 + $0x92]]
    %v1355 = vstv %s1354
    %v1356 = vmul.f32 %v260, %v1355
    %v1357 = vadd.f32 %v1351, %v1356
    %v1358 = vmul.f32 %v288, %v1355
    %v1359 = vadd.f32 %v1353, %v1358
    %s1360 = sld [smem:[#allocation2 + $0x96]]
    %v1361 = vstv %s1360
    %v1362 = vmul.f32 %v265, %v1361
    %v1363 = vadd.f32 %v1357, %v1362
    %v1364 = vmul.f32 %v293, %v1361
    %v1365 = vadd.f32 %v1359, %v1364
    %s1366 = sld [smem:[#allocation2 + $0x9a]]
    %v1367 = vstv %s1366
    %v1368 = vmul.f32 %v268, %v1367
    %v1369 = vadd.f32 %v1363, %v1368
    %v1370 = vmul.f32 %v296, %v1367
    %v1371 = vadd.f32 %v1365, %v1370
    %s1372 = sld [smem:[#allocation2 + $0x9e]]
    %v1373 = vstv %s1372
    %v1374 = vmul.f32 %v269, %v1373
    %v1375 = vadd.f32 %v1369, %v1374
    %v1376 = vmul.f32 %v297, %v1373
    %v1377 = vadd.f32 %v1371, %v1376
    %v1378 = vmul.f32 %v204, %v1375
    %v1379 = vadd.f32 %v1327, %v1378
    %v1380 = vmul.f32 %v232, %v1375
    %v1381 = vadd.f32 %v1329, %v1380
    %v1382 = vmul.f32 %v204, %v1377
    %v1383 = vadd.f32 %v1331, %v1382
    %s1384 = sld [smem:[#allocation2 + $0xa2]]
    %v1385 = vstv %s1384
    %v1386 = vmul.f32 %v242, %v1385
    %v1387 = vmul.f32 %v270, %v1385
    %s1388 = sld [smem:[#allocation2 + $0xa6]]
    %v1389 = vstv %s1388
    %v1390 = vmul.f32 %v245, %v1389
    %v1391 = vadd.f32 %v1386, %v1390
    %v1392 = vmul.f32 %v273, %v1389
    %v1393 = vadd.f32 %v1387, %v1392
    %s1394 = sld [smem:[#allocation2 + $0xaa]]
    %v1395 = vstv %s1394
    %v1396 = vmul.f32 %v250, %v1395
    %v1397 = vadd.f32 %v1391, %v1396
    %v1398 = vmul.f32 %v278, %v1395
    %v1399 = vadd.f32 %v1393, %v1398
    %s1400 = sld [smem:[#allocation2 + $0xae]]
    %v1401 = vstv %s1400
    %v1402 = vmul.f32 %v255, %v1401
    %v1403 = vadd.f32 %v1397, %v1402
    %v1404 = vmul.f32 %v283, %v1401
    %v1405 = vadd.f32 %v1399, %v1404
    %s1406 = sld [smem:[#allocation2 + $0xb2]]
    %v1407 = vstv %s1406
    %v1408 = vmul.f32 %v260, %v1407
    %v1409 = vadd.f32 %v1403, %v1408
    %v1410 = vmul.f32 %v288, %v1407
    %v1411 = vadd.f32 %v1405, %v1410
    %s1412 = sld [smem:[#allocation2 + $0xb6]]
    %v1413 = vstv %s1412
    %v1414 = vmul.f32 %v265, %v1413
    %v1415 = vadd.f32 %v1409, %v1414
    %v1416 = vmul.f32 %v293, %v1413
    %v1417 = vadd.f32 %v1411, %v1416
    %s1418 = sld [smem:[#allocation2 + $0xba]]
    %v1419 = vstv %s1418
    %v1420 = vmul.f32 %v268, %v1419
    %v1421 = vadd.f32 %v1415, %v1420
    %v1422 = vmul.f32 %v296, %v1419
    %v1423 = vadd.f32 %v1417, %v1422
    %s1424 = sld [smem:[#allocation2 + $0xbe]]
    %v1425 = vstv %s1424
    %v1426 = vmul.f32 %v269, %v1425
    %v1427 = vadd.f32 %v1421, %v1426
    %v1428 = vmul.f32 %v297, %v1425
    %v1429 = vadd.f32 %v1423, %v1428
    %v1430 = vmul.f32 %v209, %v1427
    %v1431 = vadd.f32 %v1379, %v1430
    %v1432 = vmul.f32 %v237, %v1427
    %v1433 = vadd.f32 %v1381, %v1432
    %v1434 = vmul.f32 %v209, %v1429
    %v1435 = vadd.f32 %v1383, %v1434
    %s1436 = sld [smem:[#allocation2 + $0xc2]]
    %v1437 = vstv %s1436
    %v1438 = vmul.f32 %v242, %v1437
    %v1439 = vmul.f32 %v270, %v1437
    %s1440 = sld [smem:[#allocation2 + $0xc6]]
    %v1441 = vstv %s1440
    %v1442 = vmul.f32 %v245, %v1441
    %v1443 = vadd.f32 %v1438, %v1442
    %v1444 = vmul.f32 %v273, %v1441
    %v1445 = vadd.f32 %v1439, %v1444
    %s1446 = sld [smem:[#allocation2 + $0xca]]
    %v1447 = vstv %s1446
    %v1448 = vmul.f32 %v250, %v1447
    %v1449 = vadd.f32 %v1443, %v1448
    %v1450 = vmul.f32 %v278, %v1447
    %v1451 = vadd.f32 %v1445, %v1450
    %s1452 = sld [smem:[#allocation2 + $0xce]]
    %v1453 = vstv %s1452
    %v1454 = vmul.f32 %v255, %v1453
    %v1455 = vadd.f32 %v1449, %v1454
    %v1456 = vmul.f32 %v283, %v1453
    %v1457 = vadd.f32 %v1451, %v1456
    %s1458 = sld [smem:[#allocation2 + $0xd2]]
    %v1459 = vstv %s1458
    %v1460 = vmul.f32 %v260, %v1459
    %v1461 = vadd.f32 %v1455, %v1460
    %v1462 = vmul.f32 %v288, %v1459
    %v1463 = vadd.f32 %v1457, %v1462
    %s1464 = sld [smem:[#allocation2 + $0xd6]]
    %v1465 = vstv %s1464
    %v1466 = vmul.f32 %v265, %v1465
    %v1467 = vadd.f32 %v1461, %v1466
    %v1468 = vmul.f32 %v293, %v1465
    %v1469 = vadd.f32 %v1463, %v1468
    %s1470 = sld [smem:[#allocation2 + $0xda]]
    %v1471 = vstv %s1470
    %v1472 = vmul.f32 %v268, %v1471
    %v1473 = vadd.f32 %v1467, %v1472
    %v1474 = vmul.f32 %v296, %v1471
    %v1475 = vadd.f32 %v1469, %v1474
    %s1476 = sld [smem:[#allocation2 + $0xde]]
    %v1477 = vstv %s1476
    %v1478 = vmul.f32 %v269, %v1477
    %v1479 = vadd.f32 %v1473, %v1478
    %v1480 = vmul.f32 %v297, %v1477
    %v1481 = vadd.f32 %v1475, %v1480
    %v1482 = vmul.f32 %v212, %v1479
    %v1483 = vadd.f32 %v1431, %v1482
    %v1484 = vmul.f32 %v240, %v1479
    %v1485 = vadd.f32 %v1433, %v1484
    %v1486 = vmul.f32 %v212, %v1481
    %v1487 = vadd.f32 %v1435, %v1486
    %s1488 = sld [smem:[#allocation2 + $0xe2]]
    %v1489 = vstv %s1488
    %v1490 = vmul.f32 %v242, %v1489
    %v1491 = vmul.f32 %v270, %v1489
    %s1492 = sld [smem:[#allocation2 + $0xe6]]
    %v1493 = vstv %s1492
    %v1494 = vmul.f32 %v245, %v1493
    %v1495 = vadd.f32 %v1490, %v1494
    %v1496 = vmul.f32 %v273, %v1493
    %v1497 = vadd.f32 %v1491, %v1496
    %s1498 = sld [smem:[#allocation2 + $0xea]]
    %v1499 = vstv %s1498
    %v1500 = vmul.f32 %v250, %v1499
    %v1501 = vadd.f32 %v1495, %v1500
    %v1502 = vmul.f32 %v278, %v1499
    %v1503 = vadd.f32 %v1497, %v1502
    %s1504 = sld [smem:[#allocation2 + $0xee]]
    %v1505 = vstv %s1504
    %v1506 = vmul.f32 %v255, %v1505
    %v1507 = vadd.f32 %v1501, %v1506
    %v1508 = vmul.f32 %v283, %v1505
    %v1509 = vadd.f32 %v1503, %v1508
    %s1510 = sld [smem:[#allocation2 + $0xf2]]
    %v1511 = vstv %s1510
    %v1512 = vmul.f32 %v260, %v1511
    %v1513 = vadd.f32 %v1507, %v1512
    %v1514 = vmul.f32 %v288, %v1511
    %v1515 = vadd.f32 %v1509, %v1514
    %s1516 = sld [smem:[#allocation2 + $0xf6]]
    %v1517 = vstv %s1516
    %v1518 = vmul.f32 %v265, %v1517
    %v1519 = vadd.f32 %v1513, %v1518
    %v1520 = vmul.f32 %v293, %v1517
    %v1521 = vadd.f32 %v1515, %v1520
    %s1522 = sld [smem:[#allocation2 + $0xfa]]
    %v1523 = vstv %s1522
    %v1524 = vmul.f32 %v268, %v1523
    %v1525 = vadd.f32 %v1519, %v1524
    %v1526 = vmul.f32 %v296, %v1523
    %v1527 = vadd.f32 %v1521, %v1526
    %s1528 = sld [smem:[#allocation2 + $0xfe]]
    %v1529 = vstv %s1528
    %v1530 = vmul.f32 %v269, %v1529
    %v1531 = vadd.f32 %v1525, %v1530
    %v1532 = vmul.f32 %v297, %v1529
    %v1533 = vadd.f32 %v1527, %v1532
    %v1534 = vmul.f32 %v213, %v1531
    %v1535 = vadd.f32 %v1483, %v1534
    %v1536 = vmul.f32 %v241, %v1531
    %v1537 = vadd.f32 %v1485, %v1536
    %v1538 = vmul.f32 %v213, %v1533
    %v1539 = vadd.f32 %v1487, %v1538
    %s1540 = scalar_lea.vmem [#allocation7], 32
    %1541 = vst [vmem:[%s1540] sm:$0xff] %v1535
    %s1542 = sld [smem:[#allocation2 + $0x3]]
    %v1543 = vstv %s1542
    %v1544 = vmul.f32 %v242, %v1543
    %s1545 = sld [smem:[#allocation2 + $0x7]]
    %v1546 = vstv %s1545
    %v1547 = vmul.f32 %v245, %v1546
    %v1548 = vadd.f32 %v1544, %v1547
    %s1549 = sld [smem:[#allocation2 + $0xb]]
    %v1550 = vstv %s1549
    %v1551 = vmul.f32 %v250, %v1550
    %v1552 = vadd.f32 %v1548, %v1551
    %s1553 = sld [smem:[#allocation2 + $0xf]]
    %v1554 = vstv %s1553
    %v1555 = vmul.f32 %v255, %v1554
    %v1556 = vadd.f32 %v1552, %v1555
    %s1557 = sld [smem:[#allocation2 + $0x13]]
    %v1558 = vstv %s1557
    %v1559 = vmul.f32 %v260, %v1558
    %v1560 = vadd.f32 %v1556, %v1559
    %s1561 = sld [smem:[#allocation2 + $0x17]]
    %v1562 = vstv %s1561
    %v1563 = vmul.f32 %v265, %v1562
    %v1564 = vadd.f32 %v1560, %v1563
    %s1565 = sld [smem:[#allocation2 + $0x1b]]
    %v1566 = vstv %s1565
    %v1567 = vmul.f32 %v268, %v1566
    %v1568 = vadd.f32 %v1564, %v1567
    %s1569 = sld [smem:[#allocation2 + $0x1f]]
    %v1570 = vstv %s1569
    %v1571 = vmul.f32 %v269, %v1570
    %v1572 = vadd.f32 %v1568, %v1571
    %v1573 = vmul.f32 %v186, %v1572
    %s1574 = sld [smem:[#allocation2 + $0x23]]
    %v1575 = vstv %s1574
    %v1576 = vmul.f32 %v242, %v1575
    %s1577 = sld [smem:[#allocation2 + $0x27]]
    %v1578 = vstv %s1577
    %v1579 = vmul.f32 %v245, %v1578
    %v1580 = vadd.f32 %v1576, %v1579
    %s1581 = sld [smem:[#allocation2 + $0x2b]]
    %v1582 = vstv %s1581
    %v1583 = vmul.f32 %v250, %v1582
    %v1584 = vadd.f32 %v1580, %v1583
    %s1585 = sld [smem:[#allocation2 + $0x2f]]
    %v1586 = vstv %s1585
    %v1587 = vmul.f32 %v255, %v1586
    %v1588 = vadd.f32 %v1584, %v1587
    %s1589 = sld [smem:[#allocation2 + $0x33]]
    %v1590 = vstv %s1589
    %v1591 = vmul.f32 %v260, %v1590
    %v1592 = vadd.f32 %v1588, %v1591
    %s1593 = sld [smem:[#allocation2 + $0x37]]
    %v1594 = vstv %s1593
    %v1595 = vmul.f32 %v265, %v1594
    %v1596 = vadd.f32 %v1592, %v1595
    %s1597 = sld [smem:[#allocation2 + $0x3b]]
    %v1598 = vstv %s1597
    %v1599 = vmul.f32 %v268, %v1598
    %v1600 = vadd.f32 %v1596, %v1599
    %s1601 = sld [smem:[#allocation2 + $0x3f]]
    %v1602 = vstv %s1601
    %v1603 = vmul.f32 %v269, %v1602
    %v1604 = vadd.f32 %v1600, %v1603
    %v1605 = vmul.f32 %v189, %v1604
    %v1606 = vadd.f32 %v1573, %v1605
    %s1607 = sld [smem:[#allocation2 + $0x43]]
    %v1608 = vstv %s1607
    %v1609 = vmul.f32 %v242, %v1608
    %s1610 = sld [smem:[#allocation2 + $0x47]]
    %v1611 = vstv %s1610
    %v1612 = vmul.f32 %v245, %v1611
    %v1613 = vadd.f32 %v1609, %v1612
    %s1614 = sld [smem:[#allocation2 + $0x4b]]
    %v1615 = vstv %s1614
    %v1616 = vmul.f32 %v250, %v1615
    %v1617 = vadd.f32 %v1613, %v1616
    %s1618 = sld [smem:[#allocation2 + $0x4f]]
    %v1619 = vstv %s1618
    %v1620 = vmul.f32 %v255, %v1619
    %v1621 = vadd.f32 %v1617, %v1620
    %s1622 = sld [smem:[#allocation2 + $0x53]]
    %v1623 = vstv %s1622
    %v1624 = vmul.f32 %v260, %v1623
    %v1625 = vadd.f32 %v1621, %v1624
    %s1626 = sld [smem:[#allocation2 + $0x57]]
    %v1627 = vstv %s1626
    %v1628 = vmul.f32 %v265, %v1627
    %v1629 = vadd.f32 %v1625, %v1628
    %s1630 = sld [smem:[#allocation2 + $0x5b]]
    %v1631 = vstv %s1630
    %v1632 = vmul.f32 %v268, %v1631
    %v1633 = vadd.f32 %v1629, %v1632
    %s1634 = sld [smem:[#allocation2 + $0x5f]]
    %v1635 = vstv %s1634
    %v1636 = vmul.f32 %v269, %v1635
    %v1637 = vadd.f32 %v1633, %v1636
    %v1638 = vmul.f32 %v194, %v1637
    %v1639 = vadd.f32 %v1606, %v1638
    %s1640 = sld [smem:[#allocation2 + $0x63]]
    %v1641 = vstv %s1640
    %v1642 = vmul.f32 %v242, %v1641
    %s1643 = sld [smem:[#allocation2 + $0x67]]
    %v1644 = vstv %s1643
    %v1645 = vmul.f32 %v245, %v1644
    %v1646 = vadd.f32 %v1642, %v1645
    %s1647 = sld [smem:[#allocation2 + $0x6b]]
    %v1648 = vstv %s1647
    %v1649 = vmul.f32 %v250, %v1648
    %v1650 = vadd.f32 %v1646, %v1649
    %s1651 = sld [smem:[#allocation2 + $0x6f]]
    %v1652 = vstv %s1651
    %v1653 = vmul.f32 %v255, %v1652
    %v1654 = vadd.f32 %v1650, %v1653
    %s1655 = sld [smem:[#allocation2 + $0x73]]
    %v1656 = vstv %s1655
    %v1657 = vmul.f32 %v260, %v1656
    %v1658 = vadd.f32 %v1654, %v1657
    %s1659 = sld [smem:[#allocation2 + $0x77]]
    %v1660 = vstv %s1659
    %v1661 = vmul.f32 %v265, %v1660
    %v1662 = vadd.f32 %v1658, %v1661
    %s1663 = sld [smem:[#allocation2 + $0x7b]]
    %v1664 = vstv %s1663
    %v1665 = vmul.f32 %v268, %v1664
    %v1666 = vadd.f32 %v1662, %v1665
    %s1667 = sld [smem:[#allocation2 + $0x7f]]
    %v1668 = vstv %s1667
    %v1669 = vmul.f32 %v269, %v1668
    %v1670 = vadd.f32 %v1666, %v1669
    %v1671 = vmul.f32 %v199, %v1670
    %v1672 = vadd.f32 %v1639, %v1671
    %s1673 = sld [smem:[#allocation2 + $0x83]]
    %v1674 = vstv %s1673
    %v1675 = vmul.f32 %v242, %v1674
    %s1676 = sld [smem:[#allocation2 + $0x87]]
    %v1677 = vstv %s1676
    %v1678 = vmul.f32 %v245, %v1677
    %v1679 = vadd.f32 %v1675, %v1678
    %s1680 = sld [smem:[#allocation2 + $0x8b]]
    %v1681 = vstv %s1680
    %v1682 = vmul.f32 %v250, %v1681
    %v1683 = vadd.f32 %v1679, %v1682
    %s1684 = sld [smem:[#allocation2 + $0x8f]]
    %v1685 = vstv %s1684
    %v1686 = vmul.f32 %v255, %v1685
    %v1687 = vadd.f32 %v1683, %v1686
    %s1688 = sld [smem:[#allocation2 + $0x93]]
    %v1689 = vstv %s1688
    %v1690 = vmul.f32 %v260, %v1689
    %v1691 = vadd.f32 %v1687, %v1690
    %s1692 = sld [smem:[#allocation2 + $0x97]]
    %v1693 = vstv %s1692
    %v1694 = vmul.f32 %v265, %v1693
    %v1695 = vadd.f32 %v1691, %v1694
    %s1696 = sld [smem:[#allocation2 + $0x9b]]
    %v1697 = vstv %s1696
    %v1698 = vmul.f32 %v268, %v1697
    %v1699 = vadd.f32 %v1695, %v1698
    %s1700 = sld [smem:[#allocation2 + $0x9f]]
    %v1701 = vstv %s1700
    %v1702 = vmul.f32 %v269, %v1701
    %v1703 = vadd.f32 %v1699, %v1702
    %v1704 = vmul.f32 %v204, %v1703
    %v1705 = vadd.f32 %v1672, %v1704
    %s1706 = sld [smem:[#allocation2 + $0xa3]]
    %v1707 = vstv %s1706
    %v1708 = vmul.f32 %v242, %v1707
    %s1709 = sld [smem:[#allocation2 + $0xa7]]
    %v1710 = vstv %s1709
    %v1711 = vmul.f32 %v245, %v1710
    %v1712 = vadd.f32 %v1708, %v1711
    %s1713 = sld [smem:[#allocation2 + $0xab]]
    %v1714 = vstv %s1713
    %v1715 = vmul.f32 %v250, %v1714
    %v1716 = vadd.f32 %v1712, %v1715
    %s1717 = sld [smem:[#allocation2 + $0xaf]]
    %v1718 = vstv %s1717
    %v1719 = vmul.f32 %v255, %v1718
    %v1720 = vadd.f32 %v1716, %v1719
    %s1721 = sld [smem:[#allocation2 + $0xb3]]
    %v1722 = vstv %s1721
    %v1723 = vmul.f32 %v260, %v1722
    %v1724 = vadd.f32 %v1720, %v1723
    %s1725 = sld [smem:[#allocation2 + $0xb7]]
    %v1726 = vstv %s1725
    %v1727 = vmul.f32 %v265, %v1726
    %v1728 = vadd.f32 %v1724, %v1727
    %s1729 = sld [smem:[#allocation2 + $0xbb]]
    %v1730 = vstv %s1729
    %v1731 = vmul.f32 %v268, %v1730
    %v1732 = vadd.f32 %v1728, %v1731
    %s1733 = sld [smem:[#allocation2 + $0xbf]]
    %v1734 = vstv %s1733
    %v1735 = vmul.f32 %v269, %v1734
    %v1736 = vadd.f32 %v1732, %v1735
    %v1737 = vmul.f32 %v209, %v1736
    %v1738 = vadd.f32 %v1705, %v1737
    %s1739 = sld [smem:[#allocation2 + $0xc3]]
    %v1740 = vstv %s1739
    %v1741 = vmul.f32 %v242, %v1740
    %s1742 = sld [smem:[#allocation2 + $0xc7]]
    %v1743 = vstv %s1742
    %v1744 = vmul.f32 %v245, %v1743
    %v1745 = vadd.f32 %v1741, %v1744
    %s1746 = sld [smem:[#allocation2 + $0xcb]]
    %v1747 = vstv %s1746
    %v1748 = vmul.f32 %v250, %v1747
    %v1749 = vadd.f32 %v1745, %v1748
    %s1750 = sld [smem:[#allocation2 + $0xcf]]
    %v1751 = vstv %s1750
    %v1752 = vmul.f32 %v255, %v1751
    %v1753 = vadd.f32 %v1749, %v1752
    %s1754 = sld [smem:[#allocation2 + $0xd3]]
    %v1755 = vstv %s1754
    %v1756 = vmul.f32 %v260, %v1755
    %v1757 = vadd.f32 %v1753, %v1756
    %s1758 = sld [smem:[#allocation2 + $0xd7]]
    %v1759 = vstv %s1758
    %v1760 = vmul.f32 %v265, %v1759
    %v1761 = vadd.f32 %v1757, %v1760
    %s1762 = sld [smem:[#allocation2 + $0xdb]]
    %v1763 = vstv %s1762
    %v1764 = vmul.f32 %v268, %v1763
    %v1765 = vadd.f32 %v1761, %v1764
    %s1766 = sld [smem:[#allocation2 + $0xdf]]
    %v1767 = vstv %s1766
    %v1768 = vmul.f32 %v269, %v1767
    %v1769 = vadd.f32 %v1765, %v1768
    %v1770 = vmul.f32 %v212, %v1769
    %v1771 = vadd.f32 %v1738, %v1770
    %s1772 = sld [smem:[#allocation2 + $0xe3]]
    %v1773 = vstv %s1772
    %v1774 = vmul.f32 %v242, %v1773
    %s1775 = sld [smem:[#allocation2 + $0xe7]]
    %v1776 = vstv %s1775
    %v1777 = vmul.f32 %v245, %v1776
    %v1778 = vadd.f32 %v1774, %v1777
    %s1779 = sld [smem:[#allocation2 + $0xeb]]
    %v1780 = vstv %s1779
    %v1781 = vmul.f32 %v250, %v1780
    %v1782 = vadd.f32 %v1778, %v1781
    %s1783 = sld [smem:[#allocation2 + $0xef]]
    %v1784 = vstv %s1783
    %v1785 = vmul.f32 %v255, %v1784
    %v1786 = vadd.f32 %v1782, %v1785
    %s1787 = sld [smem:[#allocation2 + $0xf3]]
    %v1788 = vstv %s1787
    %v1789 = vmul.f32 %v260, %v1788
    %v1790 = vadd.f32 %v1786, %v1789
    %s1791 = sld [smem:[#allocation2 + $0xf7]]
    %v1792 = vstv %s1791
    %v1793 = vmul.f32 %v265, %v1792
    %v1794 = vadd.f32 %v1790, %v1793
    %s1795 = sld [smem:[#allocation2 + $0xfb]]
    %v1796 = vstv %s1795
    %v1797 = vmul.f32 %v268, %v1796
    %v1798 = vadd.f32 %v1794, %v1797
    %s1799 = sld [smem:[#allocation2 + $0xff]]
    %v1800 = vstv %s1799
    %v1801 = vmul.f32 %v269, %v1800
    %v1802 = vadd.f32 %v1798, %v1801
    %v1803 = vmul.f32 %v213, %v1802
    %v1804 = vadd.f32 %v1771, %v1803
    %s1805 = scalar_lea.vmem [#allocation7], 48
    %1806 = vst [vmem:[%s1805] sm:$0xff] %v1804
    %v1807 = vmul.f32 %v1122, %v1539
    %v1808 = vmul.f32 %v1537, %v1124
    %v1809 = vsub.f32 %v1807, %v1808
    %v1810 = vmul.f32 %v1537, %v710
    %v1811 = vmul.f32 %v708, %v1539
    %v1812 = vsub.f32 %v1810, %v1811
    %v1813 = vmul.f32 %v708, %v1124
    %v1814 = vmul.f32 %v1122, %v710
    %v1815 = vsub.f32 %v1813, %v1814
    %v1816 = vmul.f32 %v1809, %v1809
    %v1817 = vmul.f32 %v1812, %v1812
    %v1818 = vadd.f32 %v1816, %v1817
    %v1819 = vmul.f32 %v1815, %v1815
    %v1820 = vadd.f32 %v1818, %v1819
    %v1821 = vmax.f32 %v1820, 1e-24
    %v1822 = vrsqrt.pop %v1821
    %v1823 = vmul.f32 %v1809, %v1822
    %s1824 = scalar_lea.vmem [#allocation7], 64
    %1825 = vst [vmem:[%s1824] sm:$0xff] %v1823
    %v1826 = vmul.f32 %v1812, %v1822
    %s1827 = scalar_lea.vmem [#allocation7], 80
    %1828 = vst [vmem:[%s1827] sm:$0xff] %v1826
    %v1829 = vmul.f32 %v1815, %v1822
    %s1830 = scalar_lea.vmem [#allocation7], 96
    %1831 = vst [vmem:[%s1830] sm:$0xff] %v1829
    %s1832 = scalar_lea.vmem [#allocation7], 112
    %1833 = vst [vmem:[%s1832] sm:$0xff] 0.0
    %v1834 = vld [vmem:[#allocation6 + $0x8] sm:$0xff]
    %v1835 = vld [vmem:[%s38 + $0x8] sm:$0xff]
    %v1836 = vmul.f32 %v1834, 6.0
    %v1837 = vfloor.f32 %v1836
    %v1838 = vmax.f32 %v1837, 0.0
    %v1839 = vmin.f32 %v1838, 5.0
    %v1840 = vmul.f32 %v1835, 6.0
    %v1841 = vfloor.f32 %v1840
    %v1842 = vmax.f32 %v1841, 0.0
    %v1843 = vmin.f32 %v1842, 5.0
    %v1844 = vadd.f32 %v1839, 0.0
    %v1845 = vmul.f32 %v1844, 0.16666667
    %v1846 = vmax.f32 %v1845, 0.0
    %v1847 = vmin.f32 %v1846, 1.0
    %v1848 = vsub.f32 %v1834, %v1847
    %v1849 = vadd.f32 %v1839, 1.0
    %v1850 = vmul.f32 %v1849, 0.16666667
    %v1851 = vmax.f32 %v1850, 0.0
    %v1852 = vmin.f32 %v1851, 1.0
    %v1853 = vsub.f32 %v1852, %v1834
    %v1854 = vadd.f32 %v1853, %v1848
    %v1855 = vrcp.pop %v1854
    %v1856 = vmul.f32 1.0, %v1855
    %v1857 = vmul.f32 %v1853, %v1856
    %v1858 = vadd.f32 %v1857, 0.0
    %v1859 = vmul.f32 %v1848, %v1856
    %v1860 = vadd.f32 %v1839, -1.0
    %v1861 = vmul.f32 %v1860, 0.16666667
    %v1862 = vmax.f32 %v1861, 0.0
    %v1863 = vmin.f32 %v1862, 1.0
    %v1864 = vsub.f32 %v1834, %v1863
    %v1865 = vadd.f32 %v1839, 2.0
    %v1866 = vmul.f32 %v1865, 0.16666667
    %v1867 = vmax.f32 %v1866, 0.0
    %v1868 = vmin.f32 %v1867, 1.0
    %v1869 = vsub.f32 %v1868, %v1834
    %v1870 = vadd.f32 %v1853, %v1864
    %v1871 = vrcp.pop %v1870
    %v1872 = vmul.f32 %v1858, %v1871
    %v1873 = vmul.f32 %v1853, %v1872
    %v1874 = vadd.f32 %v1873, 0.0
    %v1875 = vmul.f32 %v1864, %v1872
    %v1876 = vadd.f32 %v1869, %v1848
    %v1877 = vrcp.pop %v1876
    %v1878 = vmul.f32 %v1859, %v1877
    %v1879 = vmul.f32 %v1869, %v1878
    %v1880 = vadd.f32 %v1875, %v1879
    %v1881 = vmul.f32 %v1848, %v1878
    %v1882 = vmul.f32 -1.0, %v1871
    %v1883 = vmul.f32 %v1882, %v1858
    %v1884 = vadd.f32 %v1883, 0.0
    %v1885 = vmul.f32 1.0, %v1871
    %v1886 = vmul.f32 %v1885, %v1858
    %v1887 = vmul.f32 -1.0, %v1877
    %v1888 = vmul.f32 %v1887, %v1859
    %v1889 = vadd.f32 %v1886, %v1888
    %v1890 = vmul.f32 1.0, %v1877
    %v1891 = vmul.f32 %v1890, %v1859
    %v1892 = vmul.f32 %v1884, 2.0
    %v1893 = vmul.f32 %v1889, 2.0
    %v1894 = vmul.f32 %v1891, 2.0
    %v1895 = vadd.f32 %v1843, 0.0
    %v1896 = vmul.f32 %v1895, 0.16666667
    %v1897 = vmax.f32 %v1896, 0.0
    %v1898 = vmin.f32 %v1897, 1.0
    %v1899 = vsub.f32 %v1835, %v1898
    %v1900 = vadd.f32 %v1843, 1.0
    %v1901 = vmul.f32 %v1900, 0.16666667
    %v1902 = vmax.f32 %v1901, 0.0
    %v1903 = vmin.f32 %v1902, 1.0
    %v1904 = vsub.f32 %v1903, %v1835
    %v1905 = vadd.f32 %v1904, %v1899
    %v1906 = vrcp.pop %v1905
    %v1907 = vmul.f32 1.0, %v1906
    %v1908 = vmul.f32 %v1904, %v1907
    %v1909 = vadd.f32 %v1908, 0.0
    %v1910 = vmul.f32 %v1899, %v1907
    %v1911 = vadd.f32 %v1843, -1.0
    %v1912 = vmul.f32 %v1911, 0.16666667
    %v1913 = vmax.f32 %v1912, 0.0
    %v1914 = vmin.f32 %v1913, 1.0
    %v1915 = vsub.f32 %v1835, %v1914
    %v1916 = vadd.f32 %v1843, 2.0
    %v1917 = vmul.f32 %v1916, 0.16666667
    %v1918 = vmax.f32 %v1917, 0.0
    %v1919 = vmin.f32 %v1918, 1.0
    %v1920 = vsub.f32 %v1919, %v1835
    %v1921 = vadd.f32 %v1904, %v1915
    %v1922 = vrcp.pop %v1921
    %v1923 = vmul.f32 %v1909, %v1922
    %v1924 = vmul.f32 %v1904, %v1923
    %v1925 = vadd.f32 %v1924, 0.0
    %v1926 = vmul.f32 %v1915, %v1923
    %v1927 = vadd.f32 %v1920, %v1899
    %v1928 = vrcp.pop %v1927
    %v1929 = vmul.f32 %v1910, %v1928
    %v1930 = vmul.f32 %v1920, %v1929
    %v1931 = vadd.f32 %v1926, %v1930
    %v1932 = vmul.f32 %v1899, %v1929
    %v1933 = vmul.f32 -1.0, %v1922
    %v1934 = vmul.f32 %v1933, %v1909
    %v1935 = vadd.f32 %v1934, 0.0
    %v1936 = vmul.f32 1.0, %v1922
    %v1937 = vmul.f32 %v1936, %v1909
    %v1938 = vmul.f32 -1.0, %v1928
    %v1939 = vmul.f32 %v1938, %v1910
    %v1940 = vadd.f32 %v1937, %v1939
    %v1941 = vmul.f32 1.0, %v1928
    %v1942 = vmul.f32 %v1941, %v1910
    %v1943 = vmul.f32 %v1935, 2.0
    %v1944 = vmul.f32 %v1940, 2.0
    %v1945 = vmul.f32 %v1942, 2.0
    %vm1946 = vcmp.eq.f32.partialorder %v1839, 0.0
    %v1947 = vsel %vm1946, 1, 0
    %v1948 = vcvt.s32.f32 %v1947
    %vm1949 = vcmp.eq.f32.partialorder %v1839, 1.0
    %v1950 = vsel %vm1949, 1, 0
    %v1951 = vcvt.s32.f32 %v1950
    %vm1952 = vcmp.eq.f32.partialorder %v1839, 2.0
    %v1953 = vsel %vm1952, 1, 0
    %v1954 = vcvt.s32.f32 %v1953
    %vm1955 = vcmp.eq.f32.partialorder %v1839, 3.0
    %v1956 = vsel %vm1955, 1, 0
    %v1957 = vcvt.s32.f32 %v1956
    %vm1958 = vcmp.eq.f32.partialorder %v1839, 4.0
    %v1959 = vsel %vm1958, 1, 0
    %v1960 = vcvt.s32.f32 %v1959
    %vm1961 = vcmp.eq.f32.partialorder %v1839, 5.0
    %v1962 = vsel %vm1961, 1, 0
    %v1963 = vcvt.s32.f32 %v1962
    %vm1964 = vcmp.eq.f32.partialorder %v1843, 0.0
    %v1965 = vsel %vm1964, 1, 0
    %v1966 = vcvt.s32.f32 %v1965
    %vm1967 = vcmp.eq.f32.partialorder %v1843, 1.0
    %v1968 = vsel %vm1967, 1, 0
    %v1969 = vcvt.s32.f32 %v1968
    %vm1970 = vcmp.eq.f32.partialorder %v1843, 2.0
    %v1971 = vsel %vm1970, 1, 0
    %v1972 = vcvt.s32.f32 %v1971
    %vm1973 = vcmp.eq.f32.partialorder %v1843, 3.0
    %v1974 = vsel %vm1973, 1, 0
    %v1975 = vcvt.s32.f32 %v1974
    %vm1976 = vcmp.eq.f32.partialorder %v1843, 4.0
    %v1977 = vsel %vm1976, 1, 0
    %v1978 = vcvt.s32.f32 %v1977
    %vm1979 = vcmp.eq.f32.partialorder %v1843, 5.0
    %v1980 = vsel %vm1979, 1, 0
    %v1981 = vcvt.s32.f32 %v1980
    %v1982 = vmul.f32 %v1948, %v1874
    %v1983 = vmul.f32 %v1948, %v1880
    %v1984 = vmul.f32 %v1951, %v1874
    %v1985 = vadd.f32 %v1983, %v1984
    %v1986 = vmul.f32 %v1948, %v1881
    %v1987 = vmul.f32 %v1951, %v1880
    %v1988 = vadd.f32 %v1986, %v1987
    %v1989 = vmul.f32 %v1954, %v1874
    %v1990 = vadd.f32 %v1988, %v1989
    %v1991 = vmul.f32 %v1951, %v1881
    %v1992 = vmul.f32 %v1954, %v1880
    %v1993 = vadd.f32 %v1991, %v1992
    %v1994 = vmul.f32 %v1957, %v1874
    %v1995 = vadd.f32 %v1993, %v1994
    %v1996 = vmul.f32 %v1954, %v1881
    %v1997 = vmul.f32 %v1957, %v1880
    %v1998 = vadd.f32 %v1996, %v1997
    %v1999 = vmul.f32 %v1960, %v1874
    %v2000 = vadd.f32 %v1998, %v1999
    %v2001 = vmul.f32 %v1957, %v1881
    %v2002 = vmul.f32 %v1960, %v1880
    %v2003 = vadd.f32 %v2001, %v2002
    %v2004 = vmul.f32 %v1963, %v1874
    %v2005 = vadd.f32 %v2003, %v2004
    %v2006 = vmul.f32 %v1960, %v1881
    %v2007 = vmul.f32 %v1963, %v1880
    %v2008 = vadd.f32 %v2006, %v2007
    %v2009 = vmul.f32 %v1963, %v1881
    %v2010 = vmul.f32 %v1948, %v1892
    %v2011 = vmul.f32 %v1948, %v1893
    %v2012 = vmul.f32 %v1951, %v1892
    %v2013 = vadd.f32 %v2011, %v2012
    %v2014 = vmul.f32 %v1948, %v1894
    %v2015 = vmul.f32 %v1951, %v1893
    %v2016 = vadd.f32 %v2014, %v2015
    %v2017 = vmul.f32 %v1954, %v1892
    %v2018 = vadd.f32 %v2016, %v2017
    %v2019 = vmul.f32 %v1951, %v1894
    %v2020 = vmul.f32 %v1954, %v1893
    %v2021 = vadd.f32 %v2019, %v2020
    %v2022 = vmul.f32 %v1957, %v1892
    %v2023 = vadd.f32 %v2021, %v2022
    %v2024 = vmul.f32 %v1954, %v1894
    %v2025 = vmul.f32 %v1957, %v1893
    %v2026 = vadd.f32 %v2024, %v2025
    %v2027 = vmul.f32 %v1960, %v1892
    %v2028 = vadd.f32 %v2026, %v2027
    %v2029 = vmul.f32 %v1957, %v1894
    %v2030 = vmul.f32 %v1960, %v1893
    %v2031 = vadd.f32 %v2029, %v2030
    %v2032 = vmul.f32 %v1963, %v1892
    %v2033 = vadd.f32 %v2031, %v2032
    %v2034 = vmul.f32 %v1960, %v1894
    %v2035 = vmul.f32 %v1963, %v1893
    %v2036 = vadd.f32 %v2034, %v2035
    %v2037 = vmul.f32 %v1963, %v1894
    %v2038 = vmul.f32 %v1966, %v1925
    %v2039 = vmul.f32 %v1966, %v1931
    %v2040 = vmul.f32 %v1969, %v1925
    %v2041 = vadd.f32 %v2039, %v2040
    %v2042 = vmul.f32 %v1966, %v1932
    %v2043 = vmul.f32 %v1969, %v1931
    %v2044 = vadd.f32 %v2042, %v2043
    %v2045 = vmul.f32 %v1972, %v1925
    %v2046 = vadd.f32 %v2044, %v2045
    %v2047 = vmul.f32 %v1969, %v1932
    %v2048 = vmul.f32 %v1972, %v1931
    %v2049 = vadd.f32 %v2047, %v2048
    %v2050 = vmul.f32 %v1975, %v1925
    %v2051 = vadd.f32 %v2049, %v2050
    %v2052 = vmul.f32 %v1972, %v1932
    %v2053 = vmul.f32 %v1975, %v1931
    %v2054 = vadd.f32 %v2052, %v2053
    %v2055 = vmul.f32 %v1978, %v1925
    %v2056 = vadd.f32 %v2054, %v2055
    %v2057 = vmul.f32 %v1975, %v1932
    %v2058 = vmul.f32 %v1978, %v1931
    %v2059 = vadd.f32 %v2057, %v2058
    %v2060 = vmul.f32 %v1981, %v1925
    %v2061 = vadd.f32 %v2059, %v2060
    %v2062 = vmul.f32 %v1978, %v1932
    %v2063 = vmul.f32 %v1981, %v1931
    %v2064 = vadd.f32 %v2062, %v2063
    %v2065 = vmul.f32 %v1981, %v1932
    %v2066 = vmul.f32 %v1966, %v1943
    %v2067 = vmul.f32 %v1966, %v1944
    %v2068 = vmul.f32 %v1969, %v1943
    %v2069 = vadd.f32 %v2067, %v2068
    %v2070 = vmul.f32 %v1966, %v1945
    %v2071 = vmul.f32 %v1969, %v1944
    %v2072 = vadd.f32 %v2070, %v2071
    %v2073 = vmul.f32 %v1972, %v1943
    %v2074 = vadd.f32 %v2072, %v2073
    %v2075 = vmul.f32 %v1969, %v1945
    %v2076 = vmul.f32 %v1972, %v1944
    %v2077 = vadd.f32 %v2075, %v2076
    %v2078 = vmul.f32 %v1975, %v1943
    %v2079 = vadd.f32 %v2077, %v2078
    %v2080 = vmul.f32 %v1972, %v1945
    %v2081 = vmul.f32 %v1975, %v1944
    %v2082 = vadd.f32 %v2080, %v2081
    %v2083 = vmul.f32 %v1978, %v1943
    %v2084 = vadd.f32 %v2082, %v2083
    %v2085 = vmul.f32 %v1975, %v1945
    %v2086 = vmul.f32 %v1978, %v1944
    %v2087 = vadd.f32 %v2085, %v2086
    %v2088 = vmul.f32 %v1981, %v1943
    %v2089 = vadd.f32 %v2087, %v2088
    %v2090 = vmul.f32 %v1978, %v1945
    %v2091 = vmul.f32 %v1981, %v1944
    %v2092 = vadd.f32 %v2090, %v2091
    %v2093 = vmul.f32 %v1981, %v1945
    %s2094 = sld [smem:[#allocation2]]
    %v2095 = vstv %s2094
    %v2096 = vmul.f32 %v2038, %v2095
    %v2097 = vmul.f32 %v2066, %v2095
    %s2098 = sld [smem:[#allocation2 + $0x4]]
    %v2099 = vstv %s2098
    %v2100 = vmul.f32 %v2041, %v2099
    %v2101 = vadd.f32 %v2096, %v2100
    %v2102 = vmul.f32 %v2069, %v2099
    %v2103 = vadd.f32 %v2097, %v2102
    %s2104 = sld [smem:[#allocation2 + $0x8]]
    %v2105 = vstv %s2104
    %v2106 = vmul.f32 %v2046, %v2105
    %v2107 = vadd.f32 %v2101, %v2106
    %v2108 = vmul.f32 %v2074, %v2105
    %v2109 = vadd.f32 %v2103, %v2108
    %s2110 = sld [smem:[#allocation2 + $0xc]]
    %v2111 = vstv %s2110
    %v2112 = vmul.f32 %v2051, %v2111
    %v2113 = vadd.f32 %v2107, %v2112
    %v2114 = vmul.f32 %v2079, %v2111
    %v2115 = vadd.f32 %v2109, %v2114
    %s2116 = sld [smem:[#allocation2 + $0x10]]
    %v2117 = vstv %s2116
    %v2118 = vmul.f32 %v2056, %v2117
    %v2119 = vadd.f32 %v2113, %v2118
    %v2120 = vmul.f32 %v2084, %v2117
    %v2121 = vadd.f32 %v2115, %v2120
    %s2122 = sld [smem:[#allocation2 + $0x14]]
    %v2123 = vstv %s2122
    %v2124 = vmul.f32 %v2061, %v2123
    %v2125 = vadd.f32 %v2119, %v2124
    %v2126 = vmul.f32 %v2089, %v2123
    %v2127 = vadd.f32 %v2121, %v2126
    %s2128 = sld [smem:[#allocation2 + $0x18]]
    %v2129 = vstv %s2128
    %v2130 = vmul.f32 %v2064, %v2129
    %v2131 = vadd.f32 %v2125, %v2130
    %v2132 = vmul.f32 %v2092, %v2129
    %v2133 = vadd.f32 %v2127, %v2132
    %s2134 = sld [smem:[#allocation2 + $0x1c]]
    %v2135 = vstv %s2134
    %v2136 = vmul.f32 %v2065, %v2135
    %v2137 = vadd.f32 %v2131, %v2136
    %v2138 = vmul.f32 %v2093, %v2135
    %v2139 = vadd.f32 %v2133, %v2138
    %v2140 = vmul.f32 %v1982, %v2137
    %v2141 = vmul.f32 %v2010, %v2137
    %v2142 = vmul.f32 %v1982, %v2139
    %s2143 = sld [smem:[#allocation2 + $0x20]]
    %v2144 = vstv %s2143
    %v2145 = vmul.f32 %v2038, %v2144
    %v2146 = vmul.f32 %v2066, %v2144
    %s2147 = sld [smem:[#allocation2 + $0x24]]
    %v2148 = vstv %s2147
    %v2149 = vmul.f32 %v2041, %v2148
    %v2150 = vadd.f32 %v2145, %v2149
    %v2151 = vmul.f32 %v2069, %v2148
    %v2152 = vadd.f32 %v2146, %v2151
    %s2153 = sld [smem:[#allocation2 + $0x28]]
    %v2154 = vstv %s2153
    %v2155 = vmul.f32 %v2046, %v2154
    %v2156 = vadd.f32 %v2150, %v2155
    %v2157 = vmul.f32 %v2074, %v2154
    %v2158 = vadd.f32 %v2152, %v2157
    %s2159 = sld [smem:[#allocation2 + $0x2c]]
    %v2160 = vstv %s2159
    %v2161 = vmul.f32 %v2051, %v2160
    %v2162 = vadd.f32 %v2156, %v2161
    %v2163 = vmul.f32 %v2079, %v2160
    %v2164 = vadd.f32 %v2158, %v2163
    %s2165 = sld [smem:[#allocation2 + $0x30]]
    %v2166 = vstv %s2165
    %v2167 = vmul.f32 %v2056, %v2166
    %v2168 = vadd.f32 %v2162, %v2167
    %v2169 = vmul.f32 %v2084, %v2166
    %v2170 = vadd.f32 %v2164, %v2169
    %s2171 = sld [smem:[#allocation2 + $0x34]]
    %v2172 = vstv %s2171
    %v2173 = vmul.f32 %v2061, %v2172
    %v2174 = vadd.f32 %v2168, %v2173
    %v2175 = vmul.f32 %v2089, %v2172
    %v2176 = vadd.f32 %v2170, %v2175
    %s2177 = sld [smem:[#allocation2 + $0x38]]
    %v2178 = vstv %s2177
    %v2179 = vmul.f32 %v2064, %v2178
    %v2180 = vadd.f32 %v2174, %v2179
    %v2181 = vmul.f32 %v2092, %v2178
    %v2182 = vadd.f32 %v2176, %v2181
    %s2183 = sld [smem:[#allocation2 + $0x3c]]
    %v2184 = vstv %s2183
    %v2185 = vmul.f32 %v2065, %v2184
    %v2186 = vadd.f32 %v2180, %v2185
    %v2187 = vmul.f32 %v2093, %v2184
    %v2188 = vadd.f32 %v2182, %v2187
    %v2189 = vmul.f32 %v1985, %v2186
    %v2190 = vadd.f32 %v2140, %v2189
    %v2191 = vmul.f32 %v2013, %v2186
    %v2192 = vadd.f32 %v2141, %v2191
    %v2193 = vmul.f32 %v1985, %v2188
    %v2194 = vadd.f32 %v2142, %v2193
    %s2195 = sld [smem:[#allocation2 + $0x40]]
    %v2196 = vstv %s2195
    %v2197 = vmul.f32 %v2038, %v2196
    %v2198 = vmul.f32 %v2066, %v2196
    %s2199 = sld [smem:[#allocation2 + $0x44]]
    %v2200 = vstv %s2199
    %v2201 = vmul.f32 %v2041, %v2200
    %v2202 = vadd.f32 %v2197, %v2201
    %v2203 = vmul.f32 %v2069, %v2200
    %v2204 = vadd.f32 %v2198, %v2203
    %s2205 = sld [smem:[#allocation2 + $0x48]]
    %v2206 = vstv %s2205
    %v2207 = vmul.f32 %v2046, %v2206
    %v2208 = vadd.f32 %v2202, %v2207
    %v2209 = vmul.f32 %v2074, %v2206
    %v2210 = vadd.f32 %v2204, %v2209
    %s2211 = sld [smem:[#allocation2 + $0x4c]]
    %v2212 = vstv %s2211
    %v2213 = vmul.f32 %v2051, %v2212
    %v2214 = vadd.f32 %v2208, %v2213
    %v2215 = vmul.f32 %v2079, %v2212
    %v2216 = vadd.f32 %v2210, %v2215
    %s2217 = sld [smem:[#allocation2 + $0x50]]
    %v2218 = vstv %s2217
    %v2219 = vmul.f32 %v2056, %v2218
    %v2220 = vadd.f32 %v2214, %v2219
    %v2221 = vmul.f32 %v2084, %v2218
    %v2222 = vadd.f32 %v2216, %v2221
    %s2223 = sld [smem:[#allocation2 + $0x54]]
    %v2224 = vstv %s2223
    %v2225 = vmul.f32 %v2061, %v2224
    %v2226 = vadd.f32 %v2220, %v2225
    %v2227 = vmul.f32 %v2089, %v2224
    %v2228 = vadd.f32 %v2222, %v2227
    %s2229 = sld [smem:[#allocation2 + $0x58]]
    %v2230 = vstv %s2229
    %v2231 = vmul.f32 %v2064, %v2230
    %v2232 = vadd.f32 %v2226, %v2231
    %v2233 = vmul.f32 %v2092, %v2230
    %v2234 = vadd.f32 %v2228, %v2233
    %s2235 = sld [smem:[#allocation2 + $0x5c]]
    %v2236 = vstv %s2235
    %v2237 = vmul.f32 %v2065, %v2236
    %v2238 = vadd.f32 %v2232, %v2237
    %v2239 = vmul.f32 %v2093, %v2236
    %v2240 = vadd.f32 %v2234, %v2239
    %v2241 = vmul.f32 %v1990, %v2238
    %v2242 = vadd.f32 %v2190, %v2241
    %v2243 = vmul.f32 %v2018, %v2238
    %v2244 = vadd.f32 %v2192, %v2243
    %v2245 = vmul.f32 %v1990, %v2240
    %v2246 = vadd.f32 %v2194, %v2245
    %s2247 = sld [smem:[#allocation2 + $0x60]]
    %v2248 = vstv %s2247
    %v2249 = vmul.f32 %v2038, %v2248
    %v2250 = vmul.f32 %v2066, %v2248
    %s2251 = sld [smem:[#allocation2 + $0x64]]
    %v2252 = vstv %s2251
    %v2253 = vmul.f32 %v2041, %v2252
    %v2254 = vadd.f32 %v2249, %v2253
    %v2255 = vmul.f32 %v2069, %v2252
    %v2256 = vadd.f32 %v2250, %v2255
    %s2257 = sld [smem:[#allocation2 + $0x68]]
    %v2258 = vstv %s2257
    %v2259 = vmul.f32 %v2046, %v2258
    %v2260 = vadd.f32 %v2254, %v2259
    %v2261 = vmul.f32 %v2074, %v2258
    %v2262 = vadd.f32 %v2256, %v2261
    %s2263 = sld [smem:[#allocation2 + $0x6c]]
    %v2264 = vstv %s2263
    %v2265 = vmul.f32 %v2051, %v2264
    %v2266 = vadd.f32 %v2260, %v2265
    %v2267 = vmul.f32 %v2079, %v2264
    %v2268 = vadd.f32 %v2262, %v2267
    %s2269 = sld [smem:[#allocation2 + $0x70]]
    %v2270 = vstv %s2269
    %v2271 = vmul.f32 %v2056, %v2270
    %v2272 = vadd.f32 %v2266, %v2271
    %v2273 = vmul.f32 %v2084, %v2270
    %v2274 = vadd.f32 %v2268, %v2273
    %s2275 = sld [smem:[#allocation2 + $0x74]]
    %v2276 = vstv %s2275
    %v2277 = vmul.f32 %v2061, %v2276
    %v2278 = vadd.f32 %v2272, %v2277
    %v2279 = vmul.f32 %v2089, %v2276
    %v2280 = vadd.f32 %v2274, %v2279
    %s2281 = sld [smem:[#allocation2 + $0x78]]
    %v2282 = vstv %s2281
    %v2283 = vmul.f32 %v2064, %v2282
    %v2284 = vadd.f32 %v2278, %v2283
    %v2285 = vmul.f32 %v2092, %v2282
    %v2286 = vadd.f32 %v2280, %v2285
    %s2287 = sld [smem:[#allocation2 + $0x7c]]
    %v2288 = vstv %s2287
    %v2289 = vmul.f32 %v2065, %v2288
    %v2290 = vadd.f32 %v2284, %v2289
    %v2291 = vmul.f32 %v2093, %v2288
    %v2292 = vadd.f32 %v2286, %v2291
    %v2293 = vmul.f32 %v1995, %v2290
    %v2294 = vadd.f32 %v2242, %v2293
    %v2295 = vmul.f32 %v2023, %v2290
    %v2296 = vadd.f32 %v2244, %v2295
    %v2297 = vmul.f32 %v1995, %v2292
    %v2298 = vadd.f32 %v2246, %v2297
    %s2299 = sld [smem:[#allocation2 + $0x80]]
    %v2300 = vstv %s2299
    %v2301 = vmul.f32 %v2038, %v2300
    %v2302 = vmul.f32 %v2066, %v2300
    %s2303 = sld [smem:[#allocation2 + $0x84]]
    %v2304 = vstv %s2303
    %v2305 = vmul.f32 %v2041, %v2304
    %v2306 = vadd.f32 %v2301, %v2305
    %v2307 = vmul.f32 %v2069, %v2304
    %v2308 = vadd.f32 %v2302, %v2307
    %s2309 = sld [smem:[#allocation2 + $0x88]]
    %v2310 = vstv %s2309
    %v2311 = vmul.f32 %v2046, %v2310
    %v2312 = vadd.f32 %v2306, %v2311
    %v2313 = vmul.f32 %v2074, %v2310
    %v2314 = vadd.f32 %v2308, %v2313
    %s2315 = sld [smem:[#allocation2 + $0x8c]]
    %v2316 = vstv %s2315
    %v2317 = vmul.f32 %v2051, %v2316
    %v2318 = vadd.f32 %v2312, %v2317
    %v2319 = vmul.f32 %v2079, %v2316
    %v2320 = vadd.f32 %v2314, %v2319
    %s2321 = sld [smem:[#allocation2 + $0x90]]
    %v2322 = vstv %s2321
    %v2323 = vmul.f32 %v2056, %v2322
    %v2324 = vadd.f32 %v2318, %v2323
    %v2325 = vmul.f32 %v2084, %v2322
    %v2326 = vadd.f32 %v2320, %v2325
    %s2327 = sld [smem:[#allocation2 + $0x94]]
    %v2328 = vstv %s2327
    %v2329 = vmul.f32 %v2061, %v2328
    %v2330 = vadd.f32 %v2324, %v2329
    %v2331 = vmul.f32 %v2089, %v2328
    %v2332 = vadd.f32 %v2326, %v2331
    %s2333 = sld [smem:[#allocation2 + $0x98]]
    %v2334 = vstv %s2333
    %v2335 = vmul.f32 %v2064, %v2334
    %v2336 = vadd.f32 %v2330, %v2335
    %v2337 = vmul.f32 %v2092, %v2334
    %v2338 = vadd.f32 %v2332, %v2337
    %s2339 = sld [smem:[#allocation2 + $0x9c]]
    %v2340 = vstv %s2339
    %v2341 = vmul.f32 %v2065, %v2340
    %v2342 = vadd.f32 %v2336, %v2341
    %v2343 = vmul.f32 %v2093, %v2340
    %v2344 = vadd.f32 %v2338, %v2343
    %v2345 = vmul.f32 %v2000, %v2342
    %v2346 = vadd.f32 %v2294, %v2345
    %v2347 = vmul.f32 %v2028, %v2342
    %v2348 = vadd.f32 %v2296, %v2347
    %v2349 = vmul.f32 %v2000, %v2344
    %v2350 = vadd.f32 %v2298, %v2349
    %s2351 = sld [smem:[#allocation2 + $0xa0]]
    %v2352 = vstv %s2351
    %v2353 = vmul.f32 %v2038, %v2352
    %v2354 = vmul.f32 %v2066, %v2352
    %s2355 = sld [smem:[#allocation2 + $0xa4]]
    %v2356 = vstv %s2355
    %v2357 = vmul.f32 %v2041, %v2356
    %v2358 = vadd.f32 %v2353, %v2357
    %v2359 = vmul.f32 %v2069, %v2356
    %v2360 = vadd.f32 %v2354, %v2359
    %s2361 = sld [smem:[#allocation2 + $0xa8]]
    %v2362 = vstv %s2361
    %v2363 = vmul.f32 %v2046, %v2362
    %v2364 = vadd.f32 %v2358, %v2363
    %v2365 = vmul.f32 %v2074, %v2362
    %v2366 = vadd.f32 %v2360, %v2365
    %s2367 = sld [smem:[#allocation2 + $0xac]]
    %v2368 = vstv %s2367
    %v2369 = vmul.f32 %v2051, %v2368
    %v2370 = vadd.f32 %v2364, %v2369
    %v2371 = vmul.f32 %v2079, %v2368
    %v2372 = vadd.f32 %v2366, %v2371
    %s2373 = sld [smem:[#allocation2 + $0xb0]]
    %v2374 = vstv %s2373
    %v2375 = vmul.f32 %v2056, %v2374
    %v2376 = vadd.f32 %v2370, %v2375
    %v2377 = vmul.f32 %v2084, %v2374
    %v2378 = vadd.f32 %v2372, %v2377
    %s2379 = sld [smem:[#allocation2 + $0xb4]]
    %v2380 = vstv %s2379
    %v2381 = vmul.f32 %v2061, %v2380
    %v2382 = vadd.f32 %v2376, %v2381
    %v2383 = vmul.f32 %v2089, %v2380
    %v2384 = vadd.f32 %v2378, %v2383
    %s2385 = sld [smem:[#allocation2 + $0xb8]]
    %v2386 = vstv %s2385
    %v2387 = vmul.f32 %v2064, %v2386
    %v2388 = vadd.f32 %v2382, %v2387
    %v2389 = vmul.f32 %v2092, %v2386
    %v2390 = vadd.f32 %v2384, %v2389
    %s2391 = sld [smem:[#allocation2 + $0xbc]]
    %v2392 = vstv %s2391
    %v2393 = vmul.f32 %v2065, %v2392
    %v2394 = vadd.f32 %v2388, %v2393
    %v2395 = vmul.f32 %v2093, %v2392
    %v2396 = vadd.f32 %v2390, %v2395
    %v2397 = vmul.f32 %v2005, %v2394
    %v2398 = vadd.f32 %v2346, %v2397
    %v2399 = vmul.f32 %v2033, %v2394
    %v2400 = vadd.f32 %v2348, %v2399
    %v2401 = vmul.f32 %v2005, %v2396
    %v2402 = vadd.f32 %v2350, %v2401
    %s2403 = sld [smem:[#allocation2 + $0xc0]]
    %v2404 = vstv %s2403
    %v2405 = vmul.f32 %v2038, %v2404
    %v2406 = vmul.f32 %v2066, %v2404
    %s2407 = sld [smem:[#allocation2 + $0xc4]]
    %v2408 = vstv %s2407
    %v2409 = vmul.f32 %v2041, %v2408
    %v2410 = vadd.f32 %v2405, %v2409
    %v2411 = vmul.f32 %v2069, %v2408
    %v2412 = vadd.f32 %v2406, %v2411
    %s2413 = sld [smem:[#allocation2 + $0xc8]]
    %v2414 = vstv %s2413
    %v2415 = vmul.f32 %v2046, %v2414
    %v2416 = vadd.f32 %v2410, %v2415
    %v2417 = vmul.f32 %v2074, %v2414
    %v2418 = vadd.f32 %v2412, %v2417
    %s2419 = sld [smem:[#allocation2 + $0xcc]]
    %v2420 = vstv %s2419
    %v2421 = vmul.f32 %v2051, %v2420
    %v2422 = vadd.f32 %v2416, %v2421
    %v2423 = vmul.f32 %v2079, %v2420
    %v2424 = vadd.f32 %v2418, %v2423
    %s2425 = sld [smem:[#allocation2 + $0xd0]]
    %v2426 = vstv %s2425
    %v2427 = vmul.f32 %v2056, %v2426
    %v2428 = vadd.f32 %v2422, %v2427
    %v2429 = vmul.f32 %v2084, %v2426
    %v2430 = vadd.f32 %v2424, %v2429
    %s2431 = sld [smem:[#allocation2 + $0xd4]]
    %v2432 = vstv %s2431
    %v2433 = vmul.f32 %v2061, %v2432
    %v2434 = vadd.f32 %v2428, %v2433
    %v2435 = vmul.f32 %v2089, %v2432
    %v2436 = vadd.f32 %v2430, %v2435
    %s2437 = sld [smem:[#allocation2 + $0xd8]]
    %v2438 = vstv %s2437
    %v2439 = vmul.f32 %v2064, %v2438
    %v2440 = vadd.f32 %v2434, %v2439
    %v2441 = vmul.f32 %v2092, %v2438
    %v2442 = vadd.f32 %v2436, %v2441
    %s2443 = sld [smem:[#allocation2 + $0xdc]]
    %v2444 = vstv %s2443
    %v2445 = vmul.f32 %v2065, %v2444
    %v2446 = vadd.f32 %v2440, %v2445
    %v2447 = vmul.f32 %v2093, %v2444
    %v2448 = vadd.f32 %v2442, %v2447
    %v2449 = vmul.f32 %v2008, %v2446
    %v2450 = vadd.f32 %v2398, %v2449
    %v2451 = vmul.f32 %v2036, %v2446
    %v2452 = vadd.f32 %v2400, %v2451
    %v2453 = vmul.f32 %v2008, %v2448
    %v2454 = vadd.f32 %v2402, %v2453
    %s2455 = sld [smem:[#allocation2 + $0xe0]]
    %v2456 = vstv %s2455
    %v2457 = vmul.f32 %v2038, %v2456
    %v2458 = vmul.f32 %v2066, %v2456
    %s2459 = sld [smem:[#allocation2 + $0xe4]]
    %v2460 = vstv %s2459
    %v2461 = vmul.f32 %v2041, %v2460
    %v2462 = vadd.f32 %v2457, %v2461
    %v2463 = vmul.f32 %v2069, %v2460
    %v2464 = vadd.f32 %v2458, %v2463
    %s2465 = sld [smem:[#allocation2 + $0xe8]]
    %v2466 = vstv %s2465
    %v2467 = vmul.f32 %v2046, %v2466
    %v2468 = vadd.f32 %v2462, %v2467
    %v2469 = vmul.f32 %v2074, %v2466
    %v2470 = vadd.f32 %v2464, %v2469
    %s2471 = sld [smem:[#allocation2 + $0xec]]
    %v2472 = vstv %s2471
    %v2473 = vmul.f32 %v2051, %v2472
    %v2474 = vadd.f32 %v2468, %v2473
    %v2475 = vmul.f32 %v2079, %v2472
    %v2476 = vadd.f32 %v2470, %v2475
    %s2477 = sld [smem:[#allocation2 + $0xf0]]
    %v2478 = vstv %s2477
    %v2479 = vmul.f32 %v2056, %v2478
    %v2480 = vadd.f32 %v2474, %v2479
    %v2481 = vmul.f32 %v2084, %v2478
    %v2482 = vadd.f32 %v2476, %v2481
    %s2483 = sld [smem:[#allocation2 + $0xf4]]
    %v2484 = vstv %s2483
    %v2485 = vmul.f32 %v2061, %v2484
    %v2486 = vadd.f32 %v2480, %v2485
    %v2487 = vmul.f32 %v2089, %v2484
    %v2488 = vadd.f32 %v2482, %v2487
    %s2489 = sld [smem:[#allocation2 + $0xf8]]
    %v2490 = vstv %s2489
    %v2491 = vmul.f32 %v2064, %v2490
    %v2492 = vadd.f32 %v2486, %v2491
    %v2493 = vmul.f32 %v2092, %v2490
    %v2494 = vadd.f32 %v2488, %v2493
    %s2495 = sld [smem:[#allocation2 + $0xfc]]
    %v2496 = vstv %s2495
    %v2497 = vmul.f32 %v2065, %v2496
    %v2498 = vadd.f32 %v2492, %v2497
    %v2499 = vmul.f32 %v2093, %v2496
    %v2500 = vadd.f32 %v2494, %v2499
    %v2501 = vmul.f32 %v2009, %v2498
    %v2502 = vadd.f32 %v2450, %v2501
    %v2503 = vmul.f32 %v2037, %v2498
    %v2504 = vadd.f32 %v2452, %v2503
    %v2505 = vmul.f32 %v2009, %v2500
    %v2506 = vadd.f32 %v2454, %v2505
    %2507 = vst [vmem:[#allocation7 + $0x8] sm:$0xff] %v2502
    %s2508 = sld [smem:[#allocation2 + $0x1]]
    %v2509 = vstv %s2508
    %v2510 = vmul.f32 %v2038, %v2509
    %v2511 = vmul.f32 %v2066, %v2509
    %s2512 = sld [smem:[#allocation2 + $0x5]]
    %v2513 = vstv %s2512
    %v2514 = vmul.f32 %v2041, %v2513
    %v2515 = vadd.f32 %v2510, %v2514
    %v2516 = vmul.f32 %v2069, %v2513
    %v2517 = vadd.f32 %v2511, %v2516
    %s2518 = sld [smem:[#allocation2 + $0x9]]
    %v2519 = vstv %s2518
    %v2520 = vmul.f32 %v2046, %v2519
    %v2521 = vadd.f32 %v2515, %v2520
    %v2522 = vmul.f32 %v2074, %v2519
    %v2523 = vadd.f32 %v2517, %v2522
    %s2524 = sld [smem:[#allocation2 + $0xd]]
    %v2525 = vstv %s2524
    %v2526 = vmul.f32 %v2051, %v2525
    %v2527 = vadd.f32 %v2521, %v2526
    %v2528 = vmul.f32 %v2079, %v2525
    %v2529 = vadd.f32 %v2523, %v2528
    %s2530 = sld [smem:[#allocation2 + $0x11]]
    %v2531 = vstv %s2530
    %v2532 = vmul.f32 %v2056, %v2531
    %v2533 = vadd.f32 %v2527, %v2532
    %v2534 = vmul.f32 %v2084, %v2531
    %v2535 = vadd.f32 %v2529, %v2534
    %s2536 = sld [smem:[#allocation2 + $0x15]]
    %v2537 = vstv %s2536
    %v2538 = vmul.f32 %v2061, %v2537
    %v2539 = vadd.f32 %v2533, %v2538
    %v2540 = vmul.f32 %v2089, %v2537
    %v2541 = vadd.f32 %v2535, %v2540
    %s2542 = sld [smem:[#allocation2 + $0x19]]
    %v2543 = vstv %s2542
    %v2544 = vmul.f32 %v2064, %v2543
    %v2545 = vadd.f32 %v2539, %v2544
    %v2546 = vmul.f32 %v2092, %v2543
    %v2547 = vadd.f32 %v2541, %v2546
    %s2548 = sld [smem:[#allocation2 + $0x1d]]
    %v2549 = vstv %s2548
    %v2550 = vmul.f32 %v2065, %v2549
    %v2551 = vadd.f32 %v2545, %v2550
    %v2552 = vmul.f32 %v2093, %v2549
    %v2553 = vadd.f32 %v2547, %v2552
    %v2554 = vmul.f32 %v1982, %v2551
    %v2555 = vmul.f32 %v2010, %v2551
    %v2556 = vmul.f32 %v1982, %v2553
    %s2557 = sld [smem:[#allocation2 + $0x21]]
    %v2558 = vstv %s2557
    %v2559 = vmul.f32 %v2038, %v2558
    %v2560 = vmul.f32 %v2066, %v2558
    %s2561 = sld [smem:[#allocation2 + $0x25]]
    %v2562 = vstv %s2561
    %v2563 = vmul.f32 %v2041, %v2562
    %v2564 = vadd.f32 %v2559, %v2563
    %v2565 = vmul.f32 %v2069, %v2562
    %v2566 = vadd.f32 %v2560, %v2565
    %s2567 = sld [smem:[#allocation2 + $0x29]]
    %v2568 = vstv %s2567
    %v2569 = vmul.f32 %v2046, %v2568
    %v2570 = vadd.f32 %v2564, %v2569
    %v2571 = vmul.f32 %v2074, %v2568
    %v2572 = vadd.f32 %v2566, %v2571
    %s2573 = sld [smem:[#allocation2 + $0x2d]]
    %v2574 = vstv %s2573
    %v2575 = vmul.f32 %v2051, %v2574
    %v2576 = vadd.f32 %v2570, %v2575
    %v2577 = vmul.f32 %v2079, %v2574
    %v2578 = vadd.f32 %v2572, %v2577
    %s2579 = sld [smem:[#allocation2 + $0x31]]
    %v2580 = vstv %s2579
    %v2581 = vmul.f32 %v2056, %v2580
    %v2582 = vadd.f32 %v2576, %v2581
    %v2583 = vmul.f32 %v2084, %v2580
    %v2584 = vadd.f32 %v2578, %v2583
    %s2585 = sld [smem:[#allocation2 + $0x35]]
    %v2586 = vstv %s2585
    %v2587 = vmul.f32 %v2061, %v2586
    %v2588 = vadd.f32 %v2582, %v2587
    %v2589 = vmul.f32 %v2089, %v2586
    %v2590 = vadd.f32 %v2584, %v2589
    %s2591 = sld [smem:[#allocation2 + $0x39]]
    %v2592 = vstv %s2591
    %v2593 = vmul.f32 %v2064, %v2592
    %v2594 = vadd.f32 %v2588, %v2593
    %v2595 = vmul.f32 %v2092, %v2592
    %v2596 = vadd.f32 %v2590, %v2595
    %s2597 = sld [smem:[#allocation2 + $0x3d]]
    %v2598 = vstv %s2597
    %v2599 = vmul.f32 %v2065, %v2598
    %v2600 = vadd.f32 %v2594, %v2599
    %v2601 = vmul.f32 %v2093, %v2598
    %v2602 = vadd.f32 %v2596, %v2601
    %v2603 = vmul.f32 %v1985, %v2600
    %v2604 = vadd.f32 %v2554, %v2603
    %v2605 = vmul.f32 %v2013, %v2600
    %v2606 = vadd.f32 %v2555, %v2605
    %v2607 = vmul.f32 %v1985, %v2602
    %v2608 = vadd.f32 %v2556, %v2607
    %s2609 = sld [smem:[#allocation2 + $0x41]]
    %v2610 = vstv %s2609
    %v2611 = vmul.f32 %v2038, %v2610
    %v2612 = vmul.f32 %v2066, %v2610
    %s2613 = sld [smem:[#allocation2 + $0x45]]
    %v2614 = vstv %s2613
    %v2615 = vmul.f32 %v2041, %v2614
    %v2616 = vadd.f32 %v2611, %v2615
    %v2617 = vmul.f32 %v2069, %v2614
    %v2618 = vadd.f32 %v2612, %v2617
    %s2619 = sld [smem:[#allocation2 + $0x49]]
    %v2620 = vstv %s2619
    %v2621 = vmul.f32 %v2046, %v2620
    %v2622 = vadd.f32 %v2616, %v2621
    %v2623 = vmul.f32 %v2074, %v2620
    %v2624 = vadd.f32 %v2618, %v2623
    %s2625 = sld [smem:[#allocation2 + $0x4d]]
    %v2626 = vstv %s2625
    %v2627 = vmul.f32 %v2051, %v2626
    %v2628 = vadd.f32 %v2622, %v2627
    %v2629 = vmul.f32 %v2079, %v2626
    %v2630 = vadd.f32 %v2624, %v2629
    %s2631 = sld [smem:[#allocation2 + $0x51]]
    %v2632 = vstv %s2631
    %v2633 = vmul.f32 %v2056, %v2632
    %v2634 = vadd.f32 %v2628, %v2633
    %v2635 = vmul.f32 %v2084, %v2632
    %v2636 = vadd.f32 %v2630, %v2635
    %s2637 = sld [smem:[#allocation2 + $0x55]]
    %v2638 = vstv %s2637
    %v2639 = vmul.f32 %v2061, %v2638
    %v2640 = vadd.f32 %v2634, %v2639
    %v2641 = vmul.f32 %v2089, %v2638
    %v2642 = vadd.f32 %v2636, %v2641
    %s2643 = sld [smem:[#allocation2 + $0x59]]
    %v2644 = vstv %s2643
    %v2645 = vmul.f32 %v2064, %v2644
    %v2646 = vadd.f32 %v2640, %v2645
    %v2647 = vmul.f32 %v2092, %v2644
    %v2648 = vadd.f32 %v2642, %v2647
    %s2649 = sld [smem:[#allocation2 + $0x5d]]
    %v2650 = vstv %s2649
    %v2651 = vmul.f32 %v2065, %v2650
    %v2652 = vadd.f32 %v2646, %v2651
    %v2653 = vmul.f32 %v2093, %v2650
    %v2654 = vadd.f32 %v2648, %v2653
    %v2655 = vmul.f32 %v1990, %v2652
    %v2656 = vadd.f32 %v2604, %v2655
    %v2657 = vmul.f32 %v2018, %v2652
    %v2658 = vadd.f32 %v2606, %v2657
    %v2659 = vmul.f32 %v1990, %v2654
    %v2660 = vadd.f32 %v2608, %v2659
    %s2661 = sld [smem:[#allocation2 + $0x61]]
    %v2662 = vstv %s2661
    %v2663 = vmul.f32 %v2038, %v2662
    %v2664 = vmul.f32 %v2066, %v2662
    %s2665 = sld [smem:[#allocation2 + $0x65]]
    %v2666 = vstv %s2665
    %v2667 = vmul.f32 %v2041, %v2666
    %v2668 = vadd.f32 %v2663, %v2667
    %v2669 = vmul.f32 %v2069, %v2666
    %v2670 = vadd.f32 %v2664, %v2669
    %s2671 = sld [smem:[#allocation2 + $0x69]]
    %v2672 = vstv %s2671
    %v2673 = vmul.f32 %v2046, %v2672
    %v2674 = vadd.f32 %v2668, %v2673
    %v2675 = vmul.f32 %v2074, %v2672
    %v2676 = vadd.f32 %v2670, %v2675
    %s2677 = sld [smem:[#allocation2 + $0x6d]]
    %v2678 = vstv %s2677
    %v2679 = vmul.f32 %v2051, %v2678
    %v2680 = vadd.f32 %v2674, %v2679
    %v2681 = vmul.f32 %v2079, %v2678
    %v2682 = vadd.f32 %v2676, %v2681
    %s2683 = sld [smem:[#allocation2 + $0x71]]
    %v2684 = vstv %s2683
    %v2685 = vmul.f32 %v2056, %v2684
    %v2686 = vadd.f32 %v2680, %v2685
    %v2687 = vmul.f32 %v2084, %v2684
    %v2688 = vadd.f32 %v2682, %v2687
    %s2689 = sld [smem:[#allocation2 + $0x75]]
    %v2690 = vstv %s2689
    %v2691 = vmul.f32 %v2061, %v2690
    %v2692 = vadd.f32 %v2686, %v2691
    %v2693 = vmul.f32 %v2089, %v2690
    %v2694 = vadd.f32 %v2688, %v2693
    %s2695 = sld [smem:[#allocation2 + $0x79]]
    %v2696 = vstv %s2695
    %v2697 = vmul.f32 %v2064, %v2696
    %v2698 = vadd.f32 %v2692, %v2697
    %v2699 = vmul.f32 %v2092, %v2696
    %v2700 = vadd.f32 %v2694, %v2699
    %s2701 = sld [smem:[#allocation2 + $0x7d]]
    %v2702 = vstv %s2701
    %v2703 = vmul.f32 %v2065, %v2702
    %v2704 = vadd.f32 %v2698, %v2703
    %v2705 = vmul.f32 %v2093, %v2702
    %v2706 = vadd.f32 %v2700, %v2705
    %v2707 = vmul.f32 %v1995, %v2704
    %v2708 = vadd.f32 %v2656, %v2707
    %v2709 = vmul.f32 %v2023, %v2704
    %v2710 = vadd.f32 %v2658, %v2709
    %v2711 = vmul.f32 %v1995, %v2706
    %v2712 = vadd.f32 %v2660, %v2711
    %s2713 = sld [smem:[#allocation2 + $0x81]]
    %v2714 = vstv %s2713
    %v2715 = vmul.f32 %v2038, %v2714
    %v2716 = vmul.f32 %v2066, %v2714
    %s2717 = sld [smem:[#allocation2 + $0x85]]
    %v2718 = vstv %s2717
    %v2719 = vmul.f32 %v2041, %v2718
    %v2720 = vadd.f32 %v2715, %v2719
    %v2721 = vmul.f32 %v2069, %v2718
    %v2722 = vadd.f32 %v2716, %v2721
    %s2723 = sld [smem:[#allocation2 + $0x89]]
    %v2724 = vstv %s2723
    %v2725 = vmul.f32 %v2046, %v2724
    %v2726 = vadd.f32 %v2720, %v2725
    %v2727 = vmul.f32 %v2074, %v2724
    %v2728 = vadd.f32 %v2722, %v2727
    %s2729 = sld [smem:[#allocation2 + $0x8d]]
    %v2730 = vstv %s2729
    %v2731 = vmul.f32 %v2051, %v2730
    %v2732 = vadd.f32 %v2726, %v2731
    %v2733 = vmul.f32 %v2079, %v2730
    %v2734 = vadd.f32 %v2728, %v2733
    %s2735 = sld [smem:[#allocation2 + $0x91]]
    %v2736 = vstv %s2735
    %v2737 = vmul.f32 %v2056, %v2736
    %v2738 = vadd.f32 %v2732, %v2737
    %v2739 = vmul.f32 %v2084, %v2736
    %v2740 = vadd.f32 %v2734, %v2739
    %s2741 = sld [smem:[#allocation2 + $0x95]]
    %v2742 = vstv %s2741
    %v2743 = vmul.f32 %v2061, %v2742
    %v2744 = vadd.f32 %v2738, %v2743
    %v2745 = vmul.f32 %v2089, %v2742
    %v2746 = vadd.f32 %v2740, %v2745
    %s2747 = sld [smem:[#allocation2 + $0x99]]
    %v2748 = vstv %s2747
    %v2749 = vmul.f32 %v2064, %v2748
    %v2750 = vadd.f32 %v2744, %v2749
    %v2751 = vmul.f32 %v2092, %v2748
    %v2752 = vadd.f32 %v2746, %v2751
    %s2753 = sld [smem:[#allocation2 + $0x9d]]
    %v2754 = vstv %s2753
    %v2755 = vmul.f32 %v2065, %v2754
    %v2756 = vadd.f32 %v2750, %v2755
    %v2757 = vmul.f32 %v2093, %v2754
    %v2758 = vadd.f32 %v2752, %v2757
    %v2759 = vmul.f32 %v2000, %v2756
    %v2760 = vadd.f32 %v2708, %v2759
    %v2761 = vmul.f32 %v2028, %v2756
    %v2762 = vadd.f32 %v2710, %v2761
    %v2763 = vmul.f32 %v2000, %v2758
    %v2764 = vadd.f32 %v2712, %v2763
    %s2765 = sld [smem:[#allocation2 + $0xa1]]
    %v2766 = vstv %s2765
    %v2767 = vmul.f32 %v2038, %v2766
    %v2768 = vmul.f32 %v2066, %v2766
    %s2769 = sld [smem:[#allocation2 + $0xa5]]
    %v2770 = vstv %s2769
    %v2771 = vmul.f32 %v2041, %v2770
    %v2772 = vadd.f32 %v2767, %v2771
    %v2773 = vmul.f32 %v2069, %v2770
    %v2774 = vadd.f32 %v2768, %v2773
    %s2775 = sld [smem:[#allocation2 + $0xa9]]
    %v2776 = vstv %s2775
    %v2777 = vmul.f32 %v2046, %v2776
    %v2778 = vadd.f32 %v2772, %v2777
    %v2779 = vmul.f32 %v2074, %v2776
    %v2780 = vadd.f32 %v2774, %v2779
    %s2781 = sld [smem:[#allocation2 + $0xad]]
    %v2782 = vstv %s2781
    %v2783 = vmul.f32 %v2051, %v2782
    %v2784 = vadd.f32 %v2778, %v2783
    %v2785 = vmul.f32 %v2079, %v2782
    %v2786 = vadd.f32 %v2780, %v2785
    %s2787 = sld [smem:[#allocation2 + $0xb1]]
    %v2788 = vstv %s2787
    %v2789 = vmul.f32 %v2056, %v2788
    %v2790 = vadd.f32 %v2784, %v2789
    %v2791 = vmul.f32 %v2084, %v2788
    %v2792 = vadd.f32 %v2786, %v2791
    %s2793 = sld [smem:[#allocation2 + $0xb5]]
    %v2794 = vstv %s2793
    %v2795 = vmul.f32 %v2061, %v2794
    %v2796 = vadd.f32 %v2790, %v2795
    %v2797 = vmul.f32 %v2089, %v2794
    %v2798 = vadd.f32 %v2792, %v2797
    %s2799 = sld [smem:[#allocation2 + $0xb9]]
    %v2800 = vstv %s2799
    %v2801 = vmul.f32 %v2064, %v2800
    %v2802 = vadd.f32 %v2796, %v2801
    %v2803 = vmul.f32 %v2092, %v2800
    %v2804 = vadd.f32 %v2798, %v2803
    %s2805 = sld [smem:[#allocation2 + $0xbd]]
    %v2806 = vstv %s2805
    %v2807 = vmul.f32 %v2065, %v2806
    %v2808 = vadd.f32 %v2802, %v2807
    %v2809 = vmul.f32 %v2093, %v2806
    %v2810 = vadd.f32 %v2804, %v2809
    %v2811 = vmul.f32 %v2005, %v2808
    %v2812 = vadd.f32 %v2760, %v2811
    %v2813 = vmul.f32 %v2033, %v2808
    %v2814 = vadd.f32 %v2762, %v2813
    %v2815 = vmul.f32 %v2005, %v2810
    %v2816 = vadd.f32 %v2764, %v2815
    %s2817 = sld [smem:[#allocation2 + $0xc1]]
    %v2818 = vstv %s2817
    %v2819 = vmul.f32 %v2038, %v2818
    %v2820 = vmul.f32 %v2066, %v2818
    %s2821 = sld [smem:[#allocation2 + $0xc5]]
    %v2822 = vstv %s2821
    %v2823 = vmul.f32 %v2041, %v2822
    %v2824 = vadd.f32 %v2819, %v2823
    %v2825 = vmul.f32 %v2069, %v2822
    %v2826 = vadd.f32 %v2820, %v2825
    %s2827 = sld [smem:[#allocation2 + $0xc9]]
    %v2828 = vstv %s2827
    %v2829 = vmul.f32 %v2046, %v2828
    %v2830 = vadd.f32 %v2824, %v2829
    %v2831 = vmul.f32 %v2074, %v2828
    %v2832 = vadd.f32 %v2826, %v2831
    %s2833 = sld [smem:[#allocation2 + $0xcd]]
    %v2834 = vstv %s2833
    %v2835 = vmul.f32 %v2051, %v2834
    %v2836 = vadd.f32 %v2830, %v2835
    %v2837 = vmul.f32 %v2079, %v2834
    %v2838 = vadd.f32 %v2832, %v2837
    %s2839 = sld [smem:[#allocation2 + $0xd1]]
    %v2840 = vstv %s2839
    %v2841 = vmul.f32 %v2056, %v2840
    %v2842 = vadd.f32 %v2836, %v2841
    %v2843 = vmul.f32 %v2084, %v2840
    %v2844 = vadd.f32 %v2838, %v2843
    %s2845 = sld [smem:[#allocation2 + $0xd5]]
    %v2846 = vstv %s2845
    %v2847 = vmul.f32 %v2061, %v2846
    %v2848 = vadd.f32 %v2842, %v2847
    %v2849 = vmul.f32 %v2089, %v2846
    %v2850 = vadd.f32 %v2844, %v2849
    %s2851 = sld [smem:[#allocation2 + $0xd9]]
    %v2852 = vstv %s2851
    %v2853 = vmul.f32 %v2064, %v2852
    %v2854 = vadd.f32 %v2848, %v2853
    %v2855 = vmul.f32 %v2092, %v2852
    %v2856 = vadd.f32 %v2850, %v2855
    %s2857 = sld [smem:[#allocation2 + $0xdd]]
    %v2858 = vstv %s2857
    %v2859 = vmul.f32 %v2065, %v2858
    %v2860 = vadd.f32 %v2854, %v2859
    %v2861 = vmul.f32 %v2093, %v2858
    %v2862 = vadd.f32 %v2856, %v2861
    %v2863 = vmul.f32 %v2008, %v2860
    %v2864 = vadd.f32 %v2812, %v2863
    %v2865 = vmul.f32 %v2036, %v2860
    %v2866 = vadd.f32 %v2814, %v2865
    %v2867 = vmul.f32 %v2008, %v2862
    %v2868 = vadd.f32 %v2816, %v2867
    %s2869 = sld [smem:[#allocation2 + $0xe1]]
    %v2870 = vstv %s2869
    %v2871 = vmul.f32 %v2038, %v2870
    %v2872 = vmul.f32 %v2066, %v2870
    %s2873 = sld [smem:[#allocation2 + $0xe5]]
    %v2874 = vstv %s2873
    %v2875 = vmul.f32 %v2041, %v2874
    %v2876 = vadd.f32 %v2871, %v2875
    %v2877 = vmul.f32 %v2069, %v2874
    %v2878 = vadd.f32 %v2872, %v2877
    %s2879 = sld [smem:[#allocation2 + $0xe9]]
    %v2880 = vstv %s2879
    %v2881 = vmul.f32 %v2046, %v2880
    %v2882 = vadd.f32 %v2876, %v2881
    %v2883 = vmul.f32 %v2074, %v2880
    %v2884 = vadd.f32 %v2878, %v2883
    %s2885 = sld [smem:[#allocation2 + $0xed]]
    %v2886 = vstv %s2885
    %v2887 = vmul.f32 %v2051, %v2886
    %v2888 = vadd.f32 %v2882, %v2887
    %v2889 = vmul.f32 %v2079, %v2886
    %v2890 = vadd.f32 %v2884, %v2889
    %s2891 = sld [smem:[#allocation2 + $0xf1]]
    %v2892 = vstv %s2891
    %v2893 = vmul.f32 %v2056, %v2892
    %v2894 = vadd.f32 %v2888, %v2893
    %v2895 = vmul.f32 %v2084, %v2892
    %v2896 = vadd.f32 %v2890, %v2895
    %s2897 = sld [smem:[#allocation2 + $0xf5]]
    %v2898 = vstv %s2897
    %v2899 = vmul.f32 %v2061, %v2898
    %v2900 = vadd.f32 %v2894, %v2899
    %v2901 = vmul.f32 %v2089, %v2898
    %v2902 = vadd.f32 %v2896, %v2901
    %s2903 = sld [smem:[#allocation2 + $0xf9]]
    %v2904 = vstv %s2903
    %v2905 = vmul.f32 %v2064, %v2904
    %v2906 = vadd.f32 %v2900, %v2905
    %v2907 = vmul.f32 %v2092, %v2904
    %v2908 = vadd.f32 %v2902, %v2907
    %s2909 = sld [smem:[#allocation2 + $0xfd]]
    %v2910 = vstv %s2909
    %v2911 = vmul.f32 %v2065, %v2910
    %v2912 = vadd.f32 %v2906, %v2911
    %v2913 = vmul.f32 %v2093, %v2910
    %v2914 = vadd.f32 %v2908, %v2913
    %v2915 = vmul.f32 %v2009, %v2912
    %v2916 = vadd.f32 %v2864, %v2915
    %v2917 = vmul.f32 %v2037, %v2912
    %v2918 = vadd.f32 %v2866, %v2917
    %v2919 = vmul.f32 %v2009, %v2914
    %v2920 = vadd.f32 %v2868, %v2919
    %2921 = vst [vmem:[%s1125 + $0x8] sm:$0xff] %v2916
    %s2922 = sld [smem:[#allocation2 + $0x2]]
    %v2923 = vstv %s2922
    %v2924 = vmul.f32 %v2038, %v2923
    %v2925 = vmul.f32 %v2066, %v2923
    %s2926 = sld [smem:[#allocation2 + $0x6]]
    %v2927 = vstv %s2926
    %v2928 = vmul.f32 %v2041, %v2927
    %v2929 = vadd.f32 %v2924, %v2928
    %v2930 = vmul.f32 %v2069, %v2927
    %v2931 = vadd.f32 %v2925, %v2930
    %s2932 = sld [smem:[#allocation2 + $0xa]]
    %v2933 = vstv %s2932
    %v2934 = vmul.f32 %v2046, %v2933
    %v2935 = vadd.f32 %v2929, %v2934
    %v2936 = vmul.f32 %v2074, %v2933
    %v2937 = vadd.f32 %v2931, %v2936
    %s2938 = sld [smem:[#allocation2 + $0xe]]
    %v2939 = vstv %s2938
    %v2940 = vmul.f32 %v2051, %v2939
    %v2941 = vadd.f32 %v2935, %v2940
    %v2942 = vmul.f32 %v2079, %v2939
    %v2943 = vadd.f32 %v2937, %v2942
    %s2944 = sld [smem:[#allocation2 + $0x12]]
    %v2945 = vstv %s2944
    %v2946 = vmul.f32 %v2056, %v2945
    %v2947 = vadd.f32 %v2941, %v2946
    %v2948 = vmul.f32 %v2084, %v2945
    %v2949 = vadd.f32 %v2943, %v2948
    %s2950 = sld [smem:[#allocation2 + $0x16]]
    %v2951 = vstv %s2950
    %v2952 = vmul.f32 %v2061, %v2951
    %v2953 = vadd.f32 %v2947, %v2952
    %v2954 = vmul.f32 %v2089, %v2951
    %v2955 = vadd.f32 %v2949, %v2954
    %s2956 = sld [smem:[#allocation2 + $0x1a]]
    %v2957 = vstv %s2956
    %v2958 = vmul.f32 %v2064, %v2957
    %v2959 = vadd.f32 %v2953, %v2958
    %v2960 = vmul.f32 %v2092, %v2957
    %v2961 = vadd.f32 %v2955, %v2960
    %s2962 = sld [smem:[#allocation2 + $0x1e]]
    %v2963 = vstv %s2962
    %v2964 = vmul.f32 %v2065, %v2963
    %v2965 = vadd.f32 %v2959, %v2964
    %v2966 = vmul.f32 %v2093, %v2963
    %v2967 = vadd.f32 %v2961, %v2966
    %v2968 = vmul.f32 %v1982, %v2965
    %v2969 = vmul.f32 %v2010, %v2965
    %v2970 = vmul.f32 %v1982, %v2967
    %s2971 = sld [smem:[#allocation2 + $0x22]]
    %v2972 = vstv %s2971
    %v2973 = vmul.f32 %v2038, %v2972
    %v2974 = vmul.f32 %v2066, %v2972
    %s2975 = sld [smem:[#allocation2 + $0x26]]
    %v2976 = vstv %s2975
    %v2977 = vmul.f32 %v2041, %v2976
    %v2978 = vadd.f32 %v2973, %v2977
    %v2979 = vmul.f32 %v2069, %v2976
    %v2980 = vadd.f32 %v2974, %v2979
    %s2981 = sld [smem:[#allocation2 + $0x2a]]
    %v2982 = vstv %s2981
    %v2983 = vmul.f32 %v2046, %v2982
    %v2984 = vadd.f32 %v2978, %v2983
    %v2985 = vmul.f32 %v2074, %v2982
    %v2986 = vadd.f32 %v2980, %v2985
    %s2987 = sld [smem:[#allocation2 + $0x2e]]
    %v2988 = vstv %s2987
    %v2989 = vmul.f32 %v2051, %v2988
    %v2990 = vadd.f32 %v2984, %v2989
    %v2991 = vmul.f32 %v2079, %v2988
    %v2992 = vadd.f32 %v2986, %v2991
    %s2993 = sld [smem:[#allocation2 + $0x32]]
    %v2994 = vstv %s2993
    %v2995 = vmul.f32 %v2056, %v2994
    %v2996 = vadd.f32 %v2990, %v2995
    %v2997 = vmul.f32 %v2084, %v2994
    %v2998 = vadd.f32 %v2992, %v2997
    %s2999 = sld [smem:[#allocation2 + $0x36]]
    %v3000 = vstv %s2999
    %v3001 = vmul.f32 %v2061, %v3000
    %v3002 = vadd.f32 %v2996, %v3001
    %v3003 = vmul.f32 %v2089, %v3000
    %v3004 = vadd.f32 %v2998, %v3003
    %s3005 = sld [smem:[#allocation2 + $0x3a]]
    %v3006 = vstv %s3005
    %v3007 = vmul.f32 %v2064, %v3006
    %v3008 = vadd.f32 %v3002, %v3007
    %v3009 = vmul.f32 %v2092, %v3006
    %v3010 = vadd.f32 %v3004, %v3009
    %s3011 = sld [smem:[#allocation2 + $0x3e]]
    %v3012 = vstv %s3011
    %v3013 = vmul.f32 %v2065, %v3012
    %v3014 = vadd.f32 %v3008, %v3013
    %v3015 = vmul.f32 %v2093, %v3012
    %v3016 = vadd.f32 %v3010, %v3015
    %v3017 = vmul.f32 %v1985, %v3014
    %v3018 = vadd.f32 %v2968, %v3017
    %v3019 = vmul.f32 %v2013, %v3014
    %v3020 = vadd.f32 %v2969, %v3019
    %v3021 = vmul.f32 %v1985, %v3016
    %v3022 = vadd.f32 %v2970, %v3021
    %s3023 = sld [smem:[#allocation2 + $0x42]]
    %v3024 = vstv %s3023
    %v3025 = vmul.f32 %v2038, %v3024
    %v3026 = vmul.f32 %v2066, %v3024
    %s3027 = sld [smem:[#allocation2 + $0x46]]
    %v3028 = vstv %s3027
    %v3029 = vmul.f32 %v2041, %v3028
    %v3030 = vadd.f32 %v3025, %v3029
    %v3031 = vmul.f32 %v2069, %v3028
    %v3032 = vadd.f32 %v3026, %v3031
    %s3033 = sld [smem:[#allocation2 + $0x4a]]
    %v3034 = vstv %s3033
    %v3035 = vmul.f32 %v2046, %v3034
    %v3036 = vadd.f32 %v3030, %v3035
    %v3037 = vmul.f32 %v2074, %v3034
    %v3038 = vadd.f32 %v3032, %v3037
    %s3039 = sld [smem:[#allocation2 + $0x4e]]
    %v3040 = vstv %s3039
    %v3041 = vmul.f32 %v2051, %v3040
    %v3042 = vadd.f32 %v3036, %v3041
    %v3043 = vmul.f32 %v2079, %v3040
    %v3044 = vadd.f32 %v3038, %v3043
    %s3045 = sld [smem:[#allocation2 + $0x52]]
    %v3046 = vstv %s3045
    %v3047 = vmul.f32 %v2056, %v3046
    %v3048 = vadd.f32 %v3042, %v3047
    %v3049 = vmul.f32 %v2084, %v3046
    %v3050 = vadd.f32 %v3044, %v3049
    %s3051 = sld [smem:[#allocation2 + $0x56]]
    %v3052 = vstv %s3051
    %v3053 = vmul.f32 %v2061, %v3052
    %v3054 = vadd.f32 %v3048, %v3053
    %v3055 = vmul.f32 %v2089, %v3052
    %v3056 = vadd.f32 %v3050, %v3055
    %s3057 = sld [smem:[#allocation2 + $0x5a]]
    %v3058 = vstv %s3057
    %v3059 = vmul.f32 %v2064, %v3058
    %v3060 = vadd.f32 %v3054, %v3059
    %v3061 = vmul.f32 %v2092, %v3058
    %v3062 = vadd.f32 %v3056, %v3061
    %s3063 = sld [smem:[#allocation2 + $0x5e]]
    %v3064 = vstv %s3063
    %v3065 = vmul.f32 %v2065, %v3064
    %v3066 = vadd.f32 %v3060, %v3065
    %v3067 = vmul.f32 %v2093, %v3064
    %v3068 = vadd.f32 %v3062, %v3067
    %v3069 = vmul.f32 %v1990, %v3066
    %v3070 = vadd.f32 %v3018, %v3069
    %v3071 = vmul.f32 %v2018, %v3066
    %v3072 = vadd.f32 %v3020, %v3071
    %v3073 = vmul.f32 %v1990, %v3068
    %v3074 = vadd.f32 %v3022, %v3073
    %s3075 = sld [smem:[#allocation2 + $0x62]]
    %v3076 = vstv %s3075
    %v3077 = vmul.f32 %v2038, %v3076
    %v3078 = vmul.f32 %v2066, %v3076
    %s3079 = sld [smem:[#allocation2 + $0x66]]
    %v3080 = vstv %s3079
    %v3081 = vmul.f32 %v2041, %v3080
    %v3082 = vadd.f32 %v3077, %v3081
    %v3083 = vmul.f32 %v2069, %v3080
    %v3084 = vadd.f32 %v3078, %v3083
    %s3085 = sld [smem:[#allocation2 + $0x6a]]
    %v3086 = vstv %s3085
    %v3087 = vmul.f32 %v2046, %v3086
    %v3088 = vadd.f32 %v3082, %v3087
    %v3089 = vmul.f32 %v2074, %v3086
    %v3090 = vadd.f32 %v3084, %v3089
    %s3091 = sld [smem:[#allocation2 + $0x6e]]
    %v3092 = vstv %s3091
    %v3093 = vmul.f32 %v2051, %v3092
    %v3094 = vadd.f32 %v3088, %v3093
    %v3095 = vmul.f32 %v2079, %v3092
    %v3096 = vadd.f32 %v3090, %v3095
    %s3097 = sld [smem:[#allocation2 + $0x72]]
    %v3098 = vstv %s3097
    %v3099 = vmul.f32 %v2056, %v3098
    %v3100 = vadd.f32 %v3094, %v3099
    %v3101 = vmul.f32 %v2084, %v3098
    %v3102 = vadd.f32 %v3096, %v3101
    %s3103 = sld [smem:[#allocation2 + $0x76]]
    %v3104 = vstv %s3103
    %v3105 = vmul.f32 %v2061, %v3104
    %v3106 = vadd.f32 %v3100, %v3105
    %v3107 = vmul.f32 %v2089, %v3104
    %v3108 = vadd.f32 %v3102, %v3107
    %s3109 = sld [smem:[#allocation2 + $0x7a]]
    %v3110 = vstv %s3109
    %v3111 = vmul.f32 %v2064, %v3110
    %v3112 = vadd.f32 %v3106, %v3111
    %v3113 = vmul.f32 %v2092, %v3110
    %v3114 = vadd.f32 %v3108, %v3113
    %s3115 = sld [smem:[#allocation2 + $0x7e]]
    %v3116 = vstv %s3115
    %v3117 = vmul.f32 %v2065, %v3116
    %v3118 = vadd.f32 %v3112, %v3117
    %v3119 = vmul.f32 %v2093, %v3116
    %v3120 = vadd.f32 %v3114, %v3119
    %v3121 = vmul.f32 %v1995, %v3118
    %v3122 = vadd.f32 %v3070, %v3121
    %v3123 = vmul.f32 %v2023, %v3118
    %v3124 = vadd.f32 %v3072, %v3123
    %v3125 = vmul.f32 %v1995, %v3120
    %v3126 = vadd.f32 %v3074, %v3125
    %s3127 = sld [smem:[#allocation2 + $0x82]]
    %v3128 = vstv %s3127
    %v3129 = vmul.f32 %v2038, %v3128
    %v3130 = vmul.f32 %v2066, %v3128
    %s3131 = sld [smem:[#allocation2 + $0x86]]
    %v3132 = vstv %s3131
    %v3133 = vmul.f32 %v2041, %v3132
    %v3134 = vadd.f32 %v3129, %v3133
    %v3135 = vmul.f32 %v2069, %v3132
    %v3136 = vadd.f32 %v3130, %v3135
    %s3137 = sld [smem:[#allocation2 + $0x8a]]
    %v3138 = vstv %s3137
    %v3139 = vmul.f32 %v2046, %v3138
    %v3140 = vadd.f32 %v3134, %v3139
    %v3141 = vmul.f32 %v2074, %v3138
    %v3142 = vadd.f32 %v3136, %v3141
    %s3143 = sld [smem:[#allocation2 + $0x8e]]
    %v3144 = vstv %s3143
    %v3145 = vmul.f32 %v2051, %v3144
    %v3146 = vadd.f32 %v3140, %v3145
    %v3147 = vmul.f32 %v2079, %v3144
    %v3148 = vadd.f32 %v3142, %v3147
    %s3149 = sld [smem:[#allocation2 + $0x92]]
    %v3150 = vstv %s3149
    %v3151 = vmul.f32 %v2056, %v3150
    %v3152 = vadd.f32 %v3146, %v3151
    %v3153 = vmul.f32 %v2084, %v3150
    %v3154 = vadd.f32 %v3148, %v3153
    %s3155 = sld [smem:[#allocation2 + $0x96]]
    %v3156 = vstv %s3155
    %v3157 = vmul.f32 %v2061, %v3156
    %v3158 = vadd.f32 %v3152, %v3157
    %v3159 = vmul.f32 %v2089, %v3156
    %v3160 = vadd.f32 %v3154, %v3159
    %s3161 = sld [smem:[#allocation2 + $0x9a]]
    %v3162 = vstv %s3161
    %v3163 = vmul.f32 %v2064, %v3162
    %v3164 = vadd.f32 %v3158, %v3163
    %v3165 = vmul.f32 %v2092, %v3162
    %v3166 = vadd.f32 %v3160, %v3165
    %s3167 = sld [smem:[#allocation2 + $0x9e]]
    %v3168 = vstv %s3167
    %v3169 = vmul.f32 %v2065, %v3168
    %v3170 = vadd.f32 %v3164, %v3169
    %v3171 = vmul.f32 %v2093, %v3168
    %v3172 = vadd.f32 %v3166, %v3171
    %v3173 = vmul.f32 %v2000, %v3170
    %v3174 = vadd.f32 %v3122, %v3173
    %v3175 = vmul.f32 %v2028, %v3170
    %v3176 = vadd.f32 %v3124, %v3175
    %v3177 = vmul.f32 %v2000, %v3172
    %v3178 = vadd.f32 %v3126, %v3177
    %s3179 = sld [smem:[#allocation2 + $0xa2]]
    %v3180 = vstv %s3179
    %v3181 = vmul.f32 %v2038, %v3180
    %v3182 = vmul.f32 %v2066, %v3180
    %s3183 = sld [smem:[#allocation2 + $0xa6]]
    %v3184 = vstv %s3183
    %v3185 = vmul.f32 %v2041, %v3184
    %v3186 = vadd.f32 %v3181, %v3185
    %v3187 = vmul.f32 %v2069, %v3184
    %v3188 = vadd.f32 %v3182, %v3187
    %s3189 = sld [smem:[#allocation2 + $0xaa]]
    %v3190 = vstv %s3189
    %v3191 = vmul.f32 %v2046, %v3190
    %v3192 = vadd.f32 %v3186, %v3191
    %v3193 = vmul.f32 %v2074, %v3190
    %v3194 = vadd.f32 %v3188, %v3193
    %s3195 = sld [smem:[#allocation2 + $0xae]]
    %v3196 = vstv %s3195
    %v3197 = vmul.f32 %v2051, %v3196
    %v3198 = vadd.f32 %v3192, %v3197
    %v3199 = vmul.f32 %v2079, %v3196
    %v3200 = vadd.f32 %v3194, %v3199
    %s3201 = sld [smem:[#allocation2 + $0xb2]]
    %v3202 = vstv %s3201
    %v3203 = vmul.f32 %v2056, %v3202
    %v3204 = vadd.f32 %v3198, %v3203
    %v3205 = vmul.f32 %v2084, %v3202
    %v3206 = vadd.f32 %v3200, %v3205
    %s3207 = sld [smem:[#allocation2 + $0xb6]]
    %v3208 = vstv %s3207
    %v3209 = vmul.f32 %v2061, %v3208
    %v3210 = vadd.f32 %v3204, %v3209
    %v3211 = vmul.f32 %v2089, %v3208
    %v3212 = vadd.f32 %v3206, %v3211
    %s3213 = sld [smem:[#allocation2 + $0xba]]
    %v3214 = vstv %s3213
    %v3215 = vmul.f32 %v2064, %v3214
    %v3216 = vadd.f32 %v3210, %v3215
    %v3217 = vmul.f32 %v2092, %v3214
    %v3218 = vadd.f32 %v3212, %v3217
    %s3219 = sld [smem:[#allocation2 + $0xbe]]
    %v3220 = vstv %s3219
    %v3221 = vmul.f32 %v2065, %v3220
    %v3222 = vadd.f32 %v3216, %v3221
    %v3223 = vmul.f32 %v2093, %v3220
    %v3224 = vadd.f32 %v3218, %v3223
    %v3225 = vmul.f32 %v2005, %v3222
    %v3226 = vadd.f32 %v3174, %v3225
    %v3227 = vmul.f32 %v2033, %v3222
    %v3228 = vadd.f32 %v3176, %v3227
    %v3229 = vmul.f32 %v2005, %v3224
    %v3230 = vadd.f32 %v3178, %v3229
    %s3231 = sld [smem:[#allocation2 + $0xc2]]
    %v3232 = vstv %s3231
    %v3233 = vmul.f32 %v2038, %v3232
    %v3234 = vmul.f32 %v2066, %v3232
    %s3235 = sld [smem:[#allocation2 + $0xc6]]
    %v3236 = vstv %s3235
    %v3237 = vmul.f32 %v2041, %v3236
    %v3238 = vadd.f32 %v3233, %v3237
    %v3239 = vmul.f32 %v2069, %v3236
    %v3240 = vadd.f32 %v3234, %v3239
    %s3241 = sld [smem:[#allocation2 + $0xca]]
    %v3242 = vstv %s3241
    %v3243 = vmul.f32 %v2046, %v3242
    %v3244 = vadd.f32 %v3238, %v3243
    %v3245 = vmul.f32 %v2074, %v3242
    %v3246 = vadd.f32 %v3240, %v3245
    %s3247 = sld [smem:[#allocation2 + $0xce]]
    %v3248 = vstv %s3247
    %v3249 = vmul.f32 %v2051, %v3248
    %v3250 = vadd.f32 %v3244, %v3249
    %v3251 = vmul.f32 %v2079, %v3248
    %v3252 = vadd.f32 %v3246, %v3251
    %s3253 = sld [smem:[#allocation2 + $0xd2]]
    %v3254 = vstv %s3253
    %v3255 = vmul.f32 %v2056, %v3254
    %v3256 = vadd.f32 %v3250, %v3255
    %v3257 = vmul.f32 %v2084, %v3254
    %v3258 = vadd.f32 %v3252, %v3257
    %s3259 = sld [smem:[#allocation2 + $0xd6]]
    %v3260 = vstv %s3259
    %v3261 = vmul.f32 %v2061, %v3260
    %v3262 = vadd.f32 %v3256, %v3261
    %v3263 = vmul.f32 %v2089, %v3260
    %v3264 = vadd.f32 %v3258, %v3263
    %s3265 = sld [smem:[#allocation2 + $0xda]]
    %v3266 = vstv %s3265
    %v3267 = vmul.f32 %v2064, %v3266
    %v3268 = vadd.f32 %v3262, %v3267
    %v3269 = vmul.f32 %v2092, %v3266
    %v3270 = vadd.f32 %v3264, %v3269
    %s3271 = sld [smem:[#allocation2 + $0xde]]
    %v3272 = vstv %s3271
    %v3273 = vmul.f32 %v2065, %v3272
    %v3274 = vadd.f32 %v3268, %v3273
    %v3275 = vmul.f32 %v2093, %v3272
    %v3276 = vadd.f32 %v3270, %v3275
    %v3277 = vmul.f32 %v2008, %v3274
    %v3278 = vadd.f32 %v3226, %v3277
    %v3279 = vmul.f32 %v2036, %v3274
    %v3280 = vadd.f32 %v3228, %v3279
    %v3281 = vmul.f32 %v2008, %v3276
    %v3282 = vadd.f32 %v3230, %v3281
    %s3283 = sld [smem:[#allocation2 + $0xe2]]
    %v3284 = vstv %s3283
    %v3285 = vmul.f32 %v2038, %v3284
    %v3286 = vmul.f32 %v2066, %v3284
    %s3287 = sld [smem:[#allocation2 + $0xe6]]
    %v3288 = vstv %s3287
    %v3289 = vmul.f32 %v2041, %v3288
    %v3290 = vadd.f32 %v3285, %v3289
    %v3291 = vmul.f32 %v2069, %v3288
    %v3292 = vadd.f32 %v3286, %v3291
    %s3293 = sld [smem:[#allocation2 + $0xea]]
    %v3294 = vstv %s3293
    %v3295 = vmul.f32 %v2046, %v3294
    %v3296 = vadd.f32 %v3290, %v3295
    %v3297 = vmul.f32 %v2074, %v3294
    %v3298 = vadd.f32 %v3292, %v3297
    %s3299 = sld [smem:[#allocation2 + $0xee]]
    %v3300 = vstv %s3299
    %v3301 = vmul.f32 %v2051, %v3300
    %v3302 = vadd.f32 %v3296, %v3301
    %v3303 = vmul.f32 %v2079, %v3300
    %v3304 = vadd.f32 %v3298, %v3303
    %s3305 = sld [smem:[#allocation2 + $0xf2]]
    %v3306 = vstv %s3305
    %v3307 = vmul.f32 %v2056, %v3306
    %v3308 = vadd.f32 %v3302, %v3307
    %v3309 = vmul.f32 %v2084, %v3306
    %v3310 = vadd.f32 %v3304, %v3309
    %s3311 = sld [smem:[#allocation2 + $0xf6]]
    %v3312 = vstv %s3311
    %v3313 = vmul.f32 %v2061, %v3312
    %v3314 = vadd.f32 %v3308, %v3313
    %v3315 = vmul.f32 %v2089, %v3312
    %v3316 = vadd.f32 %v3310, %v3315
    %s3317 = sld [smem:[#allocation2 + $0xfa]]
    %v3318 = vstv %s3317
    %v3319 = vmul.f32 %v2064, %v3318
    %v3320 = vadd.f32 %v3314, %v3319
    %v3321 = vmul.f32 %v2092, %v3318
    %v3322 = vadd.f32 %v3316, %v3321
    %s3323 = sld [smem:[#allocation2 + $0xfe]]
    %v3324 = vstv %s3323
    %v3325 = vmul.f32 %v2065, %v3324
    %v3326 = vadd.f32 %v3320, %v3325
    %v3327 = vmul.f32 %v2093, %v3324
    %v3328 = vadd.f32 %v3322, %v3327
    %v3329 = vmul.f32 %v2009, %v3326
    %v3330 = vadd.f32 %v3278, %v3329
    %v3331 = vmul.f32 %v2037, %v3326
    %v3332 = vadd.f32 %v3280, %v3331
    %v3333 = vmul.f32 %v2009, %v3328
    %v3334 = vadd.f32 %v3282, %v3333
    %3335 = vst [vmem:[%s1540 + $0x8] sm:$0xff] %v3330
    %s3336 = sld [smem:[#allocation2 + $0x3]]
    %v3337 = vstv %s3336
    %v3338 = vmul.f32 %v2038, %v3337
    %s3339 = sld [smem:[#allocation2 + $0x7]]
    %v3340 = vstv %s3339
    %v3341 = vmul.f32 %v2041, %v3340
    %v3342 = vadd.f32 %v3338, %v3341
    %s3343 = sld [smem:[#allocation2 + $0xb]]
    %v3344 = vstv %s3343
    %v3345 = vmul.f32 %v2046, %v3344
    %v3346 = vadd.f32 %v3342, %v3345
    %s3347 = sld [smem:[#allocation2 + $0xf]]
    %v3348 = vstv %s3347
    %v3349 = vmul.f32 %v2051, %v3348
    %v3350 = vadd.f32 %v3346, %v3349
    %s3351 = sld [smem:[#allocation2 + $0x13]]
    %v3352 = vstv %s3351
    %v3353 = vmul.f32 %v2056, %v3352
    %v3354 = vadd.f32 %v3350, %v3353
    %s3355 = sld [smem:[#allocation2 + $0x17]]
    %v3356 = vstv %s3355
    %v3357 = vmul.f32 %v2061, %v3356
    %v3358 = vadd.f32 %v3354, %v3357
    %s3359 = sld [smem:[#allocation2 + $0x1b]]
    %v3360 = vstv %s3359
    %v3361 = vmul.f32 %v2064, %v3360
    %v3362 = vadd.f32 %v3358, %v3361
    %s3363 = sld [smem:[#allocation2 + $0x1f]]
    %v3364 = vstv %s3363
    %v3365 = vmul.f32 %v2065, %v3364
    %v3366 = vadd.f32 %v3362, %v3365
    %v3367 = vmul.f32 %v1982, %v3366
    %s3368 = sld [smem:[#allocation2 + $0x23]]
    %v3369 = vstv %s3368
    %v3370 = vmul.f32 %v2038, %v3369
    %s3371 = sld [smem:[#allocation2 + $0x27]]
    %v3372 = vstv %s3371
    %v3373 = vmul.f32 %v2041, %v3372
    %v3374 = vadd.f32 %v3370, %v3373
    %s3375 = sld [smem:[#allocation2 + $0x2b]]
    %v3376 = vstv %s3375
    %v3377 = vmul.f32 %v2046, %v3376
    %v3378 = vadd.f32 %v3374, %v3377
    %s3379 = sld [smem:[#allocation2 + $0x2f]]
    %v3380 = vstv %s3379
    %v3381 = vmul.f32 %v2051, %v3380
    %v3382 = vadd.f32 %v3378, %v3381
    %s3383 = sld [smem:[#allocation2 + $0x33]]
    %v3384 = vstv %s3383
    %v3385 = vmul.f32 %v2056, %v3384
    %v3386 = vadd.f32 %v3382, %v3385
    %s3387 = sld [smem:[#allocation2 + $0x37]]
    %v3388 = vstv %s3387
    %v3389 = vmul.f32 %v2061, %v3388
    %v3390 = vadd.f32 %v3386, %v3389
    %s3391 = sld [smem:[#allocation2 + $0x3b]]
    %v3392 = vstv %s3391
    %v3393 = vmul.f32 %v2064, %v3392
    %v3394 = vadd.f32 %v3390, %v3393
    %s3395 = sld [smem:[#allocation2 + $0x3f]]
    %v3396 = vstv %s3395
    %v3397 = vmul.f32 %v2065, %v3396
    %v3398 = vadd.f32 %v3394, %v3397
    %v3399 = vmul.f32 %v1985, %v3398
    %v3400 = vadd.f32 %v3367, %v3399
    %s3401 = sld [smem:[#allocation2 + $0x43]]
    %v3402 = vstv %s3401
    %v3403 = vmul.f32 %v2038, %v3402
    %s3404 = sld [smem:[#allocation2 + $0x47]]
    %v3405 = vstv %s3404
    %v3406 = vmul.f32 %v2041, %v3405
    %v3407 = vadd.f32 %v3403, %v3406
    %s3408 = sld [smem:[#allocation2 + $0x4b]]
    %v3409 = vstv %s3408
    %v3410 = vmul.f32 %v2046, %v3409
    %v3411 = vadd.f32 %v3407, %v3410
    %s3412 = sld [smem:[#allocation2 + $0x4f]]
    %v3413 = vstv %s3412
    %v3414 = vmul.f32 %v2051, %v3413
    %v3415 = vadd.f32 %v3411, %v3414
    %s3416 = sld [smem:[#allocation2 + $0x53]]
    %v3417 = vstv %s3416
    %v3418 = vmul.f32 %v2056, %v3417
    %v3419 = vadd.f32 %v3415, %v3418
    %s3420 = sld [smem:[#allocation2 + $0x57]]
    %v3421 = vstv %s3420
    %v3422 = vmul.f32 %v2061, %v3421
    %v3423 = vadd.f32 %v3419, %v3422
    %s3424 = sld [smem:[#allocation2 + $0x5b]]
    %v3425 = vstv %s3424
    %v3426 = vmul.f32 %v2064, %v3425
    %v3427 = vadd.f32 %v3423, %v3426
    %s3428 = sld [smem:[#allocation2 + $0x5f]]
    %v3429 = vstv %s3428
    %v3430 = vmul.f32 %v2065, %v3429
    %v3431 = vadd.f32 %v3427, %v3430
    %v3432 = vmul.f32 %v1990, %v3431
    %v3433 = vadd.f32 %v3400, %v3432
    %s3434 = sld [smem:[#allocation2 + $0x63]]
    %v3435 = vstv %s3434
    %v3436 = vmul.f32 %v2038, %v3435
    %s3437 = sld [smem:[#allocation2 + $0x67]]
    %v3438 = vstv %s3437
    %v3439 = vmul.f32 %v2041, %v3438
    %v3440 = vadd.f32 %v3436, %v3439
    %s3441 = sld [smem:[#allocation2 + $0x6b]]
    %v3442 = vstv %s3441
    %v3443 = vmul.f32 %v2046, %v3442
    %v3444 = vadd.f32 %v3440, %v3443
    %s3445 = sld [smem:[#allocation2 + $0x6f]]
    %v3446 = vstv %s3445
    %v3447 = vmul.f32 %v2051, %v3446
    %v3448 = vadd.f32 %v3444, %v3447
    %s3449 = sld [smem:[#allocation2 + $0x73]]
    %v3450 = vstv %s3449
    %v3451 = vmul.f32 %v2056, %v3450
    %v3452 = vadd.f32 %v3448, %v3451
    %s3453 = sld [smem:[#allocation2 + $0x77]]
    %v3454 = vstv %s3453
    %v3455 = vmul.f32 %v2061, %v3454
    %v3456 = vadd.f32 %v3452, %v3455
    %s3457 = sld [smem:[#allocation2 + $0x7b]]
    %v3458 = vstv %s3457
    %v3459 = vmul.f32 %v2064, %v3458
    %v3460 = vadd.f32 %v3456, %v3459
    %s3461 = sld [smem:[#allocation2 + $0x7f]]
    %v3462 = vstv %s3461
    %v3463 = vmul.f32 %v2065, %v3462
    %v3464 = vadd.f32 %v3460, %v3463
    %v3465 = vmul.f32 %v1995, %v3464
    %v3466 = vadd.f32 %v3433, %v3465
    %s3467 = sld [smem:[#allocation2 + $0x83]]
    %v3468 = vstv %s3467
    %v3469 = vmul.f32 %v2038, %v3468
    %s3470 = sld [smem:[#allocation2 + $0x87]]
    %v3471 = vstv %s3470
    %v3472 = vmul.f32 %v2041, %v3471
    %v3473 = vadd.f32 %v3469, %v3472
    %s3474 = sld [smem:[#allocation2 + $0x8b]]
    %v3475 = vstv %s3474
    %v3476 = vmul.f32 %v2046, %v3475
    %v3477 = vadd.f32 %v3473, %v3476
    %s3478 = sld [smem:[#allocation2 + $0x8f]]
    %v3479 = vstv %s3478
    %v3480 = vmul.f32 %v2051, %v3479
    %v3481 = vadd.f32 %v3477, %v3480
    %s3482 = sld [smem:[#allocation2 + $0x93]]
    %v3483 = vstv %s3482
    %v3484 = vmul.f32 %v2056, %v3483
    %v3485 = vadd.f32 %v3481, %v3484
    %s3486 = sld [smem:[#allocation2 + $0x97]]
    %v3487 = vstv %s3486
    %v3488 = vmul.f32 %v2061, %v3487
    %v3489 = vadd.f32 %v3485, %v3488
    %s3490 = sld [smem:[#allocation2 + $0x9b]]
    %v3491 = vstv %s3490
    %v3492 = vmul.f32 %v2064, %v3491
    %v3493 = vadd.f32 %v3489, %v3492
    %s3494 = sld [smem:[#allocation2 + $0x9f]]
    %v3495 = vstv %s3494
    %v3496 = vmul.f32 %v2065, %v3495
    %v3497 = vadd.f32 %v3493, %v3496
    %v3498 = vmul.f32 %v2000, %v3497
    %v3499 = vadd.f32 %v3466, %v3498
    %s3500 = sld [smem:[#allocation2 + $0xa3]]
    %v3501 = vstv %s3500
    %v3502 = vmul.f32 %v2038, %v3501
    %s3503 = sld [smem:[#allocation2 + $0xa7]]
    %v3504 = vstv %s3503
    %v3505 = vmul.f32 %v2041, %v3504
    %v3506 = vadd.f32 %v3502, %v3505
    %s3507 = sld [smem:[#allocation2 + $0xab]]
    %v3508 = vstv %s3507
    %v3509 = vmul.f32 %v2046, %v3508
    %v3510 = vadd.f32 %v3506, %v3509
    %s3511 = sld [smem:[#allocation2 + $0xaf]]
    %v3512 = vstv %s3511
    %v3513 = vmul.f32 %v2051, %v3512
    %v3514 = vadd.f32 %v3510, %v3513
    %s3515 = sld [smem:[#allocation2 + $0xb3]]
    %v3516 = vstv %s3515
    %v3517 = vmul.f32 %v2056, %v3516
    %v3518 = vadd.f32 %v3514, %v3517
    %s3519 = sld [smem:[#allocation2 + $0xb7]]
    %v3520 = vstv %s3519
    %v3521 = vmul.f32 %v2061, %v3520
    %v3522 = vadd.f32 %v3518, %v3521
    %s3523 = sld [smem:[#allocation2 + $0xbb]]
    %v3524 = vstv %s3523
    %v3525 = vmul.f32 %v2064, %v3524
    %v3526 = vadd.f32 %v3522, %v3525
    %s3527 = sld [smem:[#allocation2 + $0xbf]]
    %v3528 = vstv %s3527
    %v3529 = vmul.f32 %v2065, %v3528
    %v3530 = vadd.f32 %v3526, %v3529
    %v3531 = vmul.f32 %v2005, %v3530
    %v3532 = vadd.f32 %v3499, %v3531
    %s3533 = sld [smem:[#allocation2 + $0xc3]]
    %v3534 = vstv %s3533
    %v3535 = vmul.f32 %v2038, %v3534
    %s3536 = sld [smem:[#allocation2 + $0xc7]]
    %v3537 = vstv %s3536
    %v3538 = vmul.f32 %v2041, %v3537
    %v3539 = vadd.f32 %v3535, %v3538
    %s3540 = sld [smem:[#allocation2 + $0xcb]]
    %v3541 = vstv %s3540
    %v3542 = vmul.f32 %v2046, %v3541
    %v3543 = vadd.f32 %v3539, %v3542
    %s3544 = sld [smem:[#allocation2 + $0xcf]]
    %v3545 = vstv %s3544
    %v3546 = vmul.f32 %v2051, %v3545
    %v3547 = vadd.f32 %v3543, %v3546
    %s3548 = sld [smem:[#allocation2 + $0xd3]]
    %v3549 = vstv %s3548
    %v3550 = vmul.f32 %v2056, %v3549
    %v3551 = vadd.f32 %v3547, %v3550
    %s3552 = sld [smem:[#allocation2 + $0xd7]]
    %v3553 = vstv %s3552
    %v3554 = vmul.f32 %v2061, %v3553
    %v3555 = vadd.f32 %v3551, %v3554
    %s3556 = sld [smem:[#allocation2 + $0xdb]]
    %v3557 = vstv %s3556
    %v3558 = vmul.f32 %v2064, %v3557
    %v3559 = vadd.f32 %v3555, %v3558
    %s3560 = sld [smem:[#allocation2 + $0xdf]]
    %v3561 = vstv %s3560
    %v3562 = vmul.f32 %v2065, %v3561
    %v3563 = vadd.f32 %v3559, %v3562
    %v3564 = vmul.f32 %v2008, %v3563
    %v3565 = vadd.f32 %v3532, %v3564
    %s3566 = sld [smem:[#allocation2 + $0xe3]]
    %v3567 = vstv %s3566
    %v3568 = vmul.f32 %v2038, %v3567
    %s3569 = sld [smem:[#allocation2 + $0xe7]]
    %v3570 = vstv %s3569
    %v3571 = vmul.f32 %v2041, %v3570
    %v3572 = vadd.f32 %v3568, %v3571
    %s3573 = sld [smem:[#allocation2 + $0xeb]]
    %v3574 = vstv %s3573
    %v3575 = vmul.f32 %v2046, %v3574
    %v3576 = vadd.f32 %v3572, %v3575
    %s3577 = sld [smem:[#allocation2 + $0xef]]
    %v3578 = vstv %s3577
    %v3579 = vmul.f32 %v2051, %v3578
    %v3580 = vadd.f32 %v3576, %v3579
    %s3581 = sld [smem:[#allocation2 + $0xf3]]
    %v3582 = vstv %s3581
    %v3583 = vmul.f32 %v2056, %v3582
    %v3584 = vadd.f32 %v3580, %v3583
    %s3585 = sld [smem:[#allocation2 + $0xf7]]
    %v3586 = vstv %s3585
    %v3587 = vmul.f32 %v2061, %v3586
    %v3588 = vadd.f32 %v3584, %v3587
    %s3589 = sld [smem:[#allocation2 + $0xfb]]
    %v3590 = vstv %s3589
    %v3591 = vmul.f32 %v2064, %v3590
    %v3592 = vadd.f32 %v3588, %v3591
    %s3593 = sld [smem:[#allocation2 + $0xff]]
    %v3594 = vstv %s3593
    %v3595 = vmul.f32 %v2065, %v3594
    %v3596 = vadd.f32 %v3592, %v3595
    %v3597 = vmul.f32 %v2009, %v3596
    %v3598 = vadd.f32 %v3565, %v3597
    %3599 = vst [vmem:[%s1805 + $0x8] sm:$0xff] %v3598
    %v3600 = vmul.f32 %v2918, %v3334
    %v3601 = vmul.f32 %v3332, %v2920
    %v3602 = vsub.f32 %v3600, %v3601
    %v3603 = vmul.f32 %v3332, %v2506
    %v3604 = vmul.f32 %v2504, %v3334
    %v3605 = vsub.f32 %v3603, %v3604
    %v3606 = vmul.f32 %v2504, %v2920
    %v3607 = vmul.f32 %v2918, %v2506
    %v3608 = vsub.f32 %v3606, %v3607
    %v3609 = vmul.f32 %v3602, %v3602
    %v3610 = vmul.f32 %v3605, %v3605
    %v3611 = vadd.f32 %v3609, %v3610
    %v3612 = vmul.f32 %v3608, %v3608
    %v3613 = vadd.f32 %v3611, %v3612
    %v3614 = vmax.f32 %v3613, 1e-24
    %v3615 = vrsqrt.pop %v3614
    %v3616 = vmul.f32 %v3602, %v3615
    %3617 = vst [vmem:[%s1824 + $0x8] sm:$0xff] %v3616
    %v3618 = vmul.f32 %v3605, %v3615
    %3619 = vst [vmem:[%s1827 + $0x8] sm:$0xff] %v3618
    %v3620 = vmul.f32 %v3608, %v3615
    %3621 = vst [vmem:[%s1830 + $0x8] sm:$0xff] %v3620
    %3622 = vst [vmem:[%s1832 + $0x8] sm:$0xff] 0.0
    // Predicated region
    $region18: #{tpu_custom_call.1} parent=1 // pred_check
      _
    $region19: #{tpu_custom_call.1} parent=1 // pred_check_branch
      %3624 = sbr.rel (0) target = $region21
    $region20: #{tpu_custom_call.1} parent=1 // pred_region
      %s3626 = ssub.s32 2048, 2048
      %3627 = vsyncadd [#allocation4], %s3626
      %s3628 = sshll.u32 [#allocation7], 4
      %s3629 = int_to_ptr.vmem [resolvable:$true] %s3628
      %3634 = dma.vmem_to_hbm [thread:$0]  %s3629, 2048, %s2, [#allocation4], 128, 128, 8
    $region21: #{tpu_custom_call.1} parent=1 // pred_fallthru
      _
    // Predicated region
    $region22: #{tpu_custom_call.1} parent=1 // pred_check
      _
    $region23: #{tpu_custom_call.1} parent=1 // pred_check_branch
      %3636 = sbr.rel (0) target = $region25
    $region24: #{tpu_custom_call.1} parent=1 // pred_region
      %3637 = dma.done [#allocation4], 2048
    $region25: #{tpu_custom_call.1} parent=1 // pred_fallthru
      _
    %3638 = vsyncpa [#allocation3], 1
    %3639 = vsyncpa [#allocation4], 1
    %3640 = vsyncpa [#allocation5], 1

</llo_original>
